<compile_context>
chip_gen: v5e
topology: v5e:2x2
jax: 0.10.0
libtpu: 0.0.40
codegen_flags: <defaults>
</compile_context>

<pallas_src>
import jax
import jax.numpy as jnp
from jax import lax
from jax.experimental import pallas as pl
from jax.experimental.pallas import tpu as pltpu

BN_EPS = 1e-5


# ---------------------------------------------------------------------------
# Conv3d(k=(3,3,1)) over a td-row tile, with the previous layer's BN + ReLU
# fused onto the input and per-tile BN partial statistics on the output.
# ---------------------------------------------------------------------------
def _make_conv_kernel(*, C, F, td, H, W, GD, fuse_bn):
    HW = H * W
    HpW = (H + 2) * W           # one W-wide zero strip on each side of the H axis
    D = GD * td

    def kernel(*refs):
        if fuse_bn:
            (x_hbm, w_ref, scale_ref, shift_ref,
             y_ref, s_ref, q_ref, in_scr, act_scr, a_scr, sem) = refs
        else:
            (x_hbm, w_ref,
             y_ref, s_ref, q_ref, in_scr, act_scr, a_scr, sem) = refs

        n = pl.program_id(0)
        di = pl.program_id(1)
        row0 = n * D + di * td               # first output row in (n*D + d) space

        # ---- fetch the (td + 2)-row halo window: main DMA + 2 conditional ----
        main = pltpu.make_async_copy(
            x_hbm.at[pl.ds(row0, td), :, :], in_scr.at[pl.ds(1, td), :, :],
            sem.at[0])
        main.start()

        @pl.when(di > 0)
        def _():
            pltpu.make_async_copy(
                x_hbm.at[pl.ds(row0 - 1, 1), :, :],
                in_scr.at[pl.ds(0, 1), :, :], sem.at[1]).start()

        @pl.when(di < GD - 1)
        def _():
            pltpu.make_async_copy(
                x_hbm.at[pl.ds(row0 + td, 1), :, :],
                in_scr.at[pl.ds(td + 1, 1), :, :], sem.at[2]).start()

        main.wait()

        @pl.when(di > 0)
        def _():
            pltpu.make_async_copy(
                x_hbm.at[pl.ds(row0 - 1, 1), :, :],
                in_scr.at[pl.ds(0, 1), :, :], sem.at[1]).wait()

        @pl.when(di < GD - 1)
        def _():
            pltpu.make_async_copy(
                x_hbm.at[pl.ds(row0 + td, 1), :, :],
                in_scr.at[pl.ds(td + 1, 1), :, :], sem.at[2]).wait()

        # ---- previous layer's BN + ReLU fused onto the input tile (f32) -----
        wmat = w_ref[...]                                  # (F, 9C) bf16
        raw = in_scr[...]                                  # (td+2, C, HW)
        if fuse_bn:
            act = jnp.maximum(raw * scale_ref[...] + shift_ref[...], 0.0)
            act = act.astype(jnp.bfloat16)
        else:
            act = raw                                      # already bf16 activations

        # ---- build the zero-padded activation tile in VMEM ------------------
        zside = jnp.zeros((td + 2, C, W), jnp.bfloat16)
        act_scr[:, :, 0:W] = zside                         # h = -1 zero pad
        act_scr[:, :, W + HW:HpW] = zside                  # h = H  zero pad
        act_scr[:, :, W:W + HW] = act

        @pl.when(di == 0)                                  # d = -1 zero pad
        def _():
            act_scr[0, :, :] = jnp.zeros((C, HpW), jnp.bfloat16)

        @pl.when(di == GD - 1)                             # d = D zero pad
        def _():
            act_scr[td + 1, :, :] = jnp.zeros((C, HpW), jnp.bfloat16)

        # ---- 3x3 conv over (d, h): one (F, 9C) x (9C, HW) GEMM per d-row ----
        ssum = jnp.zeros((F, 1), jnp.float32)
        ssq = jnp.zeros((F, 1), jnp.float32)
        for dd in range(td):                               # static unroll
            for kd in range(3):
                for kh in range(3):
                    kidx = kd * 3 + kh
                    a_scr[kidx * C:(kidx + 1) * C, :] = (
                        act_scr[dd + kd, :, kh * W:kh * W + HW])
            y = jnp.dot(wmat, a_scr[...],
                        preferred_element_type=jnp.float32)   # (F, HW) f32
            y_ref[dd, :, :] = y
            ssum = ssum + jnp.sum(y, axis=1, keepdims=True)
            ssq = ssq + jnp.sum(y * y, axis=1, keepdims=True)

        s_ref[0, 0, :, :] = ssum
        q_ref[0, 0, :, :] = ssq

    return kernel


def _conv_layer(x_rows, wmat, scale_in, shift_in, *, C, F, N, D, H, W, td):
    """One Conv3d(k=(3,3,1), pad=(1,1,0), stride=1) layer as a Pallas kernel.

    x_rows : (N*D, C, H*W) activations.  bf16 for the first layer, or the
             previous layer's raw f32 pre-BN conv output (its BN+ReLU is then
             applied inside this kernel via scale_in / shift_in).
    Returns (raw_y, tile_sum, tile_sumsq):
      raw_y       : (N*D, F, H*W) f32 pre-BN conv output
      tile_sum/sq : (N, D//td, F, 1) per-tile BN partial statistics.
    """
    HW = H * W
    GD = D // td
    fuse = scale_in is not None
    kernel = _make_conv_kernel(C=C, F=F, td=td, H=H, W=W, GD=GD, fuse_bn=fuse)

    in_specs = [pl.BlockSpec(memory_space=pl.ANY),                 # halo DMA'd manually
                pl.BlockSpec((F, 9 * C), lambda n, di: (0, 0))]
    inputs = [x_rows, wmat]
    if fuse:
        in_specs += [pl.BlockSpec((1, C, 1), lambda n, di: (0, 0, 0)),
                     pl.BlockSpec((1, C, 1), lambda n, di: (0, 0, 0))]
        inputs += [scale_in.reshape(1, C, 1), shift_in.reshape(1, C, 1)]

    return pl.pallas_call(
        kernel,
        out_shape=(jax.ShapeDtypeStruct((N * D, F, HW), jnp.float32),
                   jax.ShapeDtypeStruct((N, GD, F, 1), jnp.float32),
                   jax.ShapeDtypeStruct((N, GD, F, 1), jnp.float32)),
        grid_spec=pltpu.PrefetchScalarGridSpec(
            num_scalar_prefetch=0,
            grid=(N, GD),
            in_specs=in_specs,
            out_specs=[
                pl.BlockSpec((td, F, HW), lambda n, di: (n * GD + di, 0, 0)),
                pl.BlockSpec((1, 1, F, 1), lambda n, di: (n, di, 0, 0)),
                pl.BlockSpec((1, 1, F, 1), lambda n, di: (n, di, 0, 0)),
            ],
            scratch_shapes=[
                pltpu.VMEM((td + 2, C, HW), x_rows.dtype),        # raw halo tile
                pltpu.VMEM((td + 2, C, (H + 2) * W), jnp.bfloat16),  # padded activations
                pltpu.VMEM((9 * C, HW), jnp.bfloat16),            # per-row im2col operand
                pltpu.SemaphoreType.DMA((3,)),
            ]),
        compiler_params=pltpu.CompilerParams(
            dimension_semantics=("parallel", "parallel"),
            vmem_limit_bytes=32 * 1024 * 1024),
    )(*inputs)


def _bn_affine(tile_sum, tile_sq, gamma, beta, n_tile, m_total):
    """Combine per-tile (sum, sum_sq) with Chan's formula -> folded BN affine."""
    Fo = tile_sum.shape[2]
    s = tile_sum.reshape(-1, Fo)                 # (T, F)
    q = tile_sq.reshape(-1, Fo)
    mu_t = s / n_tile
    m2_t = jnp.maximum(q - s * mu_t, 0.0)        # per-tile centered sum of squares
    mean = jnp.sum(s, axis=0) / m_total
    m2 = jnp.sum(m2_t, axis=0) + n_tile * jnp.sum(jnp.square(mu_t - mean), axis=0)
    var = m2 / m_total
    scale = gamma * lax.rsqrt(var + BN_EPS)
    shift = beta - mean * scale                  # conv bias would cancel here anyway
    return scale, shift


# ---------------------------------------------------------------------------
# Standalone folded BN + ReLU (only used for the final layer's output).
# ---------------------------------------------------------------------------
def _bn_relu_kernel(y_ref, scale_ref, shift_ref, o_ref):
    o_ref[...] = jnp.maximum(y_ref[...] * scale_ref[...] + shift_ref[...], 0.0)


def fcn_conv3_forward(x, params, *, td=8):
    """FCNConv3.forward (is_batchnorm=True, default kernel/stride/padding).

    x: (N, C, D, H, W) f32.  params: list of (w, gamma, beta) with
    w: (F, C, 3, 3, 1).  Returns (N, F, D, H, W) f32.
    """
    N, C, D, H, W = x.shape
    if D % td != 0 or td % 8 != 0:
        raise ValueError("td must be a multiple of 8 dividing D")
    HW = H * W
    NR = N * D
    M = NR * HW

    # Single layout move in: (n*D + d, c, h*W + w), bf16 for the first conv.
    cur = jnp.transpose(x, (0, 2, 1, 3, 4)).reshape(NR, C, HW).astype(jnp.bfloat16)
    cur_C = C
    scale = shift = None
    y = None
    Fo = None
    for (w, gamma, beta) in params:
        Fo = w.shape[0]
        # A-row order inside the kernel is (kd, kh, c).
        wmat = jnp.transpose(w[..., 0], (0, 2, 3, 1)).reshape(Fo, 9 * cur_C)
        wmat = wmat.astype(jnp.bfloat16)
        y, tsum, tsq = _conv_layer(cur, wmat, scale, shift,
                                   C=cur_C, F=Fo, N=N, D=D, H=H, W=W, td=td)
        scale, shift = _bn_affine(tsum, tsq, gamma, beta, td * HW, M)
        cur, cur_C = y, Fo   # raw f32 pre-BN output; BN+ReLU fused into next layer

    # Final layer's BN + ReLU (inner layers' epilogues were fused away).
    out = pl.pallas_call(
        _bn_relu_kernel,
        out_shape=jax.ShapeDtypeStruct((NR, Fo, HW), jnp.float32),
        grid_spec=pltpu.PrefetchScalarGridSpec(
            num_scalar_prefetch=0,
            grid=(NR // td,),
            in_specs=[pl.BlockSpec((td, Fo, HW), lambda i: (i, 0, 0)),
                      pl.BlockSpec((1, Fo, 1), lambda i: (0, 0, 0)),
                      pl.BlockSpec((1, Fo, 1), lambda i: (0, 0, 0))],
            out_specs=pl.BlockSpec((td, Fo, HW), lambda i: (i, 0, 0))),
        compiler_params=pltpu.CompilerParams(
            dimension_semantics=("parallel",),
            vmem_limit_bytes=32 * 1024 * 1024),
    )(y, scale.reshape(1, Fo, 1), shift.reshape(1, Fo, 1))

    return out.reshape(N, D, Fo, H, W).transpose(0, 2, 1, 3, 4)


# ---------------------------------------------------------------------------
# Pure-JAX/XLA reference with the same precision schedule (bf16 conv inputs,
# f32 accumulation and f32 BN/ReLU).  Keeps the conv bias to show that
# training-mode BatchNorm cancels it exactly.
# ---------------------------------------------------------------------------
def _reference(x, layers):
    N, C, D, H, W = x.shape
    # kW == 1: fold W into the batch and run a 2-D 3x3 conv over (D, H).
    y = jnp.transpose(x, (0, 4, 1, 2, 3)).reshape(N * W, C, D, H)
    for w, b, gamma, beta in layers:
        y = lax.conv_general_dilated(
            y.astype(jnp.bfloat16), w[..., 0].astype(jnp.bfloat16),
            window_strides=(1, 1), padding=[(1, 1), (1, 1)],
            dimension_numbers=("NCHW", "OIHW", "NCHW"),
            preferred_element_type=jnp.float32)
        y = y + b.reshape(1, -1, 1, 1)
        mean = y.mean(axis=(0, 2, 3), keepdims=True)
        var = jnp.square(y - mean).mean(axis=(0, 2, 3), keepdims=True)
        y = (y - mean) * lax.rsqrt(var + BN_EPS)
        y = y * gamma.reshape(1, -1, 1, 1) + beta.reshape(1, -1, 1, 1)
        y = jnp.maximum(y, 0.0)
    Fo = y.shape[1]
    return y.reshape(N, W, Fo, D, H).transpose(0, 2, 3, 4, 1)


if __name__ == "__main__":
    # FCNConv3(in_size=4, out_size=8, is_batchnorm=True) with default
    # kernel_size=(3, 3, 1), padding_size=(1, 1, 0), init_stride=(1, 1, 1).
    N, C_in, C_out = 2, 4, 8
    D, H, W = 16, 16, 8

    key = jax.random.PRNGKey(0)
    k = jax.random.split(key, 10)

    x = jax.random.normal(k[0], (N, C_in, D, H, W), dtype=jnp.float32)

    def make_layer(kw, kb, kg, cin, cout):
        fan_in = cin * 3 * 3 * 1
        # Conv3d weight: kaiming_normal_(a=0, mode='fan_in') -> std = sqrt(2/fan_in)
        w = jax.random.normal(kw, (cout, cin, 3, 3, 1), jnp.float32) * (2.0 / fan_in) ** 0.5
        # Conv3d bias: PyTorch default U(-1/sqrt(fan_in), 1/sqrt(fan_in))
        bound = 1.0 / fan_in ** 0.5
        b = jax.random.uniform(kb, (cout,), jnp.float32, -bound, bound)
        # BatchNorm3d under weights_init_kaiming: weight ~ N(1, 0.02), bias = 0
        gamma = 1.0 + 0.02 * jax.random.normal(kg, (cout,), jnp.float32)
        beta = jnp.zeros((cout,), jnp.float32)
        return w, b, gamma, beta

    layers = [
        make_layer(k[1], k[2], k[3], C_in, C_out),
        make_layer(k[4], k[5], k[6], C_out, C_out),
        make_layer(k[7], k[8], k[9], C_out, C_out),
    ]
    # Kernel path drops the conv bias: training-mode BN subtracts the batch
    # mean, cancelling it exactly (the reference keeps it as the proof).
    params = [(w, gamma, beta) for (w, _b, gamma, beta) in layers]

    out = jax.block_until_ready(jax.jit(fcn_conv3_forward)(x, params))
    ref = jax.block_until_ready(_reference(x, layers))

    assert out.shape == (N, C_out, D, H, W), out.shape
    err = jnp.abs(out - ref)
    max_err = float(jnp.max(err))
    mean_err = float(jnp.mean(err))
    # Both paths hand bf16 activations to the next conv; accumulation-order
    # differences can flip a handful of bf16 roundings (one ulp ~ 0.2%), which
    # propagates to ~1e-3 absolute at isolated output positions.  The mean
    # error bound is the tight correctness check.
    assert max_err < 1e-3, (max_err, mean_err)
    assert mean_err < 5e-5, (max_err, mean_err)
    print("KERNEL_OK")
</pallas_src>

<mosaic_0001>
module attributes {stable_mosaic.version = 11 : i64} {
  func.func @kernel(%arg0: i32, %arg1: i32, %arg2: memref<32x4x128xbf16, #tpu.memory_space<any>>, %arg3: memref<8x36xbf16, #tpu.memory_space<vmem>>, %arg4: memref<8x8x128xf32, #tpu.memory_space<vmem>>, %arg5: memref<1x1x8x1xf32, #tpu.memory_space<vmem>>, %arg6: memref<1x1x8x1xf32, #tpu.memory_space<vmem>>, %arg7: memref<10x4x128xbf16, #tpu.memory_space<vmem>>, %arg8: memref<10x4x144xbf16, #tpu.memory_space<vmem>>, %arg9: memref<36x128xbf16, #tpu.memory_space<vmem>>, %arg10: memref<3x!tpu.dma_semaphore, #tpu.memory_space<semaphore_mem>>) attributes {dimension_semantics = [#tpu.dimension_semantics<parallel>, #tpu.dimension_semantics<parallel>], iteration_bounds = array<i64: 2, 2>, scalar_prefetch = 0 : i64, scratch_operands = 4 : i64, tpu.core_type = #tpu.core_type<tc>, window_params = [{}, {pipeline_mode = #tpu.pipeline_mode<synchronous>, transform_indices = @transform_1, window_bounds = array<i64: 8, 36>}, {transform_indices = @transform_2, window_bounds = array<i64: 8, 8, 128>}, {transform_indices = @transform_3, window_bounds = array<i64: 1, 1, 8, 1>}, {transform_indices = @transform_4, window_bounds = array<i64: 1, 1, 8, 1>}]} {
    %c16_i32 = arith.constant 16 : i32
    %0 = arith.muli %arg0, %c16_i32 : i32
    %c8_i32 = arith.constant 8 : i32
    %1 = arith.muli %arg1, %c8_i32 : i32
    %2 = arith.addi %0, %1 : i32
    %c0_i32 = arith.constant 0 : i32
    %c0_i32_0 = arith.constant 0 : i32
    %c0_i32_1 = arith.constant 0 : i32
    %3 = tpu.memref_slice %arg2[%2, %c0_i32_0, %c0_i32_1] : memref<32x4x128xbf16, #tpu.memory_space<any>> -> memref<8x4x128xbf16, #tpu.memory_space<any>>
    %c1_i32 = arith.constant 1 : i32
    %c0_i32_2 = arith.constant 0 : i32
    %c0_i32_3 = arith.constant 0 : i32
    %4 = tpu.memref_slice %arg7[%c1_i32, %c0_i32_2, %c0_i32_3] : memref<10x4x128xbf16, #tpu.memory_space<vmem>> -> memref<8x4x128xbf16, #tpu.memory_space<vmem>>
    %5 = tpu.memref_slice %arg10[%c0_i32] : memref<3x!tpu.dma_semaphore, #tpu.memory_space<semaphore_mem>> -> memref<1x!tpu.dma_semaphore, #tpu.memory_space<semaphore_mem>>
    %6 = tpu.memref_squeeze %5 : memref<1x!tpu.dma_semaphore, #tpu.memory_space<semaphore_mem>> -> memref<!tpu.dma_semaphore, #tpu.memory_space<semaphore_mem>>
    tpu.enqueue_dma source(%3 : memref<8x4x128xbf16, #tpu.memory_space<any>>) target(%4 : memref<8x4x128xbf16, #tpu.memory_space<vmem>>) target_semaphore(%6 : memref<!tpu.dma_semaphore, #tpu.memory_space<semaphore_mem>>)
    %c0_i32_4 = arith.constant 0 : i32
    %7 = arith.cmpi sgt, %arg1, %c0_i32_4 : i32
    %8 = arith.extui %7 : i1 to i32
    %c0_i32_5 = arith.constant 0 : i32
    %9 = arith.cmpi ne, %8, %c0_i32_5 : i32
    scf.if %9 {
      %c1_i32_453 = arith.constant 1 : i32
      %355 = arith.subi %2, %c1_i32_453 : i32
      %c1_i32_454 = arith.constant 1 : i32
      %c0_i32_455 = arith.constant 0 : i32
      %c0_i32_456 = arith.constant 0 : i32
      %356 = tpu.memref_slice %arg2[%355, %c0_i32_455, %c0_i32_456] : memref<32x4x128xbf16, #tpu.memory_space<any>> -> memref<1x4x128xbf16, #tpu.memory_space<any>>
      %c0_i32_457 = arith.constant 0 : i32
      %c0_i32_458 = arith.constant 0 : i32
      %c0_i32_459 = arith.constant 0 : i32
      %357 = tpu.memref_slice %arg7[%c0_i32_457, %c0_i32_458, %c0_i32_459] : memref<10x4x128xbf16, #tpu.memory_space<vmem>> -> memref<1x4x128xbf16, #tpu.memory_space<vmem>>
      %358 = tpu.memref_slice %arg10[%c1_i32_454] : memref<3x!tpu.dma_semaphore, #tpu.memory_space<semaphore_mem>> -> memref<1x!tpu.dma_semaphore, #tpu.memory_space<semaphore_mem>>
      %359 = tpu.memref_squeeze %358 : memref<1x!tpu.dma_semaphore, #tpu.memory_space<semaphore_mem>> -> memref<!tpu.dma_semaphore, #tpu.memory_space<semaphore_mem>>
      tpu.enqueue_dma source(%356 : memref<1x4x128xbf16, #tpu.memory_space<any>>) target(%357 : memref<1x4x128xbf16, #tpu.memory_space<vmem>>) target_semaphore(%359 : memref<!tpu.dma_semaphore, #tpu.memory_space<semaphore_mem>>)
    } else {
    }
    %c1_i32_6 = arith.constant 1 : i32
    %10 = arith.cmpi slt, %arg1, %c1_i32_6 : i32
    %11 = arith.extui %10 : i1 to i32
    %c0_i32_7 = arith.constant 0 : i32
    %12 = arith.cmpi ne, %11, %c0_i32_7 : i32
    scf.if %12 {
      %c8_i32_453 = arith.constant 8 : i32
      %355 = arith.addi %2, %c8_i32_453 : i32
      %c2_i32 = arith.constant 2 : i32
      %c0_i32_454 = arith.constant 0 : i32
      %c0_i32_455 = arith.constant 0 : i32
      %356 = tpu.memref_slice %arg2[%355, %c0_i32_454, %c0_i32_455] : memref<32x4x128xbf16, #tpu.memory_space<any>> -> memref<1x4x128xbf16, #tpu.memory_space<any>>
      %c9_i32 = arith.constant 9 : i32
      %c0_i32_456 = arith.constant 0 : i32
      %c0_i32_457 = arith.constant 0 : i32
      %357 = tpu.memref_slice %arg7[%c9_i32, %c0_i32_456, %c0_i32_457] : memref<10x4x128xbf16, #tpu.memory_space<vmem>> -> memref<1x4x128xbf16, #tpu.memory_space<vmem>>
      %358 = tpu.memref_slice %arg10[%c2_i32] : memref<3x!tpu.dma_semaphore, #tpu.memory_space<semaphore_mem>> -> memref<1x!tpu.dma_semaphore, #tpu.memory_space<semaphore_mem>>
      %359 = tpu.memref_squeeze %358 : memref<1x!tpu.dma_semaphore, #tpu.memory_space<semaphore_mem>> -> memref<!tpu.dma_semaphore, #tpu.memory_space<semaphore_mem>>
      tpu.enqueue_dma source(%356 : memref<1x4x128xbf16, #tpu.memory_space<any>>) target(%357 : memref<1x4x128xbf16, #tpu.memory_space<vmem>>) target_semaphore(%359 : memref<!tpu.dma_semaphore, #tpu.memory_space<semaphore_mem>>)
    } else {
    }
    %c0_i32_8 = arith.constant 0 : i32
    %c0_i32_9 = arith.constant 0 : i32
    %c0_i32_10 = arith.constant 0 : i32
    %13 = tpu.memref_slice %arg2[%2, %c0_i32_9, %c0_i32_10] : memref<32x4x128xbf16, #tpu.memory_space<any>> -> memref<8x4x128xbf16, #tpu.memory_space<any>>
    %c1_i32_11 = arith.constant 1 : i32
    %c0_i32_12 = arith.constant 0 : i32
    %c0_i32_13 = arith.constant 0 : i32
    %14 = tpu.memref_slice %arg7[%c1_i32_11, %c0_i32_12, %c0_i32_13] : memref<10x4x128xbf16, #tpu.memory_space<vmem>> -> memref<8x4x128xbf16, #tpu.memory_space<vmem>>
    %15 = tpu.memref_slice %arg10[%c0_i32_8] : memref<3x!tpu.dma_semaphore, #tpu.memory_space<semaphore_mem>> -> memref<1x!tpu.dma_semaphore, #tpu.memory_space<semaphore_mem>>
    %16 = tpu.memref_squeeze %15 : memref<1x!tpu.dma_semaphore, #tpu.memory_space<semaphore_mem>> -> memref<!tpu.dma_semaphore, #tpu.memory_space<semaphore_mem>>
    tpu.wait_dma2 semaphore(%16 : memref<!tpu.dma_semaphore, #tpu.memory_space<semaphore_mem>>) src(%13 : memref<8x4x128xbf16, #tpu.memory_space<any>>) dst(%14 : memref<8x4x128xbf16, #tpu.memory_space<vmem>>)
    %c0_i32_14 = arith.constant 0 : i32
    %17 = arith.cmpi sgt, %arg1, %c0_i32_14 : i32
    %18 = arith.extui %17 : i1 to i32
    %c0_i32_15 = arith.constant 0 : i32
    %19 = arith.cmpi ne, %18, %c0_i32_15 : i32
    scf.if %19 {
      %c1_i32_453 = arith.constant 1 : i32
      %355 = arith.subi %2, %c1_i32_453 : i32
      %c1_i32_454 = arith.constant 1 : i32
      %c0_i32_455 = arith.constant 0 : i32
      %c0_i32_456 = arith.constant 0 : i32
      %356 = tpu.memref_slice %arg2[%355, %c0_i32_455, %c0_i32_456] : memref<32x4x128xbf16, #tpu.memory_space<any>> -> memref<1x4x128xbf16, #tpu.memory_space<any>>
      %c0_i32_457 = arith.constant 0 : i32
      %c0_i32_458 = arith.constant 0 : i32
      %c0_i32_459 = arith.constant 0 : i32
      %357 = tpu.memref_slice %arg7[%c0_i32_457, %c0_i32_458, %c0_i32_459] : memref<10x4x128xbf16, #tpu.memory_space<vmem>> -> memref<1x4x128xbf16, #tpu.memory_space<vmem>>
      %358 = tpu.memref_slice %arg10[%c1_i32_454] : memref<3x!tpu.dma_semaphore, #tpu.memory_space<semaphore_mem>> -> memref<1x!tpu.dma_semaphore, #tpu.memory_space<semaphore_mem>>
      %359 = tpu.memref_squeeze %358 : memref<1x!tpu.dma_semaphore, #tpu.memory_space<semaphore_mem>> -> memref<!tpu.dma_semaphore, #tpu.memory_space<semaphore_mem>>
      tpu.wait_dma2 semaphore(%359 : memref<!tpu.dma_semaphore, #tpu.memory_space<semaphore_mem>>) src(%356 : memref<1x4x128xbf16, #tpu.memory_space<any>>) dst(%357 : memref<1x4x128xbf16, #tpu.memory_space<vmem>>)
    } else {
    }
    %c1_i32_16 = arith.constant 1 : i32
    %20 = arith.cmpi slt, %arg1, %c1_i32_16 : i32
    %21 = arith.extui %20 : i1 to i32
    %c0_i32_17 = arith.constant 0 : i32
    %22 = arith.cmpi ne, %21, %c0_i32_17 : i32
    scf.if %22 {
      %c8_i32_453 = arith.constant 8 : i32
      %355 = arith.addi %2, %c8_i32_453 : i32
      %c2_i32 = arith.constant 2 : i32
      %c0_i32_454 = arith.constant 0 : i32
      %c0_i32_455 = arith.constant 0 : i32
      %356 = tpu.memref_slice %arg2[%355, %c0_i32_454, %c0_i32_455] : memref<32x4x128xbf16, #tpu.memory_space<any>> -> memref<1x4x128xbf16, #tpu.memory_space<any>>
      %c9_i32 = arith.constant 9 : i32
      %c0_i32_456 = arith.constant 0 : i32
      %c0_i32_457 = arith.constant 0 : i32
      %357 = tpu.memref_slice %arg7[%c9_i32, %c0_i32_456, %c0_i32_457] : memref<10x4x128xbf16, #tpu.memory_space<vmem>> -> memref<1x4x128xbf16, #tpu.memory_space<vmem>>
      %358 = tpu.memref_slice %arg10[%c2_i32] : memref<3x!tpu.dma_semaphore, #tpu.memory_space<semaphore_mem>> -> memref<1x!tpu.dma_semaphore, #tpu.memory_space<semaphore_mem>>
      %359 = tpu.memref_squeeze %358 : memref<1x!tpu.dma_semaphore, #tpu.memory_space<semaphore_mem>> -> memref<!tpu.dma_semaphore, #tpu.memory_space<semaphore_mem>>
      tpu.wait_dma2 semaphore(%359 : memref<!tpu.dma_semaphore, #tpu.memory_space<semaphore_mem>>) src(%356 : memref<1x4x128xbf16, #tpu.memory_space<any>>) dst(%357 : memref<1x4x128xbf16, #tpu.memory_space<vmem>>)
    } else {
    }
    %c0 = arith.constant 0 : index
    %c0_18 = arith.constant 0 : index
    %23 = vector.load %arg3[%c0, %c0_18] : memref<8x36xbf16, #tpu.memory_space<vmem>>, vector<8x36xbf16>
    %c0_19 = arith.constant 0 : index
    %c0_20 = arith.constant 0 : index
    %c0_21 = arith.constant 0 : index
    %24 = vector.load %arg7[%c0_19, %c0_20, %c0_21] : memref<10x4x128xbf16, #tpu.memory_space<vmem>>, vector<10x4x128xbf16>
    %cst = arith.constant 0.000000e+00 : bf16
    %25 = vector.broadcast %cst : bf16 to vector<10x4x8xbf16>
    %c0_22 = arith.constant 0 : index
    %c0_23 = arith.constant 0 : index
    %c0_24 = arith.constant 0 : index
    %26 = vector.load %arg8[%c0_22, %c0_23, %c0_24] : memref<10x4x144xbf16, #tpu.memory_space<vmem>>, vector<10x4x8xbf16>
    tpu.vector_store %arg8[%c0_22, %c0_23, %c0_24], %25 {strides = array<i32>} : memref<10x4x144xbf16, #tpu.memory_space<vmem>>, vector<10x4x8xbf16>,
    %c0_25 = arith.constant 0 : index
    %c0_26 = arith.constant 0 : index
    %c136 = arith.constant 136 : index
    %27 = vector.load %arg8[%c0_25, %c0_26, %c136] : memref<10x4x144xbf16, #tpu.memory_space<vmem>>, vector<10x4x8xbf16>
    tpu.vector_store %arg8[%c0_25, %c0_26, %c136], %25 {strides = array<i32>} : memref<10x4x144xbf16, #tpu.memory_space<vmem>>, vector<10x4x8xbf16>,
    %c0_27 = arith.constant 0 : index
    %c0_28 = arith.constant 0 : index
    %c8 = arith.constant 8 : index
    %28 = vector.load %arg8[%c0_27, %c0_28, %c8] : memref<10x4x144xbf16, #tpu.memory_space<vmem>>, vector<10x4x128xbf16>
    tpu.vector_store %arg8[%c0_27, %c0_28, %c8], %24 {strides = array<i32>} : memref<10x4x144xbf16, #tpu.memory_space<vmem>>, vector<10x4x128xbf16>,
    %c0_i32_29 = arith.constant 0 : i32
    %29 = arith.cmpi eq, %arg1, %c0_i32_29 : i32
    %30 = arith.extui %29 : i1 to i32
    %c0_i32_30 = arith.constant 0 : i32
    %31 = arith.cmpi ne, %30, %c0_i32_30 : i32
    scf.if %31 {
      %cst_453 = arith.constant 0.000000e+00 : bf16
      %355 = vector.broadcast %cst_453 : bf16 to vector<4x144xbf16>
      %c0_454 = arith.constant 0 : index
      %c0_455 = arith.constant 0 : index
      %c0_456 = arith.constant 0 : index
      %356 = vector.load %arg8[%c0_454, %c0_455, %c0_456] : memref<10x4x144xbf16, #tpu.memory_space<vmem>>, vector<1x4x144xbf16>
      %357 = vector.shape_cast %356 : vector<1x4x144xbf16> to vector<4x144xbf16>
      %358 = vector.shape_cast %355 : vector<4x144xbf16> to vector<1x4x144xbf16>
      tpu.vector_store %arg8[%c0_454, %c0_455, %c0_456], %358 {strides = array<i32>} : memref<10x4x144xbf16, #tpu.memory_space<vmem>>, vector<1x4x144xbf16>,
    } else {
    }
    %c1_i32_31 = arith.constant 1 : i32
    %32 = arith.cmpi eq, %arg1, %c1_i32_31 : i32
    %33 = arith.extui %32 : i1 to i32
    %c0_i32_32 = arith.constant 0 : i32
    %34 = arith.cmpi ne, %33, %c0_i32_32 : i32
    scf.if %34 {
      %cst_453 = arith.constant 0.000000e+00 : bf16
      %355 = vector.broadcast %cst_453 : bf16 to vector<4x144xbf16>
      %c9_454 = arith.constant 9 : index
      %c0_455 = arith.constant 0 : index
      %c0_456 = arith.constant 0 : index
      %356 = vector.load %arg8[%c9_454, %c0_455, %c0_456] : memref<10x4x144xbf16, #tpu.memory_space<vmem>>, vector<1x4x144xbf16>
      %357 = vector.shape_cast %356 : vector<1x4x144xbf16> to vector<4x144xbf16>
      %358 = vector.shape_cast %355 : vector<4x144xbf16> to vector<1x4x144xbf16>
      tpu.vector_store %arg8[%c9_454, %c0_455, %c0_456], %358 {strides = array<i32>} : memref<10x4x144xbf16, #tpu.memory_space<vmem>>, vector<1x4x144xbf16>,
    } else {
    }
    %cst_33 = arith.constant 0.000000e+00 : f32
    %35 = vector.broadcast %cst_33 : f32 to vector<8x1xf32>
    %cst_34 = arith.constant 0.000000e+00 : f32
    %36 = vector.broadcast %cst_34 : f32 to vector<8x1xf32>
    %c0_35 = arith.constant 0 : index
    %c0_36 = arith.constant 0 : index
    %c0_37 = arith.constant 0 : index
    %37 = vector.load %arg8[%c0_35, %c0_36, %c0_37] : memref<10x4x144xbf16, #tpu.memory_space<vmem>>, vector<1x4x128xbf16>
    %38 = vector.shape_cast %37 : vector<1x4x128xbf16> to vector<4x128xbf16>
    %c0_38 = arith.constant 0 : index
    %c0_39 = arith.constant 0 : index
    %39 = vector.load %arg9[%c0_38, %c0_39] : memref<36x128xbf16, #tpu.memory_space<vmem>>, vector<4x128xbf16>
    tpu.vector_store %arg9[%c0_38, %c0_39], %38 {strides = array<i32>} : memref<36x128xbf16, #tpu.memory_space<vmem>>, vector<4x128xbf16>,
    %c0_40 = arith.constant 0 : index
    %c0_41 = arith.constant 0 : index
    %c8_42 = arith.constant 8 : index
    %40 = vector.load %arg8[%c0_40, %c0_41, %c8_42] : memref<10x4x144xbf16, #tpu.memory_space<vmem>>, vector<1x4x128xbf16>
    %41 = vector.shape_cast %40 : vector<1x4x128xbf16> to vector<4x128xbf16>
    %c4 = arith.constant 4 : index
    %c0_43 = arith.constant 0 : index
    %42 = vector.load %arg9[%c4, %c0_43] : memref<36x128xbf16, #tpu.memory_space<vmem>>, vector<4x128xbf16>
    tpu.vector_store %arg9[%c4, %c0_43], %41 {strides = array<i32>} : memref<36x128xbf16, #tpu.memory_space<vmem>>, vector<4x128xbf16>,
    %c0_44 = arith.constant 0 : index
    %c0_45 = arith.constant 0 : index
    %c16 = arith.constant 16 : index
    %43 = vector.load %arg8[%c0_44, %c0_45, %c16] : memref<10x4x144xbf16, #tpu.memory_space<vmem>>, vector<1x4x128xbf16>
    %44 = vector.shape_cast %43 : vector<1x4x128xbf16> to vector<4x128xbf16>
    %c8_46 = arith.constant 8 : index
    %c0_47 = arith.constant 0 : index
    %45 = vector.load %arg9[%c8_46, %c0_47] : memref<36x128xbf16, #tpu.memory_space<vmem>>, vector<4x128xbf16>
    tpu.vector_store %arg9[%c8_46, %c0_47], %44 {strides = array<i32>} : memref<36x128xbf16, #tpu.memory_space<vmem>>, vector<4x128xbf16>,
    %c1 = arith.constant 1 : index
    %c0_48 = arith.constant 0 : index
    %c0_49 = arith.constant 0 : index
    %46 = vector.load %arg8[%c1, %c0_48, %c0_49] : memref<10x4x144xbf16, #tpu.memory_space<vmem>>, vector<1x4x128xbf16>
    %47 = vector.shape_cast %46 : vector<1x4x128xbf16> to vector<4x128xbf16>
    %c12 = arith.constant 12 : index
    %c0_50 = arith.constant 0 : index
    %48 = vector.load %arg9[%c12, %c0_50] : memref<36x128xbf16, #tpu.memory_space<vmem>>, vector<4x128xbf16>
    tpu.vector_store %arg9[%c12, %c0_50], %47 {strides = array<i32>} : memref<36x128xbf16, #tpu.memory_space<vmem>>, vector<4x128xbf16>,
    %c1_51 = arith.constant 1 : index
    %c0_52 = arith.constant 0 : index
    %c8_53 = arith.constant 8 : index
    %49 = vector.load %arg8[%c1_51, %c0_52, %c8_53] : memref<10x4x144xbf16, #tpu.memory_space<vmem>>, vector<1x4x128xbf16>
    %50 = vector.shape_cast %49 : vector<1x4x128xbf16> to vector<4x128xbf16>
    %c16_54 = arith.constant 16 : index
    %c0_55 = arith.constant 0 : index
    %51 = vector.load %arg9[%c16_54, %c0_55] : memref<36x128xbf16, #tpu.memory_space<vmem>>, vector<4x128xbf16>
    tpu.vector_store %arg9[%c16_54, %c0_55], %50 {strides = array<i32>} : memref<36x128xbf16, #tpu.memory_space<vmem>>, vector<4x128xbf16>,
    %c1_56 = arith.constant 1 : index
    %c0_57 = arith.constant 0 : index
    %c16_58 = arith.constant 16 : index
    %52 = vector.load %arg8[%c1_56, %c0_57, %c16_58] : memref<10x4x144xbf16, #tpu.memory_space<vmem>>, vector<1x4x128xbf16>
    %53 = vector.shape_cast %52 : vector<1x4x128xbf16> to vector<4x128xbf16>
    %c20 = arith.constant 20 : index
    %c0_59 = arith.constant 0 : index
    %54 = vector.load %arg9[%c20, %c0_59] : memref<36x128xbf16, #tpu.memory_space<vmem>>, vector<4x128xbf16>
    tpu.vector_store %arg9[%c20, %c0_59], %53 {strides = array<i32>} : memref<36x128xbf16, #tpu.memory_space<vmem>>, vector<4x128xbf16>,
    %c2 = arith.constant 2 : index
    %c0_60 = arith.constant 0 : index
    %c0_61 = arith.constant 0 : index
    %55 = vector.load %arg8[%c2, %c0_60, %c0_61] : memref<10x4x144xbf16, #tpu.memory_space<vmem>>, vector<1x4x128xbf16>
    %56 = vector.shape_cast %55 : vector<1x4x128xbf16> to vector<4x128xbf16>
    %c24 = arith.constant 24 : index
    %c0_62 = arith.constant 0 : index
    %57 = vector.load %arg9[%c24, %c0_62] : memref<36x128xbf16, #tpu.memory_space<vmem>>, vector<4x128xbf16>
    tpu.vector_store %arg9[%c24, %c0_62], %56 {strides = array<i32>} : memref<36x128xbf16, #tpu.memory_space<vmem>>, vector<4x128xbf16>,
    %c2_63 = arith.constant 2 : index
    %c0_64 = arith.constant 0 : index
    %c8_65 = arith.constant 8 : index
    %58 = vector.load %arg8[%c2_63, %c0_64, %c8_65] : memref<10x4x144xbf16, #tpu.memory_space<vmem>>, vector<1x4x128xbf16>
    %59 = vector.shape_cast %58 : vector<1x4x128xbf16> to vector<4x128xbf16>
    %c28 = arith.constant 28 : index
    %c0_66 = arith.constant 0 : index
    %60 = vector.load %arg9[%c28, %c0_66] : memref<36x128xbf16, #tpu.memory_space<vmem>>, vector<4x128xbf16>
    tpu.vector_store %arg9[%c28, %c0_66], %59 {strides = array<i32>} : memref<36x128xbf16, #tpu.memory_space<vmem>>, vector<4x128xbf16>,
    %c2_67 = arith.constant 2 : index
    %c0_68 = arith.constant 0 : index
    %c16_69 = arith.constant 16 : index
    %61 = vector.load %arg8[%c2_67, %c0_68, %c16_69] : memref<10x4x144xbf16, #tpu.memory_space<vmem>>, vector<1x4x128xbf16>
    %62 = vector.shape_cast %61 : vector<1x4x128xbf16> to vector<4x128xbf16>
    %c32 = arith.constant 32 : index
    %c0_70 = arith.constant 0 : index
    %63 = vector.load %arg9[%c32, %c0_70] : memref<36x128xbf16, #tpu.memory_space<vmem>>, vector<4x128xbf16>
    tpu.vector_store %arg9[%c32, %c0_70], %62 {strides = array<i32>} : memref<36x128xbf16, #tpu.memory_space<vmem>>, vector<4x128xbf16>,
    %c0_71 = arith.constant 0 : index
    %c0_72 = arith.constant 0 : index
    %64 = vector.load %arg9[%c0_71, %c0_72] : memref<36x128xbf16, #tpu.memory_space<vmem>>, vector<36x128xbf16>
    %cst_73 = arith.constant dense<0.000000e+00> : vector<8x128xf32>
    %65 = tpu.matmul %23, %64, %cst_73 {dimension_numbers = #tpu.dot_dimension_numbers<[1], [0], [0], [1], [0, 0, 1, 1], [], []>} : vector<8x36xbf16>, vector<36x128xbf16>, vector<8x128xf32> -> vector<8x128xf32>
    %c0_74 = arith.constant 0 : index
    %c0_75 = arith.constant 0 : index
    %c0_76 = arith.constant 0 : index
    %66 = vector.load %arg4[%c0_74, %c0_75, %c0_76] : memref<8x8x128xf32, #tpu.memory_space<vmem>>, vector<1x8x128xf32>
    %67 = vector.shape_cast %66 : vector<1x8x128xf32> to vector<8x128xf32>
    %68 = vector.shape_cast %65 : vector<8x128xf32> to vector<1x8x128xf32>
    tpu.vector_store %arg4[%c0_74, %c0_75, %c0_76], %68 {strides = array<i32>} : memref<8x8x128xf32, #tpu.memory_space<vmem>>, vector<1x8x128xf32>,
    %cst_77 = arith.constant dense<0.000000e+00> : vector<8xf32>
    %69 = vector.multi_reduction <add>, %65, %cst_77 [1] : vector<8x128xf32> to vector<8xf32>
    %70 = vector.shape_cast %69 : vector<8xf32> to vector<8x1xf32>
    %71 = arith.addf %35, %70 : vector<8x1xf32>
    %72 = arith.mulf %65, %65 : vector<8x128xf32>
    %cst_78 = arith.constant dense<0.000000e+00> : vector<8xf32>
    %73 = vector.multi_reduction <add>, %72, %cst_78 [1] : vector<8x128xf32> to vector<8xf32>
    %74 = vector.shape_cast %73 : vector<8xf32> to vector<8x1xf32>
    %75 = arith.addf %36, %74 : vector<8x1xf32>
    %c1_79 = arith.constant 1 : index
    %c0_80 = arith.constant 0 : index
    %c0_81 = arith.constant 0 : index
    %76 = vector.load %arg8[%c1_79, %c0_80, %c0_81] : memref<10x4x144xbf16, #tpu.memory_space<vmem>>, vector<1x4x128xbf16>
    %77 = vector.shape_cast %76 : vector<1x4x128xbf16> to vector<4x128xbf16>
    %c0_82 = arith.constant 0 : index
    %c0_83 = arith.constant 0 : index
    %78 = vector.load %arg9[%c0_82, %c0_83] : memref<36x128xbf16, #tpu.memory_space<vmem>>, vector<4x128xbf16>
    tpu.vector_store %arg9[%c0_82, %c0_83], %77 {strides = array<i32>} : memref<36x128xbf16, #tpu.memory_space<vmem>>, vector<4x128xbf16>,
    %c1_84 = arith.constant 1 : index
    %c0_85 = arith.constant 0 : index
    %c8_86 = arith.constant 8 : index
    %79 = vector.load %arg8[%c1_84, %c0_85, %c8_86] : memref<10x4x144xbf16, #tpu.memory_space<vmem>>, vector<1x4x128xbf16>
    %80 = vector.shape_cast %79 : vector<1x4x128xbf16> to vector<4x128xbf16>
    %c4_87 = arith.constant 4 : index
    %c0_88 = arith.constant 0 : index
    %81 = vector.load %arg9[%c4_87, %c0_88] : memref<36x128xbf16, #tpu.memory_space<vmem>>, vector<4x128xbf16>
    tpu.vector_store %arg9[%c4_87, %c0_88], %80 {strides = array<i32>} : memref<36x128xbf16, #tpu.memory_space<vmem>>, vector<4x128xbf16>,
    %c1_89 = arith.constant 1 : index
    %c0_90 = arith.constant 0 : index
    %c16_91 = arith.constant 16 : index
    %82 = vector.load %arg8[%c1_89, %c0_90, %c16_91] : memref<10x4x144xbf16, #tpu.memory_space<vmem>>, vector<1x4x128xbf16>
    %83 = vector.shape_cast %82 : vector<1x4x128xbf16> to vector<4x128xbf16>
    %c8_92 = arith.constant 8 : index
    %c0_93 = arith.constant 0 : index
    %84 = vector.load %arg9[%c8_92, %c0_93] : memref<36x128xbf16, #tpu.memory_space<vmem>>, vector<4x128xbf16>
    tpu.vector_store %arg9[%c8_92, %c0_93], %83 {strides = array<i32>} : memref<36x128xbf16, #tpu.memory_space<vmem>>, vector<4x128xbf16>,
    %c2_94 = arith.constant 2 : index
    %c0_95 = arith.constant 0 : index
    %c0_96 = arith.constant 0 : index
    %85 = vector.load %arg8[%c2_94, %c0_95, %c0_96] : memref<10x4x144xbf16, #tpu.memory_space<vmem>>, vector<1x4x128xbf16>
    %86 = vector.shape_cast %85 : vector<1x4x128xbf16> to vector<4x128xbf16>
    %c12_97 = arith.constant 12 : index
    %c0_98 = arith.constant 0 : index
    %87 = vector.load %arg9[%c12_97, %c0_98] : memref<36x128xbf16, #tpu.memory_space<vmem>>, vector<4x128xbf16>
    tpu.vector_store %arg9[%c12_97, %c0_98], %86 {strides = array<i32>} : memref<36x128xbf16, #tpu.memory_space<vmem>>, vector<4x128xbf16>,
    %c2_99 = arith.constant 2 : index
    %c0_100 = arith.constant 0 : index
    %c8_101 = arith.constant 8 : index
    %88 = vector.load %arg8[%c2_99, %c0_100, %c8_101] : memref<10x4x144xbf16, #tpu.memory_space<vmem>>, vector<1x4x128xbf16>
    %89 = vector.shape_cast %88 : vector<1x4x128xbf16> to vector<4x128xbf16>
    %c16_102 = arith.constant 16 : index
    %c0_103 = arith.constant 0 : index
    %90 = vector.load %arg9[%c16_102, %c0_103] : memref<36x128xbf16, #tpu.memory_space<vmem>>, vector<4x128xbf16>
    tpu.vector_store %arg9[%c16_102, %c0_103], %89 {strides = array<i32>} : memref<36x128xbf16, #tpu.memory_space<vmem>>, vector<4x128xbf16>,
    %c2_104 = arith.constant 2 : index
    %c0_105 = arith.constant 0 : index
    %c16_106 = arith.constant 16 : index
    %91 = vector.load %arg8[%c2_104, %c0_105, %c16_106] : memref<10x4x144xbf16, #tpu.memory_space<vmem>>, vector<1x4x128xbf16>
    %92 = vector.shape_cast %91 : vector<1x4x128xbf16> to vector<4x128xbf16>
    %c20_107 = arith.constant 20 : index
    %c0_108 = arith.constant 0 : index
    %93 = vector.load %arg9[%c20_107, %c0_108] : memref<36x128xbf16, #tpu.memory_space<vmem>>, vector<4x128xbf16>
    tpu.vector_store %arg9[%c20_107, %c0_108], %92 {strides = array<i32>} : memref<36x128xbf16, #tpu.memory_space<vmem>>, vector<4x128xbf16>,
    %c3 = arith.constant 3 : index
    %c0_109 = arith.constant 0 : index
    %c0_110 = arith.constant 0 : index
    %94 = vector.load %arg8[%c3, %c0_109, %c0_110] : memref<10x4x144xbf16, #tpu.memory_space<vmem>>, vector<1x4x128xbf16>
    %95 = vector.shape_cast %94 : vector<1x4x128xbf16> to vector<4x128xbf16>
    %c24_111 = arith.constant 24 : index
    %c0_112 = arith.constant 0 : index
    %96 = vector.load %arg9[%c24_111, %c0_112] : memref<36x128xbf16, #tpu.memory_space<vmem>>, vector<4x128xbf16>
    tpu.vector_store %arg9[%c24_111, %c0_112], %95 {strides = array<i32>} : memref<36x128xbf16, #tpu.memory_space<vmem>>, vector<4x128xbf16>,
    %c3_113 = arith.constant 3 : index
    %c0_114 = arith.constant 0 : index
    %c8_115 = arith.constant 8 : index
    %97 = vector.load %arg8[%c3_113, %c0_114, %c8_115] : memref<10x4x144xbf16, #tpu.memory_space<vmem>>, vector<1x4x128xbf16>
    %98 = vector.shape_cast %97 : vector<1x4x128xbf16> to vector<4x128xbf16>
    %c28_116 = arith.constant 28 : index
    %c0_117 = arith.constant 0 : index
    %99 = vector.load %arg9[%c28_116, %c0_117] : memref<36x128xbf16, #tpu.memory_space<vmem>>, vector<4x128xbf16>
    tpu.vector_store %arg9[%c28_116, %c0_117], %98 {strides = array<i32>} : memref<36x128xbf16, #tpu.memory_space<vmem>>, vector<4x128xbf16>,
    %c3_118 = arith.constant 3 : index
    %c0_119 = arith.constant 0 : index
    %c16_120 = arith.constant 16 : index
    %100 = vector.load %arg8[%c3_118, %c0_119, %c16_120] : memref<10x4x144xbf16, #tpu.memory_space<vmem>>, vector<1x4x128xbf16>
    %101 = vector.shape_cast %100 : vector<1x4x128xbf16> to vector<4x128xbf16>
    %c32_121 = arith.constant 32 : index
    %c0_122 = arith.constant 0 : index
    %102 = vector.load %arg9[%c32_121, %c0_122] : memref<36x128xbf16, #tpu.memory_space<vmem>>, vector<4x128xbf16>
    tpu.vector_store %arg9[%c32_121, %c0_122], %101 {strides = array<i32>} : memref<36x128xbf16, #tpu.memory_space<vmem>>, vector<4x128xbf16>,
    %c0_123 = arith.constant 0 : index
    %c0_124 = arith.constant 0 : index
    %103 = vector.load %arg9[%c0_123, %c0_124] : memref<36x128xbf16, #tpu.memory_space<vmem>>, vector<36x128xbf16>
    %cst_125 = arith.constant dense<0.000000e+00> : vector<8x128xf32>
    %104 = tpu.matmul %23, %103, %cst_125 {dimension_numbers = #tpu.dot_dimension_numbers<[1], [0], [0], [1], [0, 0, 1, 1], [], []>} : vector<8x36xbf16>, vector<36x128xbf16>, vector<8x128xf32> -> vector<8x128xf32>
    %c1_126 = arith.constant 1 : index
    %c0_127 = arith.constant 0 : index
    %c0_128 = arith.constant 0 : index
    %105 = vector.load %arg4[%c1_126, %c0_127, %c0_128] : memref<8x8x128xf32, #tpu.memory_space<vmem>>, vector<1x8x128xf32>
    %106 = vector.shape_cast %105 : vector<1x8x128xf32> to vector<8x128xf32>
    %107 = vector.shape_cast %104 : vector<8x128xf32> to vector<1x8x128xf32>
    tpu.vector_store %arg4[%c1_126, %c0_127, %c0_128], %107 {strides = array<i32>} : memref<8x8x128xf32, #tpu.memory_space<vmem>>, vector<1x8x128xf32>,
    %cst_129 = arith.constant dense<0.000000e+00> : vector<8xf32>
    %108 = vector.multi_reduction <add>, %104, %cst_129 [1] : vector<8x128xf32> to vector<8xf32>
    %109 = vector.shape_cast %108 : vector<8xf32> to vector<8x1xf32>
    %110 = arith.addf %71, %109 : vector<8x1xf32>
    %111 = arith.mulf %104, %104 : vector<8x128xf32>
    %cst_130 = arith.constant dense<0.000000e+00> : vector<8xf32>
    %112 = vector.multi_reduction <add>, %111, %cst_130 [1] : vector<8x128xf32> to vector<8xf32>
    %113 = vector.shape_cast %112 : vector<8xf32> to vector<8x1xf32>
    %114 = arith.addf %75, %113 : vector<8x1xf32>
    %c2_131 = arith.constant 2 : index
    %c0_132 = arith.constant 0 : index
    %c0_133 = arith.constant 0 : index
    %115 = vector.load %arg8[%c2_131, %c0_132, %c0_133] : memref<10x4x144xbf16, #tpu.memory_space<vmem>>, vector<1x4x128xbf16>
    %116 = vector.shape_cast %115 : vector<1x4x128xbf16> to vector<4x128xbf16>
    %c0_134 = arith.constant 0 : index
    %c0_135 = arith.constant 0 : index
    %117 = vector.load %arg9[%c0_134, %c0_135] : memref<36x128xbf16, #tpu.memory_space<vmem>>, vector<4x128xbf16>
    tpu.vector_store %arg9[%c0_134, %c0_135], %116 {strides = array<i32>} : memref<36x128xbf16, #tpu.memory_space<vmem>>, vector<4x128xbf16>,
    %c2_136 = arith.constant 2 : index
    %c0_137 = arith.constant 0 : index
    %c8_138 = arith.constant 8 : index
    %118 = vector.load %arg8[%c2_136, %c0_137, %c8_138] : memref<10x4x144xbf16, #tpu.memory_space<vmem>>, vector<1x4x128xbf16>
    %119 = vector.shape_cast %118 : vector<1x4x128xbf16> to vector<4x128xbf16>
    %c4_139 = arith.constant 4 : index
    %c0_140 = arith.constant 0 : index
    %120 = vector.load %arg9[%c4_139, %c0_140] : memref<36x128xbf16, #tpu.memory_space<vmem>>, vector<4x128xbf16>
    tpu.vector_store %arg9[%c4_139, %c0_140], %119 {strides = array<i32>} : memref<36x128xbf16, #tpu.memory_space<vmem>>, vector<4x128xbf16>,
    %c2_141 = arith.constant 2 : index
    %c0_142 = arith.constant 0 : index
    %c16_143 = arith.constant 16 : index
    %121 = vector.load %arg8[%c2_141, %c0_142, %c16_143] : memref<10x4x144xbf16, #tpu.memory_space<vmem>>, vector<1x4x128xbf16>
    %122 = vector.shape_cast %121 : vector<1x4x128xbf16> to vector<4x128xbf16>
    %c8_144 = arith.constant 8 : index
    %c0_145 = arith.constant 0 : index
    %123 = vector.load %arg9[%c8_144, %c0_145] : memref<36x128xbf16, #tpu.memory_space<vmem>>, vector<4x128xbf16>
    tpu.vector_store %arg9[%c8_144, %c0_145], %122 {strides = array<i32>} : memref<36x128xbf16, #tpu.memory_space<vmem>>, vector<4x128xbf16>,
    %c3_146 = arith.constant 3 : index
    %c0_147 = arith.constant 0 : index
    %c0_148 = arith.constant 0 : index
    %124 = vector.load %arg8[%c3_146, %c0_147, %c0_148] : memref<10x4x144xbf16, #tpu.memory_space<vmem>>, vector<1x4x128xbf16>
    %125 = vector.shape_cast %124 : vector<1x4x128xbf16> to vector<4x128xbf16>
    %c12_149 = arith.constant 12 : index
    %c0_150 = arith.constant 0 : index
    %126 = vector.load %arg9[%c12_149, %c0_150] : memref<36x128xbf16, #tpu.memory_space<vmem>>, vector<4x128xbf16>
    tpu.vector_store %arg9[%c12_149, %c0_150], %125 {strides = array<i32>} : memref<36x128xbf16, #tpu.memory_space<vmem>>, vector<4x128xbf16>,
    %c3_151 = arith.constant 3 : index
    %c0_152 = arith.constant 0 : index
    %c8_153 = arith.constant 8 : index
    %127 = vector.load %arg8[%c3_151, %c0_152, %c8_153] : memref<10x4x144xbf16, #tpu.memory_space<vmem>>, vector<1x4x128xbf16>
    %128 = vector.shape_cast %127 : vector<1x4x128xbf16> to vector<4x128xbf16>
    %c16_154 = arith.constant 16 : index
    %c0_155 = arith.constant 0 : index
    %129 = vector.load %arg9[%c16_154, %c0_155] : memref<36x128xbf16, #tpu.memory_space<vmem>>, vector<4x128xbf16>
    tpu.vector_store %arg9[%c16_154, %c0_155], %128 {strides = array<i32>} : memref<36x128xbf16, #tpu.memory_space<vmem>>, vector<4x128xbf16>,
    %c3_156 = arith.constant 3 : index
    %c0_157 = arith.constant 0 : index
    %c16_158 = arith.constant 16 : index
    %130 = vector.load %arg8[%c3_156, %c0_157, %c16_158] : memref<10x4x144xbf16, #tpu.memory_space<vmem>>, vector<1x4x128xbf16>
    %131 = vector.shape_cast %130 : vector<1x4x128xbf16> to vector<4x128xbf16>
    %c20_159 = arith.constant 20 : index
    %c0_160 = arith.constant 0 : index
    %132 = vector.load %arg9[%c20_159, %c0_160] : memref<36x128xbf16, #tpu.memory_space<vmem>>, vector<4x128xbf16>
    tpu.vector_store %arg9[%c20_159, %c0_160], %131 {strides = array<i32>} : memref<36x128xbf16, #tpu.memory_space<vmem>>, vector<4x128xbf16>,
    %c4_161 = arith.constant 4 : index
    %c0_162 = arith.constant 0 : index
    %c0_163 = arith.constant 0 : index
    %133 = vector.load %arg8[%c4_161, %c0_162, %c0_163] : memref<10x4x144xbf16, #tpu.memory_space<vmem>>, vector<1x4x128xbf16>
    %134 = vector.shape_cast %133 : vector<1x4x128xbf16> to vector<4x128xbf16>
    %c24_164 = arith.constant 24 : index
    %c0_165 = arith.constant 0 : index
    %135 = vector.load %arg9[%c24_164, %c0_165] : memref<36x128xbf16, #tpu.memory_space<vmem>>, vector<4x128xbf16>
    tpu.vector_store %arg9[%c24_164, %c0_165], %134 {strides = array<i32>} : memref<36x128xbf16, #tpu.memory_space<vmem>>, vector<4x128xbf16>,
    %c4_166 = arith.constant 4 : index
    %c0_167 = arith.constant 0 : index
    %c8_168 = arith.constant 8 : index
    %136 = vector.load %arg8[%c4_166, %c0_167, %c8_168] : memref<10x4x144xbf16, #tpu.memory_space<vmem>>, vector<1x4x128xbf16>
    %137 = vector.shape_cast %136 : vector<1x4x128xbf16> to vector<4x128xbf16>
    %c28_169 = arith.constant 28 : index
    %c0_170 = arith.constant 0 : index
    %138 = vector.load %arg9[%c28_169, %c0_170] : memref<36x128xbf16, #tpu.memory_space<vmem>>, vector<4x128xbf16>
    tpu.vector_store %arg9[%c28_169, %c0_170], %137 {strides = array<i32>} : memref<36x128xbf16, #tpu.memory_space<vmem>>, vector<4x128xbf16>,
    %c4_171 = arith.constant 4 : index
    %c0_172 = arith.constant 0 : index
    %c16_173 = arith.constant 16 : index
    %139 = vector.load %arg8[%c4_171, %c0_172, %c16_173] : memref<10x4x144xbf16, #tpu.memory_space<vmem>>, vector<1x4x128xbf16>
    %140 = vector.shape_cast %139 : vector<1x4x128xbf16> to vector<4x128xbf16>
    %c32_174 = arith.constant 32 : index
    %c0_175 = arith.constant 0 : index
    %141 = vector.load %arg9[%c32_174, %c0_175] : memref<36x128xbf16, #tpu.memory_space<vmem>>, vector<4x128xbf16>
    tpu.vector_store %arg9[%c32_174, %c0_175], %140 {strides = array<i32>} : memref<36x128xbf16, #tpu.memory_space<vmem>>, vector<4x128xbf16>,
    %c0_176 = arith.constant 0 : index
    %c0_177 = arith.constant 0 : index
    %142 = vector.load %arg9[%c0_176, %c0_177] : memref<36x128xbf16, #tpu.memory_space<vmem>>, vector<36x128xbf16>
    %cst_178 = arith.constant dense<0.000000e+00> : vector<8x128xf32>
    %143 = tpu.matmul %23, %142, %cst_178 {dimension_numbers = #tpu.dot_dimension_numbers<[1], [0], [0], [1], [0, 0, 1, 1], [], []>} : vector<8x36xbf16>, vector<36x128xbf16>, vector<8x128xf32> -> vector<8x128xf32>
    %c2_179 = arith.constant 2 : index
    %c0_180 = arith.constant 0 : index
    %c0_181 = arith.constant 0 : index
    %144 = vector.load %arg4[%c2_179, %c0_180, %c0_181] : memref<8x8x128xf32, #tpu.memory_space<vmem>>, vector<1x8x128xf32>
    %145 = vector.shape_cast %144 : vector<1x8x128xf32> to vector<8x128xf32>
    %146 = vector.shape_cast %143 : vector<8x128xf32> to vector<1x8x128xf32>
    tpu.vector_store %arg4[%c2_179, %c0_180, %c0_181], %146 {strides = array<i32>} : memref<8x8x128xf32, #tpu.memory_space<vmem>>, vector<1x8x128xf32>,
    %cst_182 = arith.constant dense<0.000000e+00> : vector<8xf32>
    %147 = vector.multi_reduction <add>, %143, %cst_182 [1] : vector<8x128xf32> to vector<8xf32>
    %148 = vector.shape_cast %147 : vector<8xf32> to vector<8x1xf32>
    %149 = arith.addf %110, %148 : vector<8x1xf32>
    %150 = arith.mulf %143, %143 : vector<8x128xf32>
    %cst_183 = arith.constant dense<0.000000e+00> : vector<8xf32>
    %151 = vector.multi_reduction <add>, %150, %cst_183 [1] : vector<8x128xf32> to vector<8xf32>
    %152 = vector.shape_cast %151 : vector<8xf32> to vector<8x1xf32>
    %153 = arith.addf %114, %152 : vector<8x1xf32>
    %c3_184 = arith.constant 3 : index
    %c0_185 = arith.constant 0 : index
    %c0_186 = arith.constant 0 : index
    %154 = vector.load %arg8[%c3_184, %c0_185, %c0_186] : memref<10x4x144xbf16, #tpu.memory_space<vmem>>, vector<1x4x128xbf16>
    %155 = vector.shape_cast %154 : vector<1x4x128xbf16> to vector<4x128xbf16>
    %c0_187 = arith.constant 0 : index
    %c0_188 = arith.constant 0 : index
    %156 = vector.load %arg9[%c0_187, %c0_188] : memref<36x128xbf16, #tpu.memory_space<vmem>>, vector<4x128xbf16>
    tpu.vector_store %arg9[%c0_187, %c0_188], %155 {strides = array<i32>} : memref<36x128xbf16, #tpu.memory_space<vmem>>, vector<4x128xbf16>,
    %c3_189 = arith.constant 3 : index
    %c0_190 = arith.constant 0 : index
    %c8_191 = arith.constant 8 : index
    %157 = vector.load %arg8[%c3_189, %c0_190, %c8_191] : memref<10x4x144xbf16, #tpu.memory_space<vmem>>, vector<1x4x128xbf16>
    %158 = vector.shape_cast %157 : vector<1x4x128xbf16> to vector<4x128xbf16>
    %c4_192 = arith.constant 4 : index
    %c0_193 = arith.constant 0 : index
    %159 = vector.load %arg9[%c4_192, %c0_193] : memref<36x128xbf16, #tpu.memory_space<vmem>>, vector<4x128xbf16>
    tpu.vector_store %arg9[%c4_192, %c0_193], %158 {strides = array<i32>} : memref<36x128xbf16, #tpu.memory_space<vmem>>, vector<4x128xbf16>,
    %c3_194 = arith.constant 3 : index
    %c0_195 = arith.constant 0 : index
    %c16_196 = arith.constant 16 : index
    %160 = vector.load %arg8[%c3_194, %c0_195, %c16_196] : memref<10x4x144xbf16, #tpu.memory_space<vmem>>, vector<1x4x128xbf16>
    %161 = vector.shape_cast %160 : vector<1x4x128xbf16> to vector<4x128xbf16>
    %c8_197 = arith.constant 8 : index
    %c0_198 = arith.constant 0 : index
    %162 = vector.load %arg9[%c8_197, %c0_198] : memref<36x128xbf16, #tpu.memory_space<vmem>>, vector<4x128xbf16>
    tpu.vector_store %arg9[%c8_197, %c0_198], %161 {strides = array<i32>} : memref<36x128xbf16, #tpu.memory_space<vmem>>, vector<4x128xbf16>,
    %c4_199 = arith.constant 4 : index
    %c0_200 = arith.constant 0 : index
    %c0_201 = arith.constant 0 : index
    %163 = vector.load %arg8[%c4_199, %c0_200, %c0_201] : memref<10x4x144xbf16, #tpu.memory_space<vmem>>, vector<1x4x128xbf16>
    %164 = vector.shape_cast %163 : vector<1x4x128xbf16> to vector<4x128xbf16>
    %c12_202 = arith.constant 12 : index
    %c0_203 = arith.constant 0 : index
    %165 = vector.load %arg9[%c12_202, %c0_203] : memref<36x128xbf16, #tpu.memory_space<vmem>>, vector<4x128xbf16>
    tpu.vector_store %arg9[%c12_202, %c0_203], %164 {strides = array<i32>} : memref<36x128xbf16, #tpu.memory_space<vmem>>, vector<4x128xbf16>,
    %c4_204 = arith.constant 4 : index
    %c0_205 = arith.constant 0 : index
    %c8_206 = arith.constant 8 : index
    %166 = vector.load %arg8[%c4_204, %c0_205, %c8_206] : memref<10x4x144xbf16, #tpu.memory_space<vmem>>, vector<1x4x128xbf16>
    %167 = vector.shape_cast %166 : vector<1x4x128xbf16> to vector<4x128xbf16>
    %c16_207 = arith.constant 16 : index
    %c0_208 = arith.constant 0 : index
    %168 = vector.load %arg9[%c16_207, %c0_208] : memref<36x128xbf16, #tpu.memory_space<vmem>>, vector<4x128xbf16>
    tpu.vector_store %arg9[%c16_207, %c0_208], %167 {strides = array<i32>} : memref<36x128xbf16, #tpu.memory_space<vmem>>, vector<4x128xbf16>,
    %c4_209 = arith.constant 4 : index
    %c0_210 = arith.constant 0 : index
    %c16_211 = arith.constant 16 : index
    %169 = vector.load %arg8[%c4_209, %c0_210, %c16_211] : memref<10x4x144xbf16, #tpu.memory_space<vmem>>, vector<1x4x128xbf16>
    %170 = vector.shape_cast %169 : vector<1x4x128xbf16> to vector<4x128xbf16>
    %c20_212 = arith.constant 20 : index
    %c0_213 = arith.constant 0 : index
    %171 = vector.load %arg9[%c20_212, %c0_213] : memref<36x128xbf16, #tpu.memory_space<vmem>>, vector<4x128xbf16>
    tpu.vector_store %arg9[%c20_212, %c0_213], %170 {strides = array<i32>} : memref<36x128xbf16, #tpu.memory_space<vmem>>, vector<4x128xbf16>,
    %c5 = arith.constant 5 : index
    %c0_214 = arith.constant 0 : index
    %c0_215 = arith.constant 0 : index
    %172 = vector.load %arg8[%c5, %c0_214, %c0_215] : memref<10x4x144xbf16, #tpu.memory_space<vmem>>, vector<1x4x128xbf16>
    %173 = vector.shape_cast %172 : vector<1x4x128xbf16> to vector<4x128xbf16>
    %c24_216 = arith.constant 24 : index
    %c0_217 = arith.constant 0 : index
    %174 = vector.load %arg9[%c24_216, %c0_217] : memref<36x128xbf16, #tpu.memory_space<vmem>>, vector<4x128xbf16>
    tpu.vector_store %arg9[%c24_216, %c0_217], %173 {strides = array<i32>} : memref<36x128xbf16, #tpu.memory_space<vmem>>, vector<4x128xbf16>,
    %c5_218 = arith.constant 5 : index
    %c0_219 = arith.constant 0 : index
    %c8_220 = arith.constant 8 : index
    %175 = vector.load %arg8[%c5_218, %c0_219, %c8_220] : memref<10x4x144xbf16, #tpu.memory_space<vmem>>, vector<1x4x128xbf16>
    %176 = vector.shape_cast %175 : vector<1x4x128xbf16> to vector<4x128xbf16>
    %c28_221 = arith.constant 28 : index
    %c0_222 = arith.constant 0 : index
    %177 = vector.load %arg9[%c28_221, %c0_222] : memref<36x128xbf16, #tpu.memory_space<vmem>>, vector<4x128xbf16>
    tpu.vector_store %arg9[%c28_221, %c0_222], %176 {strides = array<i32>} : memref<36x128xbf16, #tpu.memory_space<vmem>>, vector<4x128xbf16>,
    %c5_223 = arith.constant 5 : index
    %c0_224 = arith.constant 0 : index
    %c16_225 = arith.constant 16 : index
    %178 = vector.load %arg8[%c5_223, %c0_224, %c16_225] : memref<10x4x144xbf16, #tpu.memory_space<vmem>>, vector<1x4x128xbf16>
    %179 = vector.shape_cast %178 : vector<1x4x128xbf16> to vector<4x128xbf16>
    %c32_226 = arith.constant 32 : index
    %c0_227 = arith.constant 0 : index
    %180 = vector.load %arg9[%c32_226, %c0_227] : memref<36x128xbf16, #tpu.memory_space<vmem>>, vector<4x128xbf16>
    tpu.vector_store %arg9[%c32_226, %c0_227], %179 {strides = array<i32>} : memref<36x128xbf16, #tpu.memory_space<vmem>>, vector<4x128xbf16>,
    %c0_228 = arith.constant 0 : index
    %c0_229 = arith.constant 0 : index
    %181 = vector.load %arg9[%c0_228, %c0_229] : memref<36x128xbf16, #tpu.memory_space<vmem>>, vector<36x128xbf16>
    %cst_230 = arith.constant dense<0.000000e+00> : vector<8x128xf32>
    %182 = tpu.matmul %23, %181, %cst_230 {dimension_numbers = #tpu.dot_dimension_numbers<[1], [0], [0], [1], [0, 0, 1, 1], [], []>} : vector<8x36xbf16>, vector<36x128xbf16>, vector<8x128xf32> -> vector<8x128xf32>
    %c3_231 = arith.constant 3 : index
    %c0_232 = arith.constant 0 : index
    %c0_233 = arith.constant 0 : index
    %183 = vector.load %arg4[%c3_231, %c0_232, %c0_233] : memref<8x8x128xf32, #tpu.memory_space<vmem>>, vector<1x8x128xf32>
    %184 = vector.shape_cast %183 : vector<1x8x128xf32> to vector<8x128xf32>
    %185 = vector.shape_cast %182 : vector<8x128xf32> to vector<1x8x128xf32>
    tpu.vector_store %arg4[%c3_231, %c0_232, %c0_233], %185 {strides = array<i32>} : memref<8x8x128xf32, #tpu.memory_space<vmem>>, vector<1x8x128xf32>,
    %cst_234 = arith.constant dense<0.000000e+00> : vector<8xf32>
    %186 = vector.multi_reduction <add>, %182, %cst_234 [1] : vector<8x128xf32> to vector<8xf32>
    %187 = vector.shape_cast %186 : vector<8xf32> to vector<8x1xf32>
    %188 = arith.addf %149, %187 : vector<8x1xf32>
    %189 = arith.mulf %182, %182 : vector<8x128xf32>
    %cst_235 = arith.constant dense<0.000000e+00> : vector<8xf32>
    %190 = vector.multi_reduction <add>, %189, %cst_235 [1] : vector<8x128xf32> to vector<8xf32>
    %191 = vector.shape_cast %190 : vector<8xf32> to vector<8x1xf32>
    %192 = arith.addf %153, %191 : vector<8x1xf32>
    %c4_236 = arith.constant 4 : index
    %c0_237 = arith.constant 0 : index
    %c0_238 = arith.constant 0 : index
    %193 = vector.load %arg8[%c4_236, %c0_237, %c0_238] : memref<10x4x144xbf16, #tpu.memory_space<vmem>>, vector<1x4x128xbf16>
    %194 = vector.shape_cast %193 : vector<1x4x128xbf16> to vector<4x128xbf16>
    %c0_239 = arith.constant 0 : index
    %c0_240 = arith.constant 0 : index
    %195 = vector.load %arg9[%c0_239, %c0_240] : memref<36x128xbf16, #tpu.memory_space<vmem>>, vector<4x128xbf16>
    tpu.vector_store %arg9[%c0_239, %c0_240], %194 {strides = array<i32>} : memref<36x128xbf16, #tpu.memory_space<vmem>>, vector<4x128xbf16>,
    %c4_241 = arith.constant 4 : index
    %c0_242 = arith.constant 0 : index
    %c8_243 = arith.constant 8 : index
    %196 = vector.load %arg8[%c4_241, %c0_242, %c8_243] : memref<10x4x144xbf16, #tpu.memory_space<vmem>>, vector<1x4x128xbf16>
    %197 = vector.shape_cast %196 : vector<1x4x128xbf16> to vector<4x128xbf16>
    %c4_244 = arith.constant 4 : index
    %c0_245 = arith.constant 0 : index
    %198 = vector.load %arg9[%c4_244, %c0_245] : memref<36x128xbf16, #tpu.memory_space<vmem>>, vector<4x128xbf16>
    tpu.vector_store %arg9[%c4_244, %c0_245], %197 {strides = array<i32>} : memref<36x128xbf16, #tpu.memory_space<vmem>>, vector<4x128xbf16>,
    %c4_246 = arith.constant 4 : index
    %c0_247 = arith.constant 0 : index
    %c16_248 = arith.constant 16 : index
    %199 = vector.load %arg8[%c4_246, %c0_247, %c16_248] : memref<10x4x144xbf16, #tpu.memory_space<vmem>>, vector<1x4x128xbf16>
    %200 = vector.shape_cast %199 : vector<1x4x128xbf16> to vector<4x128xbf16>
    %c8_249 = arith.constant 8 : index
    %c0_250 = arith.constant 0 : index
    %201 = vector.load %arg9[%c8_249, %c0_250] : memref<36x128xbf16, #tpu.memory_space<vmem>>, vector<4x128xbf16>
    tpu.vector_store %arg9[%c8_249, %c0_250], %200 {strides = array<i32>} : memref<36x128xbf16, #tpu.memory_space<vmem>>, vector<4x128xbf16>,
    %c5_251 = arith.constant 5 : index
    %c0_252 = arith.constant 0 : index
    %c0_253 = arith.constant 0 : index
    %202 = vector.load %arg8[%c5_251, %c0_252, %c0_253] : memref<10x4x144xbf16, #tpu.memory_space<vmem>>, vector<1x4x128xbf16>
    %203 = vector.shape_cast %202 : vector<1x4x128xbf16> to vector<4x128xbf16>
    %c12_254 = arith.constant 12 : index
    %c0_255 = arith.constant 0 : index
    %204 = vector.load %arg9[%c12_254, %c0_255] : memref<36x128xbf16, #tpu.memory_space<vmem>>, vector<4x128xbf16>
    tpu.vector_store %arg9[%c12_254, %c0_255], %203 {strides = array<i32>} : memref<36x128xbf16, #tpu.memory_space<vmem>>, vector<4x128xbf16>,
    %c5_256 = arith.constant 5 : index
    %c0_257 = arith.constant 0 : index
    %c8_258 = arith.constant 8 : index
    %205 = vector.load %arg8[%c5_256, %c0_257, %c8_258] : memref<10x4x144xbf16, #tpu.memory_space<vmem>>, vector<1x4x128xbf16>
    %206 = vector.shape_cast %205 : vector<1x4x128xbf16> to vector<4x128xbf16>
    %c16_259 = arith.constant 16 : index
    %c0_260 = arith.constant 0 : index
    %207 = vector.load %arg9[%c16_259, %c0_260] : memref<36x128xbf16, #tpu.memory_space<vmem>>, vector<4x128xbf16>
    tpu.vector_store %arg9[%c16_259, %c0_260], %206 {strides = array<i32>} : memref<36x128xbf16, #tpu.memory_space<vmem>>, vector<4x128xbf16>,
    %c5_261 = arith.constant 5 : index
    %c0_262 = arith.constant 0 : index
    %c16_263 = arith.constant 16 : index
    %208 = vector.load %arg8[%c5_261, %c0_262, %c16_263] : memref<10x4x144xbf16, #tpu.memory_space<vmem>>, vector<1x4x128xbf16>
    %209 = vector.shape_cast %208 : vector<1x4x128xbf16> to vector<4x128xbf16>
    %c20_264 = arith.constant 20 : index
    %c0_265 = arith.constant 0 : index
    %210 = vector.load %arg9[%c20_264, %c0_265] : memref<36x128xbf16, #tpu.memory_space<vmem>>, vector<4x128xbf16>
    tpu.vector_store %arg9[%c20_264, %c0_265], %209 {strides = array<i32>} : memref<36x128xbf16, #tpu.memory_space<vmem>>, vector<4x128xbf16>,
    %c6 = arith.constant 6 : index
    %c0_266 = arith.constant 0 : index
    %c0_267 = arith.constant 0 : index
    %211 = vector.load %arg8[%c6, %c0_266, %c0_267] : memref<10x4x144xbf16, #tpu.memory_space<vmem>>, vector<1x4x128xbf16>
    %212 = vector.shape_cast %211 : vector<1x4x128xbf16> to vector<4x128xbf16>
    %c24_268 = arith.constant 24 : index
    %c0_269 = arith.constant 0 : index
    %213 = vector.load %arg9[%c24_268, %c0_269] : memref<36x128xbf16, #tpu.memory_space<vmem>>, vector<4x128xbf16>
    tpu.vector_store %arg9[%c24_268, %c0_269], %212 {strides = array<i32>} : memref<36x128xbf16, #tpu.memory_space<vmem>>, vector<4x128xbf16>,
    %c6_270 = arith.constant 6 : index
    %c0_271 = arith.constant 0 : index
    %c8_272 = arith.constant 8 : index
    %214 = vector.load %arg8[%c6_270, %c0_271, %c8_272] : memref<10x4x144xbf16, #tpu.memory_space<vmem>>, vector<1x4x128xbf16>
    %215 = vector.shape_cast %214 : vector<1x4x128xbf16> to vector<4x128xbf16>
    %c28_273 = arith.constant 28 : index
    %c0_274 = arith.constant 0 : index
    %216 = vector.load %arg9[%c28_273, %c0_274] : memref<36x128xbf16, #tpu.memory_space<vmem>>, vector<4x128xbf16>
    tpu.vector_store %arg9[%c28_273, %c0_274], %215 {strides = array<i32>} : memref<36x128xbf16, #tpu.memory_space<vmem>>, vector<4x128xbf16>,
    %c6_275 = arith.constant 6 : index
    %c0_276 = arith.constant 0 : index
    %c16_277 = arith.constant 16 : index
    %217 = vector.load %arg8[%c6_275, %c0_276, %c16_277] : memref<10x4x144xbf16, #tpu.memory_space<vmem>>, vector<1x4x128xbf16>
    %218 = vector.shape_cast %217 : vector<1x4x128xbf16> to vector<4x128xbf16>
    %c32_278 = arith.constant 32 : index
    %c0_279 = arith.constant 0 : index
    %219 = vector.load %arg9[%c32_278, %c0_279] : memref<36x128xbf16, #tpu.memory_space<vmem>>, vector<4x128xbf16>
    tpu.vector_store %arg9[%c32_278, %c0_279], %218 {strides = array<i32>} : memref<36x128xbf16, #tpu.memory_space<vmem>>, vector<4x128xbf16>,
    %c0_280 = arith.constant 0 : index
    %c0_281 = arith.constant 0 : index
    %220 = vector.load %arg9[%c0_280, %c0_281] : memref<36x128xbf16, #tpu.memory_space<vmem>>, vector<36x128xbf16>
    %cst_282 = arith.constant dense<0.000000e+00> : vector<8x128xf32>
    %221 = tpu.matmul %23, %220, %cst_282 {dimension_numbers = #tpu.dot_dimension_numbers<[1], [0], [0], [1], [0, 0, 1, 1], [], []>} : vector<8x36xbf16>, vector<36x128xbf16>, vector<8x128xf32> -> vector<8x128xf32>
    %c4_283 = arith.constant 4 : index
    %c0_284 = arith.constant 0 : index
    %c0_285 = arith.constant 0 : index
    %222 = vector.load %arg4[%c4_283, %c0_284, %c0_285] : memref<8x8x128xf32, #tpu.memory_space<vmem>>, vector<1x8x128xf32>
    %223 = vector.shape_cast %222 : vector<1x8x128xf32> to vector<8x128xf32>
    %224 = vector.shape_cast %221 : vector<8x128xf32> to vector<1x8x128xf32>
    tpu.vector_store %arg4[%c4_283, %c0_284, %c0_285], %224 {strides = array<i32>} : memref<8x8x128xf32, #tpu.memory_space<vmem>>, vector<1x8x128xf32>,
    %cst_286 = arith.constant dense<0.000000e+00> : vector<8xf32>
    %225 = vector.multi_reduction <add>, %221, %cst_286 [1] : vector<8x128xf32> to vector<8xf32>
    %226 = vector.shape_cast %225 : vector<8xf32> to vector<8x1xf32>
    %227 = arith.addf %188, %226 : vector<8x1xf32>
    %228 = arith.mulf %221, %221 : vector<8x128xf32>
    %cst_287 = arith.constant dense<0.000000e+00> : vector<8xf32>
    %229 = vector.multi_reduction <add>, %228, %cst_287 [1] : vector<8x128xf32> to vector<8xf32>
    %230 = vector.shape_cast %229 : vector<8xf32> to vector<8x1xf32>
    %231 = arith.addf %192, %230 : vector<8x1xf32>
    %c5_288 = arith.constant 5 : index
    %c0_289 = arith.constant 0 : index
    %c0_290 = arith.constant 0 : index
    %232 = vector.load %arg8[%c5_288, %c0_289, %c0_290] : memref<10x4x144xbf16, #tpu.memory_space<vmem>>, vector<1x4x128xbf16>
    %233 = vector.shape_cast %232 : vector<1x4x128xbf16> to vector<4x128xbf16>
    %c0_291 = arith.constant 0 : index
    %c0_292 = arith.constant 0 : index
    %234 = vector.load %arg9[%c0_291, %c0_292] : memref<36x128xbf16, #tpu.memory_space<vmem>>, vector<4x128xbf16>
    tpu.vector_store %arg9[%c0_291, %c0_292], %233 {strides = array<i32>} : memref<36x128xbf16, #tpu.memory_space<vmem>>, vector<4x128xbf16>,
    %c5_293 = arith.constant 5 : index
    %c0_294 = arith.constant 0 : index
    %c8_295 = arith.constant 8 : index
    %235 = vector.load %arg8[%c5_293, %c0_294, %c8_295] : memref<10x4x144xbf16, #tpu.memory_space<vmem>>, vector<1x4x128xbf16>
    %236 = vector.shape_cast %235 : vector<1x4x128xbf16> to vector<4x128xbf16>
    %c4_296 = arith.constant 4 : index
    %c0_297 = arith.constant 0 : index
    %237 = vector.load %arg9[%c4_296, %c0_297] : memref<36x128xbf16, #tpu.memory_space<vmem>>, vector<4x128xbf16>
    tpu.vector_store %arg9[%c4_296, %c0_297], %236 {strides = array<i32>} : memref<36x128xbf16, #tpu.memory_space<vmem>>, vector<4x128xbf16>,
    %c5_298 = arith.constant 5 : index
    %c0_299 = arith.constant 0 : index
    %c16_300 = arith.constant 16 : index
    %238 = vector.load %arg8[%c5_298, %c0_299, %c16_300] : memref<10x4x144xbf16, #tpu.memory_space<vmem>>, vector<1x4x128xbf16>
    %239 = vector.shape_cast %238 : vector<1x4x128xbf16> to vector<4x128xbf16>
    %c8_301 = arith.constant 8 : index
    %c0_302 = arith.constant 0 : index
    %240 = vector.load %arg9[%c8_301, %c0_302] : memref<36x128xbf16, #tpu.memory_space<vmem>>, vector<4x128xbf16>
    tpu.vector_store %arg9[%c8_301, %c0_302], %239 {strides = array<i32>} : memref<36x128xbf16, #tpu.memory_space<vmem>>, vector<4x128xbf16>,
    %c6_303 = arith.constant 6 : index
    %c0_304 = arith.constant 0 : index
    %c0_305 = arith.constant 0 : index
    %241 = vector.load %arg8[%c6_303, %c0_304, %c0_305] : memref<10x4x144xbf16, #tpu.memory_space<vmem>>, vector<1x4x128xbf16>
    %242 = vector.shape_cast %241 : vector<1x4x128xbf16> to vector<4x128xbf16>
    %c12_306 = arith.constant 12 : index
    %c0_307 = arith.constant 0 : index
    %243 = vector.load %arg9[%c12_306, %c0_307] : memref<36x128xbf16, #tpu.memory_space<vmem>>, vector<4x128xbf16>
    tpu.vector_store %arg9[%c12_306, %c0_307], %242 {strides = array<i32>} : memref<36x128xbf16, #tpu.memory_space<vmem>>, vector<4x128xbf16>,
    %c6_308 = arith.constant 6 : index
    %c0_309 = arith.constant 0 : index
    %c8_310 = arith.constant 8 : index
    %244 = vector.load %arg8[%c6_308, %c0_309, %c8_310] : memref<10x4x144xbf16, #tpu.memory_space<vmem>>, vector<1x4x128xbf16>
    %245 = vector.shape_cast %244 : vector<1x4x128xbf16> to vector<4x128xbf16>
    %c16_311 = arith.constant 16 : index
    %c0_312 = arith.constant 0 : index
    %246 = vector.load %arg9[%c16_311, %c0_312] : memref<36x128xbf16, #tpu.memory_space<vmem>>, vector<4x128xbf16>
    tpu.vector_store %arg9[%c16_311, %c0_312], %245 {strides = array<i32>} : memref<36x128xbf16, #tpu.memory_space<vmem>>, vector<4x128xbf16>,
    %c6_313 = arith.constant 6 : index
    %c0_314 = arith.constant 0 : index
    %c16_315 = arith.constant 16 : index
    %247 = vector.load %arg8[%c6_313, %c0_314, %c16_315] : memref<10x4x144xbf16, #tpu.memory_space<vmem>>, vector<1x4x128xbf16>
    %248 = vector.shape_cast %247 : vector<1x4x128xbf16> to vector<4x128xbf16>
    %c20_316 = arith.constant 20 : index
    %c0_317 = arith.constant 0 : index
    %249 = vector.load %arg9[%c20_316, %c0_317] : memref<36x128xbf16, #tpu.memory_space<vmem>>, vector<4x128xbf16>
    tpu.vector_store %arg9[%c20_316, %c0_317], %248 {strides = array<i32>} : memref<36x128xbf16, #tpu.memory_space<vmem>>, vector<4x128xbf16>,
    %c7 = arith.constant 7 : index
    %c0_318 = arith.constant 0 : index
    %c0_319 = arith.constant 0 : index
    %250 = vector.load %arg8[%c7, %c0_318, %c0_319] : memref<10x4x144xbf16, #tpu.memory_space<vmem>>, vector<1x4x128xbf16>
    %251 = vector.shape_cast %250 : vector<1x4x128xbf16> to vector<4x128xbf16>
    %c24_320 = arith.constant 24 : index
    %c0_321 = arith.constant 0 : index
    %252 = vector.load %arg9[%c24_320, %c0_321] : memref<36x128xbf16, #tpu.memory_space<vmem>>, vector<4x128xbf16>
    tpu.vector_store %arg9[%c24_320, %c0_321], %251 {strides = array<i32>} : memref<36x128xbf16, #tpu.memory_space<vmem>>, vector<4x128xbf16>,
    %c7_322 = arith.constant 7 : index
    %c0_323 = arith.constant 0 : index
    %c8_324 = arith.constant 8 : index
    %253 = vector.load %arg8[%c7_322, %c0_323, %c8_324] : memref<10x4x144xbf16, #tpu.memory_space<vmem>>, vector<1x4x128xbf16>
    %254 = vector.shape_cast %253 : vector<1x4x128xbf16> to vector<4x128xbf16>
    %c28_325 = arith.constant 28 : index
    %c0_326 = arith.constant 0 : index
    %255 = vector.load %arg9[%c28_325, %c0_326] : memref<36x128xbf16, #tpu.memory_space<vmem>>, vector<4x128xbf16>
    tpu.vector_store %arg9[%c28_325, %c0_326], %254 {strides = array<i32>} : memref<36x128xbf16, #tpu.memory_space<vmem>>, vector<4x128xbf16>,
    %c7_327 = arith.constant 7 : index
    %c0_328 = arith.constant 0 : index
    %c16_329 = arith.constant 16 : index
    %256 = vector.load %arg8[%c7_327, %c0_328, %c16_329] : memref<10x4x144xbf16, #tpu.memory_space<vmem>>, vector<1x4x128xbf16>
    %257 = vector.shape_cast %256 : vector<1x4x128xbf16> to vector<4x128xbf16>
    %c32_330 = arith.constant 32 : index
    %c0_331 = arith.constant 0 : index
    %258 = vector.load %arg9[%c32_330, %c0_331] : memref<36x128xbf16, #tpu.memory_space<vmem>>, vector<4x128xbf16>
    tpu.vector_store %arg9[%c32_330, %c0_331], %257 {strides = array<i32>} : memref<36x128xbf16, #tpu.memory_space<vmem>>, vector<4x128xbf16>,
    %c0_332 = arith.constant 0 : index
    %c0_333 = arith.constant 0 : index
    %259 = vector.load %arg9[%c0_332, %c0_333] : memref<36x128xbf16, #tpu.memory_space<vmem>>, vector<36x128xbf16>
    %cst_334 = arith.constant dense<0.000000e+00> : vector<8x128xf32>
    %260 = tpu.matmul %23, %259, %cst_334 {dimension_numbers = #tpu.dot_dimension_numbers<[1], [0], [0], [1], [0, 0, 1, 1], [], []>} : vector<8x36xbf16>, vector<36x128xbf16>, vector<8x128xf32> -> vector<8x128xf32>
    %c5_335 = arith.constant 5 : index
    %c0_336 = arith.constant 0 : index
    %c0_337 = arith.constant 0 : index
    %261 = vector.load %arg4[%c5_335, %c0_336, %c0_337] : memref<8x8x128xf32, #tpu.memory_space<vmem>>, vector<1x8x128xf32>
    %262 = vector.shape_cast %261 : vector<1x8x128xf32> to vector<8x128xf32>
    %263 = vector.shape_cast %260 : vector<8x128xf32> to vector<1x8x128xf32>
    tpu.vector_store %arg4[%c5_335, %c0_336, %c0_337], %263 {strides = array<i32>} : memref<8x8x128xf32, #tpu.memory_space<vmem>>, vector<1x8x128xf32>,
    %cst_338 = arith.constant dense<0.000000e+00> : vector<8xf32>
    %264 = vector.multi_reduction <add>, %260, %cst_338 [1] : vector<8x128xf32> to vector<8xf32>
    %265 = vector.shape_cast %264 : vector<8xf32> to vector<8x1xf32>
    %266 = arith.addf %227, %265 : vector<8x1xf32>
    %267 = arith.mulf %260, %260 : vector<8x128xf32>
    %cst_339 = arith.constant dense<0.000000e+00> : vector<8xf32>
    %268 = vector.multi_reduction <add>, %267, %cst_339 [1] : vector<8x128xf32> to vector<8xf32>
    %269 = vector.shape_cast %268 : vector<8xf32> to vector<8x1xf32>
    %270 = arith.addf %231, %269 : vector<8x1xf32>
    %c6_340 = arith.constant 6 : index
    %c0_341 = arith.constant 0 : index
    %c0_342 = arith.constant 0 : index
    %271 = vector.load %arg8[%c6_340, %c0_341, %c0_342] : memref<10x4x144xbf16, #tpu.memory_space<vmem>>, vector<1x4x128xbf16>
    %272 = vector.shape_cast %271 : vector<1x4x128xbf16> to vector<4x128xbf16>
    %c0_343 = arith.constant 0 : index
    %c0_344 = arith.constant 0 : index
    %273 = vector.load %arg9[%c0_343, %c0_344] : memref<36x128xbf16, #tpu.memory_space<vmem>>, vector<4x128xbf16>
    tpu.vector_store %arg9[%c0_343, %c0_344], %272 {strides = array<i32>} : memref<36x128xbf16, #tpu.memory_space<vmem>>, vector<4x128xbf16>,
    %c6_345 = arith.constant 6 : index
    %c0_346 = arith.constant 0 : index
    %c8_347 = arith.constant 8 : index
    %274 = vector.load %arg8[%c6_345, %c0_346, %c8_347] : memref<10x4x144xbf16, #tpu.memory_space<vmem>>, vector<1x4x128xbf16>
    %275 = vector.shape_cast %274 : vector<1x4x128xbf16> to vector<4x128xbf16>
    %c4_348 = arith.constant 4 : index
    %c0_349 = arith.constant 0 : index
    %276 = vector.load %arg9[%c4_348, %c0_349] : memref<36x128xbf16, #tpu.memory_space<vmem>>, vector<4x128xbf16>
    tpu.vector_store %arg9[%c4_348, %c0_349], %275 {strides = array<i32>} : memref<36x128xbf16, #tpu.memory_space<vmem>>, vector<4x128xbf16>,
    %c6_350 = arith.constant 6 : index
    %c0_351 = arith.constant 0 : index
    %c16_352 = arith.constant 16 : index
    %277 = vector.load %arg8[%c6_350, %c0_351, %c16_352] : memref<10x4x144xbf16, #tpu.memory_space<vmem>>, vector<1x4x128xbf16>
    %278 = vector.shape_cast %277 : vector<1x4x128xbf16> to vector<4x128xbf16>
    %c8_353 = arith.constant 8 : index
    %c0_354 = arith.constant 0 : index
    %279 = vector.load %arg9[%c8_353, %c0_354] : memref<36x128xbf16, #tpu.memory_space<vmem>>, vector<4x128xbf16>
    tpu.vector_store %arg9[%c8_353, %c0_354], %278 {strides = array<i32>} : memref<36x128xbf16, #tpu.memory_space<vmem>>, vector<4x128xbf16>,
    %c7_355 = arith.constant 7 : index
    %c0_356 = arith.constant 0 : index
    %c0_357 = arith.constant 0 : index
    %280 = vector.load %arg8[%c7_355, %c0_356, %c0_357] : memref<10x4x144xbf16, #tpu.memory_space<vmem>>, vector<1x4x128xbf16>
    %281 = vector.shape_cast %280 : vector<1x4x128xbf16> to vector<4x128xbf16>
    %c12_358 = arith.constant 12 : index
    %c0_359 = arith.constant 0 : index
    %282 = vector.load %arg9[%c12_358, %c0_359] : memref<36x128xbf16, #tpu.memory_space<vmem>>, vector<4x128xbf16>
    tpu.vector_store %arg9[%c12_358, %c0_359], %281 {strides = array<i32>} : memref<36x128xbf16, #tpu.memory_space<vmem>>, vector<4x128xbf16>,
    %c7_360 = arith.constant 7 : index
    %c0_361 = arith.constant 0 : index
    %c8_362 = arith.constant 8 : index
    %283 = vector.load %arg8[%c7_360, %c0_361, %c8_362] : memref<10x4x144xbf16, #tpu.memory_space<vmem>>, vector<1x4x128xbf16>
    %284 = vector.shape_cast %283 : vector<1x4x128xbf16> to vector<4x128xbf16>
    %c16_363 = arith.constant 16 : index
    %c0_364 = arith.constant 0 : index
    %285 = vector.load %arg9[%c16_363, %c0_364] : memref<36x128xbf16, #tpu.memory_space<vmem>>, vector<4x128xbf16>
    tpu.vector_store %arg9[%c16_363, %c0_364], %284 {strides = array<i32>} : memref<36x128xbf16, #tpu.memory_space<vmem>>, vector<4x128xbf16>,
    %c7_365 = arith.constant 7 : index
    %c0_366 = arith.constant 0 : index
    %c16_367 = arith.constant 16 : index
    %286 = vector.load %arg8[%c7_365, %c0_366, %c16_367] : memref<10x4x144xbf16, #tpu.memory_space<vmem>>, vector<1x4x128xbf16>
    %287 = vector.shape_cast %286 : vector<1x4x128xbf16> to vector<4x128xbf16>
    %c20_368 = arith.constant 20 : index
    %c0_369 = arith.constant 0 : index
    %288 = vector.load %arg9[%c20_368, %c0_369] : memref<36x128xbf16, #tpu.memory_space<vmem>>, vector<4x128xbf16>
    tpu.vector_store %arg9[%c20_368, %c0_369], %287 {strides = array<i32>} : memref<36x128xbf16, #tpu.memory_space<vmem>>, vector<4x128xbf16>,
    %c8_370 = arith.constant 8 : index
    %c0_371 = arith.constant 0 : index
    %c0_372 = arith.constant 0 : index
    %289 = vector.load %arg8[%c8_370, %c0_371, %c0_372] : memref<10x4x144xbf16, #tpu.memory_space<vmem>>, vector<1x4x128xbf16>
    %290 = vector.shape_cast %289 : vector<1x4x128xbf16> to vector<4x128xbf16>
    %c24_373 = arith.constant 24 : index
    %c0_374 = arith.constant 0 : index
    %291 = vector.load %arg9[%c24_373, %c0_374] : memref<36x128xbf16, #tpu.memory_space<vmem>>, vector<4x128xbf16>
    tpu.vector_store %arg9[%c24_373, %c0_374], %290 {strides = array<i32>} : memref<36x128xbf16, #tpu.memory_space<vmem>>, vector<4x128xbf16>,
    %c8_375 = arith.constant 8 : index
    %c0_376 = arith.constant 0 : index
    %c8_377 = arith.constant 8 : index
    %292 = vector.load %arg8[%c8_375, %c0_376, %c8_377] : memref<10x4x144xbf16, #tpu.memory_space<vmem>>, vector<1x4x128xbf16>
    %293 = vector.shape_cast %292 : vector<1x4x128xbf16> to vector<4x128xbf16>
    %c28_378 = arith.constant 28 : index
    %c0_379 = arith.constant 0 : index
    %294 = vector.load %arg9[%c28_378, %c0_379] : memref<36x128xbf16, #tpu.memory_space<vmem>>, vector<4x128xbf16>
    tpu.vector_store %arg9[%c28_378, %c0_379], %293 {strides = array<i32>} : memref<36x128xbf16, #tpu.memory_space<vmem>>, vector<4x128xbf16>,
    %c8_380 = arith.constant 8 : index
    %c0_381 = arith.constant 0 : index
    %c16_382 = arith.constant 16 : index
    %295 = vector.load %arg8[%c8_380, %c0_381, %c16_382] : memref<10x4x144xbf16, #tpu.memory_space<vmem>>, vector<1x4x128xbf16>
    %296 = vector.shape_cast %295 : vector<1x4x128xbf16> to vector<4x128xbf16>
    %c32_383 = arith.constant 32 : index
    %c0_384 = arith.constant 0 : index
    %297 = vector.load %arg9[%c32_383, %c0_384] : memref<36x128xbf16, #tpu.memory_space<vmem>>, vector<4x128xbf16>
    tpu.vector_store %arg9[%c32_383, %c0_384], %296 {strides = array<i32>} : memref<36x128xbf16, #tpu.memory_space<vmem>>, vector<4x128xbf16>,
    %c0_385 = arith.constant 0 : index
    %c0_386 = arith.constant 0 : index
    %298 = vector.load %arg9[%c0_385, %c0_386] : memref<36x128xbf16, #tpu.memory_space<vmem>>, vector<36x128xbf16>
    %cst_387 = arith.constant dense<0.000000e+00> : vector<8x128xf32>
    %299 = tpu.matmul %23, %298, %cst_387 {dimension_numbers = #tpu.dot_dimension_numbers<[1], [0], [0], [1], [0, 0, 1, 1], [], []>} : vector<8x36xbf16>, vector<36x128xbf16>, vector<8x128xf32> -> vector<8x128xf32>
    %c6_388 = arith.constant 6 : index
    %c0_389 = arith.constant 0 : index
    %c0_390 = arith.constant 0 : index
    %300 = vector.load %arg4[%c6_388, %c0_389, %c0_390] : memref<8x8x128xf32, #tpu.memory_space<vmem>>, vector<1x8x128xf32>
    %301 = vector.shape_cast %300 : vector<1x8x128xf32> to vector<8x128xf32>
    %302 = vector.shape_cast %299 : vector<8x128xf32> to vector<1x8x128xf32>
    tpu.vector_store %arg4[%c6_388, %c0_389, %c0_390], %302 {strides = array<i32>} : memref<8x8x128xf32, #tpu.memory_space<vmem>>, vector<1x8x128xf32>,
    %cst_391 = arith.constant dense<0.000000e+00> : vector<8xf32>
    %303 = vector.multi_reduction <add>, %299, %cst_391 [1] : vector<8x128xf32> to vector<8xf32>
    %304 = vector.shape_cast %303 : vector<8xf32> to vector<8x1xf32>
    %305 = arith.addf %266, %304 : vector<8x1xf32>
    %306 = arith.mulf %299, %299 : vector<8x128xf32>
    %cst_392 = arith.constant dense<0.000000e+00> : vector<8xf32>
    %307 = vector.multi_reduction <add>, %306, %cst_392 [1] : vector<8x128xf32> to vector<8xf32>
    %308 = vector.shape_cast %307 : vector<8xf32> to vector<8x1xf32>
    %309 = arith.addf %270, %308 : vector<8x1xf32>
    %c7_393 = arith.constant 7 : index
    %c0_394 = arith.constant 0 : index
    %c0_395 = arith.constant 0 : index
    %310 = vector.load %arg8[%c7_393, %c0_394, %c0_395] : memref<10x4x144xbf16, #tpu.memory_space<vmem>>, vector<1x4x128xbf16>
    %311 = vector.shape_cast %310 : vector<1x4x128xbf16> to vector<4x128xbf16>
    %c0_396 = arith.constant 0 : index
    %c0_397 = arith.constant 0 : index
    %312 = vector.load %arg9[%c0_396, %c0_397] : memref<36x128xbf16, #tpu.memory_space<vmem>>, vector<4x128xbf16>
    tpu.vector_store %arg9[%c0_396, %c0_397], %311 {strides = array<i32>} : memref<36x128xbf16, #tpu.memory_space<vmem>>, vector<4x128xbf16>,
    %c7_398 = arith.constant 7 : index
    %c0_399 = arith.constant 0 : index
    %c8_400 = arith.constant 8 : index
    %313 = vector.load %arg8[%c7_398, %c0_399, %c8_400] : memref<10x4x144xbf16, #tpu.memory_space<vmem>>, vector<1x4x128xbf16>
    %314 = vector.shape_cast %313 : vector<1x4x128xbf16> to vector<4x128xbf16>
    %c4_401 = arith.constant 4 : index
    %c0_402 = arith.constant 0 : index
    %315 = vector.load %arg9[%c4_401, %c0_402] : memref<36x128xbf16, #tpu.memory_space<vmem>>, vector<4x128xbf16>
    tpu.vector_store %arg9[%c4_401, %c0_402], %314 {strides = array<i32>} : memref<36x128xbf16, #tpu.memory_space<vmem>>, vector<4x128xbf16>,
    %c7_403 = arith.constant 7 : index
    %c0_404 = arith.constant 0 : index
    %c16_405 = arith.constant 16 : index
    %316 = vector.load %arg8[%c7_403, %c0_404, %c16_405] : memref<10x4x144xbf16, #tpu.memory_space<vmem>>, vector<1x4x128xbf16>
    %317 = vector.shape_cast %316 : vector<1x4x128xbf16> to vector<4x128xbf16>
    %c8_406 = arith.constant 8 : index
    %c0_407 = arith.constant 0 : index
    %318 = vector.load %arg9[%c8_406, %c0_407] : memref<36x128xbf16, #tpu.memory_space<vmem>>, vector<4x128xbf16>
    tpu.vector_store %arg9[%c8_406, %c0_407], %317 {strides = array<i32>} : memref<36x128xbf16, #tpu.memory_space<vmem>>, vector<4x128xbf16>,
    %c8_408 = arith.constant 8 : index
    %c0_409 = arith.constant 0 : index
    %c0_410 = arith.constant 0 : index
    %319 = vector.load %arg8[%c8_408, %c0_409, %c0_410] : memref<10x4x144xbf16, #tpu.memory_space<vmem>>, vector<1x4x128xbf16>
    %320 = vector.shape_cast %319 : vector<1x4x128xbf16> to vector<4x128xbf16>
    %c12_411 = arith.constant 12 : index
    %c0_412 = arith.constant 0 : index
    %321 = vector.load %arg9[%c12_411, %c0_412] : memref<36x128xbf16, #tpu.memory_space<vmem>>, vector<4x128xbf16>
    tpu.vector_store %arg9[%c12_411, %c0_412], %320 {strides = array<i32>} : memref<36x128xbf16, #tpu.memory_space<vmem>>, vector<4x128xbf16>,
    %c8_413 = arith.constant 8 : index
    %c0_414 = arith.constant 0 : index
    %c8_415 = arith.constant 8 : index
    %322 = vector.load %arg8[%c8_413, %c0_414, %c8_415] : memref<10x4x144xbf16, #tpu.memory_space<vmem>>, vector<1x4x128xbf16>
    %323 = vector.shape_cast %322 : vector<1x4x128xbf16> to vector<4x128xbf16>
    %c16_416 = arith.constant 16 : index
    %c0_417 = arith.constant 0 : index
    %324 = vector.load %arg9[%c16_416, %c0_417] : memref<36x128xbf16, #tpu.memory_space<vmem>>, vector<4x128xbf16>
    tpu.vector_store %arg9[%c16_416, %c0_417], %323 {strides = array<i32>} : memref<36x128xbf16, #tpu.memory_space<vmem>>, vector<4x128xbf16>,
    %c8_418 = arith.constant 8 : index
    %c0_419 = arith.constant 0 : index
    %c16_420 = arith.constant 16 : index
    %325 = vector.load %arg8[%c8_418, %c0_419, %c16_420] : memref<10x4x144xbf16, #tpu.memory_space<vmem>>, vector<1x4x128xbf16>
    %326 = vector.shape_cast %325 : vector<1x4x128xbf16> to vector<4x128xbf16>
    %c20_421 = arith.constant 20 : index
    %c0_422 = arith.constant 0 : index
    %327 = vector.load %arg9[%c20_421, %c0_422] : memref<36x128xbf16, #tpu.memory_space<vmem>>, vector<4x128xbf16>
    tpu.vector_store %arg9[%c20_421, %c0_422], %326 {strides = array<i32>} : memref<36x128xbf16, #tpu.memory_space<vmem>>, vector<4x128xbf16>,
    %c9 = arith.constant 9 : index
    %c0_423 = arith.constant 0 : index
    %c0_424 = arith.constant 0 : index
    %328 = vector.load %arg8[%c9, %c0_423, %c0_424] : memref<10x4x144xbf16, #tpu.memory_space<vmem>>, vector<1x4x128xbf16>
    %329 = vector.shape_cast %328 : vector<1x4x128xbf16> to vector<4x128xbf16>
    %c24_425 = arith.constant 24 : index
    %c0_426 = arith.constant 0 : index
    %330 = vector.load %arg9[%c24_425, %c0_426] : memref<36x128xbf16, #tpu.memory_space<vmem>>, vector<4x128xbf16>
    tpu.vector_store %arg9[%c24_425, %c0_426], %329 {strides = array<i32>} : memref<36x128xbf16, #tpu.memory_space<vmem>>, vector<4x128xbf16>,
    %c9_427 = arith.constant 9 : index
    %c0_428 = arith.constant 0 : index
    %c8_429 = arith.constant 8 : index
    %331 = vector.load %arg8[%c9_427, %c0_428, %c8_429] : memref<10x4x144xbf16, #tpu.memory_space<vmem>>, vector<1x4x128xbf16>
    %332 = vector.shape_cast %331 : vector<1x4x128xbf16> to vector<4x128xbf16>
    %c28_430 = arith.constant 28 : index
    %c0_431 = arith.constant 0 : index
    %333 = vector.load %arg9[%c28_430, %c0_431] : memref<36x128xbf16, #tpu.memory_space<vmem>>, vector<4x128xbf16>
    tpu.vector_store %arg9[%c28_430, %c0_431], %332 {strides = array<i32>} : memref<36x128xbf16, #tpu.memory_space<vmem>>, vector<4x128xbf16>,
    %c9_432 = arith.constant 9 : index
    %c0_433 = arith.constant 0 : index
    %c16_434 = arith.constant 16 : index
    %334 = vector.load %arg8[%c9_432, %c0_433, %c16_434] : memref<10x4x144xbf16, #tpu.memory_space<vmem>>, vector<1x4x128xbf16>
    %335 = vector.shape_cast %334 : vector<1x4x128xbf16> to vector<4x128xbf16>
    %c32_435 = arith.constant 32 : index
    %c0_436 = arith.constant 0 : index
    %336 = vector.load %arg9[%c32_435, %c0_436] : memref<36x128xbf16, #tpu.memory_space<vmem>>, vector<4x128xbf16>
    tpu.vector_store %arg9[%c32_435, %c0_436], %335 {strides = array<i32>} : memref<36x128xbf16, #tpu.memory_space<vmem>>, vector<4x128xbf16>,
    %c0_437 = arith.constant 0 : index
    %c0_438 = arith.constant 0 : index
    %337 = vector.load %arg9[%c0_437, %c0_438] : memref<36x128xbf16, #tpu.memory_space<vmem>>, vector<36x128xbf16>
    %cst_439 = arith.constant dense<0.000000e+00> : vector<8x128xf32>
    %338 = tpu.matmul %23, %337, %cst_439 {dimension_numbers = #tpu.dot_dimension_numbers<[1], [0], [0], [1], [0, 0, 1, 1], [], []>} : vector<8x36xbf16>, vector<36x128xbf16>, vector<8x128xf32> -> vector<8x128xf32>
    %c7_440 = arith.constant 7 : index
    %c0_441 = arith.constant 0 : index
    %c0_442 = arith.constant 0 : index
    %339 = vector.load %arg4[%c7_440, %c0_441, %c0_442] : memref<8x8x128xf32, #tpu.memory_space<vmem>>, vector<1x8x128xf32>
    %340 = vector.shape_cast %339 : vector<1x8x128xf32> to vector<8x128xf32>
    %341 = vector.shape_cast %338 : vector<8x128xf32> to vector<1x8x128xf32>
    tpu.vector_store %arg4[%c7_440, %c0_441, %c0_442], %341 {strides = array<i32>} : memref<8x8x128xf32, #tpu.memory_space<vmem>>, vector<1x8x128xf32>,
    %cst_443 = arith.constant dense<0.000000e+00> : vector<8xf32>
    %342 = vector.multi_reduction <add>, %338, %cst_443 [1] : vector<8x128xf32> to vector<8xf32>
    %343 = vector.shape_cast %342 : vector<8xf32> to vector<8x1xf32>
    %344 = arith.addf %305, %343 : vector<8x1xf32>
    %345 = arith.mulf %338, %338 : vector<8x128xf32>
    %cst_444 = arith.constant dense<0.000000e+00> : vector<8xf32>
    %346 = vector.multi_reduction <add>, %345, %cst_444 [1] : vector<8x128xf32> to vector<8xf32>
    %347 = vector.shape_cast %346 : vector<8xf32> to vector<8x1xf32>
    %348 = arith.addf %309, %347 : vector<8x1xf32>
    %c0_445 = arith.constant 0 : index
    %c0_446 = arith.constant 0 : index
    %c0_447 = arith.constant 0 : index
    %c0_448 = arith.constant 0 : index
    %349 = vector.load %arg5[%c0_445, %c0_446, %c0_447, %c0_448] : memref<1x1x8x1xf32, #tpu.memory_space<vmem>>, vector<1x1x8x1xf32>
    %350 = vector.shape_cast %349 : vector<1x1x8x1xf32> to vector<8x1xf32>
    %351 = vector.shape_cast %344 : vector<8x1xf32> to vector<1x1x8x1xf32>
    tpu.vector_store %arg5[%c0_445, %c0_446, %c0_447, %c0_448], %351 {strides = array<i32>} : memref<1x1x8x1xf32, #tpu.memory_space<vmem>>, vector<1x1x8x1xf32>,
    %c0_449 = arith.constant 0 : index
    %c0_450 = arith.constant 0 : index
    %c0_451 = arith.constant 0 : index
    %c0_452 = arith.constant 0 : index
    %352 = vector.load %arg6[%c0_449, %c0_450, %c0_451, %c0_452] : memref<1x1x8x1xf32, #tpu.memory_space<vmem>>, vector<1x1x8x1xf32>
    %353 = vector.shape_cast %352 : vector<1x1x8x1xf32> to vector<8x1xf32>
    %354 = vector.shape_cast %348 : vector<8x1xf32> to vector<1x1x8x1xf32>
    tpu.vector_store %arg6[%c0_449, %c0_450, %c0_451, %c0_452], %354 {strides = array<i32>} : memref<1x1x8x1xf32, #tpu.memory_space<vmem>>, vector<1x1x8x1xf32>,
    return
  }
  func.func @transform_1(%arg0: i32, %arg1: i32) -> (i32, i32) {
    %c0_i32 = arith.constant 0 : i32
    %c0_i32_0 = arith.constant 0 : i32
    %c0_i32_1 = arith.constant 0 : i32
    return %c0_i32, %c0_i32_0 : i32, i32
  }
  func.func @transform_2(%arg0: i32, %arg1: i32) -> (i32, i32, i32) {
    %c2_i32 = arith.constant 2 : i32
    %0 = arith.muli %arg0, %c2_i32 : i32
    %1 = arith.addi %0, %arg1 : i32
    %c0_i32 = arith.constant 0 : i32
    %c0_i32_0 = arith.constant 0 : i32
    %c0_i32_1 = arith.constant 0 : i32
    return %1, %c0_i32, %c0_i32_0 : i32, i32, i32
  }
  func.func @transform_3(%arg0: i32, %arg1: i32) -> (i32, i32, i32, i32) {
    %c0_i32 = arith.constant 0 : i32
    %c0_i32_0 = arith.constant 0 : i32
    %c0_i32_1 = arith.constant 0 : i32
    return %arg0, %arg1, %c0_i32, %c0_i32_0 : i32, i32, i32, i32
  }
  func.func @transform_4(%arg0: i32, %arg1: i32) -> (i32, i32, i32, i32) {
    %c0_i32 = arith.constant 0 : i32
    %c0_i32_0 = arith.constant 0 : i32
    %c0_i32_1 = arith.constant 0 : i32
    return %arg0, %arg1, %c0_i32, %c0_i32_0 : i32, i32, i32, i32
  }
}

module attributes {stable_mosaic.version = 11 : i64} {
  func.func @kernel(%arg0: i32, %arg1: i32, %arg2: memref<32x8x128xf32, #tpu.memory_space<any>>, %arg3: memref<8x72xbf16, #tpu.memory_space<vmem>>, %arg4: memref<1x8x1xf32, #tpu.memory_space<vmem>>, %arg5: memref<1x8x1xf32, #tpu.memory_space<vmem>>, %arg6: memref<8x8x128xf32, #tpu.memory_space<vmem>>, %arg7: memref<1x1x8x1xf32, #tpu.memory_space<vmem>>, %arg8: memref<1x1x8x1xf32, #tpu.memory_space<vmem>>, %arg9: memref<10x8x128xf32, #tpu.memory_space<vmem>>, %arg10: memref<10x8x144xbf16, #tpu.memory_space<vmem>>, %arg11: memref<72x128xbf16, #tpu.memory_space<vmem>>, %arg12: memref<3x!tpu.dma_semaphore, #tpu.memory_space<semaphore_mem>>) attributes {dimension_semantics = [#tpu.dimension_semantics<parallel>, #tpu.dimension_semantics<parallel>], iteration_bounds = array<i64: 2, 2>, scalar_prefetch = 0 : i64, scratch_operands = 4 : i64, tpu.core_type = #tpu.core_type<tc>, window_params = [{}, {pipeline_mode = #tpu.pipeline_mode<synchronous>, transform_indices = @transform_1, window_bounds = array<i64: 8, 72>}, {pipeline_mode = #tpu.pipeline_mode<synchronous>, transform_indices = @transform_2, window_bounds = array<i64: 1, 8, 1>}, {pipeline_mode = #tpu.pipeline_mode<synchronous>, transform_indices = @transform_3, window_bounds = array<i64: 1, 8, 1>}, {transform_indices = @transform_4, window_bounds = array<i64: 8, 8, 128>}, {transform_indices = @transform_5, window_bounds = array<i64: 1, 1, 8, 1>}, {transform_indices = @transform_6, window_bounds = array<i64: 1, 1, 8, 1>}]} {
    %c16_i32 = arith.constant 16 : i32
    %0 = arith.muli %arg0, %c16_i32 : i32
    %c8_i32 = arith.constant 8 : i32
    %1 = arith.muli %arg1, %c8_i32 : i32
    %2 = arith.addi %0, %1 : i32
    %c0_i32 = arith.constant 0 : i32
    %c0_i32_0 = arith.constant 0 : i32
    %c0_i32_1 = arith.constant 0 : i32
    %3 = tpu.memref_slice %arg2[%2, %c0_i32_0, %c0_i32_1] : memref<32x8x128xf32, #tpu.memory_space<any>> -> memref<8x8x128xf32, #tpu.memory_space<any>>
    %c1_i32 = arith.constant 1 : i32
    %c0_i32_2 = arith.constant 0 : i32
    %c0_i32_3 = arith.constant 0 : i32
    %4 = tpu.memref_slice %arg9[%c1_i32, %c0_i32_2, %c0_i32_3] : memref<10x8x128xf32, #tpu.memory_space<vmem>> -> memref<8x8x128xf32, #tpu.memory_space<vmem>>
    %5 = tpu.memref_slice %arg12[%c0_i32] : memref<3x!tpu.dma_semaphore, #tpu.memory_space<semaphore_mem>> -> memref<1x!tpu.dma_semaphore, #tpu.memory_space<semaphore_mem>>
    %6 = tpu.memref_squeeze %5 : memref<1x!tpu.dma_semaphore, #tpu.memory_space<semaphore_mem>> -> memref<!tpu.dma_semaphore, #tpu.memory_space<semaphore_mem>>
    tpu.enqueue_dma source(%3 : memref<8x8x128xf32, #tpu.memory_space<any>>) target(%4 : memref<8x8x128xf32, #tpu.memory_space<vmem>>) target_semaphore(%6 : memref<!tpu.dma_semaphore, #tpu.memory_space<semaphore_mem>>)
    %c0_i32_4 = arith.constant 0 : i32
    %7 = arith.cmpi sgt, %arg1, %c0_i32_4 : i32
    %8 = arith.extui %7 : i1 to i32
    %c0_i32_5 = arith.constant 0 : i32
    %9 = arith.cmpi ne, %8, %c0_i32_5 : i32
    scf.if %9 {
      %c1_i32_459 = arith.constant 1 : i32
      %364 = arith.subi %2, %c1_i32_459 : i32
      %c1_i32_460 = arith.constant 1 : i32
      %c0_i32_461 = arith.constant 0 : i32
      %c0_i32_462 = arith.constant 0 : i32
      %365 = tpu.memref_slice %arg2[%364, %c0_i32_461, %c0_i32_462] : memref<32x8x128xf32, #tpu.memory_space<any>> -> memref<1x8x128xf32, #tpu.memory_space<any>>
      %c0_i32_463 = arith.constant 0 : i32
      %c0_i32_464 = arith.constant 0 : i32
      %c0_i32_465 = arith.constant 0 : i32
      %366 = tpu.memref_slice %arg9[%c0_i32_463, %c0_i32_464, %c0_i32_465] : memref<10x8x128xf32, #tpu.memory_space<vmem>> -> memref<1x8x128xf32, #tpu.memory_space<vmem>>
      %367 = tpu.memref_slice %arg12[%c1_i32_460] : memref<3x!tpu.dma_semaphore, #tpu.memory_space<semaphore_mem>> -> memref<1x!tpu.dma_semaphore, #tpu.memory_space<semaphore_mem>>
      %368 = tpu.memref_squeeze %367 : memref<1x!tpu.dma_semaphore, #tpu.memory_space<semaphore_mem>> -> memref<!tpu.dma_semaphore, #tpu.memory_space<semaphore_mem>>
      tpu.enqueue_dma source(%365 : memref<1x8x128xf32, #tpu.memory_space<any>>) target(%366 : memref<1x8x128xf32, #tpu.memory_space<vmem>>) target_semaphore(%368 : memref<!tpu.dma_semaphore, #tpu.memory_space<semaphore_mem>>)
    } else {
    }
    %c1_i32_6 = arith.constant 1 : i32
    %10 = arith.cmpi slt, %arg1, %c1_i32_6 : i32
    %11 = arith.extui %10 : i1 to i32
    %c0_i32_7 = arith.constant 0 : i32
    %12 = arith.cmpi ne, %11, %c0_i32_7 : i32
    scf.if %12 {
      %c8_i32_459 = arith.constant 8 : i32
      %364 = arith.addi %2, %c8_i32_459 : i32
      %c2_i32 = arith.constant 2 : i32
      %c0_i32_460 = arith.constant 0 : i32
      %c0_i32_461 = arith.constant 0 : i32
      %365 = tpu.memref_slice %arg2[%364, %c0_i32_460, %c0_i32_461] : memref<32x8x128xf32, #tpu.memory_space<any>> -> memref<1x8x128xf32, #tpu.memory_space<any>>
      %c9_i32 = arith.constant 9 : i32
      %c0_i32_462 = arith.constant 0 : i32
      %c0_i32_463 = arith.constant 0 : i32
      %366 = tpu.memref_slice %arg9[%c9_i32, %c0_i32_462, %c0_i32_463] : memref<10x8x128xf32, #tpu.memory_space<vmem>> -> memref<1x8x128xf32, #tpu.memory_space<vmem>>
      %367 = tpu.memref_slice %arg12[%c2_i32] : memref<3x!tpu.dma_semaphore, #tpu.memory_space<semaphore_mem>> -> memref<1x!tpu.dma_semaphore, #tpu.memory_space<semaphore_mem>>
      %368 = tpu.memref_squeeze %367 : memref<1x!tpu.dma_semaphore, #tpu.memory_space<semaphore_mem>> -> memref<!tpu.dma_semaphore, #tpu.memory_space<semaphore_mem>>
      tpu.enqueue_dma source(%365 : memref<1x8x128xf32, #tpu.memory_space<any>>) target(%366 : memref<1x8x128xf32, #tpu.memory_space<vmem>>) target_semaphore(%368 : memref<!tpu.dma_semaphore, #tpu.memory_space<semaphore_mem>>)
    } else {
    }
    %c0_i32_8 = arith.constant 0 : i32
    %c0_i32_9 = arith.constant 0 : i32
    %c0_i32_10 = arith.constant 0 : i32
    %13 = tpu.memref_slice %arg2[%2, %c0_i32_9, %c0_i32_10] : memref<32x8x128xf32, #tpu.memory_space<any>> -> memref<8x8x128xf32, #tpu.memory_space<any>>
    %c1_i32_11 = arith.constant 1 : i32
    %c0_i32_12 = arith.constant 0 : i32
    %c0_i32_13 = arith.constant 0 : i32
    %14 = tpu.memref_slice %arg9[%c1_i32_11, %c0_i32_12, %c0_i32_13] : memref<10x8x128xf32, #tpu.memory_space<vmem>> -> memref<8x8x128xf32, #tpu.memory_space<vmem>>
    %15 = tpu.memref_slice %arg12[%c0_i32_8] : memref<3x!tpu.dma_semaphore, #tpu.memory_space<semaphore_mem>> -> memref<1x!tpu.dma_semaphore, #tpu.memory_space<semaphore_mem>>
    %16 = tpu.memref_squeeze %15 : memref<1x!tpu.dma_semaphore, #tpu.memory_space<semaphore_mem>> -> memref<!tpu.dma_semaphore, #tpu.memory_space<semaphore_mem>>
    tpu.wait_dma2 semaphore(%16 : memref<!tpu.dma_semaphore, #tpu.memory_space<semaphore_mem>>) src(%13 : memref<8x8x128xf32, #tpu.memory_space<any>>) dst(%14 : memref<8x8x128xf32, #tpu.memory_space<vmem>>)
    %c0_i32_14 = arith.constant 0 : i32
    %17 = arith.cmpi sgt, %arg1, %c0_i32_14 : i32
    %18 = arith.extui %17 : i1 to i32
    %c0_i32_15 = arith.constant 0 : i32
    %19 = arith.cmpi ne, %18, %c0_i32_15 : i32
    scf.if %19 {
      %c1_i32_459 = arith.constant 1 : i32
      %364 = arith.subi %2, %c1_i32_459 : i32
      %c1_i32_460 = arith.constant 1 : i32
      %c0_i32_461 = arith.constant 0 : i32
      %c0_i32_462 = arith.constant 0 : i32
      %365 = tpu.memref_slice %arg2[%364, %c0_i32_461, %c0_i32_462] : memref<32x8x128xf32, #tpu.memory_space<any>> -> memref<1x8x128xf32, #tpu.memory_space<any>>
      %c0_i32_463 = arith.constant 0 : i32
      %c0_i32_464 = arith.constant 0 : i32
      %c0_i32_465 = arith.constant 0 : i32
      %366 = tpu.memref_slice %arg9[%c0_i32_463, %c0_i32_464, %c0_i32_465] : memref<10x8x128xf32, #tpu.memory_space<vmem>> -> memref<1x8x128xf32, #tpu.memory_space<vmem>>
      %367 = tpu.memref_slice %arg12[%c1_i32_460] : memref<3x!tpu.dma_semaphore, #tpu.memory_space<semaphore_mem>> -> memref<1x!tpu.dma_semaphore, #tpu.memory_space<semaphore_mem>>
      %368 = tpu.memref_squeeze %367 : memref<1x!tpu.dma_semaphore, #tpu.memory_space<semaphore_mem>> -> memref<!tpu.dma_semaphore, #tpu.memory_space<semaphore_mem>>
      tpu.wait_dma2 semaphore(%368 : memref<!tpu.dma_semaphore, #tpu.memory_space<semaphore_mem>>) src(%365 : memref<1x8x128xf32, #tpu.memory_space<any>>) dst(%366 : memref<1x8x128xf32, #tpu.memory_space<vmem>>)
    } else {
    }
    %c1_i32_16 = arith.constant 1 : i32
    %20 = arith.cmpi slt, %arg1, %c1_i32_16 : i32
    %21 = arith.extui %20 : i1 to i32
    %c0_i32_17 = arith.constant 0 : i32
    %22 = arith.cmpi ne, %21, %c0_i32_17 : i32
    scf.if %22 {
      %c8_i32_459 = arith.constant 8 : i32
      %364 = arith.addi %2, %c8_i32_459 : i32
      %c2_i32 = arith.constant 2 : i32
      %c0_i32_460 = arith.constant 0 : i32
      %c0_i32_461 = arith.constant 0 : i32
      %365 = tpu.memref_slice %arg2[%364, %c0_i32_460, %c0_i32_461] : memref<32x8x128xf32, #tpu.memory_space<any>> -> memref<1x8x128xf32, #tpu.memory_space<any>>
      %c9_i32 = arith.constant 9 : i32
      %c0_i32_462 = arith.constant 0 : i32
      %c0_i32_463 = arith.constant 0 : i32
      %366 = tpu.memref_slice %arg9[%c9_i32, %c0_i32_462, %c0_i32_463] : memref<10x8x128xf32, #tpu.memory_space<vmem>> -> memref<1x8x128xf32, #tpu.memory_space<vmem>>
      %367 = tpu.memref_slice %arg12[%c2_i32] : memref<3x!tpu.dma_semaphore, #tpu.memory_space<semaphore_mem>> -> memref<1x!tpu.dma_semaphore, #tpu.memory_space<semaphore_mem>>
      %368 = tpu.memref_squeeze %367 : memref<1x!tpu.dma_semaphore, #tpu.memory_space<semaphore_mem>> -> memref<!tpu.dma_semaphore, #tpu.memory_space<semaphore_mem>>
      tpu.wait_dma2 semaphore(%368 : memref<!tpu.dma_semaphore, #tpu.memory_space<semaphore_mem>>) src(%365 : memref<1x8x128xf32, #tpu.memory_space<any>>) dst(%366 : memref<1x8x128xf32, #tpu.memory_space<vmem>>)
    } else {
    }
    %c0 = arith.constant 0 : index
    %c0_18 = arith.constant 0 : index
    %23 = vector.load %arg3[%c0, %c0_18] : memref<8x72xbf16, #tpu.memory_space<vmem>>, vector<8x72xbf16>
    %c0_19 = arith.constant 0 : index
    %c0_20 = arith.constant 0 : index
    %c0_21 = arith.constant 0 : index
    %24 = vector.load %arg9[%c0_19, %c0_20, %c0_21] : memref<10x8x128xf32, #tpu.memory_space<vmem>>, vector<10x8x128xf32>
    %c0_22 = arith.constant 0 : index
    %c0_23 = arith.constant 0 : index
    %c0_24 = arith.constant 0 : index
    %25 = vector.load %arg4[%c0_22, %c0_23, %c0_24] : memref<1x8x1xf32, #tpu.memory_space<vmem>>, vector<1x8x1xf32>
    %26 = vector.broadcast %25 : vector<1x8x1xf32> to vector<10x8x128xf32>
    %27 = arith.mulf %24, %26 : vector<10x8x128xf32>
    %c0_25 = arith.constant 0 : index
    %c0_26 = arith.constant 0 : index
    %c0_27 = arith.constant 0 : index
    %28 = vector.load %arg5[%c0_25, %c0_26, %c0_27] : memref<1x8x1xf32, #tpu.memory_space<vmem>>, vector<1x8x1xf32>
    %29 = vector.broadcast %28 : vector<1x8x1xf32> to vector<10x8x128xf32>
    %30 = arith.addf %27, %29 : vector<10x8x128xf32>
    %cst = arith.constant 0.000000e+00 : f32
    %31 = vector.broadcast %cst : f32 to vector<10x8x128xf32>
    %32 = arith.maximumf %30, %31 : vector<10x8x128xf32>
    %33 = arith.truncf %32 : vector<10x8x128xf32> to vector<10x8x128xbf16>
    %cst_28 = arith.constant 0.000000e+00 : bf16
    %34 = vector.broadcast %cst_28 : bf16 to vector<10x8x8xbf16>
    %c0_29 = arith.constant 0 : index
    %c0_30 = arith.constant 0 : index
    %c0_31 = arith.constant 0 : index
    %35 = vector.load %arg10[%c0_29, %c0_30, %c0_31] : memref<10x8x144xbf16, #tpu.memory_space<vmem>>, vector<10x8x8xbf16>
    tpu.vector_store %arg10[%c0_29, %c0_30, %c0_31], %34 {strides = array<i32>} : memref<10x8x144xbf16, #tpu.memory_space<vmem>>, vector<10x8x8xbf16>,
    %c0_32 = arith.constant 0 : index
    %c0_33 = arith.constant 0 : index
    %c136 = arith.constant 136 : index
    %36 = vector.load %arg10[%c0_32, %c0_33, %c136] : memref<10x8x144xbf16, #tpu.memory_space<vmem>>, vector<10x8x8xbf16>
    tpu.vector_store %arg10[%c0_32, %c0_33, %c136], %34 {strides = array<i32>} : memref<10x8x144xbf16, #tpu.memory_space<vmem>>, vector<10x8x8xbf16>,
    %c0_34 = arith.constant 0 : index
    %c0_35 = arith.constant 0 : index
    %c8 = arith.constant 8 : index
    %37 = vector.load %arg10[%c0_34, %c0_35, %c8] : memref<10x8x144xbf16, #tpu.memory_space<vmem>>, vector<10x8x128xbf16>
    tpu.vector_store %arg10[%c0_34, %c0_35, %c8], %33 {strides = array<i32>} : memref<10x8x144xbf16, #tpu.memory_space<vmem>>, vector<10x8x128xbf16>,
    %c0_i32_36 = arith.constant 0 : i32
    %38 = arith.cmpi eq, %arg1, %c0_i32_36 : i32
    %39 = arith.extui %38 : i1 to i32
    %c0_i32_37 = arith.constant 0 : i32
    %40 = arith.cmpi ne, %39, %c0_i32_37 : i32
    scf.if %40 {
      %cst_459 = arith.constant 0.000000e+00 : bf16
      %364 = vector.broadcast %cst_459 : bf16 to vector<8x144xbf16>
      %c0_460 = arith.constant 0 : index
      %c0_461 = arith.constant 0 : index
      %c0_462 = arith.constant 0 : index
      %365 = vector.load %arg10[%c0_460, %c0_461, %c0_462] : memref<10x8x144xbf16, #tpu.memory_space<vmem>>, vector<1x8x144xbf16>
      %366 = vector.shape_cast %365 : vector<1x8x144xbf16> to vector<8x144xbf16>
      %367 = vector.shape_cast %364 : vector<8x144xbf16> to vector<1x8x144xbf16>
      tpu.vector_store %arg10[%c0_460, %c0_461, %c0_462], %367 {strides = array<i32>} : memref<10x8x144xbf16, #tpu.memory_space<vmem>>, vector<1x8x144xbf16>,
    } else {
    }
    %c1_i32_38 = arith.constant 1 : i32
    %41 = arith.cmpi eq, %arg1, %c1_i32_38 : i32
    %42 = arith.extui %41 : i1 to i32
    %c0_i32_39 = arith.constant 0 : i32
    %43 = arith.cmpi ne, %42, %c0_i32_39 : i32
    scf.if %43 {
      %cst_459 = arith.constant 0.000000e+00 : bf16
      %364 = vector.broadcast %cst_459 : bf16 to vector<8x144xbf16>
      %c9_460 = arith.constant 9 : index
      %c0_461 = arith.constant 0 : index
      %c0_462 = arith.constant 0 : index
      %365 = vector.load %arg10[%c9_460, %c0_461, %c0_462] : memref<10x8x144xbf16, #tpu.memory_space<vmem>>, vector<1x8x144xbf16>
      %366 = vector.shape_cast %365 : vector<1x8x144xbf16> to vector<8x144xbf16>
      %367 = vector.shape_cast %364 : vector<8x144xbf16> to vector<1x8x144xbf16>
      tpu.vector_store %arg10[%c9_460, %c0_461, %c0_462], %367 {strides = array<i32>} : memref<10x8x144xbf16, #tpu.memory_space<vmem>>, vector<1x8x144xbf16>,
    } else {
    }
    %cst_40 = arith.constant 0.000000e+00 : f32
    %44 = vector.broadcast %cst_40 : f32 to vector<8x1xf32>
    %cst_41 = arith.constant 0.000000e+00 : f32
    %45 = vector.broadcast %cst_41 : f32 to vector<8x1xf32>
    %c0_42 = arith.constant 0 : index
    %c0_43 = arith.constant 0 : index
    %c0_44 = arith.constant 0 : index
    %46 = vector.load %arg10[%c0_42, %c0_43, %c0_44] : memref<10x8x144xbf16, #tpu.memory_space<vmem>>, vector<1x8x128xbf16>
    %47 = vector.shape_cast %46 : vector<1x8x128xbf16> to vector<8x128xbf16>
    %c0_45 = arith.constant 0 : index
    %c0_46 = arith.constant 0 : index
    %48 = vector.load %arg11[%c0_45, %c0_46] : memref<72x128xbf16, #tpu.memory_space<vmem>>, vector<8x128xbf16>
    tpu.vector_store %arg11[%c0_45, %c0_46], %47 {strides = array<i32>} : memref<72x128xbf16, #tpu.memory_space<vmem>>, vector<8x128xbf16>,
    %c0_47 = arith.constant 0 : index
    %c0_48 = arith.constant 0 : index
    %c8_49 = arith.constant 8 : index
    %49 = vector.load %arg10[%c0_47, %c0_48, %c8_49] : memref<10x8x144xbf16, #tpu.memory_space<vmem>>, vector<1x8x128xbf16>
    %50 = vector.shape_cast %49 : vector<1x8x128xbf16> to vector<8x128xbf16>
    %c8_50 = arith.constant 8 : index
    %c0_51 = arith.constant 0 : index
    %51 = vector.load %arg11[%c8_50, %c0_51] : memref<72x128xbf16, #tpu.memory_space<vmem>>, vector<8x128xbf16>
    tpu.vector_store %arg11[%c8_50, %c0_51], %50 {strides = array<i32>} : memref<72x128xbf16, #tpu.memory_space<vmem>>, vector<8x128xbf16>,
    %c0_52 = arith.constant 0 : index
    %c0_53 = arith.constant 0 : index
    %c16 = arith.constant 16 : index
    %52 = vector.load %arg10[%c0_52, %c0_53, %c16] : memref<10x8x144xbf16, #tpu.memory_space<vmem>>, vector<1x8x128xbf16>
    %53 = vector.shape_cast %52 : vector<1x8x128xbf16> to vector<8x128xbf16>
    %c16_54 = arith.constant 16 : index
    %c0_55 = arith.constant 0 : index
    %54 = vector.load %arg11[%c16_54, %c0_55] : memref<72x128xbf16, #tpu.memory_space<vmem>>, vector<8x128xbf16>
    tpu.vector_store %arg11[%c16_54, %c0_55], %53 {strides = array<i32>} : memref<72x128xbf16, #tpu.memory_space<vmem>>, vector<8x128xbf16>,
    %c1 = arith.constant 1 : index
    %c0_56 = arith.constant 0 : index
    %c0_57 = arith.constant 0 : index
    %55 = vector.load %arg10[%c1, %c0_56, %c0_57] : memref<10x8x144xbf16, #tpu.memory_space<vmem>>, vector<1x8x128xbf16>
    %56 = vector.shape_cast %55 : vector<1x8x128xbf16> to vector<8x128xbf16>
    %c24 = arith.constant 24 : index
    %c0_58 = arith.constant 0 : index
    %57 = vector.load %arg11[%c24, %c0_58] : memref<72x128xbf16, #tpu.memory_space<vmem>>, vector<8x128xbf16>
    tpu.vector_store %arg11[%c24, %c0_58], %56 {strides = array<i32>} : memref<72x128xbf16, #tpu.memory_space<vmem>>, vector<8x128xbf16>,
    %c1_59 = arith.constant 1 : index
    %c0_60 = arith.constant 0 : index
    %c8_61 = arith.constant 8 : index
    %58 = vector.load %arg10[%c1_59, %c0_60, %c8_61] : memref<10x8x144xbf16, #tpu.memory_space<vmem>>, vector<1x8x128xbf16>
    %59 = vector.shape_cast %58 : vector<1x8x128xbf16> to vector<8x128xbf16>
    %c32 = arith.constant 32 : index
    %c0_62 = arith.constant 0 : index
    %60 = vector.load %arg11[%c32, %c0_62] : memref<72x128xbf16, #tpu.memory_space<vmem>>, vector<8x128xbf16>
    tpu.vector_store %arg11[%c32, %c0_62], %59 {strides = array<i32>} : memref<72x128xbf16, #tpu.memory_space<vmem>>, vector<8x128xbf16>,
    %c1_63 = arith.constant 1 : index
    %c0_64 = arith.constant 0 : index
    %c16_65 = arith.constant 16 : index
    %61 = vector.load %arg10[%c1_63, %c0_64, %c16_65] : memref<10x8x144xbf16, #tpu.memory_space<vmem>>, vector<1x8x128xbf16>
    %62 = vector.shape_cast %61 : vector<1x8x128xbf16> to vector<8x128xbf16>
    %c40 = arith.constant 40 : index
    %c0_66 = arith.constant 0 : index
    %63 = vector.load %arg11[%c40, %c0_66] : memref<72x128xbf16, #tpu.memory_space<vmem>>, vector<8x128xbf16>
    tpu.vector_store %arg11[%c40, %c0_66], %62 {strides = array<i32>} : memref<72x128xbf16, #tpu.memory_space<vmem>>, vector<8x128xbf16>,
    %c2 = arith.constant 2 : index
    %c0_67 = arith.constant 0 : index
    %c0_68 = arith.constant 0 : index
    %64 = vector.load %arg10[%c2, %c0_67, %c0_68] : memref<10x8x144xbf16, #tpu.memory_space<vmem>>, vector<1x8x128xbf16>
    %65 = vector.shape_cast %64 : vector<1x8x128xbf16> to vector<8x128xbf16>
    %c48 = arith.constant 48 : index
    %c0_69 = arith.constant 0 : index
    %66 = vector.load %arg11[%c48, %c0_69] : memref<72x128xbf16, #tpu.memory_space<vmem>>, vector<8x128xbf16>
    tpu.vector_store %arg11[%c48, %c0_69], %65 {strides = array<i32>} : memref<72x128xbf16, #tpu.memory_space<vmem>>, vector<8x128xbf16>,
    %c2_70 = arith.constant 2 : index
    %c0_71 = arith.constant 0 : index
    %c8_72 = arith.constant 8 : index
    %67 = vector.load %arg10[%c2_70, %c0_71, %c8_72] : memref<10x8x144xbf16, #tpu.memory_space<vmem>>, vector<1x8x128xbf16>
    %68 = vector.shape_cast %67 : vector<1x8x128xbf16> to vector<8x128xbf16>
    %c56 = arith.constant 56 : index
    %c0_73 = arith.constant 0 : index
    %69 = vector.load %arg11[%c56, %c0_73] : memref<72x128xbf16, #tpu.memory_space<vmem>>, vector<8x128xbf16>
    tpu.vector_store %arg11[%c56, %c0_73], %68 {strides = array<i32>} : memref<72x128xbf16, #tpu.memory_space<vmem>>, vector<8x128xbf16>,
    %c2_74 = arith.constant 2 : index
    %c0_75 = arith.constant 0 : index
    %c16_76 = arith.constant 16 : index
    %70 = vector.load %arg10[%c2_74, %c0_75, %c16_76] : memref<10x8x144xbf16, #tpu.memory_space<vmem>>, vector<1x8x128xbf16>
    %71 = vector.shape_cast %70 : vector<1x8x128xbf16> to vector<8x128xbf16>
    %c64 = arith.constant 64 : index
    %c0_77 = arith.constant 0 : index
    %72 = vector.load %arg11[%c64, %c0_77] : memref<72x128xbf16, #tpu.memory_space<vmem>>, vector<8x128xbf16>
    tpu.vector_store %arg11[%c64, %c0_77], %71 {strides = array<i32>} : memref<72x128xbf16, #tpu.memory_space<vmem>>, vector<8x128xbf16>,
    %c0_78 = arith.constant 0 : index
    %c0_79 = arith.constant 0 : index
    %73 = vector.load %arg11[%c0_78, %c0_79] : memref<72x128xbf16, #tpu.memory_space<vmem>>, vector<72x128xbf16>
    %cst_80 = arith.constant dense<0.000000e+00> : vector<8x128xf32>
    %74 = tpu.matmul %23, %73, %cst_80 {dimension_numbers = #tpu.dot_dimension_numbers<[1], [0], [0], [1], [0, 0, 1, 1], [], []>} : vector<8x72xbf16>, vector<72x128xbf16>, vector<8x128xf32> -> vector<8x128xf32>
    %c0_81 = arith.constant 0 : index
    %c0_82 = arith.constant 0 : index
    %c0_83 = arith.constant 0 : index
    %75 = vector.load %arg6[%c0_81, %c0_82, %c0_83] : memref<8x8x128xf32, #tpu.memory_space<vmem>>, vector<1x8x128xf32>
    %76 = vector.shape_cast %75 : vector<1x8x128xf32> to vector<8x128xf32>
    %77 = vector.shape_cast %74 : vector<8x128xf32> to vector<1x8x128xf32>
    tpu.vector_store %arg6[%c0_81, %c0_82, %c0_83], %77 {strides = array<i32>} : memref<8x8x128xf32, #tpu.memory_space<vmem>>, vector<1x8x128xf32>,
    %cst_84 = arith.constant dense<0.000000e+00> : vector<8xf32>
    %78 = vector.multi_reduction <add>, %74, %cst_84 [1] : vector<8x128xf32> to vector<8xf32>
    %79 = vector.shape_cast %78 : vector<8xf32> to vector<8x1xf32>
    %80 = arith.addf %44, %79 : vector<8x1xf32>
    %81 = arith.mulf %74, %74 : vector<8x128xf32>
    %cst_85 = arith.constant dense<0.000000e+00> : vector<8xf32>
    %82 = vector.multi_reduction <add>, %81, %cst_85 [1] : vector<8x128xf32> to vector<8xf32>
    %83 = vector.shape_cast %82 : vector<8xf32> to vector<8x1xf32>
    %84 = arith.addf %45, %83 : vector<8x1xf32>
    %c1_86 = arith.constant 1 : index
    %c0_87 = arith.constant 0 : index
    %c0_88 = arith.constant 0 : index
    %85 = vector.load %arg10[%c1_86, %c0_87, %c0_88] : memref<10x8x144xbf16, #tpu.memory_space<vmem>>, vector<1x8x128xbf16>
    %86 = vector.shape_cast %85 : vector<1x8x128xbf16> to vector<8x128xbf16>
    %c0_89 = arith.constant 0 : index
    %c0_90 = arith.constant 0 : index
    %87 = vector.load %arg11[%c0_89, %c0_90] : memref<72x128xbf16, #tpu.memory_space<vmem>>, vector<8x128xbf16>
    tpu.vector_store %arg11[%c0_89, %c0_90], %86 {strides = array<i32>} : memref<72x128xbf16, #tpu.memory_space<vmem>>, vector<8x128xbf16>,
    %c1_91 = arith.constant 1 : index
    %c0_92 = arith.constant 0 : index
    %c8_93 = arith.constant 8 : index
    %88 = vector.load %arg10[%c1_91, %c0_92, %c8_93] : memref<10x8x144xbf16, #tpu.memory_space<vmem>>, vector<1x8x128xbf16>
    %89 = vector.shape_cast %88 : vector<1x8x128xbf16> to vector<8x128xbf16>
    %c8_94 = arith.constant 8 : index
    %c0_95 = arith.constant 0 : index
    %90 = vector.load %arg11[%c8_94, %c0_95] : memref<72x128xbf16, #tpu.memory_space<vmem>>, vector<8x128xbf16>
    tpu.vector_store %arg11[%c8_94, %c0_95], %89 {strides = array<i32>} : memref<72x128xbf16, #tpu.memory_space<vmem>>, vector<8x128xbf16>,
    %c1_96 = arith.constant 1 : index
    %c0_97 = arith.constant 0 : index
    %c16_98 = arith.constant 16 : index
    %91 = vector.load %arg10[%c1_96, %c0_97, %c16_98] : memref<10x8x144xbf16, #tpu.memory_space<vmem>>, vector<1x8x128xbf16>
    %92 = vector.shape_cast %91 : vector<1x8x128xbf16> to vector<8x128xbf16>
    %c16_99 = arith.constant 16 : index
    %c0_100 = arith.constant 0 : index
    %93 = vector.load %arg11[%c16_99, %c0_100] : memref<72x128xbf16, #tpu.memory_space<vmem>>, vector<8x128xbf16>
    tpu.vector_store %arg11[%c16_99, %c0_100], %92 {strides = array<i32>} : memref<72x128xbf16, #tpu.memory_space<vmem>>, vector<8x128xbf16>,
    %c2_101 = arith.constant 2 : index
    %c0_102 = arith.constant 0 : index
    %c0_103 = arith.constant 0 : index
    %94 = vector.load %arg10[%c2_101, %c0_102, %c0_103] : memref<10x8x144xbf16, #tpu.memory_space<vmem>>, vector<1x8x128xbf16>
    %95 = vector.shape_cast %94 : vector<1x8x128xbf16> to vector<8x128xbf16>
    %c24_104 = arith.constant 24 : index
    %c0_105 = arith.constant 0 : index
    %96 = vector.load %arg11[%c24_104, %c0_105] : memref<72x128xbf16, #tpu.memory_space<vmem>>, vector<8x128xbf16>
    tpu.vector_store %arg11[%c24_104, %c0_105], %95 {strides = array<i32>} : memref<72x128xbf16, #tpu.memory_space<vmem>>, vector<8x128xbf16>,
    %c2_106 = arith.constant 2 : index
    %c0_107 = arith.constant 0 : index
    %c8_108 = arith.constant 8 : index
    %97 = vector.load %arg10[%c2_106, %c0_107, %c8_108] : memref<10x8x144xbf16, #tpu.memory_space<vmem>>, vector<1x8x128xbf16>
    %98 = vector.shape_cast %97 : vector<1x8x128xbf16> to vector<8x128xbf16>
    %c32_109 = arith.constant 32 : index
    %c0_110 = arith.constant 0 : index
    %99 = vector.load %arg11[%c32_109, %c0_110] : memref<72x128xbf16, #tpu.memory_space<vmem>>, vector<8x128xbf16>
    tpu.vector_store %arg11[%c32_109, %c0_110], %98 {strides = array<i32>} : memref<72x128xbf16, #tpu.memory_space<vmem>>, vector<8x128xbf16>,
    %c2_111 = arith.constant 2 : index
    %c0_112 = arith.constant 0 : index
    %c16_113 = arith.constant 16 : index
    %100 = vector.load %arg10[%c2_111, %c0_112, %c16_113] : memref<10x8x144xbf16, #tpu.memory_space<vmem>>, vector<1x8x128xbf16>
    %101 = vector.shape_cast %100 : vector<1x8x128xbf16> to vector<8x128xbf16>
    %c40_114 = arith.constant 40 : index
    %c0_115 = arith.constant 0 : index
    %102 = vector.load %arg11[%c40_114, %c0_115] : memref<72x128xbf16, #tpu.memory_space<vmem>>, vector<8x128xbf16>
    tpu.vector_store %arg11[%c40_114, %c0_115], %101 {strides = array<i32>} : memref<72x128xbf16, #tpu.memory_space<vmem>>, vector<8x128xbf16>,
    %c3 = arith.constant 3 : index
    %c0_116 = arith.constant 0 : index
    %c0_117 = arith.constant 0 : index
    %103 = vector.load %arg10[%c3, %c0_116, %c0_117] : memref<10x8x144xbf16, #tpu.memory_space<vmem>>, vector<1x8x128xbf16>
    %104 = vector.shape_cast %103 : vector<1x8x128xbf16> to vector<8x128xbf16>
    %c48_118 = arith.constant 48 : index
    %c0_119 = arith.constant 0 : index
    %105 = vector.load %arg11[%c48_118, %c0_119] : memref<72x128xbf16, #tpu.memory_space<vmem>>, vector<8x128xbf16>
    tpu.vector_store %arg11[%c48_118, %c0_119], %104 {strides = array<i32>} : memref<72x128xbf16, #tpu.memory_space<vmem>>, vector<8x128xbf16>,
    %c3_120 = arith.constant 3 : index
    %c0_121 = arith.constant 0 : index
    %c8_122 = arith.constant 8 : index
    %106 = vector.load %arg10[%c3_120, %c0_121, %c8_122] : memref<10x8x144xbf16, #tpu.memory_space<vmem>>, vector<1x8x128xbf16>
    %107 = vector.shape_cast %106 : vector<1x8x128xbf16> to vector<8x128xbf16>
    %c56_123 = arith.constant 56 : index
    %c0_124 = arith.constant 0 : index
    %108 = vector.load %arg11[%c56_123, %c0_124] : memref<72x128xbf16, #tpu.memory_space<vmem>>, vector<8x128xbf16>
    tpu.vector_store %arg11[%c56_123, %c0_124], %107 {strides = array<i32>} : memref<72x128xbf16, #tpu.memory_space<vmem>>, vector<8x128xbf16>,
    %c3_125 = arith.constant 3 : index
    %c0_126 = arith.constant 0 : index
    %c16_127 = arith.constant 16 : index
    %109 = vector.load %arg10[%c3_125, %c0_126, %c16_127] : memref<10x8x144xbf16, #tpu.memory_space<vmem>>, vector<1x8x128xbf16>
    %110 = vector.shape_cast %109 : vector<1x8x128xbf16> to vector<8x128xbf16>
    %c64_128 = arith.constant 64 : index
    %c0_129 = arith.constant 0 : index
    %111 = vector.load %arg11[%c64_128, %c0_129] : memref<72x128xbf16, #tpu.memory_space<vmem>>, vector<8x128xbf16>
    tpu.vector_store %arg11[%c64_128, %c0_129], %110 {strides = array<i32>} : memref<72x128xbf16, #tpu.memory_space<vmem>>, vector<8x128xbf16>,
    %c0_130 = arith.constant 0 : index
    %c0_131 = arith.constant 0 : index
    %112 = vector.load %arg11[%c0_130, %c0_131] : memref<72x128xbf16, #tpu.memory_space<vmem>>, vector<72x128xbf16>
    %cst_132 = arith.constant dense<0.000000e+00> : vector<8x128xf32>
    %113 = tpu.matmul %23, %112, %cst_132 {dimension_numbers = #tpu.dot_dimension_numbers<[1], [0], [0], [1], [0, 0, 1, 1], [], []>} : vector<8x72xbf16>, vector<72x128xbf16>, vector<8x128xf32> -> vector<8x128xf32>
    %c1_133 = arith.constant 1 : index
    %c0_134 = arith.constant 0 : index
    %c0_135 = arith.constant 0 : index
    %114 = vector.load %arg6[%c1_133, %c0_134, %c0_135] : memref<8x8x128xf32, #tpu.memory_space<vmem>>, vector<1x8x128xf32>
    %115 = vector.shape_cast %114 : vector<1x8x128xf32> to vector<8x128xf32>
    %116 = vector.shape_cast %113 : vector<8x128xf32> to vector<1x8x128xf32>
    tpu.vector_store %arg6[%c1_133, %c0_134, %c0_135], %116 {strides = array<i32>} : memref<8x8x128xf32, #tpu.memory_space<vmem>>, vector<1x8x128xf32>,
    %cst_136 = arith.constant dense<0.000000e+00> : vector<8xf32>
    %117 = vector.multi_reduction <add>, %113, %cst_136 [1] : vector<8x128xf32> to vector<8xf32>
    %118 = vector.shape_cast %117 : vector<8xf32> to vector<8x1xf32>
    %119 = arith.addf %80, %118 : vector<8x1xf32>
    %120 = arith.mulf %113, %113 : vector<8x128xf32>
    %cst_137 = arith.constant dense<0.000000e+00> : vector<8xf32>
    %121 = vector.multi_reduction <add>, %120, %cst_137 [1] : vector<8x128xf32> to vector<8xf32>
    %122 = vector.shape_cast %121 : vector<8xf32> to vector<8x1xf32>
    %123 = arith.addf %84, %122 : vector<8x1xf32>
    %c2_138 = arith.constant 2 : index
    %c0_139 = arith.constant 0 : index
    %c0_140 = arith.constant 0 : index
    %124 = vector.load %arg10[%c2_138, %c0_139, %c0_140] : memref<10x8x144xbf16, #tpu.memory_space<vmem>>, vector<1x8x128xbf16>
    %125 = vector.shape_cast %124 : vector<1x8x128xbf16> to vector<8x128xbf16>
    %c0_141 = arith.constant 0 : index
    %c0_142 = arith.constant 0 : index
    %126 = vector.load %arg11[%c0_141, %c0_142] : memref<72x128xbf16, #tpu.memory_space<vmem>>, vector<8x128xbf16>
    tpu.vector_store %arg11[%c0_141, %c0_142], %125 {strides = array<i32>} : memref<72x128xbf16, #tpu.memory_space<vmem>>, vector<8x128xbf16>,
    %c2_143 = arith.constant 2 : index
    %c0_144 = arith.constant 0 : index
    %c8_145 = arith.constant 8 : index
    %127 = vector.load %arg10[%c2_143, %c0_144, %c8_145] : memref<10x8x144xbf16, #tpu.memory_space<vmem>>, vector<1x8x128xbf16>
    %128 = vector.shape_cast %127 : vector<1x8x128xbf16> to vector<8x128xbf16>
    %c8_146 = arith.constant 8 : index
    %c0_147 = arith.constant 0 : index
    %129 = vector.load %arg11[%c8_146, %c0_147] : memref<72x128xbf16, #tpu.memory_space<vmem>>, vector<8x128xbf16>
    tpu.vector_store %arg11[%c8_146, %c0_147], %128 {strides = array<i32>} : memref<72x128xbf16, #tpu.memory_space<vmem>>, vector<8x128xbf16>,
    %c2_148 = arith.constant 2 : index
    %c0_149 = arith.constant 0 : index
    %c16_150 = arith.constant 16 : index
    %130 = vector.load %arg10[%c2_148, %c0_149, %c16_150] : memref<10x8x144xbf16, #tpu.memory_space<vmem>>, vector<1x8x128xbf16>
    %131 = vector.shape_cast %130 : vector<1x8x128xbf16> to vector<8x128xbf16>
    %c16_151 = arith.constant 16 : index
    %c0_152 = arith.constant 0 : index
    %132 = vector.load %arg11[%c16_151, %c0_152] : memref<72x128xbf16, #tpu.memory_space<vmem>>, vector<8x128xbf16>
    tpu.vector_store %arg11[%c16_151, %c0_152], %131 {strides = array<i32>} : memref<72x128xbf16, #tpu.memory_space<vmem>>, vector<8x128xbf16>,
    %c3_153 = arith.constant 3 : index
    %c0_154 = arith.constant 0 : index
    %c0_155 = arith.constant 0 : index
    %133 = vector.load %arg10[%c3_153, %c0_154, %c0_155] : memref<10x8x144xbf16, #tpu.memory_space<vmem>>, vector<1x8x128xbf16>
    %134 = vector.shape_cast %133 : vector<1x8x128xbf16> to vector<8x128xbf16>
    %c24_156 = arith.constant 24 : index
    %c0_157 = arith.constant 0 : index
    %135 = vector.load %arg11[%c24_156, %c0_157] : memref<72x128xbf16, #tpu.memory_space<vmem>>, vector<8x128xbf16>
    tpu.vector_store %arg11[%c24_156, %c0_157], %134 {strides = array<i32>} : memref<72x128xbf16, #tpu.memory_space<vmem>>, vector<8x128xbf16>,
    %c3_158 = arith.constant 3 : index
    %c0_159 = arith.constant 0 : index
    %c8_160 = arith.constant 8 : index
    %136 = vector.load %arg10[%c3_158, %c0_159, %c8_160] : memref<10x8x144xbf16, #tpu.memory_space<vmem>>, vector<1x8x128xbf16>
    %137 = vector.shape_cast %136 : vector<1x8x128xbf16> to vector<8x128xbf16>
    %c32_161 = arith.constant 32 : index
    %c0_162 = arith.constant 0 : index
    %138 = vector.load %arg11[%c32_161, %c0_162] : memref<72x128xbf16, #tpu.memory_space<vmem>>, vector<8x128xbf16>
    tpu.vector_store %arg11[%c32_161, %c0_162], %137 {strides = array<i32>} : memref<72x128xbf16, #tpu.memory_space<vmem>>, vector<8x128xbf16>,
    %c3_163 = arith.constant 3 : index
    %c0_164 = arith.constant 0 : index
    %c16_165 = arith.constant 16 : index
    %139 = vector.load %arg10[%c3_163, %c0_164, %c16_165] : memref<10x8x144xbf16, #tpu.memory_space<vmem>>, vector<1x8x128xbf16>
    %140 = vector.shape_cast %139 : vector<1x8x128xbf16> to vector<8x128xbf16>
    %c40_166 = arith.constant 40 : index
    %c0_167 = arith.constant 0 : index
    %141 = vector.load %arg11[%c40_166, %c0_167] : memref<72x128xbf16, #tpu.memory_space<vmem>>, vector<8x128xbf16>
    tpu.vector_store %arg11[%c40_166, %c0_167], %140 {strides = array<i32>} : memref<72x128xbf16, #tpu.memory_space<vmem>>, vector<8x128xbf16>,
    %c4 = arith.constant 4 : index
    %c0_168 = arith.constant 0 : index
    %c0_169 = arith.constant 0 : index
    %142 = vector.load %arg10[%c4, %c0_168, %c0_169] : memref<10x8x144xbf16, #tpu.memory_space<vmem>>, vector<1x8x128xbf16>
    %143 = vector.shape_cast %142 : vector<1x8x128xbf16> to vector<8x128xbf16>
    %c48_170 = arith.constant 48 : index
    %c0_171 = arith.constant 0 : index
    %144 = vector.load %arg11[%c48_170, %c0_171] : memref<72x128xbf16, #tpu.memory_space<vmem>>, vector<8x128xbf16>
    tpu.vector_store %arg11[%c48_170, %c0_171], %143 {strides = array<i32>} : memref<72x128xbf16, #tpu.memory_space<vmem>>, vector<8x128xbf16>,
    %c4_172 = arith.constant 4 : index
    %c0_173 = arith.constant 0 : index
    %c8_174 = arith.constant 8 : index
    %145 = vector.load %arg10[%c4_172, %c0_173, %c8_174] : memref<10x8x144xbf16, #tpu.memory_space<vmem>>, vector<1x8x128xbf16>
    %146 = vector.shape_cast %145 : vector<1x8x128xbf16> to vector<8x128xbf16>
    %c56_175 = arith.constant 56 : index
    %c0_176 = arith.constant 0 : index
    %147 = vector.load %arg11[%c56_175, %c0_176] : memref<72x128xbf16, #tpu.memory_space<vmem>>, vector<8x128xbf16>
    tpu.vector_store %arg11[%c56_175, %c0_176], %146 {strides = array<i32>} : memref<72x128xbf16, #tpu.memory_space<vmem>>, vector<8x128xbf16>,
    %c4_177 = arith.constant 4 : index
    %c0_178 = arith.constant 0 : index
    %c16_179 = arith.constant 16 : index
    %148 = vector.load %arg10[%c4_177, %c0_178, %c16_179] : memref<10x8x144xbf16, #tpu.memory_space<vmem>>, vector<1x8x128xbf16>
    %149 = vector.shape_cast %148 : vector<1x8x128xbf16> to vector<8x128xbf16>
    %c64_180 = arith.constant 64 : index
    %c0_181 = arith.constant 0 : index
    %150 = vector.load %arg11[%c64_180, %c0_181] : memref<72x128xbf16, #tpu.memory_space<vmem>>, vector<8x128xbf16>
    tpu.vector_store %arg11[%c64_180, %c0_181], %149 {strides = array<i32>} : memref<72x128xbf16, #tpu.memory_space<vmem>>, vector<8x128xbf16>,
    %c0_182 = arith.constant 0 : index
    %c0_183 = arith.constant 0 : index
    %151 = vector.load %arg11[%c0_182, %c0_183] : memref<72x128xbf16, #tpu.memory_space<vmem>>, vector<72x128xbf16>
    %cst_184 = arith.constant dense<0.000000e+00> : vector<8x128xf32>
    %152 = tpu.matmul %23, %151, %cst_184 {dimension_numbers = #tpu.dot_dimension_numbers<[1], [0], [0], [1], [0, 0, 1, 1], [], []>} : vector<8x72xbf16>, vector<72x128xbf16>, vector<8x128xf32> -> vector<8x128xf32>
    %c2_185 = arith.constant 2 : index
    %c0_186 = arith.constant 0 : index
    %c0_187 = arith.constant 0 : index
    %153 = vector.load %arg6[%c2_185, %c0_186, %c0_187] : memref<8x8x128xf32, #tpu.memory_space<vmem>>, vector<1x8x128xf32>
    %154 = vector.shape_cast %153 : vector<1x8x128xf32> to vector<8x128xf32>
    %155 = vector.shape_cast %152 : vector<8x128xf32> to vector<1x8x128xf32>
    tpu.vector_store %arg6[%c2_185, %c0_186, %c0_187], %155 {strides = array<i32>} : memref<8x8x128xf32, #tpu.memory_space<vmem>>, vector<1x8x128xf32>,
    %cst_188 = arith.constant dense<0.000000e+00> : vector<8xf32>
    %156 = vector.multi_reduction <add>, %152, %cst_188 [1] : vector<8x128xf32> to vector<8xf32>
    %157 = vector.shape_cast %156 : vector<8xf32> to vector<8x1xf32>
    %158 = arith.addf %119, %157 : vector<8x1xf32>
    %159 = arith.mulf %152, %152 : vector<8x128xf32>
    %cst_189 = arith.constant dense<0.000000e+00> : vector<8xf32>
    %160 = vector.multi_reduction <add>, %159, %cst_189 [1] : vector<8x128xf32> to vector<8xf32>
    %161 = vector.shape_cast %160 : vector<8xf32> to vector<8x1xf32>
    %162 = arith.addf %123, %161 : vector<8x1xf32>
    %c3_190 = arith.constant 3 : index
    %c0_191 = arith.constant 0 : index
    %c0_192 = arith.constant 0 : index
    %163 = vector.load %arg10[%c3_190, %c0_191, %c0_192] : memref<10x8x144xbf16, #tpu.memory_space<vmem>>, vector<1x8x128xbf16>
    %164 = vector.shape_cast %163 : vector<1x8x128xbf16> to vector<8x128xbf16>
    %c0_193 = arith.constant 0 : index
    %c0_194 = arith.constant 0 : index
    %165 = vector.load %arg11[%c0_193, %c0_194] : memref<72x128xbf16, #tpu.memory_space<vmem>>, vector<8x128xbf16>
    tpu.vector_store %arg11[%c0_193, %c0_194], %164 {strides = array<i32>} : memref<72x128xbf16, #tpu.memory_space<vmem>>, vector<8x128xbf16>,
    %c3_195 = arith.constant 3 : index
    %c0_196 = arith.constant 0 : index
    %c8_197 = arith.constant 8 : index
    %166 = vector.load %arg10[%c3_195, %c0_196, %c8_197] : memref<10x8x144xbf16, #tpu.memory_space<vmem>>, vector<1x8x128xbf16>
    %167 = vector.shape_cast %166 : vector<1x8x128xbf16> to vector<8x128xbf16>
    %c8_198 = arith.constant 8 : index
    %c0_199 = arith.constant 0 : index
    %168 = vector.load %arg11[%c8_198, %c0_199] : memref<72x128xbf16, #tpu.memory_space<vmem>>, vector<8x128xbf16>
    tpu.vector_store %arg11[%c8_198, %c0_199], %167 {strides = array<i32>} : memref<72x128xbf16, #tpu.memory_space<vmem>>, vector<8x128xbf16>,
    %c3_200 = arith.constant 3 : index
    %c0_201 = arith.constant 0 : index
    %c16_202 = arith.constant 16 : index
    %169 = vector.load %arg10[%c3_200, %c0_201, %c16_202] : memref<10x8x144xbf16, #tpu.memory_space<vmem>>, vector<1x8x128xbf16>
    %170 = vector.shape_cast %169 : vector<1x8x128xbf16> to vector<8x128xbf16>
    %c16_203 = arith.constant 16 : index
    %c0_204 = arith.constant 0 : index
    %171 = vector.load %arg11[%c16_203, %c0_204] : memref<72x128xbf16, #tpu.memory_space<vmem>>, vector<8x128xbf16>
    tpu.vector_store %arg11[%c16_203, %c0_204], %170 {strides = array<i32>} : memref<72x128xbf16, #tpu.memory_space<vmem>>, vector<8x128xbf16>,
    %c4_205 = arith.constant 4 : index
    %c0_206 = arith.constant 0 : index
    %c0_207 = arith.constant 0 : index
    %172 = vector.load %arg10[%c4_205, %c0_206, %c0_207] : memref<10x8x144xbf16, #tpu.memory_space<vmem>>, vector<1x8x128xbf16>
    %173 = vector.shape_cast %172 : vector<1x8x128xbf16> to vector<8x128xbf16>
    %c24_208 = arith.constant 24 : index
    %c0_209 = arith.constant 0 : index
    %174 = vector.load %arg11[%c24_208, %c0_209] : memref<72x128xbf16, #tpu.memory_space<vmem>>, vector<8x128xbf16>
    tpu.vector_store %arg11[%c24_208, %c0_209], %173 {strides = array<i32>} : memref<72x128xbf16, #tpu.memory_space<vmem>>, vector<8x128xbf16>,
    %c4_210 = arith.constant 4 : index
    %c0_211 = arith.constant 0 : index
    %c8_212 = arith.constant 8 : index
    %175 = vector.load %arg10[%c4_210, %c0_211, %c8_212] : memref<10x8x144xbf16, #tpu.memory_space<vmem>>, vector<1x8x128xbf16>
    %176 = vector.shape_cast %175 : vector<1x8x128xbf16> to vector<8x128xbf16>
    %c32_213 = arith.constant 32 : index
    %c0_214 = arith.constant 0 : index
    %177 = vector.load %arg11[%c32_213, %c0_214] : memref<72x128xbf16, #tpu.memory_space<vmem>>, vector<8x128xbf16>
    tpu.vector_store %arg11[%c32_213, %c0_214], %176 {strides = array<i32>} : memref<72x128xbf16, #tpu.memory_space<vmem>>, vector<8x128xbf16>,
    %c4_215 = arith.constant 4 : index
    %c0_216 = arith.constant 0 : index
    %c16_217 = arith.constant 16 : index
    %178 = vector.load %arg10[%c4_215, %c0_216, %c16_217] : memref<10x8x144xbf16, #tpu.memory_space<vmem>>, vector<1x8x128xbf16>
    %179 = vector.shape_cast %178 : vector<1x8x128xbf16> to vector<8x128xbf16>
    %c40_218 = arith.constant 40 : index
    %c0_219 = arith.constant 0 : index
    %180 = vector.load %arg11[%c40_218, %c0_219] : memref<72x128xbf16, #tpu.memory_space<vmem>>, vector<8x128xbf16>
    tpu.vector_store %arg11[%c40_218, %c0_219], %179 {strides = array<i32>} : memref<72x128xbf16, #tpu.memory_space<vmem>>, vector<8x128xbf16>,
    %c5 = arith.constant 5 : index
    %c0_220 = arith.constant 0 : index
    %c0_221 = arith.constant 0 : index
    %181 = vector.load %arg10[%c5, %c0_220, %c0_221] : memref<10x8x144xbf16, #tpu.memory_space<vmem>>, vector<1x8x128xbf16>
    %182 = vector.shape_cast %181 : vector<1x8x128xbf16> to vector<8x128xbf16>
    %c48_222 = arith.constant 48 : index
    %c0_223 = arith.constant 0 : index
    %183 = vector.load %arg11[%c48_222, %c0_223] : memref<72x128xbf16, #tpu.memory_space<vmem>>, vector<8x128xbf16>
    tpu.vector_store %arg11[%c48_222, %c0_223], %182 {strides = array<i32>} : memref<72x128xbf16, #tpu.memory_space<vmem>>, vector<8x128xbf16>,
    %c5_224 = arith.constant 5 : index
    %c0_225 = arith.constant 0 : index
    %c8_226 = arith.constant 8 : index
    %184 = vector.load %arg10[%c5_224, %c0_225, %c8_226] : memref<10x8x144xbf16, #tpu.memory_space<vmem>>, vector<1x8x128xbf16>
    %185 = vector.shape_cast %184 : vector<1x8x128xbf16> to vector<8x128xbf16>
    %c56_227 = arith.constant 56 : index
    %c0_228 = arith.constant 0 : index
    %186 = vector.load %arg11[%c56_227, %c0_228] : memref<72x128xbf16, #tpu.memory_space<vmem>>, vector<8x128xbf16>
    tpu.vector_store %arg11[%c56_227, %c0_228], %185 {strides = array<i32>} : memref<72x128xbf16, #tpu.memory_space<vmem>>, vector<8x128xbf16>,
    %c5_229 = arith.constant 5 : index
    %c0_230 = arith.constant 0 : index
    %c16_231 = arith.constant 16 : index
    %187 = vector.load %arg10[%c5_229, %c0_230, %c16_231] : memref<10x8x144xbf16, #tpu.memory_space<vmem>>, vector<1x8x128xbf16>
    %188 = vector.shape_cast %187 : vector<1x8x128xbf16> to vector<8x128xbf16>
    %c64_232 = arith.constant 64 : index
    %c0_233 = arith.constant 0 : index
    %189 = vector.load %arg11[%c64_232, %c0_233] : memref<72x128xbf16, #tpu.memory_space<vmem>>, vector<8x128xbf16>
    tpu.vector_store %arg11[%c64_232, %c0_233], %188 {strides = array<i32>} : memref<72x128xbf16, #tpu.memory_space<vmem>>, vector<8x128xbf16>,
    %c0_234 = arith.constant 0 : index
    %c0_235 = arith.constant 0 : index
    %190 = vector.load %arg11[%c0_234, %c0_235] : memref<72x128xbf16, #tpu.memory_space<vmem>>, vector<72x128xbf16>
    %cst_236 = arith.constant dense<0.000000e+00> : vector<8x128xf32>
    %191 = tpu.matmul %23, %190, %cst_236 {dimension_numbers = #tpu.dot_dimension_numbers<[1], [0], [0], [1], [0, 0, 1, 1], [], []>} : vector<8x72xbf16>, vector<72x128xbf16>, vector<8x128xf32> -> vector<8x128xf32>
    %c3_237 = arith.constant 3 : index
    %c0_238 = arith.constant 0 : index
    %c0_239 = arith.constant 0 : index
    %192 = vector.load %arg6[%c3_237, %c0_238, %c0_239] : memref<8x8x128xf32, #tpu.memory_space<vmem>>, vector<1x8x128xf32>
    %193 = vector.shape_cast %192 : vector<1x8x128xf32> to vector<8x128xf32>
    %194 = vector.shape_cast %191 : vector<8x128xf32> to vector<1x8x128xf32>
    tpu.vector_store %arg6[%c3_237, %c0_238, %c0_239], %194 {strides = array<i32>} : memref<8x8x128xf32, #tpu.memory_space<vmem>>, vector<1x8x128xf32>,
    %cst_240 = arith.constant dense<0.000000e+00> : vector<8xf32>
    %195 = vector.multi_reduction <add>, %191, %cst_240 [1] : vector<8x128xf32> to vector<8xf32>
    %196 = vector.shape_cast %195 : vector<8xf32> to vector<8x1xf32>
    %197 = arith.addf %158, %196 : vector<8x1xf32>
    %198 = arith.mulf %191, %191 : vector<8x128xf32>
    %cst_241 = arith.constant dense<0.000000e+00> : vector<8xf32>
    %199 = vector.multi_reduction <add>, %198, %cst_241 [1] : vector<8x128xf32> to vector<8xf32>
    %200 = vector.shape_cast %199 : vector<8xf32> to vector<8x1xf32>
    %201 = arith.addf %162, %200 : vector<8x1xf32>
    %c4_242 = arith.constant 4 : index
    %c0_243 = arith.constant 0 : index
    %c0_244 = arith.constant 0 : index
    %202 = vector.load %arg10[%c4_242, %c0_243, %c0_244] : memref<10x8x144xbf16, #tpu.memory_space<vmem>>, vector<1x8x128xbf16>
    %203 = vector.shape_cast %202 : vector<1x8x128xbf16> to vector<8x128xbf16>
    %c0_245 = arith.constant 0 : index
    %c0_246 = arith.constant 0 : index
    %204 = vector.load %arg11[%c0_245, %c0_246] : memref<72x128xbf16, #tpu.memory_space<vmem>>, vector<8x128xbf16>
    tpu.vector_store %arg11[%c0_245, %c0_246], %203 {strides = array<i32>} : memref<72x128xbf16, #tpu.memory_space<vmem>>, vector<8x128xbf16>,
    %c4_247 = arith.constant 4 : index
    %c0_248 = arith.constant 0 : index
    %c8_249 = arith.constant 8 : index
    %205 = vector.load %arg10[%c4_247, %c0_248, %c8_249] : memref<10x8x144xbf16, #tpu.memory_space<vmem>>, vector<1x8x128xbf16>
    %206 = vector.shape_cast %205 : vector<1x8x128xbf16> to vector<8x128xbf16>
    %c8_250 = arith.constant 8 : index
    %c0_251 = arith.constant 0 : index
    %207 = vector.load %arg11[%c8_250, %c0_251] : memref<72x128xbf16, #tpu.memory_space<vmem>>, vector<8x128xbf16>
    tpu.vector_store %arg11[%c8_250, %c0_251], %206 {strides = array<i32>} : memref<72x128xbf16, #tpu.memory_space<vmem>>, vector<8x128xbf16>,
    %c4_252 = arith.constant 4 : index
    %c0_253 = arith.constant 0 : index
    %c16_254 = arith.constant 16 : index
    %208 = vector.load %arg10[%c4_252, %c0_253, %c16_254] : memref<10x8x144xbf16, #tpu.memory_space<vmem>>, vector<1x8x128xbf16>
    %209 = vector.shape_cast %208 : vector<1x8x128xbf16> to vector<8x128xbf16>
    %c16_255 = arith.constant 16 : index
    %c0_256 = arith.constant 0 : index
    %210 = vector.load %arg11[%c16_255, %c0_256] : memref<72x128xbf16, #tpu.memory_space<vmem>>, vector<8x128xbf16>
    tpu.vector_store %arg11[%c16_255, %c0_256], %209 {strides = array<i32>} : memref<72x128xbf16, #tpu.memory_space<vmem>>, vector<8x128xbf16>,
    %c5_257 = arith.constant 5 : index
    %c0_258 = arith.constant 0 : index
    %c0_259 = arith.constant 0 : index
    %211 = vector.load %arg10[%c5_257, %c0_258, %c0_259] : memref<10x8x144xbf16, #tpu.memory_space<vmem>>, vector<1x8x128xbf16>
    %212 = vector.shape_cast %211 : vector<1x8x128xbf16> to vector<8x128xbf16>
    %c24_260 = arith.constant 24 : index
    %c0_261 = arith.constant 0 : index
    %213 = vector.load %arg11[%c24_260, %c0_261] : memref<72x128xbf16, #tpu.memory_space<vmem>>, vector<8x128xbf16>
    tpu.vector_store %arg11[%c24_260, %c0_261], %212 {strides = array<i32>} : memref<72x128xbf16, #tpu.memory_space<vmem>>, vector<8x128xbf16>,
    %c5_262 = arith.constant 5 : index
    %c0_263 = arith.constant 0 : index
    %c8_264 = arith.constant 8 : index
    %214 = vector.load %arg10[%c5_262, %c0_263, %c8_264] : memref<10x8x144xbf16, #tpu.memory_space<vmem>>, vector<1x8x128xbf16>
    %215 = vector.shape_cast %214 : vector<1x8x128xbf16> to vector<8x128xbf16>
    %c32_265 = arith.constant 32 : index
    %c0_266 = arith.constant 0 : index
    %216 = vector.load %arg11[%c32_265, %c0_266] : memref<72x128xbf16, #tpu.memory_space<vmem>>, vector<8x128xbf16>
    tpu.vector_store %arg11[%c32_265, %c0_266], %215 {strides = array<i32>} : memref<72x128xbf16, #tpu.memory_space<vmem>>, vector<8x128xbf16>,
    %c5_267 = arith.constant 5 : index
    %c0_268 = arith.constant 0 : index
    %c16_269 = arith.constant 16 : index
    %217 = vector.load %arg10[%c5_267, %c0_268, %c16_269] : memref<10x8x144xbf16, #tpu.memory_space<vmem>>, vector<1x8x128xbf16>
    %218 = vector.shape_cast %217 : vector<1x8x128xbf16> to vector<8x128xbf16>
    %c40_270 = arith.constant 40 : index
    %c0_271 = arith.constant 0 : index
    %219 = vector.load %arg11[%c40_270, %c0_271] : memref<72x128xbf16, #tpu.memory_space<vmem>>, vector<8x128xbf16>
    tpu.vector_store %arg11[%c40_270, %c0_271], %218 {strides = array<i32>} : memref<72x128xbf16, #tpu.memory_space<vmem>>, vector<8x128xbf16>,
    %c6 = arith.constant 6 : index
    %c0_272 = arith.constant 0 : index
    %c0_273 = arith.constant 0 : index
    %220 = vector.load %arg10[%c6, %c0_272, %c0_273] : memref<10x8x144xbf16, #tpu.memory_space<vmem>>, vector<1x8x128xbf16>
    %221 = vector.shape_cast %220 : vector<1x8x128xbf16> to vector<8x128xbf16>
    %c48_274 = arith.constant 48 : index
    %c0_275 = arith.constant 0 : index
    %222 = vector.load %arg11[%c48_274, %c0_275] : memref<72x128xbf16, #tpu.memory_space<vmem>>, vector<8x128xbf16>
    tpu.vector_store %arg11[%c48_274, %c0_275], %221 {strides = array<i32>} : memref<72x128xbf16, #tpu.memory_space<vmem>>, vector<8x128xbf16>,
    %c6_276 = arith.constant 6 : index
    %c0_277 = arith.constant 0 : index
    %c8_278 = arith.constant 8 : index
    %223 = vector.load %arg10[%c6_276, %c0_277, %c8_278] : memref<10x8x144xbf16, #tpu.memory_space<vmem>>, vector<1x8x128xbf16>
    %224 = vector.shape_cast %223 : vector<1x8x128xbf16> to vector<8x128xbf16>
    %c56_279 = arith.constant 56 : index
    %c0_280 = arith.constant 0 : index
    %225 = vector.load %arg11[%c56_279, %c0_280] : memref<72x128xbf16, #tpu.memory_space<vmem>>, vector<8x128xbf16>
    tpu.vector_store %arg11[%c56_279, %c0_280], %224 {strides = array<i32>} : memref<72x128xbf16, #tpu.memory_space<vmem>>, vector<8x128xbf16>,
    %c6_281 = arith.constant 6 : index
    %c0_282 = arith.constant 0 : index
    %c16_283 = arith.constant 16 : index
    %226 = vector.load %arg10[%c6_281, %c0_282, %c16_283] : memref<10x8x144xbf16, #tpu.memory_space<vmem>>, vector<1x8x128xbf16>
    %227 = vector.shape_cast %226 : vector<1x8x128xbf16> to vector<8x128xbf16>
    %c64_284 = arith.constant 64 : index
    %c0_285 = arith.constant 0 : index
    %228 = vector.load %arg11[%c64_284, %c0_285] : memref<72x128xbf16, #tpu.memory_space<vmem>>, vector<8x128xbf16>
    tpu.vector_store %arg11[%c64_284, %c0_285], %227 {strides = array<i32>} : memref<72x128xbf16, #tpu.memory_space<vmem>>, vector<8x128xbf16>,
    %c0_286 = arith.constant 0 : index
    %c0_287 = arith.constant 0 : index
    %229 = vector.load %arg11[%c0_286, %c0_287] : memref<72x128xbf16, #tpu.memory_space<vmem>>, vector<72x128xbf16>
    %cst_288 = arith.constant dense<0.000000e+00> : vector<8x128xf32>
    %230 = tpu.matmul %23, %229, %cst_288 {dimension_numbers = #tpu.dot_dimension_numbers<[1], [0], [0], [1], [0, 0, 1, 1], [], []>} : vector<8x72xbf16>, vector<72x128xbf16>, vector<8x128xf32> -> vector<8x128xf32>
    %c4_289 = arith.constant 4 : index
    %c0_290 = arith.constant 0 : index
    %c0_291 = arith.constant 0 : index
    %231 = vector.load %arg6[%c4_289, %c0_290, %c0_291] : memref<8x8x128xf32, #tpu.memory_space<vmem>>, vector<1x8x128xf32>
    %232 = vector.shape_cast %231 : vector<1x8x128xf32> to vector<8x128xf32>
    %233 = vector.shape_cast %230 : vector<8x128xf32> to vector<1x8x128xf32>
    tpu.vector_store %arg6[%c4_289, %c0_290, %c0_291], %233 {strides = array<i32>} : memref<8x8x128xf32, #tpu.memory_space<vmem>>, vector<1x8x128xf32>,
    %cst_292 = arith.constant dense<0.000000e+00> : vector<8xf32>
    %234 = vector.multi_reduction <add>, %230, %cst_292 [1] : vector<8x128xf32> to vector<8xf32>
    %235 = vector.shape_cast %234 : vector<8xf32> to vector<8x1xf32>
    %236 = arith.addf %197, %235 : vector<8x1xf32>
    %237 = arith.mulf %230, %230 : vector<8x128xf32>
    %cst_293 = arith.constant dense<0.000000e+00> : vector<8xf32>
    %238 = vector.multi_reduction <add>, %237, %cst_293 [1] : vector<8x128xf32> to vector<8xf32>
    %239 = vector.shape_cast %238 : vector<8xf32> to vector<8x1xf32>
    %240 = arith.addf %201, %239 : vector<8x1xf32>
    %c5_294 = arith.constant 5 : index
    %c0_295 = arith.constant 0 : index
    %c0_296 = arith.constant 0 : index
    %241 = vector.load %arg10[%c5_294, %c0_295, %c0_296] : memref<10x8x144xbf16, #tpu.memory_space<vmem>>, vector<1x8x128xbf16>
    %242 = vector.shape_cast %241 : vector<1x8x128xbf16> to vector<8x128xbf16>
    %c0_297 = arith.constant 0 : index
    %c0_298 = arith.constant 0 : index
    %243 = vector.load %arg11[%c0_297, %c0_298] : memref<72x128xbf16, #tpu.memory_space<vmem>>, vector<8x128xbf16>
    tpu.vector_store %arg11[%c0_297, %c0_298], %242 {strides = array<i32>} : memref<72x128xbf16, #tpu.memory_space<vmem>>, vector<8x128xbf16>,
    %c5_299 = arith.constant 5 : index
    %c0_300 = arith.constant 0 : index
    %c8_301 = arith.constant 8 : index
    %244 = vector.load %arg10[%c5_299, %c0_300, %c8_301] : memref<10x8x144xbf16, #tpu.memory_space<vmem>>, vector<1x8x128xbf16>
    %245 = vector.shape_cast %244 : vector<1x8x128xbf16> to vector<8x128xbf16>
    %c8_302 = arith.constant 8 : index
    %c0_303 = arith.constant 0 : index
    %246 = vector.load %arg11[%c8_302, %c0_303] : memref<72x128xbf16, #tpu.memory_space<vmem>>, vector<8x128xbf16>
    tpu.vector_store %arg11[%c8_302, %c0_303], %245 {strides = array<i32>} : memref<72x128xbf16, #tpu.memory_space<vmem>>, vector<8x128xbf16>,
    %c5_304 = arith.constant 5 : index
    %c0_305 = arith.constant 0 : index
    %c16_306 = arith.constant 16 : index
    %247 = vector.load %arg10[%c5_304, %c0_305, %c16_306] : memref<10x8x144xbf16, #tpu.memory_space<vmem>>, vector<1x8x128xbf16>
    %248 = vector.shape_cast %247 : vector<1x8x128xbf16> to vector<8x128xbf16>
    %c16_307 = arith.constant 16 : index
    %c0_308 = arith.constant 0 : index
    %249 = vector.load %arg11[%c16_307, %c0_308] : memref<72x128xbf16, #tpu.memory_space<vmem>>, vector<8x128xbf16>
    tpu.vector_store %arg11[%c16_307, %c0_308], %248 {strides = array<i32>} : memref<72x128xbf16, #tpu.memory_space<vmem>>, vector<8x128xbf16>,
    %c6_309 = arith.constant 6 : index
    %c0_310 = arith.constant 0 : index
    %c0_311 = arith.constant 0 : index
    %250 = vector.load %arg10[%c6_309, %c0_310, %c0_311] : memref<10x8x144xbf16, #tpu.memory_space<vmem>>, vector<1x8x128xbf16>
    %251 = vector.shape_cast %250 : vector<1x8x128xbf16> to vector<8x128xbf16>
    %c24_312 = arith.constant 24 : index
    %c0_313 = arith.constant 0 : index
    %252 = vector.load %arg11[%c24_312, %c0_313] : memref<72x128xbf16, #tpu.memory_space<vmem>>, vector<8x128xbf16>
    tpu.vector_store %arg11[%c24_312, %c0_313], %251 {strides = array<i32>} : memref<72x128xbf16, #tpu.memory_space<vmem>>, vector<8x128xbf16>,
    %c6_314 = arith.constant 6 : index
    %c0_315 = arith.constant 0 : index
    %c8_316 = arith.constant 8 : index
    %253 = vector.load %arg10[%c6_314, %c0_315, %c8_316] : memref<10x8x144xbf16, #tpu.memory_space<vmem>>, vector<1x8x128xbf16>
    %254 = vector.shape_cast %253 : vector<1x8x128xbf16> to vector<8x128xbf16>
    %c32_317 = arith.constant 32 : index
    %c0_318 = arith.constant 0 : index
    %255 = vector.load %arg11[%c32_317, %c0_318] : memref<72x128xbf16, #tpu.memory_space<vmem>>, vector<8x128xbf16>
    tpu.vector_store %arg11[%c32_317, %c0_318], %254 {strides = array<i32>} : memref<72x128xbf16, #tpu.memory_space<vmem>>, vector<8x128xbf16>,
    %c6_319 = arith.constant 6 : index
    %c0_320 = arith.constant 0 : index
    %c16_321 = arith.constant 16 : index
    %256 = vector.load %arg10[%c6_319, %c0_320, %c16_321] : memref<10x8x144xbf16, #tpu.memory_space<vmem>>, vector<1x8x128xbf16>
    %257 = vector.shape_cast %256 : vector<1x8x128xbf16> to vector<8x128xbf16>
    %c40_322 = arith.constant 40 : index
    %c0_323 = arith.constant 0 : index
    %258 = vector.load %arg11[%c40_322, %c0_323] : memref<72x128xbf16, #tpu.memory_space<vmem>>, vector<8x128xbf16>
    tpu.vector_store %arg11[%c40_322, %c0_323], %257 {strides = array<i32>} : memref<72x128xbf16, #tpu.memory_space<vmem>>, vector<8x128xbf16>,
    %c7 = arith.constant 7 : index
    %c0_324 = arith.constant 0 : index
    %c0_325 = arith.constant 0 : index
    %259 = vector.load %arg10[%c7, %c0_324, %c0_325] : memref<10x8x144xbf16, #tpu.memory_space<vmem>>, vector<1x8x128xbf16>
    %260 = vector.shape_cast %259 : vector<1x8x128xbf16> to vector<8x128xbf16>
    %c48_326 = arith.constant 48 : index
    %c0_327 = arith.constant 0 : index
    %261 = vector.load %arg11[%c48_326, %c0_327] : memref<72x128xbf16, #tpu.memory_space<vmem>>, vector<8x128xbf16>
    tpu.vector_store %arg11[%c48_326, %c0_327], %260 {strides = array<i32>} : memref<72x128xbf16, #tpu.memory_space<vmem>>, vector<8x128xbf16>,
    %c7_328 = arith.constant 7 : index
    %c0_329 = arith.constant 0 : index
    %c8_330 = arith.constant 8 : index
    %262 = vector.load %arg10[%c7_328, %c0_329, %c8_330] : memref<10x8x144xbf16, #tpu.memory_space<vmem>>, vector<1x8x128xbf16>
    %263 = vector.shape_cast %262 : vector<1x8x128xbf16> to vector<8x128xbf16>
    %c56_331 = arith.constant 56 : index
    %c0_332 = arith.constant 0 : index
    %264 = vector.load %arg11[%c56_331, %c0_332] : memref<72x128xbf16, #tpu.memory_space<vmem>>, vector<8x128xbf16>
    tpu.vector_store %arg11[%c56_331, %c0_332], %263 {strides = array<i32>} : memref<72x128xbf16, #tpu.memory_space<vmem>>, vector<8x128xbf16>,
    %c7_333 = arith.constant 7 : index
    %c0_334 = arith.constant 0 : index
    %c16_335 = arith.constant 16 : index
    %265 = vector.load %arg10[%c7_333, %c0_334, %c16_335] : memref<10x8x144xbf16, #tpu.memory_space<vmem>>, vector<1x8x128xbf16>
    %266 = vector.shape_cast %265 : vector<1x8x128xbf16> to vector<8x128xbf16>
    %c64_336 = arith.constant 64 : index
    %c0_337 = arith.constant 0 : index
    %267 = vector.load %arg11[%c64_336, %c0_337] : memref<72x128xbf16, #tpu.memory_space<vmem>>, vector<8x128xbf16>
    tpu.vector_store %arg11[%c64_336, %c0_337], %266 {strides = array<i32>} : memref<72x128xbf16, #tpu.memory_space<vmem>>, vector<8x128xbf16>,
    %c0_338 = arith.constant 0 : index
    %c0_339 = arith.constant 0 : index
    %268 = vector.load %arg11[%c0_338, %c0_339] : memref<72x128xbf16, #tpu.memory_space<vmem>>, vector<72x128xbf16>
    %cst_340 = arith.constant dense<0.000000e+00> : vector<8x128xf32>
    %269 = tpu.matmul %23, %268, %cst_340 {dimension_numbers = #tpu.dot_dimension_numbers<[1], [0], [0], [1], [0, 0, 1, 1], [], []>} : vector<8x72xbf16>, vector<72x128xbf16>, vector<8x128xf32> -> vector<8x128xf32>
    %c5_341 = arith.constant 5 : index
    %c0_342 = arith.constant 0 : index
    %c0_343 = arith.constant 0 : index
    %270 = vector.load %arg6[%c5_341, %c0_342, %c0_343] : memref<8x8x128xf32, #tpu.memory_space<vmem>>, vector<1x8x128xf32>
    %271 = vector.shape_cast %270 : vector<1x8x128xf32> to vector<8x128xf32>
    %272 = vector.shape_cast %269 : vector<8x128xf32> to vector<1x8x128xf32>
    tpu.vector_store %arg6[%c5_341, %c0_342, %c0_343], %272 {strides = array<i32>} : memref<8x8x128xf32, #tpu.memory_space<vmem>>, vector<1x8x128xf32>,
    %cst_344 = arith.constant dense<0.000000e+00> : vector<8xf32>
    %273 = vector.multi_reduction <add>, %269, %cst_344 [1] : vector<8x128xf32> to vector<8xf32>
    %274 = vector.shape_cast %273 : vector<8xf32> to vector<8x1xf32>
    %275 = arith.addf %236, %274 : vector<8x1xf32>
    %276 = arith.mulf %269, %269 : vector<8x128xf32>
    %cst_345 = arith.constant dense<0.000000e+00> : vector<8xf32>
    %277 = vector.multi_reduction <add>, %276, %cst_345 [1] : vector<8x128xf32> to vector<8xf32>
    %278 = vector.shape_cast %277 : vector<8xf32> to vector<8x1xf32>
    %279 = arith.addf %240, %278 : vector<8x1xf32>
    %c6_346 = arith.constant 6 : index
    %c0_347 = arith.constant 0 : index
    %c0_348 = arith.constant 0 : index
    %280 = vector.load %arg10[%c6_346, %c0_347, %c0_348] : memref<10x8x144xbf16, #tpu.memory_space<vmem>>, vector<1x8x128xbf16>
    %281 = vector.shape_cast %280 : vector<1x8x128xbf16> to vector<8x128xbf16>
    %c0_349 = arith.constant 0 : index
    %c0_350 = arith.constant 0 : index
    %282 = vector.load %arg11[%c0_349, %c0_350] : memref<72x128xbf16, #tpu.memory_space<vmem>>, vector<8x128xbf16>
    tpu.vector_store %arg11[%c0_349, %c0_350], %281 {strides = array<i32>} : memref<72x128xbf16, #tpu.memory_space<vmem>>, vector<8x128xbf16>,
    %c6_351 = arith.constant 6 : index
    %c0_352 = arith.constant 0 : index
    %c8_353 = arith.constant 8 : index
    %283 = vector.load %arg10[%c6_351, %c0_352, %c8_353] : memref<10x8x144xbf16, #tpu.memory_space<vmem>>, vector<1x8x128xbf16>
    %284 = vector.shape_cast %283 : vector<1x8x128xbf16> to vector<8x128xbf16>
    %c8_354 = arith.constant 8 : index
    %c0_355 = arith.constant 0 : index
    %285 = vector.load %arg11[%c8_354, %c0_355] : memref<72x128xbf16, #tpu.memory_space<vmem>>, vector<8x128xbf16>
    tpu.vector_store %arg11[%c8_354, %c0_355], %284 {strides = array<i32>} : memref<72x128xbf16, #tpu.memory_space<vmem>>, vector<8x128xbf16>,
    %c6_356 = arith.constant 6 : index
    %c0_357 = arith.constant 0 : index
    %c16_358 = arith.constant 16 : index
    %286 = vector.load %arg10[%c6_356, %c0_357, %c16_358] : memref<10x8x144xbf16, #tpu.memory_space<vmem>>, vector<1x8x128xbf16>
    %287 = vector.shape_cast %286 : vector<1x8x128xbf16> to vector<8x128xbf16>
    %c16_359 = arith.constant 16 : index
    %c0_360 = arith.constant 0 : index
    %288 = vector.load %arg11[%c16_359, %c0_360] : memref<72x128xbf16, #tpu.memory_space<vmem>>, vector<8x128xbf16>
    tpu.vector_store %arg11[%c16_359, %c0_360], %287 {strides = array<i32>} : memref<72x128xbf16, #tpu.memory_space<vmem>>, vector<8x128xbf16>,
    %c7_361 = arith.constant 7 : index
    %c0_362 = arith.constant 0 : index
    %c0_363 = arith.constant 0 : index
    %289 = vector.load %arg10[%c7_361, %c0_362, %c0_363] : memref<10x8x144xbf16, #tpu.memory_space<vmem>>, vector<1x8x128xbf16>
    %290 = vector.shape_cast %289 : vector<1x8x128xbf16> to vector<8x128xbf16>
    %c24_364 = arith.constant 24 : index
    %c0_365 = arith.constant 0 : index
    %291 = vector.load %arg11[%c24_364, %c0_365] : memref<72x128xbf16, #tpu.memory_space<vmem>>, vector<8x128xbf16>
    tpu.vector_store %arg11[%c24_364, %c0_365], %290 {strides = array<i32>} : memref<72x128xbf16, #tpu.memory_space<vmem>>, vector<8x128xbf16>,
    %c7_366 = arith.constant 7 : index
    %c0_367 = arith.constant 0 : index
    %c8_368 = arith.constant 8 : index
    %292 = vector.load %arg10[%c7_366, %c0_367, %c8_368] : memref<10x8x144xbf16, #tpu.memory_space<vmem>>, vector<1x8x128xbf16>
    %293 = vector.shape_cast %292 : vector<1x8x128xbf16> to vector<8x128xbf16>
    %c32_369 = arith.constant 32 : index
    %c0_370 = arith.constant 0 : index
    %294 = vector.load %arg11[%c32_369, %c0_370] : memref<72x128xbf16, #tpu.memory_space<vmem>>, vector<8x128xbf16>
    tpu.vector_store %arg11[%c32_369, %c0_370], %293 {strides = array<i32>} : memref<72x128xbf16, #tpu.memory_space<vmem>>, vector<8x128xbf16>,
    %c7_371 = arith.constant 7 : index
    %c0_372 = arith.constant 0 : index
    %c16_373 = arith.constant 16 : index
    %295 = vector.load %arg10[%c7_371, %c0_372, %c16_373] : memref<10x8x144xbf16, #tpu.memory_space<vmem>>, vector<1x8x128xbf16>
    %296 = vector.shape_cast %295 : vector<1x8x128xbf16> to vector<8x128xbf16>
    %c40_374 = arith.constant 40 : index
    %c0_375 = arith.constant 0 : index
    %297 = vector.load %arg11[%c40_374, %c0_375] : memref<72x128xbf16, #tpu.memory_space<vmem>>, vector<8x128xbf16>
    tpu.vector_store %arg11[%c40_374, %c0_375], %296 {strides = array<i32>} : memref<72x128xbf16, #tpu.memory_space<vmem>>, vector<8x128xbf16>,
    %c8_376 = arith.constant 8 : index
    %c0_377 = arith.constant 0 : index
    %c0_378 = arith.constant 0 : index
    %298 = vector.load %arg10[%c8_376, %c0_377, %c0_378] : memref<10x8x144xbf16, #tpu.memory_space<vmem>>, vector<1x8x128xbf16>
    %299 = vector.shape_cast %298 : vector<1x8x128xbf16> to vector<8x128xbf16>
    %c48_379 = arith.constant 48 : index
    %c0_380 = arith.constant 0 : index
    %300 = vector.load %arg11[%c48_379, %c0_380] : memref<72x128xbf16, #tpu.memory_space<vmem>>, vector<8x128xbf16>
    tpu.vector_store %arg11[%c48_379, %c0_380], %299 {strides = array<i32>} : memref<72x128xbf16, #tpu.memory_space<vmem>>, vector<8x128xbf16>,
    %c8_381 = arith.constant 8 : index
    %c0_382 = arith.constant 0 : index
    %c8_383 = arith.constant 8 : index
    %301 = vector.load %arg10[%c8_381, %c0_382, %c8_383] : memref<10x8x144xbf16, #tpu.memory_space<vmem>>, vector<1x8x128xbf16>
    %302 = vector.shape_cast %301 : vector<1x8x128xbf16> to vector<8x128xbf16>
    %c56_384 = arith.constant 56 : index
    %c0_385 = arith.constant 0 : index
    %303 = vector.load %arg11[%c56_384, %c0_385] : memref<72x128xbf16, #tpu.memory_space<vmem>>, vector<8x128xbf16>
    tpu.vector_store %arg11[%c56_384, %c0_385], %302 {strides = array<i32>} : memref<72x128xbf16, #tpu.memory_space<vmem>>, vector<8x128xbf16>,
    %c8_386 = arith.constant 8 : index
    %c0_387 = arith.constant 0 : index
    %c16_388 = arith.constant 16 : index
    %304 = vector.load %arg10[%c8_386, %c0_387, %c16_388] : memref<10x8x144xbf16, #tpu.memory_space<vmem>>, vector<1x8x128xbf16>
    %305 = vector.shape_cast %304 : vector<1x8x128xbf16> to vector<8x128xbf16>
    %c64_389 = arith.constant 64 : index
    %c0_390 = arith.constant 0 : index
    %306 = vector.load %arg11[%c64_389, %c0_390] : memref<72x128xbf16, #tpu.memory_space<vmem>>, vector<8x128xbf16>
    tpu.vector_store %arg11[%c64_389, %c0_390], %305 {strides = array<i32>} : memref<72x128xbf16, #tpu.memory_space<vmem>>, vector<8x128xbf16>,
    %c0_391 = arith.constant 0 : index
    %c0_392 = arith.constant 0 : index
    %307 = vector.load %arg11[%c0_391, %c0_392] : memref<72x128xbf16, #tpu.memory_space<vmem>>, vector<72x128xbf16>
    %cst_393 = arith.constant dense<0.000000e+00> : vector<8x128xf32>
    %308 = tpu.matmul %23, %307, %cst_393 {dimension_numbers = #tpu.dot_dimension_numbers<[1], [0], [0], [1], [0, 0, 1, 1], [], []>} : vector<8x72xbf16>, vector<72x128xbf16>, vector<8x128xf32> -> vector<8x128xf32>
    %c6_394 = arith.constant 6 : index
    %c0_395 = arith.constant 0 : index
    %c0_396 = arith.constant 0 : index
    %309 = vector.load %arg6[%c6_394, %c0_395, %c0_396] : memref<8x8x128xf32, #tpu.memory_space<vmem>>, vector<1x8x128xf32>
    %310 = vector.shape_cast %309 : vector<1x8x128xf32> to vector<8x128xf32>
    %311 = vector.shape_cast %308 : vector<8x128xf32> to vector<1x8x128xf32>
    tpu.vector_store %arg6[%c6_394, %c0_395, %c0_396], %311 {strides = array<i32>} : memref<8x8x128xf32, #tpu.memory_space<vmem>>, vector<1x8x128xf32>,
    %cst_397 = arith.constant dense<0.000000e+00> : vector<8xf32>
    %312 = vector.multi_reduction <add>, %308, %cst_397 [1] : vector<8x128xf32> to vector<8xf32>
    %313 = vector.shape_cast %312 : vector<8xf32> to vector<8x1xf32>
    %314 = arith.addf %275, %313 : vector<8x1xf32>
    %315 = arith.mulf %308, %308 : vector<8x128xf32>
    %cst_398 = arith.constant dense<0.000000e+00> : vector<8xf32>
    %316 = vector.multi_reduction <add>, %315, %cst_398 [1] : vector<8x128xf32> to vector<8xf32>
    %317 = vector.shape_cast %316 : vector<8xf32> to vector<8x1xf32>
    %318 = arith.addf %279, %317 : vector<8x1xf32>
    %c7_399 = arith.constant 7 : index
    %c0_400 = arith.constant 0 : index
    %c0_401 = arith.constant 0 : index
    %319 = vector.load %arg10[%c7_399, %c0_400, %c0_401] : memref<10x8x144xbf16, #tpu.memory_space<vmem>>, vector<1x8x128xbf16>
    %320 = vector.shape_cast %319 : vector<1x8x128xbf16> to vector<8x128xbf16>
    %c0_402 = arith.constant 0 : index
    %c0_403 = arith.constant 0 : index
    %321 = vector.load %arg11[%c0_402, %c0_403] : memref<72x128xbf16, #tpu.memory_space<vmem>>, vector<8x128xbf16>
    tpu.vector_store %arg11[%c0_402, %c0_403], %320 {strides = array<i32>} : memref<72x128xbf16, #tpu.memory_space<vmem>>, vector<8x128xbf16>,
    %c7_404 = arith.constant 7 : index
    %c0_405 = arith.constant 0 : index
    %c8_406 = arith.constant 8 : index
    %322 = vector.load %arg10[%c7_404, %c0_405, %c8_406] : memref<10x8x144xbf16, #tpu.memory_space<vmem>>, vector<1x8x128xbf16>
    %323 = vector.shape_cast %322 : vector<1x8x128xbf16> to vector<8x128xbf16>
    %c8_407 = arith.constant 8 : index
    %c0_408 = arith.constant 0 : index
    %324 = vector.load %arg11[%c8_407, %c0_408] : memref<72x128xbf16, #tpu.memory_space<vmem>>, vector<8x128xbf16>
    tpu.vector_store %arg11[%c8_407, %c0_408], %323 {strides = array<i32>} : memref<72x128xbf16, #tpu.memory_space<vmem>>, vector<8x128xbf16>,
    %c7_409 = arith.constant 7 : index
    %c0_410 = arith.constant 0 : index
    %c16_411 = arith.constant 16 : index
    %325 = vector.load %arg10[%c7_409, %c0_410, %c16_411] : memref<10x8x144xbf16, #tpu.memory_space<vmem>>, vector<1x8x128xbf16>
    %326 = vector.shape_cast %325 : vector<1x8x128xbf16> to vector<8x128xbf16>
    %c16_412 = arith.constant 16 : index
    %c0_413 = arith.constant 0 : index
    %327 = vector.load %arg11[%c16_412, %c0_413] : memref<72x128xbf16, #tpu.memory_space<vmem>>, vector<8x128xbf16>
    tpu.vector_store %arg11[%c16_412, %c0_413], %326 {strides = array<i32>} : memref<72x128xbf16, #tpu.memory_space<vmem>>, vector<8x128xbf16>,
    %c8_414 = arith.constant 8 : index
    %c0_415 = arith.constant 0 : index
    %c0_416 = arith.constant 0 : index
    %328 = vector.load %arg10[%c8_414, %c0_415, %c0_416] : memref<10x8x144xbf16, #tpu.memory_space<vmem>>, vector<1x8x128xbf16>
    %329 = vector.shape_cast %328 : vector<1x8x128xbf16> to vector<8x128xbf16>
    %c24_417 = arith.constant 24 : index
    %c0_418 = arith.constant 0 : index
    %330 = vector.load %arg11[%c24_417, %c0_418] : memref<72x128xbf16, #tpu.memory_space<vmem>>, vector<8x128xbf16>
    tpu.vector_store %arg11[%c24_417, %c0_418], %329 {strides = array<i32>} : memref<72x128xbf16, #tpu.memory_space<vmem>>, vector<8x128xbf16>,
    %c8_419 = arith.constant 8 : index
    %c0_420 = arith.constant 0 : index
    %c8_421 = arith.constant 8 : index
    %331 = vector.load %arg10[%c8_419, %c0_420, %c8_421] : memref<10x8x144xbf16, #tpu.memory_space<vmem>>, vector<1x8x128xbf16>
    %332 = vector.shape_cast %331 : vector<1x8x128xbf16> to vector<8x128xbf16>
    %c32_422 = arith.constant 32 : index
    %c0_423 = arith.constant 0 : index
    %333 = vector.load %arg11[%c32_422, %c0_423] : memref<72x128xbf16, #tpu.memory_space<vmem>>, vector<8x128xbf16>
    tpu.vector_store %arg11[%c32_422, %c0_423], %332 {strides = array<i32>} : memref<72x128xbf16, #tpu.memory_space<vmem>>, vector<8x128xbf16>,
    %c8_424 = arith.constant 8 : index
    %c0_425 = arith.constant 0 : index
    %c16_426 = arith.constant 16 : index
    %334 = vector.load %arg10[%c8_424, %c0_425, %c16_426] : memref<10x8x144xbf16, #tpu.memory_space<vmem>>, vector<1x8x128xbf16>
    %335 = vector.shape_cast %334 : vector<1x8x128xbf16> to vector<8x128xbf16>
    %c40_427 = arith.constant 40 : index
    %c0_428 = arith.constant 0 : index
    %336 = vector.load %arg11[%c40_427, %c0_428] : memref<72x128xbf16, #tpu.memory_space<vmem>>, vector<8x128xbf16>
    tpu.vector_store %arg11[%c40_427, %c0_428], %335 {strides = array<i32>} : memref<72x128xbf16, #tpu.memory_space<vmem>>, vector<8x128xbf16>,
    %c9 = arith.constant 9 : index
    %c0_429 = arith.constant 0 : index
    %c0_430 = arith.constant 0 : index
    %337 = vector.load %arg10[%c9, %c0_429, %c0_430] : memref<10x8x144xbf16, #tpu.memory_space<vmem>>, vector<1x8x128xbf16>
    %338 = vector.shape_cast %337 : vector<1x8x128xbf16> to vector<8x128xbf16>
    %c48_431 = arith.constant 48 : index
    %c0_432 = arith.constant 0 : index
    %339 = vector.load %arg11[%c48_431, %c0_432] : memref<72x128xbf16, #tpu.memory_space<vmem>>, vector<8x128xbf16>
    tpu.vector_store %arg11[%c48_431, %c0_432], %338 {strides = array<i32>} : memref<72x128xbf16, #tpu.memory_space<vmem>>, vector<8x128xbf16>,
    %c9_433 = arith.constant 9 : index
    %c0_434 = arith.constant 0 : index
    %c8_435 = arith.constant 8 : index
    %340 = vector.load %arg10[%c9_433, %c0_434, %c8_435] : memref<10x8x144xbf16, #tpu.memory_space<vmem>>, vector<1x8x128xbf16>
    %341 = vector.shape_cast %340 : vector<1x8x128xbf16> to vector<8x128xbf16>
    %c56_436 = arith.constant 56 : index
    %c0_437 = arith.constant 0 : index
    %342 = vector.load %arg11[%c56_436, %c0_437] : memref<72x128xbf16, #tpu.memory_space<vmem>>, vector<8x128xbf16>
    tpu.vector_store %arg11[%c56_436, %c0_437], %341 {strides = array<i32>} : memref<72x128xbf16, #tpu.memory_space<vmem>>, vector<8x128xbf16>,
    %c9_438 = arith.constant 9 : index
    %c0_439 = arith.constant 0 : index
    %c16_440 = arith.constant 16 : index
    %343 = vector.load %arg10[%c9_438, %c0_439, %c16_440] : memref<10x8x144xbf16, #tpu.memory_space<vmem>>, vector<1x8x128xbf16>
    %344 = vector.shape_cast %343 : vector<1x8x128xbf16> to vector<8x128xbf16>
    %c64_441 = arith.constant 64 : index
    %c0_442 = arith.constant 0 : index
    %345 = vector.load %arg11[%c64_441, %c0_442] : memref<72x128xbf16, #tpu.memory_space<vmem>>, vector<8x128xbf16>
    tpu.vector_store %arg11[%c64_441, %c0_442], %344 {strides = array<i32>} : memref<72x128xbf16, #tpu.memory_space<vmem>>, vector<8x128xbf16>,
    %c0_443 = arith.constant 0 : index
    %c0_444 = arith.constant 0 : index
    %346 = vector.load %arg11[%c0_443, %c0_444] : memref<72x128xbf16, #tpu.memory_space<vmem>>, vector<72x128xbf16>
    %cst_445 = arith.constant dense<0.000000e+00> : vector<8x128xf32>
    %347 = tpu.matmul %23, %346, %cst_445 {dimension_numbers = #tpu.dot_dimension_numbers<[1], [0], [0], [1], [0, 0, 1, 1], [], []>} : vector<8x72xbf16>, vector<72x128xbf16>, vector<8x128xf32> -> vector<8x128xf32>
    %c7_446 = arith.constant 7 : index
    %c0_447 = arith.constant 0 : index
    %c0_448 = arith.constant 0 : index
    %348 = vector.load %arg6[%c7_446, %c0_447, %c0_448] : memref<8x8x128xf32, #tpu.memory_space<vmem>>, vector<1x8x128xf32>
    %349 = vector.shape_cast %348 : vector<1x8x128xf32> to vector<8x128xf32>
    %350 = vector.shape_cast %347 : vector<8x128xf32> to vector<1x8x128xf32>
    tpu.vector_store %arg6[%c7_446, %c0_447, %c0_448], %350 {strides = array<i32>} : memref<8x8x128xf32, #tpu.memory_space<vmem>>, vector<1x8x128xf32>,
    %cst_449 = arith.constant dense<0.000000e+00> : vector<8xf32>
    %351 = vector.multi_reduction <add>, %347, %cst_449 [1] : vector<8x128xf32> to vector<8xf32>
    %352 = vector.shape_cast %351 : vector<8xf32> to vector<8x1xf32>
    %353 = arith.addf %314, %352 : vector<8x1xf32>
    %354 = arith.mulf %347, %347 : vector<8x128xf32>
    %cst_450 = arith.constant dense<0.000000e+00> : vector<8xf32>
    %355 = vector.multi_reduction <add>, %354, %cst_450 [1] : vector<8x128xf32> to vector<8xf32>
    %356 = vector.shape_cast %355 : vector<8xf32> to vector<8x1xf32>
    %357 = arith.addf %318, %356 : vector<8x1xf32>
    %c0_451 = arith.constant 0 : index
    %c0_452 = arith.constant 0 : index
    %c0_453 = arith.constant 0 : index
    %c0_454 = arith.constant 0 : index
    %358 = vector.load %arg7[%c0_451, %c0_452, %c0_453, %c0_454] : memref<1x1x8x1xf32, #tpu.memory_space<vmem>>, vector<1x1x8x1xf32>
    %359 = vector.shape_cast %358 : vector<1x1x8x1xf32> to vector<8x1xf32>
    %360 = vector.shape_cast %353 : vector<8x1xf32> to vector<1x1x8x1xf32>
    tpu.vector_store %arg7[%c0_451, %c0_452, %c0_453, %c0_454], %360 {strides = array<i32>} : memref<1x1x8x1xf32, #tpu.memory_space<vmem>>, vector<1x1x8x1xf32>,
    %c0_455 = arith.constant 0 : index
    %c0_456 = arith.constant 0 : index
    %c0_457 = arith.constant 0 : index
    %c0_458 = arith.constant 0 : index
    %361 = vector.load %arg8[%c0_455, %c0_456, %c0_457, %c0_458] : memref<1x1x8x1xf32, #tpu.memory_space<vmem>>, vector<1x1x8x1xf32>
    %362 = vector.shape_cast %361 : vector<1x1x8x1xf32> to vector<8x1xf32>
    %363 = vector.shape_cast %357 : vector<8x1xf32> to vector<1x1x8x1xf32>
    tpu.vector_store %arg8[%c0_455, %c0_456, %c0_457, %c0_458], %363 {strides = array<i32>} : memref<1x1x8x1xf32, #tpu.memory_space<vmem>>, vector<1x1x8x1xf32>,
    return
  }
  func.func @transform_1(%arg0: i32, %arg1: i32) -> (i32, i32) {
    %c0_i32 = arith.constant 0 : i32
    %c0_i32_0 = arith.constant 0 : i32
    %c0_i32_1 = arith.constant 0 : i32
    return %c0_i32, %c0_i32_0 : i32, i32
  }
  func.func @transform_2(%arg0: i32, %arg1: i32) -> (i32, i32, i32) {
    %c0_i32 = arith.constant 0 : i32
    %c0_i32_0 = arith.constant 0 : i32
    %c0_i32_1 = arith.constant 0 : i32
    %c0_i32_2 = arith.constant 0 : i32
    return %c0_i32, %c0_i32_0, %c0_i32_1 : i32, i32, i32
  }
  func.func @transform_3(%arg0: i32, %arg1: i32) -> (i32, i32, i32) {
    %c0_i32 = arith.constant 0 : i32
    %c0_i32_0 = arith.constant 0 : i32
    %c0_i32_1 = arith.constant 0 : i32
    %c0_i32_2 = arith.constant 0 : i32
    return %c0_i32, %c0_i32_0, %c0_i32_1 : i32, i32, i32
  }
  func.func @transform_4(%arg0: i32, %arg1: i32) -> (i32, i32, i32) {
    %c2_i32 = arith.constant 2 : i32
    %0 = arith.muli %arg0, %c2_i32 : i32
    %1 = arith.addi %0, %arg1 : i32
    %c0_i32 = arith.constant 0 : i32
    %c0_i32_0 = arith.constant 0 : i32
    %c0_i32_1 = arith.constant 0 : i32
    return %1, %c0_i32, %c0_i32_0 : i32, i32, i32
  }
  func.func @transform_5(%arg0: i32, %arg1: i32) -> (i32, i32, i32, i32) {
    %c0_i32 = arith.constant 0 : i32
    %c0_i32_0 = arith.constant 0 : i32
    %c0_i32_1 = arith.constant 0 : i32
    return %arg0, %arg1, %c0_i32, %c0_i32_0 : i32, i32, i32, i32
  }
  func.func @transform_6(%arg0: i32, %arg1: i32) -> (i32, i32, i32, i32) {
    %c0_i32 = arith.constant 0 : i32
    %c0_i32_0 = arith.constant 0 : i32
    %c0_i32_1 = arith.constant 0 : i32
    return %arg0, %arg1, %c0_i32, %c0_i32_0 : i32, i32, i32, i32
  }
}

module attributes {stable_mosaic.version = 11 : i64} {
  func.func @_bn_relu_kernel(%arg0: i32, %arg1: memref<8x8x128xf32, #tpu.memory_space<vmem>>, %arg2: memref<1x8x1xf32, #tpu.memory_space<vmem>>, %arg3: memref<1x8x1xf32, #tpu.memory_space<vmem>>, %arg4: memref<8x8x128xf32, #tpu.memory_space<vmem>>) attributes {dimension_semantics = [#tpu.dimension_semantics<parallel>], iteration_bounds = array<i64: 4>, scalar_prefetch = 0 : i64, scratch_operands = 0 : i64, tpu.core_type = #tpu.core_type<tc>, window_params = [{transform_indices = @transform_0, window_bounds = array<i64: 8, 8, 128>}, {pipeline_mode = #tpu.pipeline_mode<synchronous>, transform_indices = @transform_1, window_bounds = array<i64: 1, 8, 1>}, {pipeline_mode = #tpu.pipeline_mode<synchronous>, transform_indices = @transform_2, window_bounds = array<i64: 1, 8, 1>}, {transform_indices = @transform_3, window_bounds = array<i64: 8, 8, 128>}]} {
    %c0 = arith.constant 0 : index
    %c0_0 = arith.constant 0 : index
    %c0_1 = arith.constant 0 : index
    %0 = vector.load %arg1[%c0, %c0_0, %c0_1] : memref<8x8x128xf32, #tpu.memory_space<vmem>>, vector<8x8x128xf32>
    %c0_2 = arith.constant 0 : index
    %c0_3 = arith.constant 0 : index
    %c0_4 = arith.constant 0 : index
    %1 = vector.load %arg2[%c0_2, %c0_3, %c0_4] : memref<1x8x1xf32, #tpu.memory_space<vmem>>, vector<1x8x1xf32>
    %2 = vector.broadcast %1 : vector<1x8x1xf32> to vector<8x8x128xf32>
    %3 = arith.mulf %0, %2 : vector<8x8x128xf32>
    %c0_5 = arith.constant 0 : index
    %c0_6 = arith.constant 0 : index
    %c0_7 = arith.constant 0 : index
    %4 = vector.load %arg3[%c0_5, %c0_6, %c0_7] : memref<1x8x1xf32, #tpu.memory_space<vmem>>, vector<1x8x1xf32>
    %5 = vector.broadcast %4 : vector<1x8x1xf32> to vector<8x8x128xf32>
    %6 = arith.addf %3, %5 : vector<8x8x128xf32>
    %cst = arith.constant 0.000000e+00 : f32
    %7 = vector.broadcast %cst : f32 to vector<8x8x128xf32>
    %8 = arith.maximumf %6, %7 : vector<8x8x128xf32>
    %c0_8 = arith.constant 0 : index
    %c0_9 = arith.constant 0 : index
    %c0_10 = arith.constant 0 : index
    %9 = vector.load %arg4[%c0_8, %c0_9, %c0_10] : memref<8x8x128xf32, #tpu.memory_space<vmem>>, vector<8x8x128xf32>
    tpu.vector_store %arg4[%c0_8, %c0_9, %c0_10], %8 {strides = array<i32>} : memref<8x8x128xf32, #tpu.memory_space<vmem>>, vector<8x8x128xf32>,
    return
  }
  func.func @transform_0(%arg0: i32) -> (i32, i32, i32) {
    %c0_i32 = arith.constant 0 : i32
    %c0_i32_0 = arith.constant 0 : i32
    %c0_i32_1 = arith.constant 0 : i32
    return %arg0, %c0_i32, %c0_i32_0 : i32, i32, i32
  }
  func.func @transform_1(%arg0: i32) -> (i32, i32, i32) {
    %c0_i32 = arith.constant 0 : i32
    %c0_i32_0 = arith.constant 0 : i32
    %c0_i32_1 = arith.constant 0 : i32
    %c0_i32_2 = arith.constant 0 : i32
    return %c0_i32, %c0_i32_0, %c0_i32_1 : i32, i32, i32
  }
  func.func @transform_2(%arg0: i32) -> (i32, i32, i32) {
    %c0_i32 = arith.constant 0 : i32
    %c0_i32_0 = arith.constant 0 : i32
    %c0_i32_1 = arith.constant 0 : i32
    %c0_i32_2 = arith.constant 0 : i32
    return %c0_i32, %c0_i32_0, %c0_i32_1 : i32, i32, i32
  }
  func.func @transform_3(%arg0: i32) -> (i32, i32, i32) {
    %c0_i32 = arith.constant 0 : i32
    %c0_i32_0 = arith.constant 0 : i32
    %c0_i32_1 = arith.constant 0 : i32
    return %arg0, %c0_i32, %c0_i32_0 : i32, i32, i32
  }
}

</mosaic_0001>

<llo_original>
// kernel: fcn_conv3_forward.7
$region0: #{fcn_conv3_forward.7}
  #allocation0 [shape = 'u32[]', space=smem, size = 0x4, offset = 0x4, fixed_abs, tag = 'smem constant byte address 0x4 - core index']
  #allocation1 [shape = 'u32[72,128]{1,0:T(1,128)}', space=vmem, size = 0x9000, scoped, tag = 'internal scratch']
  %s0 = inlined_call_operand.vmem [shape: f32[32,8,128], index: 0, kind: input, shape index: {}]
  %s1 = inlined_call_operand.vmem [shape: f32[1,8,1], index: 1, kind: input, shape index: {}]
  %s2 = inlined_call_operand.vmem [shape: f32[1,8,1], index: 2, kind: input, shape index: {}]
  %s3 = inlined_call_operand.vmem [shape: f32[32,8,128], index: 3, kind: output, shape index: {}]
  %s4 = sld [smem:[#allocation0]]
  $region45: #{fcn_conv3_forward.7} parent=0
    _
  %s6 = ssub.s32 1, %s4
  %s7 = scalar_select 0, %s6, %s4
  loop: start=0, step=1, limit=6
  $region2: #{fcn_conv3_forward.7} parent=0 // loop_pre_header
    _
  $region3: #{fcn_conv3_forward.7} parent=0 // loop_header
    %s9 = sphi 0, %s13
    %p10 = scmp.ge.s32.totalorder %s9, 6
    %s19 = sphi 0, %s21
    %s22 = sphi 0, %s19
    %s23 = sphi 0, %s22
    %s39 = sphi 0, %s23
    %s43 = sphi 0, %s43
    %s45 = sphi 0, %s43
    %s46 = sphi 0, %s45
    %s60 = sphi 0, %s46
    %s64 = sphi 0, %s64
    %s66 = sphi 0, %s64
    %s67 = sphi 0, %s66
    %s81 = sphi 0, %s67
    %s87 = sphi 0, %s89
    %s90 = sphi 0, %s87
    %s91 = sphi 0, %s90
    %s107 = sphi 0, %s91
  $region4: #{fcn_conv3_forward.7} parent=0 // loop_header_branch
    %12 = sbr.rel (%p10) target = $region8
  $region5: #{fcn_conv3_forward.7} parent=0 // loop_body
    %s14 = ssub.s32 %s9, 1
    %s15 = ssub.s32 %s9, 2
    %s16 = sadd.s32 %s9, 1
    %s17 = ssub.s32 %s9, %s16
    %p18 = scmp.eq.s32.totalorder %s17, 0
    %s20 = sadd.s32 %s19, 1
    %s21 = scalar_select %p18, %s19, %s20
    %p24 = pneg %p18
    %p25 = scmp.eq.s32.totalorder %s9, 3
    %p26 = por %p24, %p25
    %p27 = scmp.ne.s32.totalorder %s19, %s22
    %p28 = scmp.eq.s32.totalorder %s9, 0
    %p29 = por %p27, %p28
    %p30 = scmp.ne.s32.totalorder %s19, %s22
    %p31 = scmp.eq.s32.totalorder %s14, 3
    %p32 = por %p30, %p31
    %p33 = scmp.ne.s32.totalorder %s22, %s23
    %p34 = scmp.eq.s32.totalorder %s14, 0
    %p35 = por %p33, %p34
    %p36 = scmp.ne.s32.totalorder %s22, %s23
    %p37 = scmp.eq.s32.totalorder %s15, 3
    %p38 = por %p36, %p37
    %p40 = scmp.ne.s32.totalorder %s23, %s39
    %p41 = scmp.eq.s32.totalorder %s15, 0
    %p42 = por %p40, %p41
    %s44 = sadd.s32 %s43, 1
    %p47 = scmp.eq.s32.totalorder %s9, 3
    %p48 = scmp.ne.s32.totalorder %s43, %s45
    %p49 = scmp.eq.s32.totalorder %s9, 0
    %p50 = por %p48, %p49
    %p51 = scmp.ne.s32.totalorder %s43, %s45
    %p52 = scmp.eq.s32.totalorder %s14, 3
    %p53 = por %p51, %p52
    %p54 = scmp.ne.s32.totalorder %s45, %s46
    %p55 = scmp.eq.s32.totalorder %s14, 0
    %p56 = por %p54, %p55
    %p57 = scmp.ne.s32.totalorder %s45, %s46
    %p58 = scmp.eq.s32.totalorder %s15, 3
    %p59 = por %p57, %p58
    %p61 = scmp.ne.s32.totalorder %s46, %s60
    %p62 = scmp.eq.s32.totalorder %s15, 0
    %p63 = por %p61, %p62
    %s65 = sadd.s32 %s64, 1
    %p68 = scmp.eq.s32.totalorder %s9, 3
    %p69 = scmp.ne.s32.totalorder %s64, %s66
    %p70 = scmp.eq.s32.totalorder %s9, 0
    %p71 = por %p69, %p70
    %p72 = scmp.ne.s32.totalorder %s64, %s66
    %p73 = scmp.eq.s32.totalorder %s14, 3
    %p74 = por %p72, %p73
    %p75 = scmp.ne.s32.totalorder %s66, %s67
    %p76 = scmp.eq.s32.totalorder %s14, 0
    %p77 = por %p75, %p76
    %p78 = scmp.ne.s32.totalorder %s66, %s67
    %p79 = scmp.eq.s32.totalorder %s15, 3
    %p80 = por %p78, %p79
    %p82 = scmp.ne.s32.totalorder %s67, %s81
    %p83 = scmp.eq.s32.totalorder %s15, 0
    %p84 = por %p82, %p83
    %s85 = ssub.s32 %s9, %s16
    %p86 = scmp.eq.s32.totalorder %s85, 0
    %s88 = sadd.s32 %s87, 1
    %s89 = scalar_select %p86, %s87, %s88
    %p92 = pneg %p86
    %p93 = scmp.eq.s32.totalorder %s9, 3
    %p94 = por %p92, %p93
    %p95 = scmp.ne.s32.totalorder %s87, %s90
    %p96 = scmp.eq.s32.totalorder %s9, 0
    %p97 = por %p95, %p96
    %p98 = scmp.ne.s32.totalorder %s87, %s90
    %p99 = scmp.eq.s32.totalorder %s14, 3
    %p100 = por %p98, %p99
    %p101 = scmp.ne.s32.totalorder %s90, %s91
    %p102 = scmp.eq.s32.totalorder %s14, 0
    %p103 = por %p101, %p102
    %p104 = scmp.ne.s32.totalorder %s90, %s91
    %p105 = scmp.eq.s32.totalorder %s15, 3
    %p106 = por %p104, %p105
    %p108 = scmp.ne.s32.totalorder %s91, %s107
    %p109 = scmp.eq.s32.totalorder %s15, 0
    %p110 = por %p108, %p109
    %p111 = scmp.le.s32.totalorder 1, %s9
    %p112 = scmp.lt.s32.totalorder %s9, 5
    %p113 = pnand %p111, %p112
    %p114 = pneg %p113
    // Predicated region
    $region9: #{fcn_conv3_forward.7} parent=5 // pred_check
      _
    $region10: #{fcn_conv3_forward.7} parent=5 // pred_check_branch
      %116 = sbr.rel (%p113) target = $region12
    $region11: #{fcn_conv3_forward.7} parent=5 // pred_region
      %s117 = ssub.s32 %s9, 1
      // Predicated region
      $region13: #{fcn_conv3_forward.7} parent=11 // pred_check
        %p118 = pneg %p56
      $region14: #{fcn_conv3_forward.7} parent=11 // pred_check_branch
        %120 = sbr.rel (%p118) target = $region16
      $region15: #{fcn_conv3_forward.7} parent=11 // pred_region
        _
      $region16: #{fcn_conv3_forward.7} parent=11 // pred_fallthru
        _
      // Predicated region
      $region17: #{fcn_conv3_forward.7} parent=11 // pred_check
        %p121 = pneg %p77
      $region18: #{fcn_conv3_forward.7} parent=11 // pred_check_branch
        %123 = sbr.rel (%p121) target = $region20
      $region19: #{fcn_conv3_forward.7} parent=11 // pred_region
        _
      $region20: #{fcn_conv3_forward.7} parent=11 // pred_fallthru
        _
    $region12: #{fcn_conv3_forward.7} parent=5 // pred_fallthru
      _
    %p124 = scmp.lt.s32.totalorder %s9, 4
    // Predicated region
    $region21: #{fcn_conv3_forward.7} parent=5 // pred_check
      %p125 = pneg %p124
    $region22: #{fcn_conv3_forward.7} parent=5 // pred_check_branch
      %127 = sbr.rel (%p125) target = $region24
    $region23: #{fcn_conv3_forward.7} parent=5 // pred_region
      // Predicated region
      $region25: #{fcn_conv3_forward.7} parent=23 // pred_check
        %p128 = pneg %p29
      $region26: #{fcn_conv3_forward.7} parent=23 // pred_check_branch
        %130 = sbr.rel (%p128) target = $region28
      $region27: #{fcn_conv3_forward.7} parent=23 // pred_region
        %s131 = smul.u32 8, %s9
        %p132 = scmp.lt.s32.totalorder %s131, 31
        %s133 = scalar_select %p132, %s131, 31
        %s134 = smul.addr %s133, 8
        %s135 = scalar_lea.vmem %s0, %s134
        %s136 = smul.u32 8, %s9
      $region28: #{fcn_conv3_forward.7} parent=23 // pred_fallthru
        _
    $region24: #{fcn_conv3_forward.7} parent=5 // pred_fallthru
      _
    %p137 = scmp.le.s32.totalorder 1, %s9
    %p138 = scmp.lt.s32.totalorder %s9, 5
    %p139 = pnand %p137, %p138
    %p140 = pneg %p139
    // Predicated region
    $region29: #{fcn_conv3_forward.7} parent=5 // pred_check
      _
    $region30: #{fcn_conv3_forward.7} parent=5 // pred_check_branch
      %142 = sbr.rel (%p139) target = $region32
    $region31: #{fcn_conv3_forward.7} parent=5 // pred_region
      %s143 = ssub.s32 %s9, 1
      %s144 = smul.u32 8, %s14
      %p145 = scmp.lt.s32.totalorder %s144, 31
      %s146 = scalar_select %p145, %s144, 31
      %s147 = smul.addr %s146, 8
      %s148 = scalar_lea.vmem %s0, %s147
      %p149 = pneg %p35
      %p150 = pneg %p32
      %p151 = pneg %p56
      %p152 = pneg %p53
      %p153 = pneg %p77
      %p154 = pneg %p74
      %p155 = pneg %p103
      %p156 = pneg %p100
      %s157 = smul.u32 8, %s14
      %p158 = scmp.lt.s32.totalorder %s157, 31
      %s159 = scalar_select %p158, %s157, 31
      %s160 = smul.addr %s159, 8
      %s161 = scalar_lea.vmem %s3, %s160
      %s162 = smul.u32 8, %s14
      %p163 = scmp.lt.s32.totalorder %s162, 31
      %s164 = scalar_select %p163, %s162, 31
      %s165 = smul.addr %s164, 8
      %s166 = scalar_lea.vmem %s0, %s165
      %s167 = smul.u32 8, %s14
      %s168 = smul.u32 8, %s14
      %p169 = scmp.lt.s32.totalorder %s168, 31
      %s170 = scalar_select %p169, %s168, 31
      %s171 = smul.addr %s170, 8
      %s172 = scalar_lea.vmem %s3, %s171
      %s173 = smul.u32 8, %s14
      %v174 = vld [vmem:[%s166] sm:$0xff]
      %v175 = vld [vmem:[%s166 + $0x8] sm:$0xff]
      %v176 = vld [vmem:[%s166 + $0x10] sm:$0xff]
      %v177 = vld [vmem:[%s166 + $0x18] sm:$0xff]
      %v178 = vld [vmem:[%s166 + $0x20] sm:$0xff]
      %v179 = vld [vmem:[%s166 + $0x28] sm:$0xff]
      %v180 = vld [vmem:[%s166 + $0x30] sm:$0xff]
      %v181 = vld [vmem:[%s166 + $0x38] sm:$0xff]
      %v182 = vld [vmem:[%s1] sm:$0xff]
      %184 = vset.pattern.permute.xlu0 0
      %185 = vperm.xlu0 %184, %v182
      %v186 = vpop.permute.xlu0 %185
      %v188 = vmul.f32 %v174, %v186
      %v189 = vmul.f32 %v175, %v186
      %v190 = vmul.f32 %v176, %v186
      %v191 = vmul.f32 %v177, %v186
      %v192 = vmul.f32 %v178, %v186
      %v193 = vmul.f32 %v179, %v186
      %v194 = vmul.f32 %v180, %v186
      %v195 = vmul.f32 %v181, %v186
      %v196 = vld [vmem:[%s2] sm:$0xff]
      %198 = vset.pattern.permute.xlu0 0
      %199 = vperm.xlu0 %198, %v196
      %v200 = vpop.permute.xlu0 %199
      %v202 = vadd.f32 %v188, %v200
      %v203 = vadd.f32 %v189, %v200
      %v204 = vadd.f32 %v190, %v200
      %v205 = vadd.f32 %v191, %v200
      %v206 = vadd.f32 %v192, %v200
      %v207 = vadd.f32 %v193, %v200
      %v208 = vadd.f32 %v194, %v200
      %v209 = vadd.f32 %v195, %v200
      %v210 = vmax.f32 %v202, 0.0
      %v211 = vmax.f32 %v203, 0.0
      %v212 = vmax.f32 %v204, 0.0
      %v213 = vmax.f32 %v205, 0.0
      %v214 = vmax.f32 %v206, 0.0
      %v215 = vmax.f32 %v207, 0.0
      %v216 = vmax.f32 %v208, 0.0
      %v217 = vmax.f32 %v209, 0.0
      %218 = vst [vmem:[%s172] sm:$0xff] %v210
      %219 = vst [vmem:[%s172 + $0x8] sm:$0xff] %v211
      %220 = vst [vmem:[%s172 + $0x10] sm:$0xff] %v212
      %221 = vst [vmem:[%s172 + $0x18] sm:$0xff] %v213
      %222 = vst [vmem:[%s172 + $0x20] sm:$0xff] %v214
      %223 = vst [vmem:[%s172 + $0x28] sm:$0xff] %v215
      %224 = vst [vmem:[%s172 + $0x30] sm:$0xff] %v216
      %225 = vst [vmem:[%s172 + $0x38] sm:$0xff] %v217
      %s226 = smul.u32 8, %s14
      %p227 = scmp.lt.s32.totalorder %s226, 31
      %s228 = scalar_select %p227, %s226, 31
      %s229 = smul.addr %s228, 8
      %s230 = scalar_lea.vmem %s3, %s229
      // Predicated region
      $region33: #{fcn_conv3_forward.7} parent=31 // pred_check
        %p231 = pneg %p100
      $region34: #{fcn_conv3_forward.7} parent=31 // pred_check_branch
        %233 = sbr.rel (%p231) target = $region36
      $region35: #{fcn_conv3_forward.7} parent=31 // pred_region
        %s234 = smul.u32 8, %s14
      $region36: #{fcn_conv3_forward.7} parent=31 // pred_fallthru
        _
    $region32: #{fcn_conv3_forward.7} parent=5 // pred_fallthru
      _
    %p235 = scmp.le.s32.totalorder 2, %s9
    // Predicated region
    $region37: #{fcn_conv3_forward.7} parent=5 // pred_check
      %p236 = pneg %p235
    $region38: #{fcn_conv3_forward.7} parent=5 // pred_check_branch
      %238 = sbr.rel (%p236) target = $region40
    $region39: #{fcn_conv3_forward.7} parent=5 // pred_region
      %s239 = ssub.s32 %s9, 2
      // Predicated region
      $region41: #{fcn_conv3_forward.7} parent=39 // pred_check
        %p240 = pneg %p106
      $region42: #{fcn_conv3_forward.7} parent=39 // pred_check_branch
        %242 = sbr.rel (%p240) target = $region44
      $region43: #{fcn_conv3_forward.7} parent=39 // pred_region
        %s243 = smul.u32 8, %s15
        %p244 = scmp.lt.s32.totalorder %s243, 31
        %s245 = scalar_select %p244, %s243, 31
        %s246 = smul.addr %s245, 8
        %s247 = scalar_lea.vmem %s3, %s246
      $region44: #{fcn_conv3_forward.7} parent=39 // pred_fallthru
        _
    $region40: #{fcn_conv3_forward.7} parent=5 // pred_fallthru
      _
  $region6: #{fcn_conv3_forward.7} parent=0 // loop_footer
    %s13 = sadd.s32 1, %s9
  $region7: #{fcn_conv3_forward.7} parent=0 // loop_footer_branch
    %8 = sbr.rel target = $region3
  $region8: #{fcn_conv3_forward.7} parent=0 // loop_exit
    _

// kernel: fcn_conv3_forward.4
$region0: #{fcn_conv3_forward.4}
  #allocation0 [shape = 'u32[]', space=smem, size = 0x4, offset = 0x4, fixed_abs, tag = 'smem constant byte address 0x4 - core index']
  #allocation1 [shape = 'u32[72,128]{1,0:T(1,128)}', space=vmem, size = 0x9000, scoped, tag = 'internal scratch']
  #allocation2 [shape = 'bf16[10,4,128]{2,1,0:T(4,128)(2,1)}', space=vmem, size = 0x2800, scoped, tag = 'scratch operand']
  #allocation3 [shape = 'bf16[10,4,144]{2,1,0:T(4,128)(2,1)}', space=vmem, size = 0x5000, scoped, tag = 'scratch operand']
  #allocation4 [shape = 'bf16[36,128]{1,0:T(8,128)(2,1)}', space=vmem, size = 0x2800, scoped, tag = 'scratch operand']
  #allocation5 [shape = 's32[3]{0}', space=sflag, size = 0xc, scoped, tag = 'scratch operand']
  #allocation6 [shape = 's32[]', space=sflag, size = 0x4, offset = 0, fixed_abs, tag = 'sflag constant byte address 0x0 - dummy sync flag']
  #allocation7 [shape = 's32[]', space=sflag, size = 0x4, offset = 0, fixed_abs, tag = 'sflag constant byte address 0x0 - dummy sync flag']
  #allocation8 [shape = 's32[]', space=sflag, size = 0x4, offset = 0, fixed_abs, tag = 'sflag constant byte address 0x0 - dummy sync flag']
  %s0 = inlined_call_operand.vmem [shape: bf16[32,4,128], index: 0, kind: input, shape index: {}]
  %s1 = inlined_call_operand.vmem [shape: bf16[8,36], index: 1, kind: input, shape index: {}]
  %s2 = inlined_call_operand.vmem [shape: f32[32,8,128], index: 2, kind: output, shape index: {0}]
  %s3 = inlined_call_operand.vmem [shape: f32[2,2,8,1], index: 3, kind: output, shape index: {1}]
  %s4 = inlined_call_operand.vmem [shape: f32[2,2,8,1], index: 4, kind: output, shape index: {2}]
  %5 = xla_tuple %s2, %s3, %s4
  %s6 = sld [smem:[#allocation0]]
  $region156: #{fcn_conv3_forward.4} parent=0
    _
  %s8 = ssub.s32 1, %s6
  %s9 = scalar_select 0, %s8, %s6
  loop: start=0, step=1, limit=6
  $region2: #{fcn_conv3_forward.4} parent=0 // loop_pre_header
    _
  $region3: #{fcn_conv3_forward.4} parent=0 // loop_header
    %s11 = sphi 0, %s15
    %p12 = scmp.ge.s32.totalorder %s11, 6
    %s18 = sphi 0, %s30
    %s19 = sphi 0, %s26
    %s20 = sphi 0, %s18
    %s21 = sphi 0, %s19
    %s22 = sphi 0, %s20
    %s23 = sphi 0, %s21
    %s31 = sphi 0, %s31
    %s33 = sphi 0, %s31
    %s34 = sphi 0, %s33
    %s48 = sphi 0, %s34
    %s58 = sphi 0, %s60
    %s61 = sphi 0, %s58
    %s62 = sphi 0, %s61
    %s78 = sphi 0, %s62
    %s86 = sphi 0, %s88
    %s89 = sphi 0, %s86
    %s90 = sphi 0, %s89
    %s106 = sphi 0, %s90
    %s114 = sphi 0, %s116
    %s117 = sphi 0, %s114
    %s118 = sphi 0, %s117
    %s134 = sphi 0, %s118
  $region4: #{fcn_conv3_forward.4} parent=0 // loop_header_branch
    %14 = sbr.rel (%p12) target = $region8
  $region5: #{fcn_conv3_forward.4} parent=0 // loop_body
    %s16 = ssub.s32 %s11, 1
    %s17 = ssub.s32 %s11, 2
    %s24 = sadd.s32 1, %s19
    %p25 = scmp.ge.s32.totalorder %s24, 2
    %s26 = scalar_select %p25, 0, %s24
    %s27 = sadd.s32 1, %s18
    %s28 = scalar_select %p25, %s27, %s18
    %p29 = scmp.ge.s32.totalorder %s28, 2
    %s30 = scalar_select %p29, 0, %s28
    %s32 = sadd.s32 %s31, 1
    %p35 = scmp.eq.s32.totalorder %s11, 3
    %p36 = scmp.ne.s32.totalorder %s31, %s33
    %p37 = scmp.eq.s32.totalorder %s11, 0
    %p38 = por %p36, %p37
    %p39 = scmp.ne.s32.totalorder %s31, %s33
    %p40 = scmp.eq.s32.totalorder %s16, 3
    %p41 = por %p39, %p40
    %p42 = scmp.ne.s32.totalorder %s33, %s34
    %p43 = scmp.eq.s32.totalorder %s16, 0
    %p44 = por %p42, %p43
    %p45 = scmp.ne.s32.totalorder %s33, %s34
    %p46 = scmp.eq.s32.totalorder %s17, 3
    %p47 = por %p45, %p46
    %p49 = scmp.ne.s32.totalorder %s34, %s48
    %p50 = scmp.eq.s32.totalorder %s17, 0
    %p51 = por %p49, %p50
    %s52 = smul.u32 %s18, 2
    %s53 = sadd.s32 %s52, %s19
    %s54 = smul.u32 %s30, 2
    %s55 = sadd.s32 %s54, %s26
    %s56 = ssub.s32 %s53, %s55
    %p57 = scmp.eq.s32.totalorder %s56, 0
    %s59 = sadd.s32 %s58, 1
    %s60 = scalar_select %p57, %s58, %s59
    %p63 = pneg %p57
    %p64 = scmp.eq.s32.totalorder %s11, 3
    %p65 = por %p63, %p64
    %p66 = scmp.ne.s32.totalorder %s58, %s61
    %p67 = scmp.eq.s32.totalorder %s11, 0
    %p68 = por %p66, %p67
    %p69 = scmp.ne.s32.totalorder %s58, %s61
    %p70 = scmp.eq.s32.totalorder %s16, 3
    %p71 = por %p69, %p70
    %p72 = scmp.ne.s32.totalorder %s61, %s62
    %p73 = scmp.eq.s32.totalorder %s16, 0
    %p74 = por %p72, %p73
    %p75 = scmp.ne.s32.totalorder %s61, %s62
    %p76 = scmp.eq.s32.totalorder %s17, 3
    %p77 = por %p75, %p76
    %p79 = scmp.ne.s32.totalorder %s62, %s78
    %p80 = scmp.eq.s32.totalorder %s17, 0
    %p81 = por %p79, %p80
    %s82 = ssub.s32 %s18, %s30
    %s83 = ssub.s32 %s19, %s26
    %s84 = sor.u32 %s82, %s83
    %p85 = scmp.eq.s32.totalorder %s84, 0
    %s87 = sadd.s32 %s86, 1
    %s88 = scalar_select %p85, %s86, %s87
    %p91 = pneg %p85
    %p92 = scmp.eq.s32.totalorder %s11, 3
    %p93 = por %p91, %p92
    %p94 = scmp.ne.s32.totalorder %s86, %s89
    %p95 = scmp.eq.s32.totalorder %s11, 0
    %p96 = por %p94, %p95
    %p97 = scmp.ne.s32.totalorder %s86, %s89
    %p98 = scmp.eq.s32.totalorder %s16, 3
    %p99 = por %p97, %p98
    %p100 = scmp.ne.s32.totalorder %s89, %s90
    %p101 = scmp.eq.s32.totalorder %s16, 0
    %p102 = por %p100, %p101
    %p103 = scmp.ne.s32.totalorder %s89, %s90
    %p104 = scmp.eq.s32.totalorder %s17, 3
    %p105 = por %p103, %p104
    %p107 = scmp.ne.s32.totalorder %s90, %s106
    %p108 = scmp.eq.s32.totalorder %s17, 0
    %p109 = por %p107, %p108
    %s110 = ssub.s32 %s18, %s30
    %s111 = ssub.s32 %s19, %s26
    %s112 = sor.u32 %s110, %s111
    %p113 = scmp.eq.s32.totalorder %s112, 0
    %s115 = sadd.s32 %s114, 1
    %s116 = scalar_select %p113, %s114, %s115
    %p119 = pneg %p113
    %p120 = scmp.eq.s32.totalorder %s11, 3
    %p121 = por %p119, %p120
    %p122 = scmp.ne.s32.totalorder %s114, %s117
    %p123 = scmp.eq.s32.totalorder %s11, 0
    %p124 = por %p122, %p123
    %p125 = scmp.ne.s32.totalorder %s114, %s117
    %p126 = scmp.eq.s32.totalorder %s16, 3
    %p127 = por %p125, %p126
    %p128 = scmp.ne.s32.totalorder %s117, %s118
    %p129 = scmp.eq.s32.totalorder %s16, 0
    %p130 = por %p128, %p129
    %p131 = scmp.ne.s32.totalorder %s117, %s118
    %p132 = scmp.eq.s32.totalorder %s17, 3
    %p133 = por %p131, %p132
    %p135 = scmp.ne.s32.totalorder %s118, %s134
    %p136 = scmp.eq.s32.totalorder %s17, 0
    %p137 = por %p135, %p136
    %p138 = scmp.le.s32.totalorder 1, %s11
    %p139 = scmp.lt.s32.totalorder %s11, 5
    %p140 = pnand %p138, %p139
    %p141 = pneg %p140
    // Predicated region
    $region9: #{fcn_conv3_forward.4} parent=5 // pred_check
      _
    $region10: #{fcn_conv3_forward.4} parent=5 // pred_check_branch
      %143 = sbr.rel (%p140) target = $region12
    $region11: #{fcn_conv3_forward.4} parent=5 // pred_region
      %s144 = ssub.s32 %s11, 1
      // Predicated region
      $region13: #{fcn_conv3_forward.4} parent=11 // pred_check
        %p145 = pneg %p44
      $region14: #{fcn_conv3_forward.4} parent=11 // pred_check_branch
        %147 = sbr.rel (%p145) target = $region16
      $region15: #{fcn_conv3_forward.4} parent=11 // pred_region
        _
      $region16: #{fcn_conv3_forward.4} parent=11 // pred_fallthru
        _
    $region12: #{fcn_conv3_forward.4} parent=5 // pred_fallthru
      _
    %p148 = scmp.lt.s32.totalorder %s11, 4
    // Predicated region
    $region17: #{fcn_conv3_forward.4} parent=5 // pred_check
      %p149 = pneg %p148
    $region18: #{fcn_conv3_forward.4} parent=5 // pred_check_branch
      %151 = sbr.rel (%p149) target = $region20
    $region19: #{fcn_conv3_forward.4} parent=5 // pred_region
      _
    $region20: #{fcn_conv3_forward.4} parent=5 // pred_fallthru
      _
    %p152 = scmp.le.s32.totalorder 1, %s11
    %p153 = scmp.lt.s32.totalorder %s11, 5
    %p154 = pnand %p152, %p153
    %p155 = pneg %p154
    // Predicated region
    $region21: #{fcn_conv3_forward.4} parent=5 // pred_check
      _
    $region22: #{fcn_conv3_forward.4} parent=5 // pred_check_branch
      %157 = sbr.rel (%p154) target = $region24
    $region23: #{fcn_conv3_forward.4} parent=5 // pred_region
      %s158 = ssub.s32 %s11, 1
      %p159 = pneg %p44
      %p160 = pneg %p41
      %p161 = pneg %p74
      %p162 = pneg %p71
      %s163 = smul.u32 %s20, 2
      %s164 = sadd.s32 %s163, %s21
      %s165 = smul.u32 8, %s164
      %p166 = scmp.lt.s32.totalorder %s165, 31
      %s167 = scalar_select %p166, %s165, 31
      %s168 = smul.addr %s167, 8
      %s169 = scalar_lea.vmem %s2, %s168
      %p170 = pneg %p102
      %p171 = pneg %p99
      %p172 = scmp.lt.s32.totalorder %s20, 1
      %s173 = scalar_select %p172, %s20, 1
      %p174 = scmp.lt.s32.totalorder %s21, 1
      %s175 = scalar_select %p174, %s21, 1
      %s176 = smul.addr %s173, 2
      %s177 = sadd.s32 %s175, %s176
      %s178 = smul.addr %s177, 8
      %s179 = scalar_lea.vmem %s3, %s178
      %p180 = pneg %p130
      %p181 = pneg %p127
      %p182 = scmp.lt.s32.totalorder %s20, 1
      %s183 = scalar_select %p182, %s20, 1
      %p184 = scmp.lt.s32.totalorder %s21, 1
      %s185 = scalar_select %p184, %s21, 1
      %s186 = smul.addr %s183, 2
      %s187 = sadd.s32 %s185, %s186
      %s188 = smul.addr %s187, 8
      %s189 = scalar_lea.vmem %s4, %s188
      %s190 = smul.u32 %s20, 2
      %s191 = sadd.s32 %s190, %s21
      %s192 = smul.u32 8, %s191
      %p193 = scmp.lt.s32.totalorder %s192, 31
      %s194 = scalar_select %p193, %s192, 31
      %s195 = smul.addr %s194, 8
      %s196 = scalar_lea.vmem %s2, %s195
      %s197 = smul.u32 %s20, 2
      %s198 = sadd.s32 %s197, %s21
      %s199 = smul.u32 8, %s198
      %p200 = scmp.lt.s32.totalorder %s20, 1
      %s201 = scalar_select %p200, %s20, 1
      %p202 = scmp.lt.s32.totalorder %s21, 1
      %s203 = scalar_select %p202, %s21, 1
      %s204 = smul.addr %s201, 2
      %s205 = sadd.s32 %s203, %s204
      %s206 = smul.addr %s205, 8
      %s207 = scalar_lea.vmem %s3, %s206
      %p208 = scmp.lt.s32.totalorder %s20, 1
      %s209 = scalar_select %p208, %s20, 1
      %p210 = scmp.lt.s32.totalorder %s21, 1
      %s211 = scalar_select %p210, %s21, 1
      %s212 = smul.addr %s209, 2
      %s213 = sadd.s32 %s211, %s212
      %s214 = smul.addr %s213, 8
      %s215 = scalar_lea.vmem %s4, %s214
      %s217 = smul.u32 %s20, 16
      %s218 = smul.u32 %s21, 8
      %s219 = sadd.s32 %s217, %s218
      %s220 = smul.addr %s219, 2
      %s221 = scalar_lea.vmem %s0, %s220
      %s222 = scalar_lea.vmem [#allocation2], 2
      // Predicated region
      $region25: #{fcn_conv3_forward.4} parent=23 // pred_check
        _
      $region26: #{fcn_conv3_forward.4} parent=23 // pred_check_branch
        %224 = sbr.rel (0) target = $region28
      $region27: #{fcn_conv3_forward.4} parent=23 // pred_region
        loop: start=0, step=1, limit=1
        $region29: #{fcn_conv3_forward.4} parent=27 // loop_pre_header
          _
        $region30: #{fcn_conv3_forward.4} parent=27 // loop_header
          %s226 = sphi 0, %s230
          %p227 = scmp.ge.s32.totalorder %s226, 1
          %s231 = sphi %s221, %s221
          %s232 = sphi %s222, %s222
        $region31: #{fcn_conv3_forward.4} parent=27 // loop_header_branch
          %229 = sbr.rel (%p227) target = $region35
        $region32: #{fcn_conv3_forward.4} parent=27 // loop_body
          %v233 = vld [vmem:[%s231] sm:$0xff]
          %234 = vst [vmem:[%s232] sm:$0xff] %v233
          %v235 = vld [vmem:[%s231 + $0x8] sm:$0xff]
          %236 = vst [vmem:[%s232 + $0x8] sm:$0xff] %v235
        $region33: #{fcn_conv3_forward.4} parent=27 // loop_footer
          %s230 = sadd.s32 1, %s226
        $region34: #{fcn_conv3_forward.4} parent=27 // loop_footer_branch
          %225 = sbr.rel target = $region30
        $region35: #{fcn_conv3_forward.4} parent=27 // loop_exit
          _
      $region28: #{fcn_conv3_forward.4} parent=23 // pred_fallthru
        _
      // Predicated region
      $region36: #{fcn_conv3_forward.4} parent=23 // pred_check
        _
      $region37: #{fcn_conv3_forward.4} parent=23 // pred_check_branch
        %238 = sbr.rel target = $region39
      $region38: #{fcn_conv3_forward.4} parent=23 // pred_region
        _
      $region39: #{fcn_conv3_forward.4} parent=23 // pred_fallthru
        _
      // Predicated region
      $region40: #{fcn_conv3_forward.4} parent=23 // pred_check
        _
      $region41: #{fcn_conv3_forward.4} parent=23 // pred_check_branch
        %241 = sbr.rel (0) target = $region43
      $region42: #{fcn_conv3_forward.4} parent=23 // pred_region
        %242 = vsyncadd [#allocation5], 256
      $region43: #{fcn_conv3_forward.4} parent=23 // pred_fallthru
        _
      %p243 = scmp.gt.s32.totalorder %s21, 0
      // Predicated region
      $region44: #{fcn_conv3_forward.4} parent=23 // pred_check
        %p244 = pneg %p243
      $region45: #{fcn_conv3_forward.4} parent=23 // pred_check_branch
        %246 = sbr.rel (%p244) target = $region47
      $region46: #{fcn_conv3_forward.4} parent=23 // pred_region
        %s247 = ssub.s32 %s219, 1
        %s248 = smul.addr %s247, 2
        %s249 = scalar_lea.vmem %s0, %s248
        %s250 = scalar_lea.sflag [#allocation5], 1
        // Predicated region
        $region48: #{fcn_conv3_forward.4} parent=46 // pred_check
          _
        $region49: #{fcn_conv3_forward.4} parent=46 // pred_check_branch
          %252 = sbr.rel target = $region51
        $region50: #{fcn_conv3_forward.4} parent=46 // pred_region
          // Predicated region
          $region63: #{fcn_conv3_forward.4} parent=50 // pred_check
            _
          $region64: #{fcn_conv3_forward.4} parent=50 // pred_check_branch
            %268 = sbr.rel (0) target = $region66
          $region65: #{fcn_conv3_forward.4} parent=50 // pred_region
            %s270 = ssub.s32 4, 1
            loop: start=0, step=1, limit=1
            $region67: #{fcn_conv3_forward.4} parent=65 // loop_pre_header
              _
            $region68: #{fcn_conv3_forward.4} parent=65 // loop_header
              %s272 = sphi 0, %s276
              %p273 = scmp.ge.s32.totalorder %s272, 1
              %s277 = sphi %s249, %s249
              %s278 = sphi [#allocation2], [#allocation2]
            $region69: #{fcn_conv3_forward.4} parent=65 // loop_header_branch
              %275 = sbr.rel (%p273) target = $region73
            $region70: #{fcn_conv3_forward.4} parent=65 // loop_body
              %v279 = vld [vmem:[%s277] sm:%s270]
              %280 = vst [vmem:[%s278] sm:%s270] %v279
            $region71: #{fcn_conv3_forward.4} parent=65 // loop_footer
              %s276 = sadd.s32 1, %s272
            $region72: #{fcn_conv3_forward.4} parent=65 // loop_footer_branch
              %271 = sbr.rel target = $region68
            $region73: #{fcn_conv3_forward.4} parent=65 // loop_exit
              _
          $region66: #{fcn_conv3_forward.4} parent=50 // pred_fallthru
            _
        $region51: #{fcn_conv3_forward.4} parent=46 // pred_fallthru
          _
        // Predicated region
        $region52: #{fcn_conv3_forward.4} parent=46 // pred_check
          _
        $region53: #{fcn_conv3_forward.4} parent=46 // pred_check_branch
          %254 = sbr.rel (0) target = $region55
        $region54: #{fcn_conv3_forward.4} parent=46 // pred_region
          %s256 = ssub.s32 4, 1
          loop: start=0, step=1, limit=1
          $region56: #{fcn_conv3_forward.4} parent=54 // loop_pre_header
            _
          $region57: #{fcn_conv3_forward.4} parent=54 // loop_header
            %s258 = sphi 0, %s262
            %p259 = scmp.ge.s32.totalorder %s258, 1
            %s263 = sphi %s249, %s249
            %s264 = sphi [#allocation2], [#allocation2]
          $region58: #{fcn_conv3_forward.4} parent=54 // loop_header_branch
            %261 = sbr.rel (%p259) target = $region62
          $region59: #{fcn_conv3_forward.4} parent=54 // loop_body
            %v265 = vld [vmem:[%s263] sm:%s256]
            %266 = vst [vmem:[%s264] sm:%s256] %v265
          $region60: #{fcn_conv3_forward.4} parent=54 // loop_footer
            %s262 = sadd.s32 1, %s258
          $region61: #{fcn_conv3_forward.4} parent=54 // loop_footer_branch
            %257 = sbr.rel target = $region57
          $region62: #{fcn_conv3_forward.4} parent=54 // loop_exit
            _
        $region55: #{fcn_conv3_forward.4} parent=46 // pred_fallthru
          _
        // Predicated region
        $region74: #{fcn_conv3_forward.4} parent=46 // pred_check
          _
        $region75: #{fcn_conv3_forward.4} parent=46 // pred_check_branch
          %283 = sbr.rel (0) target = $region77
        $region76: #{fcn_conv3_forward.4} parent=46 // pred_region
          %284 = vsyncadd %s250, 32
        $region77: #{fcn_conv3_forward.4} parent=46 // pred_fallthru
          _
      $region47: #{fcn_conv3_forward.4} parent=23 // pred_fallthru
        _
      %p285 = scmp.lt.s32.totalorder %s21, 1
      // Predicated region
      $region78: #{fcn_conv3_forward.4} parent=23 // pred_check
        %p286 = pneg %p285
      $region79: #{fcn_conv3_forward.4} parent=23 // pred_check_branch
        %288 = sbr.rel (%p286) target = $region81
      $region80: #{fcn_conv3_forward.4} parent=23 // pred_region
        %s289 = sadd.s32 %s219, 8
        %s290 = smul.addr %s289, 2
        %s291 = scalar_lea.vmem %s0, %s290
        %s292 = scalar_lea.vmem [#allocation2], 18
        %s293 = scalar_lea.sflag [#allocation5], 2
        // Predicated region
        $region82: #{fcn_conv3_forward.4} parent=80 // pred_check
          _
        $region83: #{fcn_conv3_forward.4} parent=80 // pred_check_branch
          %295 = sbr.rel target = $region85
        $region84: #{fcn_conv3_forward.4} parent=80 // pred_region
          // Predicated region
          $region97: #{fcn_conv3_forward.4} parent=84 // pred_check
            _
          $region98: #{fcn_conv3_forward.4} parent=84 // pred_check_branch
            %311 = sbr.rel (0) target = $region100
          $region99: #{fcn_conv3_forward.4} parent=84 // pred_region
            %s313 = ssub.s32 4, 1
            loop: start=0, step=1, limit=1
            $region101: #{fcn_conv3_forward.4} parent=99 // loop_pre_header
              _
            $region102: #{fcn_conv3_forward.4} parent=99 // loop_header
              %s315 = sphi 0, %s319
              %p316 = scmp.ge.s32.totalorder %s315, 1
              %s320 = sphi %s291, %s291
              %s321 = sphi %s292, %s292
            $region103: #{fcn_conv3_forward.4} parent=99 // loop_header_branch
              %318 = sbr.rel (%p316) target = $region107
            $region104: #{fcn_conv3_forward.4} parent=99 // loop_body
              %v322 = vld [vmem:[%s320] sm:%s313]
              %323 = vst [vmem:[%s321] sm:%s313] %v322
            $region105: #{fcn_conv3_forward.4} parent=99 // loop_footer
              %s319 = sadd.s32 1, %s315
            $region106: #{fcn_conv3_forward.4} parent=99 // loop_footer_branch
              %314 = sbr.rel target = $region102
            $region107: #{fcn_conv3_forward.4} parent=99 // loop_exit
              _
          $region100: #{fcn_conv3_forward.4} parent=84 // pred_fallthru
            _
        $region85: #{fcn_conv3_forward.4} parent=80 // pred_fallthru
          _
        // Predicated region
        $region86: #{fcn_conv3_forward.4} parent=80 // pred_check
          _
        $region87: #{fcn_conv3_forward.4} parent=80 // pred_check_branch
          %297 = sbr.rel (0) target = $region89
        $region88: #{fcn_conv3_forward.4} parent=80 // pred_region
          %s299 = ssub.s32 4, 1
          loop: start=0, step=1, limit=1
          $region90: #{fcn_conv3_forward.4} parent=88 // loop_pre_header
            _
          $region91: #{fcn_conv3_forward.4} parent=88 // loop_header
            %s301 = sphi 0, %s305
            %p302 = scmp.ge.s32.totalorder %s301, 1
            %s306 = sphi %s291, %s291
            %s307 = sphi %s292, %s292
          $region92: #{fcn_conv3_forward.4} parent=88 // loop_header_branch
            %304 = sbr.rel (%p302) target = $region96
          $region93: #{fcn_conv3_forward.4} parent=88 // loop_body
            %v308 = vld [vmem:[%s306] sm:%s299]
            %309 = vst [vmem:[%s307] sm:%s299] %v308
          $region94: #{fcn_conv3_forward.4} parent=88 // loop_footer
            %s305 = sadd.s32 1, %s301
          $region95: #{fcn_conv3_forward.4} parent=88 // loop_footer_branch
            %300 = sbr.rel target = $region91
          $region96: #{fcn_conv3_forward.4} parent=88 // loop_exit
            _
        $region89: #{fcn_conv3_forward.4} parent=80 // pred_fallthru
          _
        // Predicated region
        $region108: #{fcn_conv3_forward.4} parent=80 // pred_check
          _
        $region109: #{fcn_conv3_forward.4} parent=80 // pred_check_branch
          %326 = sbr.rel (0) target = $region111
        $region110: #{fcn_conv3_forward.4} parent=80 // pred_region
          %327 = vsyncadd %s293, 32
        $region111: #{fcn_conv3_forward.4} parent=80 // pred_fallthru
          _
      $region81: #{fcn_conv3_forward.4} parent=23 // pred_fallthru
        _
      %s328 = smul.u32 2, 8
      %s329 = smul.u32 %s328, 1
      %s330 = smul.u32 %s329, 1
      %s331 = sshll.u32 %s330, 4
      %332 = dma.done [#allocation5], %s331
      // Predicated region
      $region112: #{fcn_conv3_forward.4} parent=23 // pred_check
        %p333 = pneg %p243
      $region113: #{fcn_conv3_forward.4} parent=23 // pred_check_branch
        %335 = sbr.rel (%p333) target = $region115
      $region114: #{fcn_conv3_forward.4} parent=23 // pred_region
        %s336 = scalar_lea.sflag [#allocation5], 1
        %s337 = smul.u32 2, 1
        %s338 = smul.u32 %s337, 1
        %s339 = smul.u32 %s338, 1
        %s340 = sshll.u32 %s339, 4
        %341 = dma.done %s336, %s340
      $region115: #{fcn_conv3_forward.4} parent=23 // pred_fallthru
        _
      // Predicated region
      $region116: #{fcn_conv3_forward.4} parent=23 // pred_check
        %p342 = pneg %p285
      $region117: #{fcn_conv3_forward.4} parent=23 // pred_check_branch
        %344 = sbr.rel (%p342) target = $region119
      $region118: #{fcn_conv3_forward.4} parent=23 // pred_region
        %s345 = scalar_lea.sflag [#allocation5], 2
        %s346 = smul.u32 2, 1
        %s347 = smul.u32 %s346, 1
        %s348 = smul.u32 %s347, 1
        %s349 = sshll.u32 %s348, 4
        %350 = dma.done %s345, %s349
      $region119: #{fcn_conv3_forward.4} parent=23 // pred_fallthru
        _
      %v351 = vld [vmem:[%s1] sm:$0xf]
      %v352 = vld [vmem:[#allocation2] sm:$0x3]
      %v353 = vld [vmem:[#allocation2 + $0x2] sm:$0x3]
      %v354 = vld [vmem:[#allocation2 + $0x4] sm:$0x3]
      %v355 = vld [vmem:[#allocation2 + $0x6] sm:$0x3]
      %v356 = vld [vmem:[#allocation2 + $0x8] sm:$0x3]
      %v357 = vld [vmem:[#allocation2 + $0xa] sm:$0x3]
      %v358 = vld [vmem:[#allocation2 + $0xc] sm:$0x3]
      %v359 = vld [vmem:[#allocation2 + $0xe] sm:$0x3]
      %v360 = vld [vmem:[#allocation2 + $0x10] sm:$0x3]
      %v361 = vld [vmem:[#allocation2 + $0x12] sm:$0x3]
      %vm362 = vcmask 58368
      %363 = vst.msk [vmem:[#allocation3] sm:$0x3] %vm362, 0
      %364 = vst.msk [vmem:[#allocation3 + $0x4] sm:$0x3] %vm362, 0
      %365 = vst.msk [vmem:[#allocation3 + $0x8] sm:$0x3] %vm362, 0
      %366 = vst.msk [vmem:[#allocation3 + $0xc] sm:$0x3] %vm362, 0
      %367 = vst.msk [vmem:[#allocation3 + $0x10] sm:$0x3] %vm362, 0
      %368 = vst.msk [vmem:[#allocation3 + $0x14] sm:$0x3] %vm362, 0
      %369 = vst.msk [vmem:[#allocation3 + $0x18] sm:$0x3] %vm362, 0
      %370 = vst.msk [vmem:[#allocation3 + $0x1c] sm:$0x3] %vm362, 0
      %371 = vst.msk [vmem:[#allocation3 + $0x20] sm:$0x3] %vm362, 0
      %372 = vst.msk [vmem:[#allocation3 + $0x24] sm:$0x3] %vm362, 0
      %vm373 = vcmask 123968
      %374 = vst.msk [vmem:[#allocation3 + $0x2] sm:$0x3] %vm373, 0
      %375 = vst.msk [vmem:[#allocation3 + $0x6] sm:$0x3] %vm373, 0
      %376 = vst.msk [vmem:[#allocation3 + $0xa] sm:$0x3] %vm373, 0
      %377 = vst.msk [vmem:[#allocation3 + $0xe] sm:$0x3] %vm373, 0
      %378 = vst.msk [vmem:[#allocation3 + $0x12] sm:$0x3] %vm373, 0
      %379 = vst.msk [vmem:[#allocation3 + $0x16] sm:$0x3] %vm373, 0
      %380 = vst.msk [vmem:[#allocation3 + $0x1a] sm:$0x3] %vm373, 0
      %381 = vst.msk [vmem:[#allocation3 + $0x1e] sm:$0x3] %vm373, 0
      %382 = vst.msk [vmem:[#allocation3 + $0x22] sm:$0x3] %vm373, 0
      %383 = vst.msk [vmem:[#allocation3 + $0x26] sm:$0x3] %vm373, 0
      %394 = vrot.lane.b32.xlu0 %v352, 8
      %v395 = vpop.permute.xlu0 %394
      %396 = vrot.lane.b32.xlu0 %v353, 8
      %v397 = vpop.permute.xlu0 %396
      %398 = vrot.lane.b32.xlu0 %v354, 8
      %v399 = vpop.permute.xlu0 %398
      %400 = vrot.lane.b32.xlu0 %v355, 8
      %v401 = vpop.permute.xlu0 %400
      %402 = vrot.lane.b32.xlu0 %v356, 8
      %v403 = vpop.permute.xlu0 %402
      %404 = vrot.lane.b32.xlu0 %v357, 8
      %v405 = vpop.permute.xlu0 %404
      %406 = vrot.lane.b32.xlu0 %v358, 8
      %v407 = vpop.permute.xlu0 %406
      %408 = vrot.lane.b32.xlu0 %v359, 8
      %v409 = vpop.permute.xlu0 %408
      %410 = vrot.lane.b32.xlu0 %v360, 8
      %v411 = vpop.permute.xlu0 %410
      %412 = vrot.lane.b32.xlu0 %v361, 8
      %v413 = vpop.permute.xlu0 %412
      %v414 = vrot.slane %v395, 6
      %v415 = vrot.slane %v397, 6
      %v416 = vrot.slane %v399, 6
      %v417 = vrot.slane %v401, 6
      %v418 = vrot.slane %v403, 6
      %v419 = vrot.slane %v405, 6
      %v420 = vrot.slane %v407, 6
      %v421 = vrot.slane %v409, 6
      %v422 = vrot.slane %v411, 6
      %v423 = vrot.slane %v413, 6
      %vm424 = vcmask 64512
      %v425 = vsel %vm424, %v414, %v395
      %v426 = vsel %vm424, %v415, %v397
      %v427 = vsel %vm424, %v416, %v399
      %v428 = vsel %vm424, %v417, %v401
      %v429 = vsel %vm424, %v418, %v403
      %v430 = vsel %vm424, %v419, %v405
      %v431 = vsel %vm424, %v420, %v407
      %v432 = vsel %vm424, %v421, %v409
      %v433 = vsel %vm424, %v422, %v411
      %v434 = vsel %vm424, %v423, %v413
      %vm445 = vcmask 1041472
      %vm446 = vcmask 60418
      %vm447 = vmor %vm446, %vm445
      %448 = vst.msk [vmem:[#allocation3] sm:$0xf] %vm447, %v425
      %449 = vst.msk [vmem:[#allocation3 + $0x4] sm:$0xf] %vm447, %v426
      %450 = vst.msk [vmem:[#allocation3 + $0x8] sm:$0xf] %vm447, %v427
      %451 = vst.msk [vmem:[#allocation3 + $0xc] sm:$0xf] %vm447, %v428
      %452 = vst.msk [vmem:[#allocation3 + $0x10] sm:$0xf] %vm447, %v429
      %453 = vst.msk [vmem:[#allocation3 + $0x14] sm:$0xf] %vm447, %v430
      %454 = vst.msk [vmem:[#allocation3 + $0x18] sm:$0xf] %vm447, %v431
      %455 = vst.msk [vmem:[#allocation3 + $0x1c] sm:$0xf] %vm447, %v432
      %456 = vst.msk [vmem:[#allocation3 + $0x20] sm:$0xf] %vm447, %v433
      %457 = vst.msk [vmem:[#allocation3 + $0x24] sm:$0xf] %vm447, %v434
      %p458 = scmp.eq.s32.totalorder %s21, 0
      // Predicated region
      $region120: #{fcn_conv3_forward.4} parent=23 // pred_check
        %p459 = pneg %p458
      $region121: #{fcn_conv3_forward.4} parent=23 // pred_check_branch
        %461 = sbr.rel (%p459) target = $region123
      $region122: #{fcn_conv3_forward.4} parent=23 // pred_region
        %vm462 = vcmask 1041408
        %vm463 = vcmask 125954
        %vm464 = vmor %vm463, %vm462
        %465 = vst.msk [vmem:[#allocation3] sm:$0xf] %vm464, 0
      $region123: #{fcn_conv3_forward.4} parent=23 // pred_fallthru
        _
      %p466 = scmp.eq.s32.totalorder %s21, 1
      // Predicated region
      $region124: #{fcn_conv3_forward.4} parent=23 // pred_check
        %p467 = pneg %p466
      $region125: #{fcn_conv3_forward.4} parent=23 // pred_check_branch
        %469 = sbr.rel (%p467) target = $region127
      $region126: #{fcn_conv3_forward.4} parent=23 // pred_region
        %s470 = scalar_lea.vmem [#allocation3], 36
        %vm471 = vcmask 1041408
        %vm472 = vcmask 125954
        %vm473 = vmor %vm472, %vm471
        %474 = vst.msk [vmem:[%s470] sm:$0xf] %vm473, 0
      $region127: #{fcn_conv3_forward.4} parent=23 // pred_fallthru
        _
      %v475 = vld [vmem:[#allocation3] sm:$0x3]
      %476 = vst [vmem:[#allocation4] sm:$0x3] %v475
      %v477 = vld [vmem:[#allocation3] sm:$0xf]
      %s479 = scalar_lea.vmem [#allocation1], 1
      %480 = vst [vmem:[%s479] ss:$2 sm:$0xff] %v477
      %v481 = vld.sshfl [vmem:[#allocation1] sm:$0xff pattern:$0x75643120]
      %483 = vrot.lane.b32.xlu0 %v481, 120
      %v484 = vpop.permute.xlu0 %483
      %v485 = vrot.slane %v484, 4
      %vm486 = vcmask 982016
      %v487 = vsel %vm486, %v484, %v485
      %489 = vst [vmem:[#allocation4] sm:$0xc] %v487
      %v490 = vld [vmem:[#allocation3] sm:$0xf]
      %492 = vst [vmem:[#allocation1] ss:$2 sm:$0xff] %v490
      %v493 = vld.sshfl [vmem:[#allocation1] sm:$0xff pattern:$0x75643120]
      %495 = vrot.lane.b32.xlu0 %v493, 112
      %v496 = vpop.permute.xlu0 %495
      %v497 = vrot.slane %v496, 4
      %vm498 = vcmask 916480
      %v499 = vsel %vm498, %v496, %v497
      %501 = vst [vmem:[#allocation4 + $0x4] sm:$0x3] %v499
      %s502 = scalar_lea.vmem [#allocation3], 4
      %v503 = vld [vmem:[%s502] sm:$0x3]
      %s505 = scalar_lea.vmem [#allocation1], 1
      %506 = vst [vmem:[%s505] ss:$2 sm:$0xff] %v503
      %v507 = vld.sshfl [vmem:[#allocation1] sm:$0xff pattern:$0x75643120]
      %509 = vst [vmem:[#allocation4 + $0x4] sm:$0xc] %v507
      %v510 = vld [vmem:[%s502] sm:$0xf]
      %512 = vst [vmem:[#allocation1] ss:$2 sm:$0xff] %v510
      %v513 = vld.sshfl [vmem:[#allocation1] sm:$0xff pattern:$0x75643120]
      %515 = vrot.lane.b32.xlu0 %v513, 120
      %v516 = vpop.permute.xlu0 %515
      %v517 = vrot.slane %v516, 4
      %v518 = vsel %vm486, %v516, %v517
      %520 = vst [vmem:[#allocation4 + $0x8] sm:$0x3] %v518
      %v521 = vld [vmem:[%s502] sm:$0xf]
      %s523 = scalar_lea.vmem [#allocation1], 1
      %524 = vst [vmem:[%s523] ss:$2 sm:$0xff] %v521
      %v525 = vld.sshfl [vmem:[#allocation1] sm:$0xff pattern:$0x75643120]
      %527 = vrot.lane.b32.xlu0 %v525, 112
      %v528 = vpop.permute.xlu0 %527
      %v529 = vrot.slane %v528, 4
      %v530 = vsel %vm498, %v528, %v529
      %532 = vst [vmem:[#allocation4 + $0x8] sm:$0xc] %v530
      %s533 = scalar_lea.vmem [#allocation3], 8
      %v534 = vld [vmem:[%s533] sm:$0x3]
      %535 = vst [vmem:[#allocation4 + $0xc] sm:$0x3] %v534
      %v536 = vld [vmem:[%s533] sm:$0xf]
      %s538 = scalar_lea.vmem [#allocation1], 1
      %539 = vst [vmem:[%s538] ss:$2 sm:$0xff] %v536
      %v540 = vld.sshfl [vmem:[#allocation1] sm:$0xff pattern:$0x75643120]
      %542 = vrot.lane.b32.xlu0 %v540, 120
      %v543 = vpop.permute.xlu0 %542
      %v544 = vrot.slane %v543, 4
      %v545 = vsel %vm486, %v543, %v544
      %547 = vst [vmem:[#allocation4 + $0xc] sm:$0xc] %v545
      %v548 = vld [vmem:[%s533] sm:$0xf]
      %550 = vst [vmem:[#allocation1] ss:$2 sm:$0xff] %v548
      %v551 = vld.sshfl [vmem:[#allocation1] sm:$0xff pattern:$0x75643120]
      %553 = vrot.lane.b32.xlu0 %v551, 112
      %v554 = vpop.permute.xlu0 %553
      %v555 = vrot.slane %v554, 4
      %v556 = vsel %vm498, %v554, %v555
      %558 = vst [vmem:[#allocation4 + $0x10] sm:$0x3] %v556
      %v559 = vld [vmem:[#allocation4] sm:$0xf]
      %v560 = vld [vmem:[#allocation4 + $0x4] sm:$0xf]
      %v561 = vld [vmem:[#allocation4 + $0x8] sm:$0xf]
      %v562 = vld [vmem:[#allocation4 + $0xc] sm:$0xf]
      %v563 = vld [vmem:[#allocation4 + $0x10] sm:$0x3]
      %v569 = vunpack.c.l.b16 %v559
      %v570 = vunpack.c.l.b16 %v560
      %v571 = vunpack.c.l.b16 %v561
      %v572 = vunpack.c.l.b16 %v562
      %v573 = vunpack.c.l.b16 %v563
      %v574 = vpack.c.b16 %v570, %v569
      %v575 = vpack.c.b16 %v572, %v571
      %v576 = vpack.c.b16 %v573, %v573
      %vm579 = vcmask 293888
      %v581 = vsel %vm579, %v351, 0
      %vm583 = vcmask 1041408
      %v585 = vsel %vm583, %v576, 0
      %587 = vmatpush.bf16.msra.mxu0 0
      %588 = vmatpush.bf16.msra.mxu0 0
      %589 = vmatpush.bf16.msra.mxu0 0
      %590 = vmatpush.bf16.msra.mxu0 0
      %591 = vmatpush.bf16.msra.mxu0 0
      %592 = vmatpush.bf16.msra.mxu0 %v585
      %593 = vmatpush.bf16.msra.mxu0 %v575
      %594 = vmatpush.bf16.msra.mxu0 %v574
      %595 = vmatmul.bf16.gmra.mxu0 %v581
      %v596 = vpop.f32.mrf.mxu0
      %v597 = vadd.f32 0.0, %v596
      %v598 = vpop.f32.mrf.mxu0
      %599 = vdwg.mxu0
      %600 = vst [vmem:[%s196] sm:$0xff] %v597
      %601 = vadd.xlane.f32.xlu0 %v597
      %v602 = vpop.xlane.xlu0 %601
      %v603 = vadd.f32 %v602, 0.0
      %v604 = vmul.f32 %v597, %v597
      %605 = vadd.xlane.f32.xlu0 %v604
      %v606 = vpop.xlane.xlu0 %605
      %v607 = vadd.f32 %v606, 0.0
      %v608 = vld [vmem:[%s502] sm:$0x3]
      %609 = vst [vmem:[#allocation4] sm:$0x3] %v608
      %v610 = vld [vmem:[%s502] sm:$0xf]
      %s612 = scalar_lea.vmem [#allocation1], 1
      %613 = vst [vmem:[%s612] ss:$2 sm:$0xff] %v610
      %v614 = vld.sshfl [vmem:[#allocation1] sm:$0xff pattern:$0x75643120]
      %616 = vrot.lane.b32.xlu0 %v614, 120
      %v617 = vpop.permute.xlu0 %616
      %v618 = vrot.slane %v617, 4
      %v619 = vsel %vm486, %v617, %v618
      %621 = vst [vmem:[#allocation4] sm:$0xc] %v619
      %v622 = vld [vmem:[%s502] sm:$0xf]
      %624 = vst [vmem:[#allocation1] ss:$2 sm:$0xff] %v622
      %v625 = vld.sshfl [vmem:[#allocation1] sm:$0xff pattern:$0x75643120]
      %627 = vrot.lane.b32.xlu0 %v625, 112
      %v628 = vpop.permute.xlu0 %627
      %v629 = vrot.slane %v628, 4
      %v630 = vsel %vm498, %v628, %v629
      %632 = vst [vmem:[#allocation4 + $0x4] sm:$0x3] %v630
      %v633 = vld [vmem:[%s533] sm:$0x3]
      %s635 = scalar_lea.vmem [#allocation1], 1
      %636 = vst [vmem:[%s635] ss:$2 sm:$0xff] %v633
      %v637 = vld.sshfl [vmem:[#allocation1] sm:$0xff pattern:$0x75643120]
      %639 = vst [vmem:[#allocation4 + $0x4] sm:$0xc] %v637
      %v640 = vld [vmem:[%s533] sm:$0xf]
      %642 = vst [vmem:[#allocation1] ss:$2 sm:$0xff] %v640
      %v643 = vld.sshfl [vmem:[#allocation1] sm:$0xff pattern:$0x75643120]
      %645 = vrot.lane.b32.xlu0 %v643, 120
      %v646 = vpop.permute.xlu0 %645
      %v647 = vrot.slane %v646, 4
      %v648 = vsel %vm486, %v646, %v647
      %650 = vst [vmem:[#allocation4 + $0x8] sm:$0x3] %v648
      %v651 = vld [vmem:[%s533] sm:$0xf]
      %s653 = scalar_lea.vmem [#allocation1], 1
      %654 = vst [vmem:[%s653] ss:$2 sm:$0xff] %v651
      %v655 = vld.sshfl [vmem:[#allocation1] sm:$0xff pattern:$0x75643120]
      %657 = vrot.lane.b32.xlu0 %v655, 112
      %v658 = vpop.permute.xlu0 %657
      %v659 = vrot.slane %v658, 4
      %v660 = vsel %vm498, %v658, %v659
      %662 = vst [vmem:[#allocation4 + $0x8] sm:$0xc] %v660
      %s663 = scalar_lea.vmem [#allocation3], 12
      %v664 = vld [vmem:[%s663] sm:$0x3]
      %665 = vst [vmem:[#allocation4 + $0xc] sm:$0x3] %v664
      %v666 = vld [vmem:[%s663] sm:$0xf]
      %s668 = scalar_lea.vmem [#allocation1], 1
      %669 = vst [vmem:[%s668] ss:$2 sm:$0xff] %v666
      %v670 = vld.sshfl [vmem:[#allocation1] sm:$0xff pattern:$0x75643120]
      %672 = vrot.lane.b32.xlu0 %v670, 120
      %v673 = vpop.permute.xlu0 %672
      %v674 = vrot.slane %v673, 4
      %v675 = vsel %vm486, %v673, %v674
      %677 = vst [vmem:[#allocation4 + $0xc] sm:$0xc] %v675
      %v678 = vld [vmem:[%s663] sm:$0xf]
      %680 = vst [vmem:[#allocation1] ss:$2 sm:$0xff] %v678
      %v681 = vld.sshfl [vmem:[#allocation1] sm:$0xff pattern:$0x75643120]
      %683 = vrot.lane.b32.xlu0 %v681, 112
      %v684 = vpop.permute.xlu0 %683
      %v685 = vrot.slane %v684, 4
      %v686 = vsel %vm498, %v684, %v685
      %688 = vst [vmem:[#allocation4 + $0x10] sm:$0x3] %v686
      %v689 = vld [vmem:[#allocation4] sm:$0xf]
      %v690 = vld [vmem:[#allocation4 + $0x4] sm:$0xf]
      %v691 = vld [vmem:[#allocation4 + $0x8] sm:$0xf]
      %v692 = vld [vmem:[#allocation4 + $0xc] sm:$0xf]
      %v693 = vld [vmem:[#allocation4 + $0x10] sm:$0x3]
      %v699 = vunpack.c.l.b16 %v689
      %v700 = vunpack.c.l.b16 %v690
      %v701 = vunpack.c.l.b16 %v691
      %v702 = vunpack.c.l.b16 %v692
      %v703 = vunpack.c.l.b16 %v693
      %v704 = vpack.c.b16 %v700, %v699
      %v705 = vpack.c.b16 %v702, %v701
      %v706 = vpack.c.b16 %v703, %v703
      %v710 = vsel %vm583, %v706, 0
      %712 = vmatpush.bf16.msra.mxu0 0
      %713 = vmatpush.bf16.msra.mxu0 0
      %714 = vmatpush.bf16.msra.mxu0 0
      %715 = vmatpush.bf16.msra.mxu0 0
      %716 = vmatpush.bf16.msra.mxu0 0
      %717 = vmatpush.bf16.msra.mxu0 %v710
      %718 = vmatpush.bf16.msra.mxu0 %v705
      %719 = vmatpush.bf16.msra.mxu0 %v704
      %720 = vmatmul.bf16.gmra.mxu0 %v581
      %v721 = vpop.f32.mrf.mxu0
      %v722 = vadd.f32 0.0, %v721
      %v723 = vpop.f32.mrf.mxu0
      %724 = vdwg.mxu0
      %s725 = scalar_lea.vmem %s196, 8
      %726 = vst [vmem:[%s725] sm:$0xff] %v722
      %727 = vadd.xlane.f32.xlu0 %v722
      %v728 = vpop.xlane.xlu0 %727
      %v729 = vadd.f32 %v603, %v728
      %v730 = vmul.f32 %v722, %v722
      %731 = vadd.xlane.f32.xlu0 %v730
      %v732 = vpop.xlane.xlu0 %731
      %v733 = vadd.f32 %v607, %v732
      %v734 = vld [vmem:[%s533] sm:$0x3]
      %735 = vst [vmem:[#allocation4] sm:$0x3] %v734
      %v736 = vld [vmem:[%s533] sm:$0xf]
      %s738 = scalar_lea.vmem [#allocation1], 1
      %739 = vst [vmem:[%s738] ss:$2 sm:$0xff] %v736
      %v740 = vld.sshfl [vmem:[#allocation1] sm:$0xff pattern:$0x75643120]
      %742 = vrot.lane.b32.xlu0 %v740, 120
      %v743 = vpop.permute.xlu0 %742
      %v744 = vrot.slane %v743, 4
      %v745 = vsel %vm486, %v743, %v744
      %747 = vst [vmem:[#allocation4] sm:$0xc] %v745
      %v748 = vld [vmem:[%s533] sm:$0xf]
      %750 = vst [vmem:[#allocation1] ss:$2 sm:$0xff] %v748
      %v751 = vld.sshfl [vmem:[#allocation1] sm:$0xff pattern:$0x75643120]
      %753 = vrot.lane.b32.xlu0 %v751, 112
      %v754 = vpop.permute.xlu0 %753
      %v755 = vrot.slane %v754, 4
      %v756 = vsel %vm498, %v754, %v755
      %758 = vst [vmem:[#allocation4 + $0x4] sm:$0x3] %v756
      %v759 = vld [vmem:[%s663] sm:$0x3]
      %s761 = scalar_lea.vmem [#allocation1], 1
      %762 = vst [vmem:[%s761] ss:$2 sm:$0xff] %v759
      %v763 = vld.sshfl [vmem:[#allocation1] sm:$0xff pattern:$0x75643120]
      %765 = vst [vmem:[#allocation4 + $0x4] sm:$0xc] %v763
      %v766 = vld [vmem:[%s663] sm:$0xf]
      %768 = vst [vmem:[#allocation1] ss:$2 sm:$0xff] %v766
      %v769 = vld.sshfl [vmem:[#allocation1] sm:$0xff pattern:$0x75643120]
      %771 = vrot.lane.b32.xlu0 %v769, 120
      %v772 = vpop.permute.xlu0 %771
      %v773 = vrot.slane %v772, 4
      %v774 = vsel %vm486, %v772, %v773
      %776 = vst [vmem:[#allocation4 + $0x8] sm:$0x3] %v774
      %v777 = vld [vmem:[%s663] sm:$0xf]
      %s779 = scalar_lea.vmem [#allocation1], 1
      %780 = vst [vmem:[%s779] ss:$2 sm:$0xff] %v777
      %v781 = vld.sshfl [vmem:[#allocation1] sm:$0xff pattern:$0x75643120]
      %783 = vrot.lane.b32.xlu0 %v781, 112
      %v784 = vpop.permute.xlu0 %783
      %v785 = vrot.slane %v784, 4
      %v786 = vsel %vm498, %v784, %v785
      %788 = vst [vmem:[#allocation4 + $0x8] sm:$0xc] %v786
      %s789 = scalar_lea.vmem [#allocation3], 16
      %v790 = vld [vmem:[%s789] sm:$0x3]
      %791 = vst [vmem:[#allocation4 + $0xc] sm:$0x3] %v790
      %v792 = vld [vmem:[%s789] sm:$0xf]
      %s794 = scalar_lea.vmem [#allocation1], 1
      %795 = vst [vmem:[%s794] ss:$2 sm:$0xff] %v792
      %v796 = vld.sshfl [vmem:[#allocation1] sm:$0xff pattern:$0x75643120]
      %798 = vrot.lane.b32.xlu0 %v796, 120
      %v799 = vpop.permute.xlu0 %798
      %v800 = vrot.slane %v799, 4
      %v801 = vsel %vm486, %v799, %v800
      %803 = vst [vmem:[#allocation4 + $0xc] sm:$0xc] %v801
      %v804 = vld [vmem:[%s789] sm:$0xf]
      %806 = vst [vmem:[#allocation1] ss:$2 sm:$0xff] %v804
      %v807 = vld.sshfl [vmem:[#allocation1] sm:$0xff pattern:$0x75643120]
      %809 = vrot.lane.b32.xlu0 %v807, 112
      %v810 = vpop.permute.xlu0 %809
      %v811 = vrot.slane %v810, 4
      %v812 = vsel %vm498, %v810, %v811
      %814 = vst [vmem:[#allocation4 + $0x10] sm:$0x3] %v812
      %v815 = vld [vmem:[#allocation4] sm:$0xf]
      %v816 = vld [vmem:[#allocation4 + $0x4] sm:$0xf]
      %v817 = vld [vmem:[#allocation4 + $0x8] sm:$0xf]
      %v818 = vld [vmem:[#allocation4 + $0xc] sm:$0xf]
      %v819 = vld [vmem:[#allocation4 + $0x10] sm:$0x3]
      %v825 = vunpack.c.l.b16 %v815
      %v826 = vunpack.c.l.b16 %v816
      %v827 = vunpack.c.l.b16 %v817
      %v828 = vunpack.c.l.b16 %v818
      %v829 = vunpack.c.l.b16 %v819
      %v830 = vpack.c.b16 %v826, %v825
      %v831 = vpack.c.b16 %v828, %v827
      %v832 = vpack.c.b16 %v829, %v829
      %v836 = vsel %vm583, %v832, 0
      %838 = vmatpush.bf16.msra.mxu0 0
      %839 = vmatpush.bf16.msra.mxu0 0
      %840 = vmatpush.bf16.msra.mxu0 0
      %841 = vmatpush.bf16.msra.mxu0 0
      %842 = vmatpush.bf16.msra.mxu0 0
      %843 = vmatpush.bf16.msra.mxu0 %v836
      %844 = vmatpush.bf16.msra.mxu0 %v831
      %845 = vmatpush.bf16.msra.mxu0 %v830
      %846 = vmatmul.bf16.gmra.mxu0 %v581
      %v847 = vpop.f32.mrf.mxu0
      %v848 = vadd.f32 0.0, %v847
      %v849 = vpop.f32.mrf.mxu0
      %850 = vdwg.mxu0
      %s851 = scalar_lea.vmem %s196, 16
      %852 = vst [vmem:[%s851] sm:$0xff] %v848
      %853 = vadd.xlane.f32.xlu0 %v848
      %v854 = vpop.xlane.xlu0 %853
      %v855 = vadd.f32 %v729, %v854
      %v856 = vmul.f32 %v848, %v848
      %857 = vadd.xlane.f32.xlu0 %v856
      %v858 = vpop.xlane.xlu0 %857
      %v859 = vadd.f32 %v733, %v858
      %v860 = vld [vmem:[%s663] sm:$0x3]
      %861 = vst [vmem:[#allocation4] sm:$0x3] %v860
      %v862 = vld [vmem:[%s663] sm:$0xf]
      %s864 = scalar_lea.vmem [#allocation1], 1
      %865 = vst [vmem:[%s864] ss:$2 sm:$0xff] %v862
      %v866 = vld.sshfl [vmem:[#allocation1] sm:$0xff pattern:$0x75643120]
      %868 = vrot.lane.b32.xlu0 %v866, 120
      %v869 = vpop.permute.xlu0 %868
      %v870 = vrot.slane %v869, 4
      %v871 = vsel %vm486, %v869, %v870
      %873 = vst [vmem:[#allocation4] sm:$0xc] %v871
      %v874 = vld [vmem:[%s663] sm:$0xf]
      %876 = vst [vmem:[#allocation1] ss:$2 sm:$0xff] %v874
      %v877 = vld.sshfl [vmem:[#allocation1] sm:$0xff pattern:$0x75643120]
      %879 = vrot.lane.b32.xlu0 %v877, 112
      %v880 = vpop.permute.xlu0 %879
      %v881 = vrot.slane %v880, 4
      %v882 = vsel %vm498, %v880, %v881
      %884 = vst [vmem:[#allocation4 + $0x4] sm:$0x3] %v882
      %v885 = vld [vmem:[%s789] sm:$0x3]
      %s887 = scalar_lea.vmem [#allocation1], 1
      %888 = vst [vmem:[%s887] ss:$2 sm:$0xff] %v885
      %v889 = vld.sshfl [vmem:[#allocation1] sm:$0xff pattern:$0x75643120]
      %891 = vst [vmem:[#allocation4 + $0x4] sm:$0xc] %v889
      %v892 = vld [vmem:[%s789] sm:$0xf]
      %894 = vst [vmem:[#allocation1] ss:$2 sm:$0xff] %v892
      %v895 = vld.sshfl [vmem:[#allocation1] sm:$0xff pattern:$0x75643120]
      %897 = vrot.lane.b32.xlu0 %v895, 120
      %v898 = vpop.permute.xlu0 %897
      %v899 = vrot.slane %v898, 4
      %v900 = vsel %vm486, %v898, %v899
      %902 = vst [vmem:[#allocation4 + $0x8] sm:$0x3] %v900
      %v903 = vld [vmem:[%s789] sm:$0xf]
      %s905 = scalar_lea.vmem [#allocation1], 1
      %906 = vst [vmem:[%s905] ss:$2 sm:$0xff] %v903
      %v907 = vld.sshfl [vmem:[#allocation1] sm:$0xff pattern:$0x75643120]
      %909 = vrot.lane.b32.xlu0 %v907, 112
      %v910 = vpop.permute.xlu0 %909
      %v911 = vrot.slane %v910, 4
      %v912 = vsel %vm498, %v910, %v911
      %914 = vst [vmem:[#allocation4 + $0x8] sm:$0xc] %v912
      %s915 = scalar_lea.vmem [#allocation3], 20
      %v916 = vld [vmem:[%s915] sm:$0x3]
      %917 = vst [vmem:[#allocation4 + $0xc] sm:$0x3] %v916
      %v918 = vld [vmem:[%s915] sm:$0xf]
      %s920 = scalar_lea.vmem [#allocation1], 1
      %921 = vst [vmem:[%s920] ss:$2 sm:$0xff] %v918
      %v922 = vld.sshfl [vmem:[#allocation1] sm:$0xff pattern:$0x75643120]
      %924 = vrot.lane.b32.xlu0 %v922, 120
      %v925 = vpop.permute.xlu0 %924
      %v926 = vrot.slane %v925, 4
      %v927 = vsel %vm486, %v925, %v926
      %929 = vst [vmem:[#allocation4 + $0xc] sm:$0xc] %v927
      %v930 = vld [vmem:[%s915] sm:$0xf]
      %932 = vst [vmem:[#allocation1] ss:$2 sm:$0xff] %v930
      %v933 = vld.sshfl [vmem:[#allocation1] sm:$0xff pattern:$0x75643120]
      %935 = vrot.lane.b32.xlu0 %v933, 112
      %v936 = vpop.permute.xlu0 %935
      %v937 = vrot.slane %v936, 4
      %v938 = vsel %vm498, %v936, %v937
      %940 = vst [vmem:[#allocation4 + $0x10] sm:$0x3] %v938
      %v941 = vld [vmem:[#allocation4] sm:$0xf]
      %v942 = vld [vmem:[#allocation4 + $0x4] sm:$0xf]
      %v943 = vld [vmem:[#allocation4 + $0x8] sm:$0xf]
      %v944 = vld [vmem:[#allocation4 + $0xc] sm:$0xf]
      %v945 = vld [vmem:[#allocation4 + $0x10] sm:$0x3]
      %v951 = vunpack.c.l.b16 %v941
      %v952 = vunpack.c.l.b16 %v942
      %v953 = vunpack.c.l.b16 %v943
      %v954 = vunpack.c.l.b16 %v944
      %v955 = vunpack.c.l.b16 %v945
      %v956 = vpack.c.b16 %v952, %v951
      %v957 = vpack.c.b16 %v954, %v953
      %v958 = vpack.c.b16 %v955, %v955
      %v962 = vsel %vm583, %v958, 0
      %964 = vmatpush.bf16.msra.mxu0 0
      %965 = vmatpush.bf16.msra.mxu0 0
      %966 = vmatpush.bf16.msra.mxu0 0
      %967 = vmatpush.bf16.msra.mxu0 0
      %968 = vmatpush.bf16.msra.mxu0 0
      %969 = vmatpush.bf16.msra.mxu0 %v962
      %970 = vmatpush.bf16.msra.mxu0 %v957
      %971 = vmatpush.bf16.msra.mxu0 %v956
      %972 = vmatmul.bf16.gmra.mxu0 %v581
      %v973 = vpop.f32.mrf.mxu0
      %v974 = vadd.f32 0.0, %v973
      %v975 = vpop.f32.mrf.mxu0
      %976 = vdwg.mxu0
      %s977 = scalar_lea.vmem %s196, 24
      %978 = vst [vmem:[%s977] sm:$0xff] %v974
      %979 = vadd.xlane.f32.xlu0 %v974
      %v980 = vpop.xlane.xlu0 %979
      %v981 = vadd.f32 %v855, %v980
      %v982 = vmul.f32 %v974, %v974
      %983 = vadd.xlane.f32.xlu0 %v982
      %v984 = vpop.xlane.xlu0 %983
      %v985 = vadd.f32 %v859, %v984
      %v986 = vld [vmem:[%s789] sm:$0x3]
      %987 = vst [vmem:[#allocation4] sm:$0x3] %v986
      %v988 = vld [vmem:[%s789] sm:$0xf]
      %s990 = scalar_lea.vmem [#allocation1], 1
      %991 = vst [vmem:[%s990] ss:$2 sm:$0xff] %v988
      %v992 = vld.sshfl [vmem:[#allocation1] sm:$0xff pattern:$0x75643120]
      %994 = vrot.lane.b32.xlu0 %v992, 120
      %v995 = vpop.permute.xlu0 %994
      %v996 = vrot.slane %v995, 4
      %v997 = vsel %vm486, %v995, %v996
      %999 = vst [vmem:[#allocation4] sm:$0xc] %v997
      %v1000 = vld [vmem:[%s789] sm:$0xf]
      %1002 = vst [vmem:[#allocation1] ss:$2 sm:$0xff] %v1000
      %v1003 = vld.sshfl [vmem:[#allocation1] sm:$0xff pattern:$0x75643120]
      %1005 = vrot.lane.b32.xlu0 %v1003, 112
      %v1006 = vpop.permute.xlu0 %1005
      %v1007 = vrot.slane %v1006, 4
      %v1008 = vsel %vm498, %v1006, %v1007
      %1010 = vst [vmem:[#allocation4 + $0x4] sm:$0x3] %v1008
      %v1011 = vld [vmem:[%s915] sm:$0x3]
      %s1013 = scalar_lea.vmem [#allocation1], 1
      %1014 = vst [vmem:[%s1013] ss:$2 sm:$0xff] %v1011
      %v1015 = vld.sshfl [vmem:[#allocation1] sm:$0xff pattern:$0x75643120]
      %1017 = vst [vmem:[#allocation4 + $0x4] sm:$0xc] %v1015
      %v1018 = vld [vmem:[%s915] sm:$0xf]
      %1020 = vst [vmem:[#allocation1] ss:$2 sm:$0xff] %v1018
      %v1021 = vld.sshfl [vmem:[#allocation1] sm:$0xff pattern:$0x75643120]
      %1023 = vrot.lane.b32.xlu0 %v1021, 120
      %v1024 = vpop.permute.xlu0 %1023
      %v1025 = vrot.slane %v1024, 4
      %v1026 = vsel %vm486, %v1024, %v1025
      %1028 = vst [vmem:[#allocation4 + $0x8] sm:$0x3] %v1026
      %v1029 = vld [vmem:[%s915] sm:$0xf]
      %s1031 = scalar_lea.vmem [#allocation1], 1
      %1032 = vst [vmem:[%s1031] ss:$2 sm:$0xff] %v1029
      %v1033 = vld.sshfl [vmem:[#allocation1] sm:$0xff pattern:$0x75643120]
      %1035 = vrot.lane.b32.xlu0 %v1033, 112
      %v1036 = vpop.permute.xlu0 %1035
      %v1037 = vrot.slane %v1036, 4
      %v1038 = vsel %vm498, %v1036, %v1037
      %1040 = vst [vmem:[#allocation4 + $0x8] sm:$0xc] %v1038
      %s1041 = scalar_lea.vmem [#allocation3], 24
      %v1042 = vld [vmem:[%s1041] sm:$0x3]
      %1043 = vst [vmem:[#allocation4 + $0xc] sm:$0x3] %v1042
      %v1044 = vld [vmem:[%s1041] sm:$0xf]
      %s1046 = scalar_lea.vmem [#allocation1], 1
      %1047 = vst [vmem:[%s1046] ss:$2 sm:$0xff] %v1044
      %v1048 = vld.sshfl [vmem:[#allocation1] sm:$0xff pattern:$0x75643120]
      %1050 = vrot.lane.b32.xlu0 %v1048, 120
      %v1051 = vpop.permute.xlu0 %1050
      %v1052 = vrot.slane %v1051, 4
      %v1053 = vsel %vm486, %v1051, %v1052
      %1055 = vst [vmem:[#allocation4 + $0xc] sm:$0xc] %v1053
      %v1056 = vld [vmem:[%s1041] sm:$0xf]
      %1058 = vst [vmem:[#allocation1] ss:$2 sm:$0xff] %v1056
      %v1059 = vld.sshfl [vmem:[#allocation1] sm:$0xff pattern:$0x75643120]
      %1061 = vrot.lane.b32.xlu0 %v1059, 112
      %v1062 = vpop.permute.xlu0 %1061
      %v1063 = vrot.slane %v1062, 4
      %v1064 = vsel %vm498, %v1062, %v1063
      %1066 = vst [vmem:[#allocation4 + $0x10] sm:$0x3] %v1064
      %v1067 = vld [vmem:[#allocation4] sm:$0xf]
      %v1068 = vld [vmem:[#allocation4 + $0x4] sm:$0xf]
      %v1069 = vld [vmem:[#allocation4 + $0x8] sm:$0xf]
      %v1070 = vld [vmem:[#allocation4 + $0xc] sm:$0xf]
      %v1071 = vld [vmem:[#allocation4 + $0x10] sm:$0x3]
      %v1077 = vunpack.c.l.b16 %v1067
      %v1078 = vunpack.c.l.b16 %v1068
      %v1079 = vunpack.c.l.b16 %v1069
      %v1080 = vunpack.c.l.b16 %v1070
      %v1081 = vunpack.c.l.b16 %v1071
      %v1082 = vpack.c.b16 %v1078, %v1077
      %v1083 = vpack.c.b16 %v1080, %v1079
      %v1084 = vpack.c.b16 %v1081, %v1081
      %v1088 = vsel %vm583, %v1084, 0
      %1090 = vmatpush.bf16.msra.mxu0 0
      %1091 = vmatpush.bf16.msra.mxu0 0
      %1092 = vmatpush.bf16.msra.mxu0 0
      %1093 = vmatpush.bf16.msra.mxu0 0
      %1094 = vmatpush.bf16.msra.mxu0 0
      %1095 = vmatpush.bf16.msra.mxu0 %v1088
      %1096 = vmatpush.bf16.msra.mxu0 %v1083
      %1097 = vmatpush.bf16.msra.mxu0 %v1082
      %1098 = vmatmul.bf16.gmra.mxu0 %v581
      %v1099 = vpop.f32.mrf.mxu0
      %v1100 = vadd.f32 0.0, %v1099
      %v1101 = vpop.f32.mrf.mxu0
      %1102 = vdwg.mxu0
      %s1103 = scalar_lea.vmem %s196, 32
      %1104 = vst [vmem:[%s1103] sm:$0xff] %v1100
      %1105 = vadd.xlane.f32.xlu0 %v1100
      %v1106 = vpop.xlane.xlu0 %1105
      %v1107 = vadd.f32 %v981, %v1106
      %v1108 = vmul.f32 %v1100, %v1100
      %1109 = vadd.xlane.f32.xlu0 %v1108
      %v1110 = vpop.xlane.xlu0 %1109
      %v1111 = vadd.f32 %v985, %v1110
      %v1112 = vld [vmem:[%s915] sm:$0x3]
      %1113 = vst [vmem:[#allocation4] sm:$0x3] %v1112
      %v1114 = vld [vmem:[%s915] sm:$0xf]
      %s1116 = scalar_lea.vmem [#allocation1], 1
      %1117 = vst [vmem:[%s1116] ss:$2 sm:$0xff] %v1114
      %v1118 = vld.sshfl [vmem:[#allocation1] sm:$0xff pattern:$0x75643120]
      %1120 = vrot.lane.b32.xlu0 %v1118, 120
      %v1121 = vpop.permute.xlu0 %1120
      %v1122 = vrot.slane %v1121, 4
      %v1123 = vsel %vm486, %v1121, %v1122
      %1125 = vst [vmem:[#allocation4] sm:$0xc] %v1123
      %v1126 = vld [vmem:[%s915] sm:$0xf]
      %1128 = vst [vmem:[#allocation1] ss:$2 sm:$0xff] %v1126
      %v1129 = vld.sshfl [vmem:[#allocation1] sm:$0xff pattern:$0x75643120]
      %1131 = vrot.lane.b32.xlu0 %v1129, 112
      %v1132 = vpop.permute.xlu0 %1131
      %v1133 = vrot.slane %v1132, 4
      %v1134 = vsel %vm498, %v1132, %v1133
      %1136 = vst [vmem:[#allocation4 + $0x4] sm:$0x3] %v1134
      %v1137 = vld [vmem:[%s1041] sm:$0x3]
      %s1139 = scalar_lea.vmem [#allocation1], 1
      %1140 = vst [vmem:[%s1139] ss:$2 sm:$0xff] %v1137
      %v1141 = vld.sshfl [vmem:[#allocation1] sm:$0xff pattern:$0x75643120]
      %1143 = vst [vmem:[#allocation4 + $0x4] sm:$0xc] %v1141
      %v1144 = vld [vmem:[%s1041] sm:$0xf]
      %1146 = vst [vmem:[#allocation1] ss:$2 sm:$0xff] %v1144
      %v1147 = vld.sshfl [vmem:[#allocation1] sm:$0xff pattern:$0x75643120]
      %1149 = vrot.lane.b32.xlu0 %v1147, 120
      %v1150 = vpop.permute.xlu0 %1149
      %v1151 = vrot.slane %v1150, 4
      %v1152 = vsel %vm486, %v1150, %v1151
      %1154 = vst [vmem:[#allocation4 + $0x8] sm:$0x3] %v1152
      %v1155 = vld [vmem:[%s1041] sm:$0xf]
      %s1157 = scalar_lea.vmem [#allocation1], 1
      %1158 = vst [vmem:[%s1157] ss:$2 sm:$0xff] %v1155
      %v1159 = vld.sshfl [vmem:[#allocation1] sm:$0xff pattern:$0x75643120]
      %1161 = vrot.lane.b32.xlu0 %v1159, 112
      %v1162 = vpop.permute.xlu0 %1161
      %v1163 = vrot.slane %v1162, 4
      %v1164 = vsel %vm498, %v1162, %v1163
      %1166 = vst [vmem:[#allocation4 + $0x8] sm:$0xc] %v1164
      %s1167 = scalar_lea.vmem [#allocation3], 28
      %v1168 = vld [vmem:[%s1167] sm:$0x3]
      %1169 = vst [vmem:[#allocation4 + $0xc] sm:$0x3] %v1168
      %v1170 = vld [vmem:[%s1167] sm:$0xf]
      %s1172 = scalar_lea.vmem [#allocation1], 1
      %1173 = vst [vmem:[%s1172] ss:$2 sm:$0xff] %v1170
      %v1174 = vld.sshfl [vmem:[#allocation1] sm:$0xff pattern:$0x75643120]
      %1176 = vrot.lane.b32.xlu0 %v1174, 120
      %v1177 = vpop.permute.xlu0 %1176
      %v1178 = vrot.slane %v1177, 4
      %v1179 = vsel %vm486, %v1177, %v1178
      %1181 = vst [vmem:[#allocation4 + $0xc] sm:$0xc] %v1179
      %v1182 = vld [vmem:[%s1167] sm:$0xf]
      %1184 = vst [vmem:[#allocation1] ss:$2 sm:$0xff] %v1182
      %v1185 = vld.sshfl [vmem:[#allocation1] sm:$0xff pattern:$0x75643120]
      %1187 = vrot.lane.b32.xlu0 %v1185, 112
      %v1188 = vpop.permute.xlu0 %1187
      %v1189 = vrot.slane %v1188, 4
      %v1190 = vsel %vm498, %v1188, %v1189
      %1192 = vst [vmem:[#allocation4 + $0x10] sm:$0x3] %v1190
      %v1193 = vld [vmem:[#allocation4] sm:$0xf]
      %v1194 = vld [vmem:[#allocation4 + $0x4] sm:$0xf]
      %v1195 = vld [vmem:[#allocation4 + $0x8] sm:$0xf]
      %v1196 = vld [vmem:[#allocation4 + $0xc] sm:$0xf]
      %v1197 = vld [vmem:[#allocation4 + $0x10] sm:$0x3]
      %v1203 = vunpack.c.l.b16 %v1193
      %v1204 = vunpack.c.l.b16 %v1194
      %v1205 = vunpack.c.l.b16 %v1195
      %v1206 = vunpack.c.l.b16 %v1196
      %v1207 = vunpack.c.l.b16 %v1197
      %v1208 = vpack.c.b16 %v1204, %v1203
      %v1209 = vpack.c.b16 %v1206, %v1205
      %v1210 = vpack.c.b16 %v1207, %v1207
      %v1214 = vsel %vm583, %v1210, 0
      %1216 = vmatpush.bf16.msra.mxu0 0
      %1217 = vmatpush.bf16.msra.mxu0 0
      %1218 = vmatpush.bf16.msra.mxu0 0
      %1219 = vmatpush.bf16.msra.mxu0 0
      %1220 = vmatpush.bf16.msra.mxu0 0
      %1221 = vmatpush.bf16.msra.mxu0 %v1214
      %1222 = vmatpush.bf16.msra.mxu0 %v1209
      %1223 = vmatpush.bf16.msra.mxu0 %v1208
      %1224 = vmatmul.bf16.gmra.mxu0 %v581
      %v1225 = vpop.f32.mrf.mxu0
      %v1226 = vadd.f32 0.0, %v1225
      %v1227 = vpop.f32.mrf.mxu0
      %1228 = vdwg.mxu0
      %s1229 = scalar_lea.vmem %s196, 40
      %1230 = vst [vmem:[%s1229] sm:$0xff] %v1226
      %1231 = vadd.xlane.f32.xlu0 %v1226
      %v1232 = vpop.xlane.xlu0 %1231
      %v1233 = vadd.f32 %v1107, %v1232
      %v1234 = vmul.f32 %v1226, %v1226
      %1235 = vadd.xlane.f32.xlu0 %v1234
      %v1236 = vpop.xlane.xlu0 %1235
      %v1237 = vadd.f32 %v1111, %v1236
      %v1238 = vld [vmem:[%s1041] sm:$0x3]
      %1239 = vst [vmem:[#allocation4] sm:$0x3] %v1238
      %v1240 = vld [vmem:[%s1041] sm:$0xf]
      %s1242 = scalar_lea.vmem [#allocation1], 1
      %1243 = vst [vmem:[%s1242] ss:$2 sm:$0xff] %v1240
      %v1244 = vld.sshfl [vmem:[#allocation1] sm:$0xff pattern:$0x75643120]
      %1246 = vrot.lane.b32.xlu0 %v1244, 120
      %v1247 = vpop.permute.xlu0 %1246
      %v1248 = vrot.slane %v1247, 4
      %v1249 = vsel %vm486, %v1247, %v1248
      %1251 = vst [vmem:[#allocation4] sm:$0xc] %v1249
      %v1252 = vld [vmem:[%s1041] sm:$0xf]
      %1254 = vst [vmem:[#allocation1] ss:$2 sm:$0xff] %v1252
      %v1255 = vld.sshfl [vmem:[#allocation1] sm:$0xff pattern:$0x75643120]
      %1257 = vrot.lane.b32.xlu0 %v1255, 112
      %v1258 = vpop.permute.xlu0 %1257
      %v1259 = vrot.slane %v1258, 4
      %v1260 = vsel %vm498, %v1258, %v1259
      %1262 = vst [vmem:[#allocation4 + $0x4] sm:$0x3] %v1260
      %v1263 = vld [vmem:[%s1167] sm:$0x3]
      %s1265 = scalar_lea.vmem [#allocation1], 1
      %1266 = vst [vmem:[%s1265] ss:$2 sm:$0xff] %v1263
      %v1267 = vld.sshfl [vmem:[#allocation1] sm:$0xff pattern:$0x75643120]
      %1269 = vst [vmem:[#allocation4 + $0x4] sm:$0xc] %v1267
      %v1270 = vld [vmem:[%s1167] sm:$0xf]
      %1272 = vst [vmem:[#allocation1] ss:$2 sm:$0xff] %v1270
      %v1273 = vld.sshfl [vmem:[#allocation1] sm:$0xff pattern:$0x75643120]
      %1275 = vrot.lane.b32.xlu0 %v1273, 120
      %v1276 = vpop.permute.xlu0 %1275
      %v1277 = vrot.slane %v1276, 4
      %v1278 = vsel %vm486, %v1276, %v1277
      %1280 = vst [vmem:[#allocation4 + $0x8] sm:$0x3] %v1278
      %v1281 = vld [vmem:[%s1167] sm:$0xf]
      %s1283 = scalar_lea.vmem [#allocation1], 1
      %1284 = vst [vmem:[%s1283] ss:$2 sm:$0xff] %v1281
      %v1285 = vld.sshfl [vmem:[#allocation1] sm:$0xff pattern:$0x75643120]
      %1287 = vrot.lane.b32.xlu0 %v1285, 112
      %v1288 = vpop.permute.xlu0 %1287
      %v1289 = vrot.slane %v1288, 4
      %v1290 = vsel %vm498, %v1288, %v1289
      %1292 = vst [vmem:[#allocation4 + $0x8] sm:$0xc] %v1290
      %s1293 = scalar_lea.vmem [#allocation3], 32
      %v1294 = vld [vmem:[%s1293] sm:$0x3]
      %1295 = vst [vmem:[#allocation4 + $0xc] sm:$0x3] %v1294
      %v1296 = vld [vmem:[%s1293] sm:$0xf]
      %s1298 = scalar_lea.vmem [#allocation1], 1
      %1299 = vst [vmem:[%s1298] ss:$2 sm:$0xff] %v1296
      %v1300 = vld.sshfl [vmem:[#allocation1] sm:$0xff pattern:$0x75643120]
      %1302 = vrot.lane.b32.xlu0 %v1300, 120
      %v1303 = vpop.permute.xlu0 %1302
      %v1304 = vrot.slane %v1303, 4
      %v1305 = vsel %vm486, %v1303, %v1304
      %1307 = vst [vmem:[#allocation4 + $0xc] sm:$0xc] %v1305
      %v1308 = vld [vmem:[%s1293] sm:$0xf]
      %1310 = vst [vmem:[#allocation1] ss:$2 sm:$0xff] %v1308
      %v1311 = vld.sshfl [vmem:[#allocation1] sm:$0xff pattern:$0x75643120]
      %1313 = vrot.lane.b32.xlu0 %v1311, 112
      %v1314 = vpop.permute.xlu0 %1313
      %v1315 = vrot.slane %v1314, 4
      %v1316 = vsel %vm498, %v1314, %v1315
      %1318 = vst [vmem:[#allocation4 + $0x10] sm:$0x3] %v1316
      %v1319 = vld [vmem:[#allocation4] sm:$0xf]
      %v1320 = vld [vmem:[#allocation4 + $0x4] sm:$0xf]
      %v1321 = vld [vmem:[#allocation4 + $0x8] sm:$0xf]
      %v1322 = vld [vmem:[#allocation4 + $0xc] sm:$0xf]
      %v1323 = vld [vmem:[#allocation4 + $0x10] sm:$0x3]
      %v1329 = vunpack.c.l.b16 %v1319
      %v1330 = vunpack.c.l.b16 %v1320
      %v1331 = vunpack.c.l.b16 %v1321
      %v1332 = vunpack.c.l.b16 %v1322
      %v1333 = vunpack.c.l.b16 %v1323
      %v1334 = vpack.c.b16 %v1330, %v1329
      %v1335 = vpack.c.b16 %v1332, %v1331
      %v1336 = vpack.c.b16 %v1333, %v1333
      %v1340 = vsel %vm583, %v1336, 0
      %1342 = vmatpush.bf16.msra.mxu0 0
      %1343 = vmatpush.bf16.msra.mxu0 0
      %1344 = vmatpush.bf16.msra.mxu0 0
      %1345 = vmatpush.bf16.msra.mxu0 0
      %1346 = vmatpush.bf16.msra.mxu0 0
      %1347 = vmatpush.bf16.msra.mxu0 %v1340
      %1348 = vmatpush.bf16.msra.mxu0 %v1335
      %1349 = vmatpush.bf16.msra.mxu0 %v1334
      %1350 = vmatmul.bf16.gmra.mxu0 %v581
      %v1351 = vpop.f32.mrf.mxu0
      %v1352 = vadd.f32 0.0, %v1351
      %v1353 = vpop.f32.mrf.mxu0
      %1354 = vdwg.mxu0
      %s1355 = scalar_lea.vmem %s196, 48
      %1356 = vst [vmem:[%s1355] sm:$0xff] %v1352
      %1357 = vadd.xlane.f32.xlu0 %v1352
      %v1358 = vpop.xlane.xlu0 %1357
      %v1359 = vadd.f32 %v1233, %v1358
      %v1360 = vmul.f32 %v1352, %v1352
      %1361 = vadd.xlane.f32.xlu0 %v1360
      %v1362 = vpop.xlane.xlu0 %1361
      %v1363 = vadd.f32 %v1237, %v1362
      %v1364 = vld [vmem:[%s1167] sm:$0x3]
      %1365 = vst [vmem:[#allocation4] sm:$0x3] %v1364
      %v1366 = vld [vmem:[%s1167] sm:$0xf]
      %s1368 = scalar_lea.vmem [#allocation1], 1
      %1369 = vst [vmem:[%s1368] ss:$2 sm:$0xff] %v1366
      %v1370 = vld.sshfl [vmem:[#allocation1] sm:$0xff pattern:$0x75643120]
      %1372 = vrot.lane.b32.xlu0 %v1370, 120
      %v1373 = vpop.permute.xlu0 %1372
      %v1374 = vrot.slane %v1373, 4
      %v1375 = vsel %vm486, %v1373, %v1374
      %1377 = vst [vmem:[#allocation4] sm:$0xc] %v1375
      %v1378 = vld [vmem:[%s1167] sm:$0xf]
      %1380 = vst [vmem:[#allocation1] ss:$2 sm:$0xff] %v1378
      %v1381 = vld.sshfl [vmem:[#allocation1] sm:$0xff pattern:$0x75643120]
      %1383 = vrot.lane.b32.xlu0 %v1381, 112
      %v1384 = vpop.permute.xlu0 %1383
      %v1385 = vrot.slane %v1384, 4
      %v1386 = vsel %vm498, %v1384, %v1385
      %1388 = vst [vmem:[#allocation4 + $0x4] sm:$0x3] %v1386
      %v1389 = vld [vmem:[%s1293] sm:$0x3]
      %s1391 = scalar_lea.vmem [#allocation1], 1
      %1392 = vst [vmem:[%s1391] ss:$2 sm:$0xff] %v1389
      %v1393 = vld.sshfl [vmem:[#allocation1] sm:$0xff pattern:$0x75643120]
      %1395 = vst [vmem:[#allocation4 + $0x4] sm:$0xc] %v1393
      %v1396 = vld [vmem:[%s1293] sm:$0xf]
      %1398 = vst [vmem:[#allocation1] ss:$2 sm:$0xff] %v1396
      %v1399 = vld.sshfl [vmem:[#allocation1] sm:$0xff pattern:$0x75643120]
      %1401 = vrot.lane.b32.xlu0 %v1399, 120
      %v1402 = vpop.permute.xlu0 %1401
      %v1403 = vrot.slane %v1402, 4
      %v1404 = vsel %vm486, %v1402, %v1403
      %1406 = vst [vmem:[#allocation4 + $0x8] sm:$0x3] %v1404
      %v1407 = vld [vmem:[%s1293] sm:$0xf]
      %s1409 = scalar_lea.vmem [#allocation1], 1
      %1410 = vst [vmem:[%s1409] ss:$2 sm:$0xff] %v1407
      %v1411 = vld.sshfl [vmem:[#allocation1] sm:$0xff pattern:$0x75643120]
      %1413 = vrot.lane.b32.xlu0 %v1411, 112
      %v1414 = vpop.permute.xlu0 %1413
      %v1415 = vrot.slane %v1414, 4
      %v1416 = vsel %vm498, %v1414, %v1415
      %1418 = vst [vmem:[#allocation4 + $0x8] sm:$0xc] %v1416
      %s1419 = scalar_lea.vmem [#allocation3], 36
      %v1420 = vld [vmem:[%s1419] sm:$0x3]
      %1421 = vst [vmem:[#allocation4 + $0xc] sm:$0x3] %v1420
      %v1422 = vld [vmem:[%s1419] sm:$0xf]
      %s1424 = scalar_lea.vmem [#allocation1], 1
      %1425 = vst [vmem:[%s1424] ss:$2 sm:$0xff] %v1422
      %v1426 = vld.sshfl [vmem:[#allocation1] sm:$0xff pattern:$0x75643120]
      %1428 = vrot.lane.b32.xlu0 %v1426, 120
      %v1429 = vpop.permute.xlu0 %1428
      %v1430 = vrot.slane %v1429, 4
      %v1431 = vsel %vm486, %v1429, %v1430
      %1433 = vst [vmem:[#allocation4 + $0xc] sm:$0xc] %v1431
      %v1434 = vld [vmem:[%s1419] sm:$0xf]
      %1436 = vst [vmem:[#allocation1] ss:$2 sm:$0xff] %v1434
      %v1437 = vld.sshfl [vmem:[#allocation1] sm:$0xff pattern:$0x75643120]
      %1439 = vrot.lane.b32.xlu0 %v1437, 112
      %v1440 = vpop.permute.xlu0 %1439
      %v1441 = vrot.slane %v1440, 4
      %v1442 = vsel %vm498, %v1440, %v1441
      %1444 = vst [vmem:[#allocation4 + $0x10] sm:$0x3] %v1442
      %v1445 = vld [vmem:[#allocation4] sm:$0xf]
      %v1446 = vld [vmem:[#allocation4 + $0x4] sm:$0xf]
      %v1447 = vld [vmem:[#allocation4 + $0x8] sm:$0xf]
      %v1448 = vld [vmem:[#allocation4 + $0xc] sm:$0xf]
      %v1449 = vld [vmem:[#allocation4 + $0x10] sm:$0x3]
      %v1455 = vunpack.c.l.b16 %v1445
      %v1456 = vunpack.c.l.b16 %v1446
      %v1457 = vunpack.c.l.b16 %v1447
      %v1458 = vunpack.c.l.b16 %v1448
      %v1459 = vunpack.c.l.b16 %v1449
      %v1460 = vpack.c.b16 %v1456, %v1455
      %v1461 = vpack.c.b16 %v1458, %v1457
      %v1462 = vpack.c.b16 %v1459, %v1459
      %v1466 = vsel %vm583, %v1462, 0
      %1468 = vmatpush.bf16.msra.mxu0 0
      %1469 = vmatpush.bf16.msra.mxu0 0
      %1470 = vmatpush.bf16.msra.mxu0 0
      %1471 = vmatpush.bf16.msra.mxu0 0
      %1472 = vmatpush.bf16.msra.mxu0 0
      %1473 = vmatpush.bf16.msra.mxu0 %v1466
      %1474 = vmatpush.bf16.msra.mxu0 %v1461
      %1475 = vmatpush.bf16.msra.mxu0 %v1460
      %1476 = vmatmul.bf16.gmra.mxu0 %v581
      %v1477 = vpop.f32.mrf.mxu0
      %v1478 = vadd.f32 0.0, %v1477
      %v1479 = vpop.f32.mrf.mxu0
      %1480 = vdwg.mxu0
      %s1481 = scalar_lea.vmem %s196, 56
      %1482 = vst [vmem:[%s1481] sm:$0xff] %v1478
      %1483 = vadd.xlane.f32.xlu0 %v1478
      %v1484 = vpop.xlane.xlu0 %1483
      %v1485 = vadd.f32 %v1359, %v1484
      %v1486 = vmul.f32 %v1478, %v1478
      %1487 = vadd.xlane.f32.xlu0 %v1486
      %v1488 = vpop.xlane.xlu0 %1487
      %v1489 = vadd.f32 %v1363, %v1488
      %vm1490 = vcmask 7168
      %1491 = vst.msk [vmem:[%s207] sm:$0xff] %vm1490, %v1485
      %1492 = vst.msk [vmem:[%s215] sm:$0xff] %vm1490, %v1489
      %s1493 = smul.u32 %s20, 2
      %s1494 = sadd.s32 %s1493, %s21
      %s1495 = smul.u32 8, %s1494
      %p1496 = scmp.lt.s32.totalorder %s1495, 31
      %s1497 = scalar_select %p1496, %s1495, 31
      %s1498 = smul.addr %s1497, 8
      %s1499 = scalar_lea.vmem %s2, %s1498
      %p1500 = scmp.lt.s32.totalorder %s20, 1
      %s1501 = scalar_select %p1500, %s20, 1
      %p1502 = scmp.lt.s32.totalorder %s21, 1
      %s1503 = scalar_select %p1502, %s21, 1
      %s1504 = smul.addr %s1501, 2
      %s1505 = sadd.s32 %s1503, %s1504
      %s1506 = smul.addr %s1505, 8
      %s1507 = scalar_lea.vmem %s3, %s1506
      %p1508 = scmp.lt.s32.totalorder %s20, 1
      %s1509 = scalar_select %p1508, %s20, 1
      %p1510 = scmp.lt.s32.totalorder %s21, 1
      %s1511 = scalar_select %p1510, %s21, 1
      %s1512 = smul.addr %s1509, 2
      %s1513 = sadd.s32 %s1511, %s1512
      %s1514 = smul.addr %s1513, 8
      %s1515 = scalar_lea.vmem %s4, %s1514
      // Predicated region
      $region128: #{fcn_conv3_forward.4} parent=23 // pred_check
        %p1516 = pneg %p71
      $region129: #{fcn_conv3_forward.4} parent=23 // pred_check_branch
        %1518 = sbr.rel (%p1516) target = $region131
      $region130: #{fcn_conv3_forward.4} parent=23 // pred_region
        %s1519 = smul.u32 %s20, 2
        %s1520 = sadd.s32 %s1519, %s21
        %s1521 = smul.u32 8, %s1520
      $region131: #{fcn_conv3_forward.4} parent=23 // pred_fallthru
        _
      // Predicated region
      $region132: #{fcn_conv3_forward.4} parent=23 // pred_check
        %p1522 = pneg %p99
      $region133: #{fcn_conv3_forward.4} parent=23 // pred_check_branch
        %1524 = sbr.rel (%p1522) target = $region135
      $region134: #{fcn_conv3_forward.4} parent=23 // pred_region
        _
      $region135: #{fcn_conv3_forward.4} parent=23 // pred_fallthru
        _
      // Predicated region
      $region136: #{fcn_conv3_forward.4} parent=23 // pred_check
        %p1525 = pneg %p127
      $region137: #{fcn_conv3_forward.4} parent=23 // pred_check_branch
        %1527 = sbr.rel (%p1525) target = $region139
      $region138: #{fcn_conv3_forward.4} parent=23 // pred_region
        _
      $region139: #{fcn_conv3_forward.4} parent=23 // pred_fallthru
        _
    $region24: #{fcn_conv3_forward.4} parent=5 // pred_fallthru
      _
    %p1528 = scmp.le.s32.totalorder 2, %s11
    // Predicated region
    $region140: #{fcn_conv3_forward.4} parent=5 // pred_check
      %p1529 = pneg %p1528
    $region141: #{fcn_conv3_forward.4} parent=5 // pred_check_branch
      %1531 = sbr.rel (%p1529) target = $region143
    $region142: #{fcn_conv3_forward.4} parent=5 // pred_region
      %s1532 = ssub.s32 %s11, 2
      // Predicated region
      $region144: #{fcn_conv3_forward.4} parent=142 // pred_check
        %p1533 = pneg %p77
      $region145: #{fcn_conv3_forward.4} parent=142 // pred_check_branch
        %1535 = sbr.rel (%p1533) target = $region147
      $region146: #{fcn_conv3_forward.4} parent=142 // pred_region
        %s1536 = smul.u32 %s22, 2
        %s1537 = sadd.s32 %s1536, %s23
        %s1538 = smul.u32 8, %s1537
        %p1539 = scmp.lt.s32.totalorder %s1538, 31
        %s1540 = scalar_select %p1539, %s1538, 31
        %s1541 = smul.addr %s1540, 8
        %s1542 = scalar_lea.vmem %s2, %s1541
      $region147: #{fcn_conv3_forward.4} parent=142 // pred_fallthru
        _
      // Predicated region
      $region148: #{fcn_conv3_forward.4} parent=142 // pred_check
        %p1543 = pneg %p105
      $region149: #{fcn_conv3_forward.4} parent=142 // pred_check_branch
        %1545 = sbr.rel (%p1543) target = $region151
      $region150: #{fcn_conv3_forward.4} parent=142 // pred_region
        %p1546 = scmp.lt.s32.totalorder %s22, 1
        %s1547 = scalar_select %p1546, %s22, 1
        %p1548 = scmp.lt.s32.totalorder %s23, 1
        %s1549 = scalar_select %p1548, %s23, 1
        %s1550 = smul.addr %s1547, 2
        %s1551 = sadd.s32 %s1549, %s1550
        %s1552 = smul.addr %s1551, 8
        %s1553 = scalar_lea.vmem %s3, %s1552
      $region151: #{fcn_conv3_forward.4} parent=142 // pred_fallthru
        _
      // Predicated region
      $region152: #{fcn_conv3_forward.4} parent=142 // pred_check
        %p1554 = pneg %p133
      $region153: #{fcn_conv3_forward.4} parent=142 // pred_check_branch
        %1556 = sbr.rel (%p1554) target = $region155
      $region154: #{fcn_conv3_forward.4} parent=142 // pred_region
        %p1557 = scmp.lt.s32.totalorder %s22, 1
        %s1558 = scalar_select %p1557, %s22, 1
        %p1559 = scmp.lt.s32.totalorder %s23, 1
        %s1560 = scalar_select %p1559, %s23, 1
        %s1561 = smul.addr %s1558, 2
        %s1562 = sadd.s32 %s1560, %s1561
        %s1563 = smul.addr %s1562, 8
        %s1564 = scalar_lea.vmem %s4, %s1563
      $region155: #{fcn_conv3_forward.4} parent=142 // pred_fallthru
        _
    $region143: #{fcn_conv3_forward.4} parent=5 // pred_fallthru
      _
  $region6: #{fcn_conv3_forward.4} parent=0 // loop_footer
    %s15 = sadd.s32 1, %s11
  $region7: #{fcn_conv3_forward.4} parent=0 // loop_footer_branch
    %10 = sbr.rel target = $region3
  $region8: #{fcn_conv3_forward.4} parent=0 // loop_exit
    _
  %1565 = vsyncmov [#allocation5]
  %s1566 = vpop.sfrf %1565
  %p1567 = scmp.eq.s32.totalorder %s1566, 0
  %p1568 = pneg %p1567
  %1570 = shalt.err (%p1568)
  %s1571 = scalar_lea.sflag [#allocation5], 1
  %1572 = vsyncmov %s1571
  %s1573 = vpop.sfrf %1572
  %p1574 = scmp.eq.s32.totalorder %s1573, 0
  %p1575 = pneg %p1574
  %1577 = shalt.err (%p1575)
  %s1578 = scalar_lea.sflag [#allocation5], 2
  %1579 = vsyncmov %s1578
  %s1580 = vpop.sfrf %1579
  %p1581 = scmp.eq.s32.totalorder %s1580, 0
  %p1582 = pneg %p1581
  %1584 = shalt.err (%p1582)

// kernel: fcn_conv3_forward.5
$region0: #{fcn_conv3_forward.5}
  #allocation0 [shape = 'u32[]', space=smem, size = 0x4, offset = 0x4, fixed_abs, tag = 'smem constant byte address 0x4 - core index']
  #allocation1 [shape = 'u32[72,128]{1,0:T(1,128)}', space=vmem, size = 0x9000, scoped, tag = 'internal scratch']
  #allocation2 [shape = 'f32[10,8,128]{2,1,0:T(8,128)}', space=vmem, size = 0xa000, scoped, tag = 'scratch operand']
  #allocation3 [shape = 'bf16[10,8,144]{2,1,0:T(8,128)(2,1)}', space=vmem, size = 0xa000, scoped, tag = 'scratch operand']
  #allocation4 [shape = 'bf16[72,128]{1,0:T(8,128)(2,1)}', space=vmem, size = 0x4800, scoped, tag = 'scratch operand']
  #allocation5 [shape = 's32[3]{0}', space=sflag, size = 0xc, scoped, tag = 'scratch operand']
  #allocation6 [shape = 's32[]', space=sflag, size = 0x4, offset = 0, fixed_abs, tag = 'sflag constant byte address 0x0 - dummy sync flag']
  #allocation7 [shape = 's32[]', space=sflag, size = 0x4, offset = 0, fixed_abs, tag = 'sflag constant byte address 0x0 - dummy sync flag']
  #allocation8 [shape = 's32[]', space=sflag, size = 0x4, offset = 0, fixed_abs, tag = 'sflag constant byte address 0x0 - dummy sync flag']
  %s0 = inlined_call_operand.vmem [shape: f32[32,8,128], index: 0, kind: input, shape index: {}]
  %s1 = inlined_call_operand.vmem [shape: bf16[8,72], index: 1, kind: input, shape index: {}]
  %s2 = inlined_call_operand.vmem [shape: f32[1,8,1], index: 2, kind: input, shape index: {}]
  %s3 = inlined_call_operand.vmem [shape: f32[1,8,1], index: 3, kind: input, shape index: {}]
  %s4 = inlined_call_operand.vmem [shape: f32[32,8,128], index: 4, kind: output, shape index: {0}]
  %s5 = inlined_call_operand.vmem [shape: f32[2,2,8,1], index: 5, kind: output, shape index: {1}]
  %s6 = inlined_call_operand.vmem [shape: f32[2,2,8,1], index: 6, kind: output, shape index: {2}]
  %7 = xla_tuple %s4, %s5, %s6
  %s8 = sld [smem:[#allocation0]]
  $region172: #{fcn_conv3_forward.5} parent=0
    _
  %s10 = ssub.s32 1, %s8
  %s11 = scalar_select 0, %s10, %s8
  loop: start=0, step=1, limit=6
  $region2: #{fcn_conv3_forward.5} parent=0 // loop_pre_header
    _
  $region3: #{fcn_conv3_forward.5} parent=0 // loop_header
    %s13 = sphi 0, %s17
    %p14 = scmp.ge.s32.totalorder %s13, 6
    %s20 = sphi 0, %s32
    %s21 = sphi 0, %s28
    %s22 = sphi 0, %s20
    %s23 = sphi 0, %s21
    %s24 = sphi 0, %s22
    %s25 = sphi 0, %s23
    %s33 = sphi 0, %s33
    %s35 = sphi 0, %s33
    %s36 = sphi 0, %s35
    %s50 = sphi 0, %s36
    %s54 = sphi 0, %s54
    %s56 = sphi 0, %s54
    %s57 = sphi 0, %s56
    %s71 = sphi 0, %s57
    %s75 = sphi 0, %s75
    %s77 = sphi 0, %s75
    %s78 = sphi 0, %s77
    %s92 = sphi 0, %s78
    %s102 = sphi 0, %s104
    %s105 = sphi 0, %s102
    %s106 = sphi 0, %s105
    %s122 = sphi 0, %s106
    %s130 = sphi 0, %s132
    %s133 = sphi 0, %s130
    %s134 = sphi 0, %s133
    %s150 = sphi 0, %s134
    %s158 = sphi 0, %s160
    %s161 = sphi 0, %s158
    %s162 = sphi 0, %s161
    %s178 = sphi 0, %s162
  $region4: #{fcn_conv3_forward.5} parent=0 // loop_header_branch
    %16 = sbr.rel (%p14) target = $region8
  $region5: #{fcn_conv3_forward.5} parent=0 // loop_body
    %s18 = ssub.s32 %s13, 1
    %s19 = ssub.s32 %s13, 2
    %s26 = sadd.s32 1, %s21
    %p27 = scmp.ge.s32.totalorder %s26, 2
    %s28 = scalar_select %p27, 0, %s26
    %s29 = sadd.s32 1, %s20
    %s30 = scalar_select %p27, %s29, %s20
    %p31 = scmp.ge.s32.totalorder %s30, 2
    %s32 = scalar_select %p31, 0, %s30
    %s34 = sadd.s32 %s33, 1
    %p37 = scmp.eq.s32.totalorder %s13, 3
    %p38 = scmp.ne.s32.totalorder %s33, %s35
    %p39 = scmp.eq.s32.totalorder %s13, 0
    %p40 = por %p38, %p39
    %p41 = scmp.ne.s32.totalorder %s33, %s35
    %p42 = scmp.eq.s32.totalorder %s18, 3
    %p43 = por %p41, %p42
    %p44 = scmp.ne.s32.totalorder %s35, %s36
    %p45 = scmp.eq.s32.totalorder %s18, 0
    %p46 = por %p44, %p45
    %p47 = scmp.ne.s32.totalorder %s35, %s36
    %p48 = scmp.eq.s32.totalorder %s19, 3
    %p49 = por %p47, %p48
    %p51 = scmp.ne.s32.totalorder %s36, %s50
    %p52 = scmp.eq.s32.totalorder %s19, 0
    %p53 = por %p51, %p52
    %s55 = sadd.s32 %s54, 1
    %p58 = scmp.eq.s32.totalorder %s13, 3
    %p59 = scmp.ne.s32.totalorder %s54, %s56
    %p60 = scmp.eq.s32.totalorder %s13, 0
    %p61 = por %p59, %p60
    %p62 = scmp.ne.s32.totalorder %s54, %s56
    %p63 = scmp.eq.s32.totalorder %s18, 3
    %p64 = por %p62, %p63
    %p65 = scmp.ne.s32.totalorder %s56, %s57
    %p66 = scmp.eq.s32.totalorder %s18, 0
    %p67 = por %p65, %p66
    %p68 = scmp.ne.s32.totalorder %s56, %s57
    %p69 = scmp.eq.s32.totalorder %s19, 3
    %p70 = por %p68, %p69
    %p72 = scmp.ne.s32.totalorder %s57, %s71
    %p73 = scmp.eq.s32.totalorder %s19, 0
    %p74 = por %p72, %p73
    %s76 = sadd.s32 %s75, 1
    %p79 = scmp.eq.s32.totalorder %s13, 3
    %p80 = scmp.ne.s32.totalorder %s75, %s77
    %p81 = scmp.eq.s32.totalorder %s13, 0
    %p82 = por %p80, %p81
    %p83 = scmp.ne.s32.totalorder %s75, %s77
    %p84 = scmp.eq.s32.totalorder %s18, 3
    %p85 = por %p83, %p84
    %p86 = scmp.ne.s32.totalorder %s77, %s78
    %p87 = scmp.eq.s32.totalorder %s18, 0
    %p88 = por %p86, %p87
    %p89 = scmp.ne.s32.totalorder %s77, %s78
    %p90 = scmp.eq.s32.totalorder %s19, 3
    %p91 = por %p89, %p90
    %p93 = scmp.ne.s32.totalorder %s78, %s92
    %p94 = scmp.eq.s32.totalorder %s19, 0
    %p95 = por %p93, %p94
    %s96 = smul.u32 %s20, 2
    %s97 = sadd.s32 %s96, %s21
    %s98 = smul.u32 %s32, 2
    %s99 = sadd.s32 %s98, %s28
    %s100 = ssub.s32 %s97, %s99
    %p101 = scmp.eq.s32.totalorder %s100, 0
    %s103 = sadd.s32 %s102, 1
    %s104 = scalar_select %p101, %s102, %s103
    %p107 = pneg %p101
    %p108 = scmp.eq.s32.totalorder %s13, 3
    %p109 = por %p107, %p108
    %p110 = scmp.ne.s32.totalorder %s102, %s105
    %p111 = scmp.eq.s32.totalorder %s13, 0
    %p112 = por %p110, %p111
    %p113 = scmp.ne.s32.totalorder %s102, %s105
    %p114 = scmp.eq.s32.totalorder %s18, 3
    %p115 = por %p113, %p114
    %p116 = scmp.ne.s32.totalorder %s105, %s106
    %p117 = scmp.eq.s32.totalorder %s18, 0
    %p118 = por %p116, %p117
    %p119 = scmp.ne.s32.totalorder %s105, %s106
    %p120 = scmp.eq.s32.totalorder %s19, 3
    %p121 = por %p119, %p120
    %p123 = scmp.ne.s32.totalorder %s106, %s122
    %p124 = scmp.eq.s32.totalorder %s19, 0
    %p125 = por %p123, %p124
    %s126 = ssub.s32 %s20, %s32
    %s127 = ssub.s32 %s21, %s28
    %s128 = sor.u32 %s126, %s127
    %p129 = scmp.eq.s32.totalorder %s128, 0
    %s131 = sadd.s32 %s130, 1
    %s132 = scalar_select %p129, %s130, %s131
    %p135 = pneg %p129
    %p136 = scmp.eq.s32.totalorder %s13, 3
    %p137 = por %p135, %p136
    %p138 = scmp.ne.s32.totalorder %s130, %s133
    %p139 = scmp.eq.s32.totalorder %s13, 0
    %p140 = por %p138, %p139
    %p141 = scmp.ne.s32.totalorder %s130, %s133
    %p142 = scmp.eq.s32.totalorder %s18, 3
    %p143 = por %p141, %p142
    %p144 = scmp.ne.s32.totalorder %s133, %s134
    %p145 = scmp.eq.s32.totalorder %s18, 0
    %p146 = por %p144, %p145
    %p147 = scmp.ne.s32.totalorder %s133, %s134
    %p148 = scmp.eq.s32.totalorder %s19, 3
    %p149 = por %p147, %p148
    %p151 = scmp.ne.s32.totalorder %s134, %s150
    %p152 = scmp.eq.s32.totalorder %s19, 0
    %p153 = por %p151, %p152
    %s154 = ssub.s32 %s20, %s32
    %s155 = ssub.s32 %s21, %s28
    %s156 = sor.u32 %s154, %s155
    %p157 = scmp.eq.s32.totalorder %s156, 0
    %s159 = sadd.s32 %s158, 1
    %s160 = scalar_select %p157, %s158, %s159
    %p163 = pneg %p157
    %p164 = scmp.eq.s32.totalorder %s13, 3
    %p165 = por %p163, %p164
    %p166 = scmp.ne.s32.totalorder %s158, %s161
    %p167 = scmp.eq.s32.totalorder %s13, 0
    %p168 = por %p166, %p167
    %p169 = scmp.ne.s32.totalorder %s158, %s161
    %p170 = scmp.eq.s32.totalorder %s18, 3
    %p171 = por %p169, %p170
    %p172 = scmp.ne.s32.totalorder %s161, %s162
    %p173 = scmp.eq.s32.totalorder %s18, 0
    %p174 = por %p172, %p173
    %p175 = scmp.ne.s32.totalorder %s161, %s162
    %p176 = scmp.eq.s32.totalorder %s19, 3
    %p177 = por %p175, %p176
    %p179 = scmp.ne.s32.totalorder %s162, %s178
    %p180 = scmp.eq.s32.totalorder %s19, 0
    %p181 = por %p179, %p180
    %p182 = scmp.le.s32.totalorder 1, %s13
    %p183 = scmp.lt.s32.totalorder %s13, 5
    %p184 = pnand %p182, %p183
    %p185 = pneg %p184
    // Predicated region
    $region9: #{fcn_conv3_forward.5} parent=5 // pred_check
      _
    $region10: #{fcn_conv3_forward.5} parent=5 // pred_check_branch
      %187 = sbr.rel (%p184) target = $region12
    $region11: #{fcn_conv3_forward.5} parent=5 // pred_region
      %s188 = ssub.s32 %s13, 1
      // Predicated region
      $region13: #{fcn_conv3_forward.5} parent=11 // pred_check
        %p189 = pneg %p46
      $region14: #{fcn_conv3_forward.5} parent=11 // pred_check_branch
        %191 = sbr.rel (%p189) target = $region16
      $region15: #{fcn_conv3_forward.5} parent=11 // pred_region
        _
      $region16: #{fcn_conv3_forward.5} parent=11 // pred_fallthru
        _
      // Predicated region
      $region17: #{fcn_conv3_forward.5} parent=11 // pred_check
        %p192 = pneg %p67
      $region18: #{fcn_conv3_forward.5} parent=11 // pred_check_branch
        %194 = sbr.rel (%p192) target = $region20
      $region19: #{fcn_conv3_forward.5} parent=11 // pred_region
        _
      $region20: #{fcn_conv3_forward.5} parent=11 // pred_fallthru
        _
      // Predicated region
      $region21: #{fcn_conv3_forward.5} parent=11 // pred_check
        %p195 = pneg %p88
      $region22: #{fcn_conv3_forward.5} parent=11 // pred_check_branch
        %197 = sbr.rel (%p195) target = $region24
      $region23: #{fcn_conv3_forward.5} parent=11 // pred_region
        _
      $region24: #{fcn_conv3_forward.5} parent=11 // pred_fallthru
        _
    $region12: #{fcn_conv3_forward.5} parent=5 // pred_fallthru
      _
    %p198 = scmp.lt.s32.totalorder %s13, 4
    // Predicated region
    $region25: #{fcn_conv3_forward.5} parent=5 // pred_check
      %p199 = pneg %p198
    $region26: #{fcn_conv3_forward.5} parent=5 // pred_check_branch
      %201 = sbr.rel (%p199) target = $region28
    $region27: #{fcn_conv3_forward.5} parent=5 // pred_region
      _
    $region28: #{fcn_conv3_forward.5} parent=5 // pred_fallthru
      _
    %p202 = scmp.le.s32.totalorder 1, %s13
    %p203 = scmp.lt.s32.totalorder %s13, 5
    %p204 = pnand %p202, %p203
    %p205 = pneg %p204
    // Predicated region
    $region29: #{fcn_conv3_forward.5} parent=5 // pred_check
      _
    $region30: #{fcn_conv3_forward.5} parent=5 // pred_check_branch
      %207 = sbr.rel (%p204) target = $region32
    $region31: #{fcn_conv3_forward.5} parent=5 // pred_region
      %s208 = ssub.s32 %s13, 1
      %p209 = pneg %p46
      %p210 = pneg %p43
      %p211 = pneg %p67
      %p212 = pneg %p64
      %p213 = pneg %p88
      %p214 = pneg %p85
      %p215 = pneg %p118
      %p216 = pneg %p115
      %s217 = smul.u32 %s22, 2
      %s218 = sadd.s32 %s217, %s23
      %s219 = smul.u32 8, %s218
      %p220 = scmp.lt.s32.totalorder %s219, 31
      %s221 = scalar_select %p220, %s219, 31
      %s222 = smul.addr %s221, 8
      %s223 = scalar_lea.vmem %s4, %s222
      %p224 = pneg %p146
      %p225 = pneg %p143
      %p226 = scmp.lt.s32.totalorder %s22, 1
      %s227 = scalar_select %p226, %s22, 1
      %p228 = scmp.lt.s32.totalorder %s23, 1
      %s229 = scalar_select %p228, %s23, 1
      %s230 = smul.addr %s227, 2
      %s231 = sadd.s32 %s229, %s230
      %s232 = smul.addr %s231, 8
      %s233 = scalar_lea.vmem %s5, %s232
      %p234 = pneg %p174
      %p235 = pneg %p171
      %p236 = scmp.lt.s32.totalorder %s22, 1
      %s237 = scalar_select %p236, %s22, 1
      %p238 = scmp.lt.s32.totalorder %s23, 1
      %s239 = scalar_select %p238, %s23, 1
      %s240 = smul.addr %s237, 2
      %s241 = sadd.s32 %s239, %s240
      %s242 = smul.addr %s241, 8
      %s243 = scalar_lea.vmem %s6, %s242
      %s244 = smul.u32 %s22, 2
      %s245 = sadd.s32 %s244, %s23
      %s246 = smul.u32 8, %s245
      %p247 = scmp.lt.s32.totalorder %s246, 31
      %s248 = scalar_select %p247, %s246, 31
      %s249 = smul.addr %s248, 8
      %s250 = scalar_lea.vmem %s4, %s249
      %s251 = smul.u32 %s22, 2
      %s252 = sadd.s32 %s251, %s23
      %s253 = smul.u32 8, %s252
      %p254 = scmp.lt.s32.totalorder %s22, 1
      %s255 = scalar_select %p254, %s22, 1
      %p256 = scmp.lt.s32.totalorder %s23, 1
      %s257 = scalar_select %p256, %s23, 1
      %s258 = smul.addr %s255, 2
      %s259 = sadd.s32 %s257, %s258
      %s260 = smul.addr %s259, 8
      %s261 = scalar_lea.vmem %s5, %s260
      %p262 = scmp.lt.s32.totalorder %s22, 1
      %s263 = scalar_select %p262, %s22, 1
      %p264 = scmp.lt.s32.totalorder %s23, 1
      %s265 = scalar_select %p264, %s23, 1
      %s266 = smul.addr %s263, 2
      %s267 = sadd.s32 %s265, %s266
      %s268 = smul.addr %s267, 8
      %s269 = scalar_lea.vmem %s6, %s268
      %s271 = smul.u32 %s22, 16
      %s272 = smul.u32 %s23, 8
      %s273 = sadd.s32 %s271, %s272
      %s274 = smul.u32 %s273, 8
      %s275 = scalar_lea.vmem %s0, %s274
      %s276 = scalar_lea.vmem [#allocation2], 8
      // Predicated region
      $region33: #{fcn_conv3_forward.5} parent=31 // pred_check
        _
      $region34: #{fcn_conv3_forward.5} parent=31 // pred_check_branch
        %278 = sbr.rel (0) target = $region36
      $region35: #{fcn_conv3_forward.5} parent=31 // pred_region
        loop: start=0, step=1, limit=1
        $region37: #{fcn_conv3_forward.5} parent=35 // loop_pre_header
          _
        $region38: #{fcn_conv3_forward.5} parent=35 // loop_header
          %s280 = sphi 0, %s284
          %p281 = scmp.ge.s32.totalorder %s280, 1
          %s285 = sphi %s275, %s275
          %s286 = sphi %s276, %s276
        $region39: #{fcn_conv3_forward.5} parent=35 // loop_header_branch
          %283 = sbr.rel (%p281) target = $region43
        $region40: #{fcn_conv3_forward.5} parent=35 // loop_body
          %v287 = vld [vmem:[%s285] sm:$0xff]
          %288 = vst [vmem:[%s286] sm:$0xff] %v287
          %v289 = vld [vmem:[%s285 + $0x8] sm:$0xff]
          %290 = vst [vmem:[%s286 + $0x8] sm:$0xff] %v289
          %v291 = vld [vmem:[%s285 + $0x10] sm:$0xff]
          %292 = vst [vmem:[%s286 + $0x10] sm:$0xff] %v291
          %v293 = vld [vmem:[%s285 + $0x18] sm:$0xff]
          %294 = vst [vmem:[%s286 + $0x18] sm:$0xff] %v293
          %v295 = vld [vmem:[%s285 + $0x20] sm:$0xff]
          %296 = vst [vmem:[%s286 + $0x20] sm:$0xff] %v295
          %v297 = vld [vmem:[%s285 + $0x28] sm:$0xff]
          %298 = vst [vmem:[%s286 + $0x28] sm:$0xff] %v297
          %v299 = vld [vmem:[%s285 + $0x30] sm:$0xff]
          %300 = vst [vmem:[%s286 + $0x30] sm:$0xff] %v299
          %v301 = vld [vmem:[%s285 + $0x38] sm:$0xff]
          %302 = vst [vmem:[%s286 + $0x38] sm:$0xff] %v301
        $region41: #{fcn_conv3_forward.5} parent=35 // loop_footer
          %s284 = sadd.s32 1, %s280
        $region42: #{fcn_conv3_forward.5} parent=35 // loop_footer_branch
          %279 = sbr.rel target = $region38
        $region43: #{fcn_conv3_forward.5} parent=35 // loop_exit
          _
      $region36: #{fcn_conv3_forward.5} parent=31 // pred_fallthru
        _
      // Predicated region
      $region44: #{fcn_conv3_forward.5} parent=31 // pred_check
        _
      $region45: #{fcn_conv3_forward.5} parent=31 // pred_check_branch
        %304 = sbr.rel target = $region47
      $region46: #{fcn_conv3_forward.5} parent=31 // pred_region
        _
      $region47: #{fcn_conv3_forward.5} parent=31 // pred_fallthru
        _
      // Predicated region
      $region48: #{fcn_conv3_forward.5} parent=31 // pred_check
        _
      $region49: #{fcn_conv3_forward.5} parent=31 // pred_check_branch
        %307 = sbr.rel (0) target = $region51
      $region50: #{fcn_conv3_forward.5} parent=31 // pred_region
        %308 = vsyncadd [#allocation5], 1024
      $region51: #{fcn_conv3_forward.5} parent=31 // pred_fallthru
        _
      %p309 = scmp.gt.s32.totalorder %s23, 0
      // Predicated region
      $region52: #{fcn_conv3_forward.5} parent=31 // pred_check
        %p310 = pneg %p309
      $region53: #{fcn_conv3_forward.5} parent=31 // pred_check_branch
        %312 = sbr.rel (%p310) target = $region55
      $region54: #{fcn_conv3_forward.5} parent=31 // pred_region
        %s313 = ssub.s32 %s273, 1
        %s314 = smul.u32 %s313, 8
        %s315 = scalar_lea.vmem %s0, %s314
        %s316 = scalar_lea.sflag [#allocation5], 1
        // Predicated region
        $region56: #{fcn_conv3_forward.5} parent=54 // pred_check
          _
        $region57: #{fcn_conv3_forward.5} parent=54 // pred_check_branch
          %318 = sbr.rel (0) target = $region59
        $region58: #{fcn_conv3_forward.5} parent=54 // pred_region
          // Predicated region
          $region71: #{fcn_conv3_forward.5} parent=58 // pred_check
            _
          $region72: #{fcn_conv3_forward.5} parent=58 // pred_check_branch
            %334 = sbr.rel (0) target = $region74
          $region73: #{fcn_conv3_forward.5} parent=58 // pred_region
            loop: start=0, step=1, limit=1
            $region75: #{fcn_conv3_forward.5} parent=73 // loop_pre_header
              _
            $region76: #{fcn_conv3_forward.5} parent=73 // loop_header
              %s336 = sphi 0, %s340
              %p337 = scmp.ge.s32.totalorder %s336, 1
              %s341 = sphi %s315, %s315
              %s342 = sphi [#allocation2], [#allocation2]
            $region77: #{fcn_conv3_forward.5} parent=73 // loop_header_branch
              %339 = sbr.rel (%p337) target = $region81
            $region78: #{fcn_conv3_forward.5} parent=73 // loop_body
              %v343 = vld [vmem:[%s341] sm:$0xff]
              %344 = vst [vmem:[%s342] sm:$0xff] %v343
            $region79: #{fcn_conv3_forward.5} parent=73 // loop_footer
              %s340 = sadd.s32 1, %s336
            $region80: #{fcn_conv3_forward.5} parent=73 // loop_footer_branch
              %335 = sbr.rel target = $region76
            $region81: #{fcn_conv3_forward.5} parent=73 // loop_exit
              _
          $region74: #{fcn_conv3_forward.5} parent=58 // pred_fallthru
            _
          // Predicated region
          $region82: #{fcn_conv3_forward.5} parent=58 // pred_check
            _
          $region83: #{fcn_conv3_forward.5} parent=58 // pred_check_branch
            %346 = sbr.rel target = $region85
          $region84: #{fcn_conv3_forward.5} parent=58 // pred_region
            _
          $region85: #{fcn_conv3_forward.5} parent=58 // pred_fallthru
            _
        $region59: #{fcn_conv3_forward.5} parent=54 // pred_fallthru
          _
        // Predicated region
        $region60: #{fcn_conv3_forward.5} parent=54 // pred_check
          _
        $region61: #{fcn_conv3_forward.5} parent=54 // pred_check_branch
          %320 = sbr.rel target = $region63
        $region62: #{fcn_conv3_forward.5} parent=54 // pred_region
          %s322 = ssub.s32 256, 1
          loop: start=0, step=1, limit=1
          $region64: #{fcn_conv3_forward.5} parent=62 // loop_pre_header
            _
          $region65: #{fcn_conv3_forward.5} parent=62 // loop_header
            %s324 = sphi 0, %s328
            %p325 = scmp.ge.s32.totalorder %s324, 1
            %s329 = sphi %s315, %s315
            %s330 = sphi [#allocation2], [#allocation2]
          $region66: #{fcn_conv3_forward.5} parent=62 // loop_header_branch
            %327 = sbr.rel (%p325) target = $region70
          $region67: #{fcn_conv3_forward.5} parent=62 // loop_body
            %v331 = vld [vmem:[%s329] sm:%s322]
            %332 = vst [vmem:[%s330] sm:%s322] %v331
          $region68: #{fcn_conv3_forward.5} parent=62 // loop_footer
            %s328 = sadd.s32 1, %s324
          $region69: #{fcn_conv3_forward.5} parent=62 // loop_footer_branch
            %323 = sbr.rel target = $region65
          $region70: #{fcn_conv3_forward.5} parent=62 // loop_exit
            _
        $region63: #{fcn_conv3_forward.5} parent=54 // pred_fallthru
          _
        // Predicated region
        $region86: #{fcn_conv3_forward.5} parent=54 // pred_check
          _
        $region87: #{fcn_conv3_forward.5} parent=54 // pred_check_branch
          %349 = sbr.rel (0) target = $region89
        $region88: #{fcn_conv3_forward.5} parent=54 // pred_region
          %350 = vsyncadd %s316, 128
        $region89: #{fcn_conv3_forward.5} parent=54 // pred_fallthru
          _
      $region55: #{fcn_conv3_forward.5} parent=31 // pred_fallthru
        _
      %p351 = scmp.lt.s32.totalorder %s23, 1
      // Predicated region
      $region90: #{fcn_conv3_forward.5} parent=31 // pred_check
        %p352 = pneg %p351
      $region91: #{fcn_conv3_forward.5} parent=31 // pred_check_branch
        %354 = sbr.rel (%p352) target = $region93
      $region92: #{fcn_conv3_forward.5} parent=31 // pred_region
        %s355 = sadd.s32 %s273, 8
        %s356 = smul.u32 %s355, 8
        %s357 = scalar_lea.vmem %s0, %s356
        %s358 = scalar_lea.vmem [#allocation2], 72
        %s359 = scalar_lea.sflag [#allocation5], 2
        // Predicated region
        $region94: #{fcn_conv3_forward.5} parent=92 // pred_check
          _
        $region95: #{fcn_conv3_forward.5} parent=92 // pred_check_branch
          %361 = sbr.rel (0) target = $region97
        $region96: #{fcn_conv3_forward.5} parent=92 // pred_region
          // Predicated region
          $region109: #{fcn_conv3_forward.5} parent=96 // pred_check
            _
          $region110: #{fcn_conv3_forward.5} parent=96 // pred_check_branch
            %377 = sbr.rel (0) target = $region112
          $region111: #{fcn_conv3_forward.5} parent=96 // pred_region
            loop: start=0, step=1, limit=1
            $region113: #{fcn_conv3_forward.5} parent=111 // loop_pre_header
              _
            $region114: #{fcn_conv3_forward.5} parent=111 // loop_header
              %s379 = sphi 0, %s383
              %p380 = scmp.ge.s32.totalorder %s379, 1
              %s384 = sphi %s357, %s357
              %s385 = sphi %s358, %s358
            $region115: #{fcn_conv3_forward.5} parent=111 // loop_header_branch
              %382 = sbr.rel (%p380) target = $region119
            $region116: #{fcn_conv3_forward.5} parent=111 // loop_body
              %v386 = vld [vmem:[%s384] sm:$0xff]
              %387 = vst [vmem:[%s385] sm:$0xff] %v386
            $region117: #{fcn_conv3_forward.5} parent=111 // loop_footer
              %s383 = sadd.s32 1, %s379
            $region118: #{fcn_conv3_forward.5} parent=111 // loop_footer_branch
              %378 = sbr.rel target = $region114
            $region119: #{fcn_conv3_forward.5} parent=111 // loop_exit
              _
          $region112: #{fcn_conv3_forward.5} parent=96 // pred_fallthru
            _
          // Predicated region
          $region120: #{fcn_conv3_forward.5} parent=96 // pred_check
            _
          $region121: #{fcn_conv3_forward.5} parent=96 // pred_check_branch
            %389 = sbr.rel target = $region123
          $region122: #{fcn_conv3_forward.5} parent=96 // pred_region
            _
          $region123: #{fcn_conv3_forward.5} parent=96 // pred_fallthru
            _
        $region97: #{fcn_conv3_forward.5} parent=92 // pred_fallthru
          _
        // Predicated region
        $region98: #{fcn_conv3_forward.5} parent=92 // pred_check
          _
        $region99: #{fcn_conv3_forward.5} parent=92 // pred_check_branch
          %363 = sbr.rel target = $region101
        $region100: #{fcn_conv3_forward.5} parent=92 // pred_region
          %s365 = ssub.s32 256, 1
          loop: start=0, step=1, limit=1
          $region102: #{fcn_conv3_forward.5} parent=100 // loop_pre_header
            _
          $region103: #{fcn_conv3_forward.5} parent=100 // loop_header
            %s367 = sphi 0, %s371
            %p368 = scmp.ge.s32.totalorder %s367, 1
            %s372 = sphi %s357, %s357
            %s373 = sphi %s358, %s358
          $region104: #{fcn_conv3_forward.5} parent=100 // loop_header_branch
            %370 = sbr.rel (%p368) target = $region108
          $region105: #{fcn_conv3_forward.5} parent=100 // loop_body
            %v374 = vld [vmem:[%s372] sm:%s365]
            %375 = vst [vmem:[%s373] sm:%s365] %v374
          $region106: #{fcn_conv3_forward.5} parent=100 // loop_footer
            %s371 = sadd.s32 1, %s367
          $region107: #{fcn_conv3_forward.5} parent=100 // loop_footer_branch
            %366 = sbr.rel target = $region103
          $region108: #{fcn_conv3_forward.5} parent=100 // loop_exit
            _
        $region101: #{fcn_conv3_forward.5} parent=92 // pred_fallthru
          _
        // Predicated region
        $region124: #{fcn_conv3_forward.5} parent=92 // pred_check
          _
        $region125: #{fcn_conv3_forward.5} parent=92 // pred_check_branch
          %392 = sbr.rel (0) target = $region127
        $region126: #{fcn_conv3_forward.5} parent=92 // pred_region
          %393 = vsyncadd %s359, 128
        $region127: #{fcn_conv3_forward.5} parent=92 // pred_fallthru
          _
      $region93: #{fcn_conv3_forward.5} parent=31 // pred_fallthru
        _
      %s394 = smul.u32 8, 8
      %s395 = smul.u32 %s394, 1
      %s396 = sshll.u32 %s395, 4
      %397 = dma.done [#allocation5], %s396
      // Predicated region
      $region128: #{fcn_conv3_forward.5} parent=31 // pred_check
        %p398 = pneg %p309
      $region129: #{fcn_conv3_forward.5} parent=31 // pred_check_branch
        %400 = sbr.rel (%p398) target = $region131
      $region130: #{fcn_conv3_forward.5} parent=31 // pred_region
        %s401 = scalar_lea.sflag [#allocation5], 1
        %s402 = smul.u32 1, 8
        %s403 = smul.u32 %s402, 1
        %s404 = sshll.u32 %s403, 4
        %405 = dma.done %s401, %s404
      $region131: #{fcn_conv3_forward.5} parent=31 // pred_fallthru
        _
      // Predicated region
      $region132: #{fcn_conv3_forward.5} parent=31 // pred_check
        %p406 = pneg %p351
      $region133: #{fcn_conv3_forward.5} parent=31 // pred_check_branch
        %408 = sbr.rel (%p406) target = $region135
      $region134: #{fcn_conv3_forward.5} parent=31 // pred_region
        %s409 = scalar_lea.sflag [#allocation5], 2
        %s410 = smul.u32 1, 8
        %s411 = smul.u32 %s410, 1
        %s412 = sshll.u32 %s411, 4
        %413 = dma.done %s409, %s412
      $region135: #{fcn_conv3_forward.5} parent=31 // pred_fallthru
        _
      %v414 = vld [vmem:[%s1] sm:$0xf]
      %v415 = vld [vmem:[#allocation2] sm:$0xff]
      %v416 = vld [vmem:[#allocation2 + $0x8] sm:$0xff]
      %v417 = vld [vmem:[#allocation2 + $0x10] sm:$0xff]
      %v418 = vld [vmem:[#allocation2 + $0x18] sm:$0xff]
      %v419 = vld [vmem:[#allocation2 + $0x20] sm:$0xff]
      %v420 = vld [vmem:[#allocation2 + $0x28] sm:$0xff]
      %v421 = vld [vmem:[#allocation2 + $0x30] sm:$0xff]
      %v422 = vld [vmem:[#allocation2 + $0x38] sm:$0xff]
      %v423 = vld [vmem:[#allocation2 + $0x40] sm:$0xff]
      %v424 = vld [vmem:[#allocation2 + $0x48] sm:$0xff]
      %v425 = vld [vmem:[%s2] sm:$0xff]
      %427 = vset.pattern.permute.xlu0 0
      %428 = vperm.xlu0 %427, %v425
      %v429 = vpop.permute.xlu0 %428
      %v431 = vmul.f32 %v415, %v429
      %v432 = vmul.f32 %v416, %v429
      %v433 = vmul.f32 %v417, %v429
      %v434 = vmul.f32 %v418, %v429
      %v435 = vmul.f32 %v419, %v429
      %v436 = vmul.f32 %v420, %v429
      %v437 = vmul.f32 %v421, %v429
      %v438 = vmul.f32 %v422, %v429
      %v439 = vmul.f32 %v423, %v429
      %v440 = vmul.f32 %v424, %v429
      %v441 = vld [vmem:[%s3] sm:$0xff]
      %443 = vset.pattern.permute.xlu0 0
      %444 = vperm.xlu0 %443, %v441
      %v445 = vpop.permute.xlu0 %444
      %v447 = vadd.f32 %v431, %v445
      %v448 = vadd.f32 %v432, %v445
      %v449 = vadd.f32 %v433, %v445
      %v450 = vadd.f32 %v434, %v445
      %v451 = vadd.f32 %v435, %v445
      %v452 = vadd.f32 %v436, %v445
      %v453 = vadd.f32 %v437, %v445
      %v454 = vadd.f32 %v438, %v445
      %v455 = vadd.f32 %v439, %v445
      %v456 = vadd.f32 %v440, %v445
      %v457 = vmax.f32 %v447, 0.0
      %v458 = vmax.f32 %v448, 0.0
      %v459 = vmax.f32 %v449, 0.0
      %v460 = vmax.f32 %v450, 0.0
      %v461 = vmax.f32 %v451, 0.0
      %v462 = vmax.f32 %v452, 0.0
      %v463 = vmax.f32 %v453, 0.0
      %v464 = vmax.f32 %v454, 0.0
      %v465 = vmax.f32 %v455, 0.0
      %v466 = vmax.f32 %v456, 0.0
      %v467 = vpack.c.bf16 %v457, %v457
      %v468 = vpack.c.bf16 %v458, %v458
      %v469 = vpack.c.bf16 %v459, %v459
      %v470 = vpack.c.bf16 %v460, %v460
      %v471 = vpack.c.bf16 %v461, %v461
      %v472 = vpack.c.bf16 %v462, %v462
      %v473 = vpack.c.bf16 %v463, %v463
      %v474 = vpack.c.bf16 %v464, %v464
      %v475 = vpack.c.bf16 %v465, %v465
      %v476 = vpack.c.bf16 %v466, %v466
      %vm477 = vcmask 60416
      %478 = vst.msk [vmem:[#allocation3] sm:$0xf] %vm477, 0
      %479 = vst.msk [vmem:[#allocation3 + $0x8] sm:$0xf] %vm477, 0
      %480 = vst.msk [vmem:[#allocation3 + $0x10] sm:$0xf] %vm477, 0
      %481 = vst.msk [vmem:[#allocation3 + $0x18] sm:$0xf] %vm477, 0
      %482 = vst.msk [vmem:[#allocation3 + $0x20] sm:$0xf] %vm477, 0
      %483 = vst.msk [vmem:[#allocation3 + $0x28] sm:$0xf] %vm477, 0
      %484 = vst.msk [vmem:[#allocation3 + $0x30] sm:$0xf] %vm477, 0
      %485 = vst.msk [vmem:[#allocation3 + $0x38] sm:$0xf] %vm477, 0
      %486 = vst.msk [vmem:[#allocation3 + $0x40] sm:$0xf] %vm477, 0
      %487 = vst.msk [vmem:[#allocation3 + $0x48] sm:$0xf] %vm477, 0
      %vm488 = vcmask 126016
      %489 = vst.msk [vmem:[#allocation3 + $0x4] sm:$0xf] %vm488, 0
      %490 = vst.msk [vmem:[#allocation3 + $0xc] sm:$0xf] %vm488, 0
      %491 = vst.msk [vmem:[#allocation3 + $0x14] sm:$0xf] %vm488, 0
      %492 = vst.msk [vmem:[#allocation3 + $0x1c] sm:$0xf] %vm488, 0
      %493 = vst.msk [vmem:[#allocation3 + $0x24] sm:$0xf] %vm488, 0
      %494 = vst.msk [vmem:[#allocation3 + $0x2c] sm:$0xf] %vm488, 0
      %495 = vst.msk [vmem:[#allocation3 + $0x34] sm:$0xf] %vm488, 0
      %496 = vst.msk [vmem:[#allocation3 + $0x3c] sm:$0xf] %vm488, 0
      %497 = vst.msk [vmem:[#allocation3 + $0x44] sm:$0xf] %vm488, 0
      %498 = vst.msk [vmem:[#allocation3 + $0x4c] sm:$0xf] %vm488, 0
      %509 = vrot.lane.b32.xlu0 %v467, 8
      %v510 = vpop.permute.xlu0 %509
      %511 = vrot.lane.b32.xlu0 %v468, 8
      %v512 = vpop.permute.xlu0 %511
      %513 = vrot.lane.b32.xlu0 %v469, 8
      %v514 = vpop.permute.xlu0 %513
      %515 = vrot.lane.b32.xlu0 %v470, 8
      %v516 = vpop.permute.xlu0 %515
      %517 = vrot.lane.b32.xlu0 %v471, 8
      %v518 = vpop.permute.xlu0 %517
      %519 = vrot.lane.b32.xlu0 %v472, 8
      %v520 = vpop.permute.xlu0 %519
      %521 = vrot.lane.b32.xlu0 %v473, 8
      %v522 = vpop.permute.xlu0 %521
      %523 = vrot.lane.b32.xlu0 %v474, 8
      %v524 = vpop.permute.xlu0 %523
      %525 = vrot.lane.b32.xlu0 %v475, 8
      %v526 = vpop.permute.xlu0 %525
      %527 = vrot.lane.b32.xlu0 %v476, 8
      %v528 = vpop.permute.xlu0 %527
      %v529 = vrot.slane %v510, 4
      %v530 = vrot.slane %v512, 4
      %v531 = vrot.slane %v514, 4
      %v532 = vrot.slane %v516, 4
      %v533 = vrot.slane %v518, 4
      %v534 = vrot.slane %v520, 4
      %v535 = vrot.slane %v522, 4
      %v536 = vrot.slane %v524, 4
      %v537 = vrot.slane %v526, 4
      %v538 = vrot.slane %v528, 4
      %vm539 = vcmask 64512
      %v540 = vsel %vm539, %v529, %v510
      %v541 = vsel %vm539, %v530, %v512
      %v542 = vsel %vm539, %v531, %v514
      %v543 = vsel %vm539, %v532, %v516
      %v544 = vsel %vm539, %v533, %v518
      %v545 = vsel %vm539, %v534, %v520
      %v546 = vsel %vm539, %v535, %v522
      %v547 = vsel %vm539, %v536, %v524
      %v548 = vsel %vm539, %v537, %v526
      %v549 = vsel %vm539, %v538, %v528
      %vm560 = vcmask 1043520
      %vm561 = vcmask 64516
      %vm562 = vmor %vm561, %vm560
      %563 = vst.msk [vmem:[#allocation3] sm:$0xff] %vm562, %v540
      %564 = vst.msk [vmem:[#allocation3 + $0x8] sm:$0xff] %vm562, %v541
      %565 = vst.msk [vmem:[#allocation3 + $0x10] sm:$0xff] %vm562, %v542
      %566 = vst.msk [vmem:[#allocation3 + $0x18] sm:$0xff] %vm562, %v543
      %567 = vst.msk [vmem:[#allocation3 + $0x20] sm:$0xff] %vm562, %v544
      %568 = vst.msk [vmem:[#allocation3 + $0x28] sm:$0xff] %vm562, %v545
      %569 = vst.msk [vmem:[#allocation3 + $0x30] sm:$0xff] %vm562, %v546
      %570 = vst.msk [vmem:[#allocation3 + $0x38] sm:$0xff] %vm562, %v547
      %571 = vst.msk [vmem:[#allocation3 + $0x40] sm:$0xff] %vm562, %v548
      %572 = vst.msk [vmem:[#allocation3 + $0x48] sm:$0xff] %vm562, %v549
      %p573 = scmp.eq.s32.totalorder %s23, 0
      // Predicated region
      $region136: #{fcn_conv3_forward.5} parent=31 // pred_check
        %p574 = pneg %p573
      $region137: #{fcn_conv3_forward.5} parent=31 // pred_check_branch
        %576 = sbr.rel (%p574) target = $region139
      $region138: #{fcn_conv3_forward.5} parent=31 // pred_region
        %vm577 = vcmask 1043456
        %vm578 = vcmask 130052
        %vm579 = vmor %vm578, %vm577
        %580 = vst.msk [vmem:[#allocation3] sm:$0xff] %vm579, 0
      $region139: #{fcn_conv3_forward.5} parent=31 // pred_fallthru
        _
      %p581 = scmp.eq.s32.totalorder %s23, 1
      // Predicated region
      $region140: #{fcn_conv3_forward.5} parent=31 // pred_check
        %p582 = pneg %p581
      $region141: #{fcn_conv3_forward.5} parent=31 // pred_check_branch
        %584 = sbr.rel (%p582) target = $region143
      $region142: #{fcn_conv3_forward.5} parent=31 // pred_region
        %s585 = scalar_lea.vmem [#allocation3], 72
        %vm586 = vcmask 1043456
        %vm587 = vcmask 130052
        %vm588 = vmor %vm587, %vm586
        %589 = vst.msk [vmem:[%s585] sm:$0xff] %vm588, 0
      $region143: #{fcn_conv3_forward.5} parent=31 // pred_fallthru
        _
      %v590 = vld [vmem:[#allocation3] sm:$0xf]
      %591 = vst [vmem:[#allocation4] sm:$0xf] %v590
      %v592 = vld [vmem:[#allocation3] sm:$0xff]
      %594 = vrot.lane.b32.xlu0 %v592, 120
      %v595 = vpop.permute.xlu0 %594
      %v596 = vrot.slane %v595, 4
      %vm597 = vcmask 982016
      %v598 = vsel %vm597, %v595, %v596
      %600 = vst [vmem:[#allocation4 + $0x4] sm:$0xf] %v598
      %v601 = vld [vmem:[#allocation3] sm:$0xff]
      %603 = vrot.lane.b32.xlu0 %v601, 112
      %v604 = vpop.permute.xlu0 %603
      %v605 = vrot.slane %v604, 4
      %vm606 = vcmask 916480
      %v607 = vsel %vm606, %v604, %v605
      %609 = vst [vmem:[#allocation4 + $0x8] sm:$0xf] %v607
      %s610 = scalar_lea.vmem [#allocation3], 8
      %v611 = vld [vmem:[%s610] sm:$0xf]
      %612 = vst [vmem:[#allocation4 + $0xc] sm:$0xf] %v611
      %v613 = vld [vmem:[%s610] sm:$0xff]
      %615 = vrot.lane.b32.xlu0 %v613, 120
      %v616 = vpop.permute.xlu0 %615
      %v617 = vrot.slane %v616, 4
      %v618 = vsel %vm597, %v616, %v617
      %620 = vst [vmem:[#allocation4 + $0x10] sm:$0xf] %v618
      %v621 = vld [vmem:[%s610] sm:$0xff]
      %623 = vrot.lane.b32.xlu0 %v621, 112
      %v624 = vpop.permute.xlu0 %623
      %v625 = vrot.slane %v624, 4
      %v626 = vsel %vm606, %v624, %v625
      %628 = vst [vmem:[#allocation4 + $0x14] sm:$0xf] %v626
      %s629 = scalar_lea.vmem [#allocation3], 16
      %v630 = vld [vmem:[%s629] sm:$0xf]
      %631 = vst [vmem:[#allocation4 + $0x18] sm:$0xf] %v630
      %v632 = vld [vmem:[%s629] sm:$0xff]
      %634 = vrot.lane.b32.xlu0 %v632, 120
      %v635 = vpop.permute.xlu0 %634
      %v636 = vrot.slane %v635, 4
      %v637 = vsel %vm597, %v635, %v636
      %639 = vst [vmem:[#allocation4 + $0x1c] sm:$0xf] %v637
      %v640 = vld [vmem:[%s629] sm:$0xff]
      %642 = vrot.lane.b32.xlu0 %v640, 112
      %v643 = vpop.permute.xlu0 %642
      %v644 = vrot.slane %v643, 4
      %v645 = vsel %vm606, %v643, %v644
      %647 = vst [vmem:[#allocation4 + $0x20] sm:$0xf] %v645
      %v648 = vld [vmem:[#allocation4] sm:$0xf]
      %v649 = vld [vmem:[#allocation4 + $0x4] sm:$0xf]
      %v650 = vld [vmem:[#allocation4 + $0x8] sm:$0xf]
      %v651 = vld [vmem:[#allocation4 + $0xc] sm:$0xf]
      %v652 = vld [vmem:[#allocation4 + $0x10] sm:$0xf]
      %v653 = vld [vmem:[#allocation4 + $0x14] sm:$0xf]
      %v654 = vld [vmem:[#allocation4 + $0x18] sm:$0xf]
      %v655 = vld [vmem:[#allocation4 + $0x1c] sm:$0xf]
      %v656 = vld [vmem:[#allocation4 + $0x20] sm:$0xf]
      %v666 = vunpack.c.l.b16 %v648
      %v667 = vunpack.c.l.b16 %v649
      %v668 = vunpack.c.l.b16 %v650
      %v669 = vunpack.c.l.b16 %v651
      %v670 = vunpack.c.l.b16 %v652
      %v671 = vunpack.c.l.b16 %v653
      %v672 = vunpack.c.l.b16 %v654
      %v673 = vunpack.c.l.b16 %v655
      %v674 = vunpack.c.l.b16 %v656
      %v675 = vpack.c.b16 %v667, %v666
      %v676 = vpack.c.b16 %v669, %v668
      %v677 = vpack.c.b16 %v671, %v670
      %v678 = vpack.c.b16 %v673, %v672
      %v679 = vpack.c.b16 %v674, %v674
      %vm684 = vcmask 588800
      %v686 = vsel %vm684, %v414, 0
      %vm688 = vcmask 1043456
      %v690 = vsel %vm688, %v679, 0
      %692 = vmatpush.bf16.msra.mxu0 0
      %693 = vmatpush.bf16.msra.mxu0 0
      %694 = vmatpush.bf16.msra.mxu0 0
      %695 = vmatpush.bf16.msra.mxu0 %v690
      %696 = vmatpush.bf16.msra.mxu0 %v678
      %697 = vmatpush.bf16.msra.mxu0 %v677
      %698 = vmatpush.bf16.msra.mxu0 %v676
      %699 = vmatpush.bf16.msra.mxu0 %v675
      %700 = vmatmul.bf16.gmra.mxu0 %v686
      %v701 = vpop.f32.mrf.mxu0
      %v702 = vadd.f32 0.0, %v701
      %v703 = vpop.f32.mrf.mxu0
      %704 = vdwg.mxu0
      %705 = vst [vmem:[%s250] sm:$0xff] %v702
      %706 = vadd.xlane.f32.xlu0 %v702
      %v707 = vpop.xlane.xlu0 %706
      %v708 = vadd.f32 %v707, 0.0
      %v709 = vmul.f32 %v702, %v702
      %710 = vadd.xlane.f32.xlu0 %v709
      %v711 = vpop.xlane.xlu0 %710
      %v712 = vadd.f32 %v711, 0.0
      %v713 = vld [vmem:[%s610] sm:$0xf]
      %714 = vst [vmem:[#allocation4] sm:$0xf] %v713
      %v715 = vld [vmem:[%s610] sm:$0xff]
      %717 = vrot.lane.b32.xlu0 %v715, 120
      %v718 = vpop.permute.xlu0 %717
      %v719 = vrot.slane %v718, 4
      %v720 = vsel %vm597, %v718, %v719
      %722 = vst [vmem:[#allocation4 + $0x4] sm:$0xf] %v720
      %v723 = vld [vmem:[%s610] sm:$0xff]
      %725 = vrot.lane.b32.xlu0 %v723, 112
      %v726 = vpop.permute.xlu0 %725
      %v727 = vrot.slane %v726, 4
      %v728 = vsel %vm606, %v726, %v727
      %730 = vst [vmem:[#allocation4 + $0x8] sm:$0xf] %v728
      %v731 = vld [vmem:[%s629] sm:$0xf]
      %732 = vst [vmem:[#allocation4 + $0xc] sm:$0xf] %v731
      %v733 = vld [vmem:[%s629] sm:$0xff]
      %735 = vrot.lane.b32.xlu0 %v733, 120
      %v736 = vpop.permute.xlu0 %735
      %v737 = vrot.slane %v736, 4
      %v738 = vsel %vm597, %v736, %v737
      %740 = vst [vmem:[#allocation4 + $0x10] sm:$0xf] %v738
      %v741 = vld [vmem:[%s629] sm:$0xff]
      %743 = vrot.lane.b32.xlu0 %v741, 112
      %v744 = vpop.permute.xlu0 %743
      %v745 = vrot.slane %v744, 4
      %v746 = vsel %vm606, %v744, %v745
      %748 = vst [vmem:[#allocation4 + $0x14] sm:$0xf] %v746
      %s749 = scalar_lea.vmem [#allocation3], 24
      %v750 = vld [vmem:[%s749] sm:$0xf]
      %751 = vst [vmem:[#allocation4 + $0x18] sm:$0xf] %v750
      %v752 = vld [vmem:[%s749] sm:$0xff]
      %754 = vrot.lane.b32.xlu0 %v752, 120
      %v755 = vpop.permute.xlu0 %754
      %v756 = vrot.slane %v755, 4
      %v757 = vsel %vm597, %v755, %v756
      %759 = vst [vmem:[#allocation4 + $0x1c] sm:$0xf] %v757
      %v760 = vld [vmem:[%s749] sm:$0xff]
      %762 = vrot.lane.b32.xlu0 %v760, 112
      %v763 = vpop.permute.xlu0 %762
      %v764 = vrot.slane %v763, 4
      %v765 = vsel %vm606, %v763, %v764
      %767 = vst [vmem:[#allocation4 + $0x20] sm:$0xf] %v765
      %v768 = vld [vmem:[#allocation4] sm:$0xf]
      %v769 = vld [vmem:[#allocation4 + $0x4] sm:$0xf]
      %v770 = vld [vmem:[#allocation4 + $0x8] sm:$0xf]
      %v771 = vld [vmem:[#allocation4 + $0xc] sm:$0xf]
      %v772 = vld [vmem:[#allocation4 + $0x10] sm:$0xf]
      %v773 = vld [vmem:[#allocation4 + $0x14] sm:$0xf]
      %v774 = vld [vmem:[#allocation4 + $0x18] sm:$0xf]
      %v775 = vld [vmem:[#allocation4 + $0x1c] sm:$0xf]
      %v776 = vld [vmem:[#allocation4 + $0x20] sm:$0xf]
      %v786 = vunpack.c.l.b16 %v768
      %v787 = vunpack.c.l.b16 %v769
      %v788 = vunpack.c.l.b16 %v770
      %v789 = vunpack.c.l.b16 %v771
      %v790 = vunpack.c.l.b16 %v772
      %v791 = vunpack.c.l.b16 %v773
      %v792 = vunpack.c.l.b16 %v774
      %v793 = vunpack.c.l.b16 %v775
      %v794 = vunpack.c.l.b16 %v776
      %v795 = vpack.c.b16 %v787, %v786
      %v796 = vpack.c.b16 %v789, %v788
      %v797 = vpack.c.b16 %v791, %v790
      %v798 = vpack.c.b16 %v793, %v792
      %v799 = vpack.c.b16 %v794, %v794
      %v805 = vsel %vm688, %v799, 0
      %807 = vmatpush.bf16.msra.mxu0 0
      %808 = vmatpush.bf16.msra.mxu0 0
      %809 = vmatpush.bf16.msra.mxu0 0
      %810 = vmatpush.bf16.msra.mxu0 %v805
      %811 = vmatpush.bf16.msra.mxu0 %v798
      %812 = vmatpush.bf16.msra.mxu0 %v797
      %813 = vmatpush.bf16.msra.mxu0 %v796
      %814 = vmatpush.bf16.msra.mxu0 %v795
      %815 = vmatmul.bf16.gmra.mxu0 %v686
      %v816 = vpop.f32.mrf.mxu0
      %v817 = vadd.f32 0.0, %v816
      %v818 = vpop.f32.mrf.mxu0
      %819 = vdwg.mxu0
      %s820 = scalar_lea.vmem %s250, 8
      %821 = vst [vmem:[%s820] sm:$0xff] %v817
      %822 = vadd.xlane.f32.xlu0 %v817
      %v823 = vpop.xlane.xlu0 %822
      %v824 = vadd.f32 %v708, %v823
      %v825 = vmul.f32 %v817, %v817
      %826 = vadd.xlane.f32.xlu0 %v825
      %v827 = vpop.xlane.xlu0 %826
      %v828 = vadd.f32 %v712, %v827
      %v829 = vld [vmem:[%s629] sm:$0xf]
      %830 = vst [vmem:[#allocation4] sm:$0xf] %v829
      %v831 = vld [vmem:[%s629] sm:$0xff]
      %833 = vrot.lane.b32.xlu0 %v831, 120
      %v834 = vpop.permute.xlu0 %833
      %v835 = vrot.slane %v834, 4
      %v836 = vsel %vm597, %v834, %v835
      %838 = vst [vmem:[#allocation4 + $0x4] sm:$0xf] %v836
      %v839 = vld [vmem:[%s629] sm:$0xff]
      %841 = vrot.lane.b32.xlu0 %v839, 112
      %v842 = vpop.permute.xlu0 %841
      %v843 = vrot.slane %v842, 4
      %v844 = vsel %vm606, %v842, %v843
      %846 = vst [vmem:[#allocation4 + $0x8] sm:$0xf] %v844
      %v847 = vld [vmem:[%s749] sm:$0xf]
      %848 = vst [vmem:[#allocation4 + $0xc] sm:$0xf] %v847
      %v849 = vld [vmem:[%s749] sm:$0xff]
      %851 = vrot.lane.b32.xlu0 %v849, 120
      %v852 = vpop.permute.xlu0 %851
      %v853 = vrot.slane %v852, 4
      %v854 = vsel %vm597, %v852, %v853
      %856 = vst [vmem:[#allocation4 + $0x10] sm:$0xf] %v854
      %v857 = vld [vmem:[%s749] sm:$0xff]
      %859 = vrot.lane.b32.xlu0 %v857, 112
      %v860 = vpop.permute.xlu0 %859
      %v861 = vrot.slane %v860, 4
      %v862 = vsel %vm606, %v860, %v861
      %864 = vst [vmem:[#allocation4 + $0x14] sm:$0xf] %v862
      %s865 = scalar_lea.vmem [#allocation3], 32
      %v866 = vld [vmem:[%s865] sm:$0xf]
      %867 = vst [vmem:[#allocation4 + $0x18] sm:$0xf] %v866
      %v868 = vld [vmem:[%s865] sm:$0xff]
      %870 = vrot.lane.b32.xlu0 %v868, 120
      %v871 = vpop.permute.xlu0 %870
      %v872 = vrot.slane %v871, 4
      %v873 = vsel %vm597, %v871, %v872
      %875 = vst [vmem:[#allocation4 + $0x1c] sm:$0xf] %v873
      %v876 = vld [vmem:[%s865] sm:$0xff]
      %878 = vrot.lane.b32.xlu0 %v876, 112
      %v879 = vpop.permute.xlu0 %878
      %v880 = vrot.slane %v879, 4
      %v881 = vsel %vm606, %v879, %v880
      %883 = vst [vmem:[#allocation4 + $0x20] sm:$0xf] %v881
      %v884 = vld [vmem:[#allocation4] sm:$0xf]
      %v885 = vld [vmem:[#allocation4 + $0x4] sm:$0xf]
      %v886 = vld [vmem:[#allocation4 + $0x8] sm:$0xf]
      %v887 = vld [vmem:[#allocation4 + $0xc] sm:$0xf]
      %v888 = vld [vmem:[#allocation4 + $0x10] sm:$0xf]
      %v889 = vld [vmem:[#allocation4 + $0x14] sm:$0xf]
      %v890 = vld [vmem:[#allocation4 + $0x18] sm:$0xf]
      %v891 = vld [vmem:[#allocation4 + $0x1c] sm:$0xf]
      %v892 = vld [vmem:[#allocation4 + $0x20] sm:$0xf]
      %v902 = vunpack.c.l.b16 %v884
      %v903 = vunpack.c.l.b16 %v885
      %v904 = vunpack.c.l.b16 %v886
      %v905 = vunpack.c.l.b16 %v887
      %v906 = vunpack.c.l.b16 %v888
      %v907 = vunpack.c.l.b16 %v889
      %v908 = vunpack.c.l.b16 %v890
      %v909 = vunpack.c.l.b16 %v891
      %v910 = vunpack.c.l.b16 %v892
      %v911 = vpack.c.b16 %v903, %v902
      %v912 = vpack.c.b16 %v905, %v904
      %v913 = vpack.c.b16 %v907, %v906
      %v914 = vpack.c.b16 %v909, %v908
      %v915 = vpack.c.b16 %v910, %v910
      %v921 = vsel %vm688, %v915, 0
      %923 = vmatpush.bf16.msra.mxu0 0
      %924 = vmatpush.bf16.msra.mxu0 0
      %925 = vmatpush.bf16.msra.mxu0 0
      %926 = vmatpush.bf16.msra.mxu0 %v921
      %927 = vmatpush.bf16.msra.mxu0 %v914
      %928 = vmatpush.bf16.msra.mxu0 %v913
      %929 = vmatpush.bf16.msra.mxu0 %v912
      %930 = vmatpush.bf16.msra.mxu0 %v911
      %931 = vmatmul.bf16.gmra.mxu0 %v686
      %v932 = vpop.f32.mrf.mxu0
      %v933 = vadd.f32 0.0, %v932
      %v934 = vpop.f32.mrf.mxu0
      %935 = vdwg.mxu0
      %s936 = scalar_lea.vmem %s250, 16
      %937 = vst [vmem:[%s936] sm:$0xff] %v933
      %938 = vadd.xlane.f32.xlu0 %v933
      %v939 = vpop.xlane.xlu0 %938
      %v940 = vadd.f32 %v824, %v939
      %v941 = vmul.f32 %v933, %v933
      %942 = vadd.xlane.f32.xlu0 %v941
      %v943 = vpop.xlane.xlu0 %942
      %v944 = vadd.f32 %v828, %v943
      %v945 = vld [vmem:[%s749] sm:$0xf]
      %946 = vst [vmem:[#allocation4] sm:$0xf] %v945
      %v947 = vld [vmem:[%s749] sm:$0xff]
      %949 = vrot.lane.b32.xlu0 %v947, 120
      %v950 = vpop.permute.xlu0 %949
      %v951 = vrot.slane %v950, 4
      %v952 = vsel %vm597, %v950, %v951
      %954 = vst [vmem:[#allocation4 + $0x4] sm:$0xf] %v952
      %v955 = vld [vmem:[%s749] sm:$0xff]
      %957 = vrot.lane.b32.xlu0 %v955, 112
      %v958 = vpop.permute.xlu0 %957
      %v959 = vrot.slane %v958, 4
      %v960 = vsel %vm606, %v958, %v959
      %962 = vst [vmem:[#allocation4 + $0x8] sm:$0xf] %v960
      %v963 = vld [vmem:[%s865] sm:$0xf]
      %964 = vst [vmem:[#allocation4 + $0xc] sm:$0xf] %v963
      %v965 = vld [vmem:[%s865] sm:$0xff]
      %967 = vrot.lane.b32.xlu0 %v965, 120
      %v968 = vpop.permute.xlu0 %967
      %v969 = vrot.slane %v968, 4
      %v970 = vsel %vm597, %v968, %v969
      %972 = vst [vmem:[#allocation4 + $0x10] sm:$0xf] %v970
      %v973 = vld [vmem:[%s865] sm:$0xff]
      %975 = vrot.lane.b32.xlu0 %v973, 112
      %v976 = vpop.permute.xlu0 %975
      %v977 = vrot.slane %v976, 4
      %v978 = vsel %vm606, %v976, %v977
      %980 = vst [vmem:[#allocation4 + $0x14] sm:$0xf] %v978
      %s981 = scalar_lea.vmem [#allocation3], 40
      %v982 = vld [vmem:[%s981] sm:$0xf]
      %983 = vst [vmem:[#allocation4 + $0x18] sm:$0xf] %v982
      %v984 = vld [vmem:[%s981] sm:$0xff]
      %986 = vrot.lane.b32.xlu0 %v984, 120
      %v987 = vpop.permute.xlu0 %986
      %v988 = vrot.slane %v987, 4
      %v989 = vsel %vm597, %v987, %v988
      %991 = vst [vmem:[#allocation4 + $0x1c] sm:$0xf] %v989
      %v992 = vld [vmem:[%s981] sm:$0xff]
      %994 = vrot.lane.b32.xlu0 %v992, 112
      %v995 = vpop.permute.xlu0 %994
      %v996 = vrot.slane %v995, 4
      %v997 = vsel %vm606, %v995, %v996
      %999 = vst [vmem:[#allocation4 + $0x20] sm:$0xf] %v997
      %v1000 = vld [vmem:[#allocation4] sm:$0xf]
      %v1001 = vld [vmem:[#allocation4 + $0x4] sm:$0xf]
      %v1002 = vld [vmem:[#allocation4 + $0x8] sm:$0xf]
      %v1003 = vld [vmem:[#allocation4 + $0xc] sm:$0xf]
      %v1004 = vld [vmem:[#allocation4 + $0x10] sm:$0xf]
      %v1005 = vld [vmem:[#allocation4 + $0x14] sm:$0xf]
      %v1006 = vld [vmem:[#allocation4 + $0x18] sm:$0xf]
      %v1007 = vld [vmem:[#allocation4 + $0x1c] sm:$0xf]
      %v1008 = vld [vmem:[#allocation4 + $0x20] sm:$0xf]
      %v1018 = vunpack.c.l.b16 %v1000
      %v1019 = vunpack.c.l.b16 %v1001
      %v1020 = vunpack.c.l.b16 %v1002
      %v1021 = vunpack.c.l.b16 %v1003
      %v1022 = vunpack.c.l.b16 %v1004
      %v1023 = vunpack.c.l.b16 %v1005
      %v1024 = vunpack.c.l.b16 %v1006
      %v1025 = vunpack.c.l.b16 %v1007
      %v1026 = vunpack.c.l.b16 %v1008
      %v1027 = vpack.c.b16 %v1019, %v1018
      %v1028 = vpack.c.b16 %v1021, %v1020
      %v1029 = vpack.c.b16 %v1023, %v1022
      %v1030 = vpack.c.b16 %v1025, %v1024
      %v1031 = vpack.c.b16 %v1026, %v1026
      %v1037 = vsel %vm688, %v1031, 0
      %1039 = vmatpush.bf16.msra.mxu0 0
      %1040 = vmatpush.bf16.msra.mxu0 0
      %1041 = vmatpush.bf16.msra.mxu0 0
      %1042 = vmatpush.bf16.msra.mxu0 %v1037
      %1043 = vmatpush.bf16.msra.mxu0 %v1030
      %1044 = vmatpush.bf16.msra.mxu0 %v1029
      %1045 = vmatpush.bf16.msra.mxu0 %v1028
      %1046 = vmatpush.bf16.msra.mxu0 %v1027
      %1047 = vmatmul.bf16.gmra.mxu0 %v686
      %v1048 = vpop.f32.mrf.mxu0
      %v1049 = vadd.f32 0.0, %v1048
      %v1050 = vpop.f32.mrf.mxu0
      %1051 = vdwg.mxu0
      %s1052 = scalar_lea.vmem %s250, 24
      %1053 = vst [vmem:[%s1052] sm:$0xff] %v1049
      %1054 = vadd.xlane.f32.xlu0 %v1049
      %v1055 = vpop.xlane.xlu0 %1054
      %v1056 = vadd.f32 %v940, %v1055
      %v1057 = vmul.f32 %v1049, %v1049
      %1058 = vadd.xlane.f32.xlu0 %v1057
      %v1059 = vpop.xlane.xlu0 %1058
      %v1060 = vadd.f32 %v944, %v1059
      %v1061 = vld [vmem:[%s865] sm:$0xf]
      %1062 = vst [vmem:[#allocation4] sm:$0xf] %v1061
      %v1063 = vld [vmem:[%s865] sm:$0xff]
      %1065 = vrot.lane.b32.xlu0 %v1063, 120
      %v1066 = vpop.permute.xlu0 %1065
      %v1067 = vrot.slane %v1066, 4
      %v1068 = vsel %vm597, %v1066, %v1067
      %1070 = vst [vmem:[#allocation4 + $0x4] sm:$0xf] %v1068
      %v1071 = vld [vmem:[%s865] sm:$0xff]
      %1073 = vrot.lane.b32.xlu0 %v1071, 112
      %v1074 = vpop.permute.xlu0 %1073
      %v1075 = vrot.slane %v1074, 4
      %v1076 = vsel %vm606, %v1074, %v1075
      %1078 = vst [vmem:[#allocation4 + $0x8] sm:$0xf] %v1076
      %v1079 = vld [vmem:[%s981] sm:$0xf]
      %1080 = vst [vmem:[#allocation4 + $0xc] sm:$0xf] %v1079
      %v1081 = vld [vmem:[%s981] sm:$0xff]
      %1083 = vrot.lane.b32.xlu0 %v1081, 120
      %v1084 = vpop.permute.xlu0 %1083
      %v1085 = vrot.slane %v1084, 4
      %v1086 = vsel %vm597, %v1084, %v1085
      %1088 = vst [vmem:[#allocation4 + $0x10] sm:$0xf] %v1086
      %v1089 = vld [vmem:[%s981] sm:$0xff]
      %1091 = vrot.lane.b32.xlu0 %v1089, 112
      %v1092 = vpop.permute.xlu0 %1091
      %v1093 = vrot.slane %v1092, 4
      %v1094 = vsel %vm606, %v1092, %v1093
      %1096 = vst [vmem:[#allocation4 + $0x14] sm:$0xf] %v1094
      %s1097 = scalar_lea.vmem [#allocation3], 48
      %v1098 = vld [vmem:[%s1097] sm:$0xf]
      %1099 = vst [vmem:[#allocation4 + $0x18] sm:$0xf] %v1098
      %v1100 = vld [vmem:[%s1097] sm:$0xff]
      %1102 = vrot.lane.b32.xlu0 %v1100, 120
      %v1103 = vpop.permute.xlu0 %1102
      %v1104 = vrot.slane %v1103, 4
      %v1105 = vsel %vm597, %v1103, %v1104
      %1107 = vst [vmem:[#allocation4 + $0x1c] sm:$0xf] %v1105
      %v1108 = vld [vmem:[%s1097] sm:$0xff]
      %1110 = vrot.lane.b32.xlu0 %v1108, 112
      %v1111 = vpop.permute.xlu0 %1110
      %v1112 = vrot.slane %v1111, 4
      %v1113 = vsel %vm606, %v1111, %v1112
      %1115 = vst [vmem:[#allocation4 + $0x20] sm:$0xf] %v1113
      %v1116 = vld [vmem:[#allocation4] sm:$0xf]
      %v1117 = vld [vmem:[#allocation4 + $0x4] sm:$0xf]
      %v1118 = vld [vmem:[#allocation4 + $0x8] sm:$0xf]
      %v1119 = vld [vmem:[#allocation4 + $0xc] sm:$0xf]
      %v1120 = vld [vmem:[#allocation4 + $0x10] sm:$0xf]
      %v1121 = vld [vmem:[#allocation4 + $0x14] sm:$0xf]
      %v1122 = vld [vmem:[#allocation4 + $0x18] sm:$0xf]
      %v1123 = vld [vmem:[#allocation4 + $0x1c] sm:$0xf]
      %v1124 = vld [vmem:[#allocation4 + $0x20] sm:$0xf]
      %v1134 = vunpack.c.l.b16 %v1116
      %v1135 = vunpack.c.l.b16 %v1117
      %v1136 = vunpack.c.l.b16 %v1118
      %v1137 = vunpack.c.l.b16 %v1119
      %v1138 = vunpack.c.l.b16 %v1120
      %v1139 = vunpack.c.l.b16 %v1121
      %v1140 = vunpack.c.l.b16 %v1122
      %v1141 = vunpack.c.l.b16 %v1123
      %v1142 = vunpack.c.l.b16 %v1124
      %v1143 = vpack.c.b16 %v1135, %v1134
      %v1144 = vpack.c.b16 %v1137, %v1136
      %v1145 = vpack.c.b16 %v1139, %v1138
      %v1146 = vpack.c.b16 %v1141, %v1140
      %v1147 = vpack.c.b16 %v1142, %v1142
      %v1153 = vsel %vm688, %v1147, 0
      %1155 = vmatpush.bf16.msra.mxu0 0
      %1156 = vmatpush.bf16.msra.mxu0 0
      %1157 = vmatpush.bf16.msra.mxu0 0
      %1158 = vmatpush.bf16.msra.mxu0 %v1153
      %1159 = vmatpush.bf16.msra.mxu0 %v1146
      %1160 = vmatpush.bf16.msra.mxu0 %v1145
      %1161 = vmatpush.bf16.msra.mxu0 %v1144
      %1162 = vmatpush.bf16.msra.mxu0 %v1143
      %1163 = vmatmul.bf16.gmra.mxu0 %v686
      %v1164 = vpop.f32.mrf.mxu0
      %v1165 = vadd.f32 0.0, %v1164
      %v1166 = vpop.f32.mrf.mxu0
      %1167 = vdwg.mxu0
      %s1168 = scalar_lea.vmem %s250, 32
      %1169 = vst [vmem:[%s1168] sm:$0xff] %v1165
      %1170 = vadd.xlane.f32.xlu0 %v1165
      %v1171 = vpop.xlane.xlu0 %1170
      %v1172 = vadd.f32 %v1056, %v1171
      %v1173 = vmul.f32 %v1165, %v1165
      %1174 = vadd.xlane.f32.xlu0 %v1173
      %v1175 = vpop.xlane.xlu0 %1174
      %v1176 = vadd.f32 %v1060, %v1175
      %v1177 = vld [vmem:[%s981] sm:$0xf]
      %1178 = vst [vmem:[#allocation4] sm:$0xf] %v1177
      %v1179 = vld [vmem:[%s981] sm:$0xff]
      %1181 = vrot.lane.b32.xlu0 %v1179, 120
      %v1182 = vpop.permute.xlu0 %1181
      %v1183 = vrot.slane %v1182, 4
      %v1184 = vsel %vm597, %v1182, %v1183
      %1186 = vst [vmem:[#allocation4 + $0x4] sm:$0xf] %v1184
      %v1187 = vld [vmem:[%s981] sm:$0xff]
      %1189 = vrot.lane.b32.xlu0 %v1187, 112
      %v1190 = vpop.permute.xlu0 %1189
      %v1191 = vrot.slane %v1190, 4
      %v1192 = vsel %vm606, %v1190, %v1191
      %1194 = vst [vmem:[#allocation4 + $0x8] sm:$0xf] %v1192
      %v1195 = vld [vmem:[%s1097] sm:$0xf]
      %1196 = vst [vmem:[#allocation4 + $0xc] sm:$0xf] %v1195
      %v1197 = vld [vmem:[%s1097] sm:$0xff]
      %1199 = vrot.lane.b32.xlu0 %v1197, 120
      %v1200 = vpop.permute.xlu0 %1199
      %v1201 = vrot.slane %v1200, 4
      %v1202 = vsel %vm597, %v1200, %v1201
      %1204 = vst [vmem:[#allocation4 + $0x10] sm:$0xf] %v1202
      %v1205 = vld [vmem:[%s1097] sm:$0xff]
      %1207 = vrot.lane.b32.xlu0 %v1205, 112
      %v1208 = vpop.permute.xlu0 %1207
      %v1209 = vrot.slane %v1208, 4
      %v1210 = vsel %vm606, %v1208, %v1209
      %1212 = vst [vmem:[#allocation4 + $0x14] sm:$0xf] %v1210
      %s1213 = scalar_lea.vmem [#allocation3], 56
      %v1214 = vld [vmem:[%s1213] sm:$0xf]
      %1215 = vst [vmem:[#allocation4 + $0x18] sm:$0xf] %v1214
      %v1216 = vld [vmem:[%s1213] sm:$0xff]
      %1218 = vrot.lane.b32.xlu0 %v1216, 120
      %v1219 = vpop.permute.xlu0 %1218
      %v1220 = vrot.slane %v1219, 4
      %v1221 = vsel %vm597, %v1219, %v1220
      %1223 = vst [vmem:[#allocation4 + $0x1c] sm:$0xf] %v1221
      %v1224 = vld [vmem:[%s1213] sm:$0xff]
      %1226 = vrot.lane.b32.xlu0 %v1224, 112
      %v1227 = vpop.permute.xlu0 %1226
      %v1228 = vrot.slane %v1227, 4
      %v1229 = vsel %vm606, %v1227, %v1228
      %1231 = vst [vmem:[#allocation4 + $0x20] sm:$0xf] %v1229
      %v1232 = vld [vmem:[#allocation4] sm:$0xf]
      %v1233 = vld [vmem:[#allocation4 + $0x4] sm:$0xf]
      %v1234 = vld [vmem:[#allocation4 + $0x8] sm:$0xf]
      %v1235 = vld [vmem:[#allocation4 + $0xc] sm:$0xf]
      %v1236 = vld [vmem:[#allocation4 + $0x10] sm:$0xf]
      %v1237 = vld [vmem:[#allocation4 + $0x14] sm:$0xf]
      %v1238 = vld [vmem:[#allocation4 + $0x18] sm:$0xf]
      %v1239 = vld [vmem:[#allocation4 + $0x1c] sm:$0xf]
      %v1240 = vld [vmem:[#allocation4 + $0x20] sm:$0xf]
      %v1250 = vunpack.c.l.b16 %v1232
      %v1251 = vunpack.c.l.b16 %v1233
      %v1252 = vunpack.c.l.b16 %v1234
      %v1253 = vunpack.c.l.b16 %v1235
      %v1254 = vunpack.c.l.b16 %v1236
      %v1255 = vunpack.c.l.b16 %v1237
      %v1256 = vunpack.c.l.b16 %v1238
      %v1257 = vunpack.c.l.b16 %v1239
      %v1258 = vunpack.c.l.b16 %v1240
      %v1259 = vpack.c.b16 %v1251, %v1250
      %v1260 = vpack.c.b16 %v1253, %v1252
      %v1261 = vpack.c.b16 %v1255, %v1254
      %v1262 = vpack.c.b16 %v1257, %v1256
      %v1263 = vpack.c.b16 %v1258, %v1258
      %v1269 = vsel %vm688, %v1263, 0
      %1271 = vmatpush.bf16.msra.mxu0 0
      %1272 = vmatpush.bf16.msra.mxu0 0
      %1273 = vmatpush.bf16.msra.mxu0 0
      %1274 = vmatpush.bf16.msra.mxu0 %v1269
      %1275 = vmatpush.bf16.msra.mxu0 %v1262
      %1276 = vmatpush.bf16.msra.mxu0 %v1261
      %1277 = vmatpush.bf16.msra.mxu0 %v1260
      %1278 = vmatpush.bf16.msra.mxu0 %v1259
      %1279 = vmatmul.bf16.gmra.mxu0 %v686
      %v1280 = vpop.f32.mrf.mxu0
      %v1281 = vadd.f32 0.0, %v1280
      %v1282 = vpop.f32.mrf.mxu0
      %1283 = vdwg.mxu0
      %s1284 = scalar_lea.vmem %s250, 40
      %1285 = vst [vmem:[%s1284] sm:$0xff] %v1281
      %1286 = vadd.xlane.f32.xlu0 %v1281
      %v1287 = vpop.xlane.xlu0 %1286
      %v1288 = vadd.f32 %v1172, %v1287
      %v1289 = vmul.f32 %v1281, %v1281
      %1290 = vadd.xlane.f32.xlu0 %v1289
      %v1291 = vpop.xlane.xlu0 %1290
      %v1292 = vadd.f32 %v1176, %v1291
      %v1293 = vld [vmem:[%s1097] sm:$0xf]
      %1294 = vst [vmem:[#allocation4] sm:$0xf] %v1293
      %v1295 = vld [vmem:[%s1097] sm:$0xff]
      %1297 = vrot.lane.b32.xlu0 %v1295, 120
      %v1298 = vpop.permute.xlu0 %1297
      %v1299 = vrot.slane %v1298, 4
      %v1300 = vsel %vm597, %v1298, %v1299
      %1302 = vst [vmem:[#allocation4 + $0x4] sm:$0xf] %v1300
      %v1303 = vld [vmem:[%s1097] sm:$0xff]
      %1305 = vrot.lane.b32.xlu0 %v1303, 112
      %v1306 = vpop.permute.xlu0 %1305
      %v1307 = vrot.slane %v1306, 4
      %v1308 = vsel %vm606, %v1306, %v1307
      %1310 = vst [vmem:[#allocation4 + $0x8] sm:$0xf] %v1308
      %v1311 = vld [vmem:[%s1213] sm:$0xf]
      %1312 = vst [vmem:[#allocation4 + $0xc] sm:$0xf] %v1311
      %v1313 = vld [vmem:[%s1213] sm:$0xff]
      %1315 = vrot.lane.b32.xlu0 %v1313, 120
      %v1316 = vpop.permute.xlu0 %1315
      %v1317 = vrot.slane %v1316, 4
      %v1318 = vsel %vm597, %v1316, %v1317
      %1320 = vst [vmem:[#allocation4 + $0x10] sm:$0xf] %v1318
      %v1321 = vld [vmem:[%s1213] sm:$0xff]
      %1323 = vrot.lane.b32.xlu0 %v1321, 112
      %v1324 = vpop.permute.xlu0 %1323
      %v1325 = vrot.slane %v1324, 4
      %v1326 = vsel %vm606, %v1324, %v1325
      %1328 = vst [vmem:[#allocation4 + $0x14] sm:$0xf] %v1326
      %s1329 = scalar_lea.vmem [#allocation3], 64
      %v1330 = vld [vmem:[%s1329] sm:$0xf]
      %1331 = vst [vmem:[#allocation4 + $0x18] sm:$0xf] %v1330
      %v1332 = vld [vmem:[%s1329] sm:$0xff]
      %1334 = vrot.lane.b32.xlu0 %v1332, 120
      %v1335 = vpop.permute.xlu0 %1334
      %v1336 = vrot.slane %v1335, 4
      %v1337 = vsel %vm597, %v1335, %v1336
      %1339 = vst [vmem:[#allocation4 + $0x1c] sm:$0xf] %v1337
      %v1340 = vld [vmem:[%s1329] sm:$0xff]
      %1342 = vrot.lane.b32.xlu0 %v1340, 112
      %v1343 = vpop.permute.xlu0 %1342
      %v1344 = vrot.slane %v1343, 4
      %v1345 = vsel %vm606, %v1343, %v1344
      %1347 = vst [vmem:[#allocation4 + $0x20] sm:$0xf] %v1345
      %v1348 = vld [vmem:[#allocation4] sm:$0xf]
      %v1349 = vld [vmem:[#allocation4 + $0x4] sm:$0xf]
      %v1350 = vld [vmem:[#allocation4 + $0x8] sm:$0xf]
      %v1351 = vld [vmem:[#allocation4 + $0xc] sm:$0xf]
      %v1352 = vld [vmem:[#allocation4 + $0x10] sm:$0xf]
      %v1353 = vld [vmem:[#allocation4 + $0x14] sm:$0xf]
      %v1354 = vld [vmem:[#allocation4 + $0x18] sm:$0xf]
      %v1355 = vld [vmem:[#allocation4 + $0x1c] sm:$0xf]
      %v1356 = vld [vmem:[#allocation4 + $0x20] sm:$0xf]
      %v1366 = vunpack.c.l.b16 %v1348
      %v1367 = vunpack.c.l.b16 %v1349
      %v1368 = vunpack.c.l.b16 %v1350
      %v1369 = vunpack.c.l.b16 %v1351
      %v1370 = vunpack.c.l.b16 %v1352
      %v1371 = vunpack.c.l.b16 %v1353
      %v1372 = vunpack.c.l.b16 %v1354
      %v1373 = vunpack.c.l.b16 %v1355
      %v1374 = vunpack.c.l.b16 %v1356
      %v1375 = vpack.c.b16 %v1367, %v1366
      %v1376 = vpack.c.b16 %v1369, %v1368
      %v1377 = vpack.c.b16 %v1371, %v1370
      %v1378 = vpack.c.b16 %v1373, %v1372
      %v1379 = vpack.c.b16 %v1374, %v1374
      %v1385 = vsel %vm688, %v1379, 0
      %1387 = vmatpush.bf16.msra.mxu0 0
      %1388 = vmatpush.bf16.msra.mxu0 0
      %1389 = vmatpush.bf16.msra.mxu0 0
      %1390 = vmatpush.bf16.msra.mxu0 %v1385
      %1391 = vmatpush.bf16.msra.mxu0 %v1378
      %1392 = vmatpush.bf16.msra.mxu0 %v1377
      %1393 = vmatpush.bf16.msra.mxu0 %v1376
      %1394 = vmatpush.bf16.msra.mxu0 %v1375
      %1395 = vmatmul.bf16.gmra.mxu0 %v686
      %v1396 = vpop.f32.mrf.mxu0
      %v1397 = vadd.f32 0.0, %v1396
      %v1398 = vpop.f32.mrf.mxu0
      %1399 = vdwg.mxu0
      %s1400 = scalar_lea.vmem %s250, 48
      %1401 = vst [vmem:[%s1400] sm:$0xff] %v1397
      %1402 = vadd.xlane.f32.xlu0 %v1397
      %v1403 = vpop.xlane.xlu0 %1402
      %v1404 = vadd.f32 %v1288, %v1403
      %v1405 = vmul.f32 %v1397, %v1397
      %1406 = vadd.xlane.f32.xlu0 %v1405
      %v1407 = vpop.xlane.xlu0 %1406
      %v1408 = vadd.f32 %v1292, %v1407
      %v1409 = vld [vmem:[%s1213] sm:$0xf]
      %1410 = vst [vmem:[#allocation4] sm:$0xf] %v1409
      %v1411 = vld [vmem:[%s1213] sm:$0xff]
      %1413 = vrot.lane.b32.xlu0 %v1411, 120
      %v1414 = vpop.permute.xlu0 %1413
      %v1415 = vrot.slane %v1414, 4
      %v1416 = vsel %vm597, %v1414, %v1415
      %1418 = vst [vmem:[#allocation4 + $0x4] sm:$0xf] %v1416
      %v1419 = vld [vmem:[%s1213] sm:$0xff]
      %1421 = vrot.lane.b32.xlu0 %v1419, 112
      %v1422 = vpop.permute.xlu0 %1421
      %v1423 = vrot.slane %v1422, 4
      %v1424 = vsel %vm606, %v1422, %v1423
      %1426 = vst [vmem:[#allocation4 + $0x8] sm:$0xf] %v1424
      %v1427 = vld [vmem:[%s1329] sm:$0xf]
      %1428 = vst [vmem:[#allocation4 + $0xc] sm:$0xf] %v1427
      %v1429 = vld [vmem:[%s1329] sm:$0xff]
      %1431 = vrot.lane.b32.xlu0 %v1429, 120
      %v1432 = vpop.permute.xlu0 %1431
      %v1433 = vrot.slane %v1432, 4
      %v1434 = vsel %vm597, %v1432, %v1433
      %1436 = vst [vmem:[#allocation4 + $0x10] sm:$0xf] %v1434
      %v1437 = vld [vmem:[%s1329] sm:$0xff]
      %1439 = vrot.lane.b32.xlu0 %v1437, 112
      %v1440 = vpop.permute.xlu0 %1439
      %v1441 = vrot.slane %v1440, 4
      %v1442 = vsel %vm606, %v1440, %v1441
      %1444 = vst [vmem:[#allocation4 + $0x14] sm:$0xf] %v1442
      %s1445 = scalar_lea.vmem [#allocation3], 72
      %v1446 = vld [vmem:[%s1445] sm:$0xf]
      %1447 = vst [vmem:[#allocation4 + $0x18] sm:$0xf] %v1446
      %v1448 = vld [vmem:[%s1445] sm:$0xff]
      %1450 = vrot.lane.b32.xlu0 %v1448, 120
      %v1451 = vpop.permute.xlu0 %1450
      %v1452 = vrot.slane %v1451, 4
      %v1453 = vsel %vm597, %v1451, %v1452
      %1455 = vst [vmem:[#allocation4 + $0x1c] sm:$0xf] %v1453
      %v1456 = vld [vmem:[%s1445] sm:$0xff]
      %1458 = vrot.lane.b32.xlu0 %v1456, 112
      %v1459 = vpop.permute.xlu0 %1458
      %v1460 = vrot.slane %v1459, 4
      %v1461 = vsel %vm606, %v1459, %v1460
      %1463 = vst [vmem:[#allocation4 + $0x20] sm:$0xf] %v1461
      %v1464 = vld [vmem:[#allocation4] sm:$0xf]
      %v1465 = vld [vmem:[#allocation4 + $0x4] sm:$0xf]
      %v1466 = vld [vmem:[#allocation4 + $0x8] sm:$0xf]
      %v1467 = vld [vmem:[#allocation4 + $0xc] sm:$0xf]
      %v1468 = vld [vmem:[#allocation4 + $0x10] sm:$0xf]
      %v1469 = vld [vmem:[#allocation4 + $0x14] sm:$0xf]
      %v1470 = vld [vmem:[#allocation4 + $0x18] sm:$0xf]
      %v1471 = vld [vmem:[#allocation4 + $0x1c] sm:$0xf]
      %v1472 = vld [vmem:[#allocation4 + $0x20] sm:$0xf]
      %v1482 = vunpack.c.l.b16 %v1464
      %v1483 = vunpack.c.l.b16 %v1465
      %v1484 = vunpack.c.l.b16 %v1466
      %v1485 = vunpack.c.l.b16 %v1467
      %v1486 = vunpack.c.l.b16 %v1468
      %v1487 = vunpack.c.l.b16 %v1469
      %v1488 = vunpack.c.l.b16 %v1470
      %v1489 = vunpack.c.l.b16 %v1471
      %v1490 = vunpack.c.l.b16 %v1472
      %v1491 = vpack.c.b16 %v1483, %v1482
      %v1492 = vpack.c.b16 %v1485, %v1484
      %v1493 = vpack.c.b16 %v1487, %v1486
      %v1494 = vpack.c.b16 %v1489, %v1488
      %v1495 = vpack.c.b16 %v1490, %v1490
      %v1501 = vsel %vm688, %v1495, 0
      %1503 = vmatpush.bf16.msra.mxu0 0
      %1504 = vmatpush.bf16.msra.mxu0 0
      %1505 = vmatpush.bf16.msra.mxu0 0
      %1506 = vmatpush.bf16.msra.mxu0 %v1501
      %1507 = vmatpush.bf16.msra.mxu0 %v1494
      %1508 = vmatpush.bf16.msra.mxu0 %v1493
      %1509 = vmatpush.bf16.msra.mxu0 %v1492
      %1510 = vmatpush.bf16.msra.mxu0 %v1491
      %1511 = vmatmul.bf16.gmra.mxu0 %v686
      %v1512 = vpop.f32.mrf.mxu0
      %v1513 = vadd.f32 0.0, %v1512
      %v1514 = vpop.f32.mrf.mxu0
      %1515 = vdwg.mxu0
      %s1516 = scalar_lea.vmem %s250, 56
      %1517 = vst [vmem:[%s1516] sm:$0xff] %v1513
      %1518 = vadd.xlane.f32.xlu0 %v1513
      %v1519 = vpop.xlane.xlu0 %1518
      %v1520 = vadd.f32 %v1404, %v1519
      %v1521 = vmul.f32 %v1513, %v1513
      %1522 = vadd.xlane.f32.xlu0 %v1521
      %v1523 = vpop.xlane.xlu0 %1522
      %v1524 = vadd.f32 %v1408, %v1523
      %vm1525 = vcmask 7168
      %1526 = vst.msk [vmem:[%s261] sm:$0xff] %vm1525, %v1520
      %1527 = vst.msk [vmem:[%s269] sm:$0xff] %vm1525, %v1524
      %s1528 = smul.u32 %s22, 2
      %s1529 = sadd.s32 %s1528, %s23
      %s1530 = smul.u32 8, %s1529
      %p1531 = scmp.lt.s32.totalorder %s1530, 31
      %s1532 = scalar_select %p1531, %s1530, 31
      %s1533 = smul.addr %s1532, 8
      %s1534 = scalar_lea.vmem %s4, %s1533
      %p1535 = scmp.lt.s32.totalorder %s22, 1
      %s1536 = scalar_select %p1535, %s22, 1
      %p1537 = scmp.lt.s32.totalorder %s23, 1
      %s1538 = scalar_select %p1537, %s23, 1
      %s1539 = smul.addr %s1536, 2
      %s1540 = sadd.s32 %s1538, %s1539
      %s1541 = smul.addr %s1540, 8
      %s1542 = scalar_lea.vmem %s5, %s1541
      %p1543 = scmp.lt.s32.totalorder %s22, 1
      %s1544 = scalar_select %p1543, %s22, 1
      %p1545 = scmp.lt.s32.totalorder %s23, 1
      %s1546 = scalar_select %p1545, %s23, 1
      %s1547 = smul.addr %s1544, 2
      %s1548 = sadd.s32 %s1546, %s1547
      %s1549 = smul.addr %s1548, 8
      %s1550 = scalar_lea.vmem %s6, %s1549
      // Predicated region
      $region144: #{fcn_conv3_forward.5} parent=31 // pred_check
        %p1551 = pneg %p115
      $region145: #{fcn_conv3_forward.5} parent=31 // pred_check_branch
        %1553 = sbr.rel (%p1551) target = $region147
      $region146: #{fcn_conv3_forward.5} parent=31 // pred_region
        %s1554 = smul.u32 %s22, 2
        %s1555 = sadd.s32 %s1554, %s23
        %s1556 = smul.u32 8, %s1555
      $region147: #{fcn_conv3_forward.5} parent=31 // pred_fallthru
        _
      // Predicated region
      $region148: #{fcn_conv3_forward.5} parent=31 // pred_check
        %p1557 = pneg %p143
      $region149: #{fcn_conv3_forward.5} parent=31 // pred_check_branch
        %1559 = sbr.rel (%p1557) target = $region151
      $region150: #{fcn_conv3_forward.5} parent=31 // pred_region
        _
      $region151: #{fcn_conv3_forward.5} parent=31 // pred_fallthru
        _
      // Predicated region
      $region152: #{fcn_conv3_forward.5} parent=31 // pred_check
        %p1560 = pneg %p171
      $region153: #{fcn_conv3_forward.5} parent=31 // pred_check_branch
        %1562 = sbr.rel (%p1560) target = $region155
      $region154: #{fcn_conv3_forward.5} parent=31 // pred_region
        _
      $region155: #{fcn_conv3_forward.5} parent=31 // pred_fallthru
        _
    $region32: #{fcn_conv3_forward.5} parent=5 // pred_fallthru
      _
    %p1563 = scmp.le.s32.totalorder 2, %s13
    // Predicated region
    $region156: #{fcn_conv3_forward.5} parent=5 // pred_check
      %p1564 = pneg %p1563
    $region157: #{fcn_conv3_forward.5} parent=5 // pred_check_branch
      %1566 = sbr.rel (%p1564) target = $region159
    $region158: #{fcn_conv3_forward.5} parent=5 // pred_region
      %s1567 = ssub.s32 %s13, 2
      // Predicated region
      $region160: #{fcn_conv3_forward.5} parent=158 // pred_check
        %p1568 = pneg %p121
      $region161: #{fcn_conv3_forward.5} parent=158 // pred_check_branch
        %1570 = sbr.rel (%p1568) target = $region163
      $region162: #{fcn_conv3_forward.5} parent=158 // pred_region
        %s1571 = smul.u32 %s24, 2
        %s1572 = sadd.s32 %s1571, %s25
        %s1573 = smul.u32 8, %s1572
        %p1574 = scmp.lt.s32.totalorder %s1573, 31
        %s1575 = scalar_select %p1574, %s1573, 31
        %s1576 = smul.addr %s1575, 8
        %s1577 = scalar_lea.vmem %s4, %s1576
      $region163: #{fcn_conv3_forward.5} parent=158 // pred_fallthru
        _
      // Predicated region
      $region164: #{fcn_conv3_forward.5} parent=158 // pred_check
        %p1578 = pneg %p149
      $region165: #{fcn_conv3_forward.5} parent=158 // pred_check_branch
        %1580 = sbr.rel (%p1578) target = $region167
      $region166: #{fcn_conv3_forward.5} parent=158 // pred_region
        %p1581 = scmp.lt.s32.totalorder %s24, 1
        %s1582 = scalar_select %p1581, %s24, 1
        %p1583 = scmp.lt.s32.totalorder %s25, 1
        %s1584 = scalar_select %p1583, %s25, 1
        %s1585 = smul.addr %s1582, 2
        %s1586 = sadd.s32 %s1584, %s1585
        %s1587 = smul.addr %s1586, 8
        %s1588 = scalar_lea.vmem %s5, %s1587
      $region167: #{fcn_conv3_forward.5} parent=158 // pred_fallthru
        _
      // Predicated region
      $region168: #{fcn_conv3_forward.5} parent=158 // pred_check
        %p1589 = pneg %p177
      $region169: #{fcn_conv3_forward.5} parent=158 // pred_check_branch
        %1591 = sbr.rel (%p1589) target = $region171
      $region170: #{fcn_conv3_forward.5} parent=158 // pred_region
        %p1592 = scmp.lt.s32.totalorder %s24, 1
        %s1593 = scalar_select %p1592, %s24, 1
        %p1594 = scmp.lt.s32.totalorder %s25, 1
        %s1595 = scalar_select %p1594, %s25, 1
        %s1596 = smul.addr %s1593, 2
        %s1597 = sadd.s32 %s1595, %s1596
        %s1598 = smul.addr %s1597, 8
        %s1599 = scalar_lea.vmem %s6, %s1598
      $region171: #{fcn_conv3_forward.5} parent=158 // pred_fallthru
        _
    $region159: #{fcn_conv3_forward.5} parent=5 // pred_fallthru
      _
  $region6: #{fcn_conv3_forward.5} parent=0 // loop_footer
    %s17 = sadd.s32 1, %s13
  $region7: #{fcn_conv3_forward.5} parent=0 // loop_footer_branch
    %12 = sbr.rel target = $region3
  $region8: #{fcn_conv3_forward.5} parent=0 // loop_exit
    _
  %1600 = vsyncmov [#allocation5]
  %s1601 = vpop.sfrf %1600
  %p1602 = scmp.eq.s32.totalorder %s1601, 0
  %p1603 = pneg %p1602
  %1605 = shalt.err (%p1603)
  %s1606 = scalar_lea.sflag [#allocation5], 1
  %1607 = vsyncmov %s1606
  %s1608 = vpop.sfrf %1607
  %p1609 = scmp.eq.s32.totalorder %s1608, 0
  %p1610 = pneg %p1609
  %1612 = shalt.err (%p1610)
  %s1613 = scalar_lea.sflag [#allocation5], 2
  %1614 = vsyncmov %s1613
  %s1615 = vpop.sfrf %1614
  %p1616 = scmp.eq.s32.totalorder %s1615, 0
  %p1617 = pneg %p1616
  %1619 = shalt.err (%p1617)

</llo_original>
